<compile_context>
chip_gen: v7x
topology: tpu7x:2x2x1
jax: 0.10.0
libtpu: 0.0.40
codegen_flags: <defaults>
</compile_context>

<pallas_src>
import math
import jax
import jax.numpy as jnp
from jax import lax
from jax.experimental import pallas as pl
from jax.experimental.pallas import tpu as pltpu

FRAME_PERIOD = 16
VOCAB = 259
VOCAB_PAD = 384               # 259 padded to a multiple of 128 -> lane-dense output
EMB_DIM = 128
HID = 64
FC1 = 512
N_LAYERS = 24
LAYERS_PER_STACK = 6          # 24 layers / 4 stacks
N_STACKS = N_LAYERS // LAYERS_PER_STACK
PAD = 2 * (2 ** (LAYERS_PER_STACK - 1))   # 64: max causal left context (k-1)*max_dilation


def _cnn_kernel(x_ref, c_ref, wconv_ref, bconv_ref, wp_ref, bp_ref,
                w1_ref, b1_ref, w2_ref, b2_ref,
                out_ref, xbuf, ccbuf, hist_ref):
    f32 = jnp.float32
    bf16 = jnp.bfloat16
    t_chunk = x_ref.shape[1]
    tcc = c_ref.shape[1]
    t_idx = pl.program_id(1)
    scale = f32(math.sqrt(0.5))

    # Reset the per-layer causal history at the start of each batch row.
    @pl.when(t_idx == 0)
    def _():
        hist_ref[...] = jnp.zeros_like(hist_ref)

    # In-kernel 16x nearest-neighbour upsample of the conditioning chunk
    # (F.interpolate default mode with integer scale): sublane-broadcast each row.
    for r in range(tcc):
        ccbuf[r * FRAME_PERIOD:(r + 1) * FRAME_PERIOD, :] = jnp.broadcast_to(
            c_ref[0, r:r + 1, :], (FRAME_PERIOD, HID))
    cc = ccbuf[...]                                   # (t_chunk, 64) f32

    # Encoder relu(Linear(Embedding(x))) is folded into the gathered table outside.
    xcur = x_ref[0]                                   # (t_chunk, 64) f32

    def stack_body(stack, xcur):
        for l in range(LAYERS_PER_STACK):             # 6 unrolled: static dilation
            li = stack * LAYERS_PER_STACK + l
            d = 2 ** l
            # Expose this layer's input + its causal left context in xbuf.
            xbuf[0:PAD, :] = hist_ref[li]
            xbuf[PAD:, :] = xcur
            # Save the last PAD rows of this layer's input for the next time chunk.
            hist_ref[li] = xcur[t_chunk - PAD:, :]
            x0 = xbuf[PAD - 2 * d:PAD - 2 * d + t_chunk, :]   # x[t - 2d]
            x1 = xbuf[PAD - d:PAD - d + t_chunk, :]           # x[t - d]
            # Fused 3-tap causal dilated conv: one (t_chunk,192)@(192,64) bf16 matmul.
            lhs = jnp.concatenate([x0, x1, xcur], axis=1).astype(bf16)
            conv = jnp.dot(lhs, wconv_ref[li],
                           preferred_element_type=f32) + bconv_ref[li]
            y = jnp.maximum(conv, 0.0) + cc                       # relu + conditioning
            y = jnp.dot(y.astype(bf16), wp_ref[li],
                        preferred_element_type=f32) + bp_ref[li]  # prefinal Linear(64,64)
            xcur = (y + xcur) * scale                             # f32 residual chain
        return xcur

    xcur = lax.fori_loop(0, N_STACKS, stack_body, xcur)

    # Final FCs: relu(x @ W1 + b1) @ W2 + b2  (vocab padded 259 -> 384, zero cols).
    h1 = jnp.maximum(jnp.dot(xcur.astype(bf16), w1_ref[...],
                             preferred_element_type=f32) + b1_ref[...], 0.0)
    out_ref[0] = jnp.dot(h1.astype(bf16), w2_ref[...],
                         preferred_element_type=f32) + b2_ref[...]


def cnnmodel_forward(x_ids, c, params, *, t_chunk=128):
    """x_ids: (B, T) int32 token ids in [0,259); c: (B, Tc, 64) with T == Tc*16."""
    B, T = x_ids.shape
    Tc = c.shape[1]
    assert T == Tc * FRAME_PERIOD, "time length must equal Tc * frame_period"
    assert t_chunk % FRAME_PERIOD == 0 and t_chunk % 8 == 0 and t_chunk >= PAD
    assert T % t_chunk == 0, "T must be a multiple of t_chunk"
    nt = T // t_chunk
    tcc = t_chunk // FRAME_PERIOD

    # Fold the encoder into the embedding table: relu(E @ Wenc + benc), then gather.
    # (relu/bias commute with the row gather, so this is exact.)
    enc_table = jnp.maximum(
        jnp.dot(params["emb_table"], params["wenc"]) + params["benc"], 0.0)
    x_enc = enc_table[x_ids]                          # (B, T, 64) f32

    def const(shape):
        nd = len(shape)
        return pl.BlockSpec(shape, lambda b, t: (0,) * nd)

    in_specs = [
        pl.BlockSpec((1, t_chunk, HID), lambda b, t: (b, t, 0)),   # encoded x chunk
        pl.BlockSpec((1, tcc, HID), lambda b, t: (b, t, 0)),       # conditioning chunk
        const((N_LAYERS, 3 * HID, HID)), const((N_LAYERS, 1, HID)),  # fused conv taps
        const((N_LAYERS, HID, HID)), const((N_LAYERS, 1, HID)),      # prefinal fcs
        const((HID, FC1)), const((1, FC1)),                          # final fc1
        const((FC1, VOCAB_PAD)), const((1, VOCAB_PAD)),              # final fc2 (padded)
    ]

    out = pl.pallas_call(
        _cnn_kernel,
        out_shape=jax.ShapeDtypeStruct((B, T, VOCAB_PAD), jnp.float32),
        grid_spec=pltpu.PrefetchScalarGridSpec(
            num_scalar_prefetch=0,
            grid=(B, nt),                      # time axis innermost, sequential
            in_specs=in_specs,
            out_specs=pl.BlockSpec((1, t_chunk, VOCAB_PAD), lambda b, t: (b, t, 0)),
            scratch_shapes=[
                pltpu.VMEM((PAD + t_chunk, HID), jnp.float32),     # layer input + context
                pltpu.VMEM((t_chunk, HID), jnp.float32),           # upsampled conditioning
                pltpu.VMEM((N_LAYERS, PAD, HID), jnp.float32),     # per-layer causal history
            ],
        ),
        compiler_params=pltpu.CompilerParams(
            dimension_semantics=("parallel", "arbitrary"),
            vmem_limit_bytes=32 * 1024 * 1024,
        ),
    )(x_enc, c, params["wconv"], params["bconv"], params["wp"], params["bp"],
      params["w1"], params["b1"], params["w2"], params["b2"])

    # One fused slice: drop the last time step (x[:, :-1, :]) and the vocab padding.
    return out[:, :T - 1, :VOCAB]


def init_params(key):
    ks = jax.random.split(key, 8)
    bf16 = jnp.bfloat16

    def n(k, shape, scl, dtype=jnp.float32):
        return (scl * jax.random.normal(k, shape)).astype(dtype)

    w2 = n(ks[7], (FC1, VOCAB), 1.0 / math.sqrt(FC1), bf16)
    w2 = jnp.pad(w2, ((0, 0), (0, VOCAB_PAD - VOCAB)))   # padded vocab columns are zero

    return dict(
        emb_table=n(ks[0], (VOCAB, EMB_DIM), 0.1),
        wenc=n(ks[1], (EMB_DIM, HID), 1.0 / math.sqrt(EMB_DIM)),
        benc=n(ks[2], (1, HID), 0.01),
        # fused conv taps: wconv[l] = [W[:,:,0]^T ; W[:,:,1]^T ; W[:,:,2]^T]  (rows 0:64
        # multiply x[t-2d], 64:128 -> x[t-d], 128:192 -> x[t]) -- (in, out) orientation.
        wconv=n(ks[3], (N_LAYERS, 3 * HID, HID), 1.0 / math.sqrt(3 * HID), bf16),
        bconv=jnp.zeros((N_LAYERS, 1, HID), jnp.float32),
        wp=n(ks[4], (N_LAYERS, HID, HID), 1.0 / math.sqrt(HID), bf16),
        bp=jnp.zeros((N_LAYERS, 1, HID), jnp.float32),
        w1=n(ks[5], (HID, FC1), 1.0 / math.sqrt(HID), bf16),
        b1=n(ks[6], (1, FC1), 0.01),
        w2=w2,
        b2=jnp.zeros((1, VOCAB_PAD), jnp.float32),
    )


if __name__ == "__main__":
    key = jax.random.PRNGKey(0)
    kx, kc, kp = jax.random.split(key, 3)

    B, Tc = 2, 16
    T = Tc * FRAME_PERIOD                        # 256 audio-rate steps (2 time chunks)
    x_ids = jax.random.randint(kx, (B, T), 0, VOCAB, dtype=jnp.int32)
    c = jax.random.normal(kc, (B, Tc, HID), dtype=jnp.float32)

    params = init_params(kp)
    out = cnnmodel_forward(x_ids, c, params, t_chunk=128)
    out = jax.block_until_ready(out)
    assert out.shape == (B, T - 1, VOCAB) and out.dtype == jnp.float32
    print("KERNEL_OK")
</pallas_src>

<mosaic_0001>
module attributes {stable_mosaic.version = 11 : i64} {
  func.func @_cnn_kernel(%arg0: i32, %arg1: i32, %arg2: memref<1x128x64xf32, #tpu.memory_space<vmem>>, %arg3: memref<1x8x64xf32, #tpu.memory_space<vmem>>, %arg4: memref<24x192x64xbf16, #tpu.memory_space<vmem>>, %arg5: memref<24x1x64xf32, #tpu.memory_space<vmem>>, %arg6: memref<24x64x64xbf16, #tpu.memory_space<vmem>>, %arg7: memref<24x1x64xf32, #tpu.memory_space<vmem>>, %arg8: memref<64x512xbf16, #tpu.memory_space<vmem>>, %arg9: memref<1x512xf32, #tpu.memory_space<vmem>>, %arg10: memref<512x384xbf16, #tpu.memory_space<vmem>>, %arg11: memref<1x384xf32, #tpu.memory_space<vmem>>, %arg12: memref<1x128x384xf32, #tpu.memory_space<vmem>>, %arg13: memref<192x64xf32, #tpu.memory_space<vmem>>, %arg14: memref<128x64xf32, #tpu.memory_space<vmem>>, %arg15: memref<24x64x64xf32, #tpu.memory_space<vmem>>) attributes {dimension_semantics = [#tpu.dimension_semantics<parallel>, #tpu.dimension_semantics<arbitrary>], iteration_bounds = array<i64: 2, 2>, scalar_prefetch = 0 : i64, scratch_operands = 3 : i64, tpu.core_type = #tpu.core_type<tc>, window_params = [{transform_indices = @transform_0, window_bounds = array<i64: 1, 128, 64>}, {transform_indices = @transform_1, window_bounds = array<i64: 1, 8, 64>}, {pipeline_mode = #tpu.pipeline_mode<synchronous>, transform_indices = @transform_2, window_bounds = array<i64: 24, 192, 64>}, {pipeline_mode = #tpu.pipeline_mode<synchronous>, transform_indices = @transform_3, window_bounds = array<i64: 24, 1, 64>}, {pipeline_mode = #tpu.pipeline_mode<synchronous>, transform_indices = @transform_4, window_bounds = array<i64: 24, 64, 64>}, {pipeline_mode = #tpu.pipeline_mode<synchronous>, transform_indices = @transform_5, window_bounds = array<i64: 24, 1, 64>}, {pipeline_mode = #tpu.pipeline_mode<synchronous>, transform_indices = @transform_6, window_bounds = array<i64: 64, 512>}, {pipeline_mode = #tpu.pipeline_mode<synchronous>, transform_indices = @transform_7, window_bounds = array<i64: 1, 512>}, {pipeline_mode = #tpu.pipeline_mode<synchronous>, transform_indices = @transform_8, window_bounds = array<i64: 512, 384>}, {pipeline_mode = #tpu.pipeline_mode<synchronous>, transform_indices = @transform_9, window_bounds = array<i64: 1, 384>}, {transform_indices = @transform_10, window_bounds = array<i64: 1, 128, 384>}]} {
    %c0_i32 = arith.constant 0 : i32
    %0 = arith.cmpi eq, %arg1, %c0_i32 : i32
    %1 = arith.extui %0 : i1 to i32
    %c0_i32_0 = arith.constant 0 : i32
    %2 = arith.cmpi ne, %1, %c0_i32_0 : i32
    scf.if %2 {
      %cst_47 = arith.constant 0.000000e+00 : f32
      %65 = vector.broadcast %cst_47 : f32 to vector<24x64x64xf32>
      %c0_48 = arith.constant 0 : index
      %c0_49 = arith.constant 0 : index
      %c0_50 = arith.constant 0 : index
      %66 = vector.load %arg15[%c0_48, %c0_49, %c0_50] : memref<24x64x64xf32, #tpu.memory_space<vmem>>, vector<24x64x64xf32>
      tpu.vector_store %arg15[%c0_48, %c0_49, %c0_50], %65 {strides = array<i32>} : memref<24x64x64xf32, #tpu.memory_space<vmem>>, vector<24x64x64xf32>,
    } else {
    }
    %c0 = arith.constant 0 : index
    %c0_1 = arith.constant 0 : index
    %c0_2 = arith.constant 0 : index
    %3 = vector.load %arg3[%c0, %c0_1, %c0_2] : memref<1x8x64xf32, #tpu.memory_space<vmem>>, vector<1x1x64xf32>
    %4 = vector.shape_cast %3 : vector<1x1x64xf32> to vector<1x64xf32>
    %5 = vector.shape_cast %4 : vector<1x64xf32> to vector<1x64xf32>
    %6 = vector.broadcast %5 : vector<1x64xf32> to vector<16x64xf32>
    %c0_3 = arith.constant 0 : index
    %c0_4 = arith.constant 0 : index
    %7 = vector.load %arg14[%c0_3, %c0_4] : memref<128x64xf32, #tpu.memory_space<vmem>>, vector<16x64xf32>
    tpu.vector_store %arg14[%c0_3, %c0_4], %6 {strides = array<i32>} : memref<128x64xf32, #tpu.memory_space<vmem>>, vector<16x64xf32>,
    %c0_5 = arith.constant 0 : index
    %c1 = arith.constant 1 : index
    %c0_6 = arith.constant 0 : index
    %8 = vector.load %arg3[%c0_5, %c1, %c0_6] : memref<1x8x64xf32, #tpu.memory_space<vmem>>, vector<1x1x64xf32>
    %9 = vector.shape_cast %8 : vector<1x1x64xf32> to vector<1x64xf32>
    %10 = vector.shape_cast %9 : vector<1x64xf32> to vector<1x64xf32>
    %11 = vector.broadcast %10 : vector<1x64xf32> to vector<16x64xf32>
    %c16 = arith.constant 16 : index
    %c0_7 = arith.constant 0 : index
    %12 = vector.load %arg14[%c16, %c0_7] : memref<128x64xf32, #tpu.memory_space<vmem>>, vector<16x64xf32>
    tpu.vector_store %arg14[%c16, %c0_7], %11 {strides = array<i32>} : memref<128x64xf32, #tpu.memory_space<vmem>>, vector<16x64xf32>,
    %c0_8 = arith.constant 0 : index
    %c2 = arith.constant 2 : index
    %c0_9 = arith.constant 0 : index
    %13 = vector.load %arg3[%c0_8, %c2, %c0_9] : memref<1x8x64xf32, #tpu.memory_space<vmem>>, vector<1x1x64xf32>
    %14 = vector.shape_cast %13 : vector<1x1x64xf32> to vector<1x64xf32>
    %15 = vector.shape_cast %14 : vector<1x64xf32> to vector<1x64xf32>
    %16 = vector.broadcast %15 : vector<1x64xf32> to vector<16x64xf32>
    %c32 = arith.constant 32 : index
    %c0_10 = arith.constant 0 : index
    %17 = vector.load %arg14[%c32, %c0_10] : memref<128x64xf32, #tpu.memory_space<vmem>>, vector<16x64xf32>
    tpu.vector_store %arg14[%c32, %c0_10], %16 {strides = array<i32>} : memref<128x64xf32, #tpu.memory_space<vmem>>, vector<16x64xf32>,
    %c0_11 = arith.constant 0 : index
    %c3 = arith.constant 3 : index
    %c0_12 = arith.constant 0 : index
    %18 = vector.load %arg3[%c0_11, %c3, %c0_12] : memref<1x8x64xf32, #tpu.memory_space<vmem>>, vector<1x1x64xf32>
    %19 = vector.shape_cast %18 : vector<1x1x64xf32> to vector<1x64xf32>
    %20 = vector.shape_cast %19 : vector<1x64xf32> to vector<1x64xf32>
    %21 = vector.broadcast %20 : vector<1x64xf32> to vector<16x64xf32>
    %c48 = arith.constant 48 : index
    %c0_13 = arith.constant 0 : index
    %22 = vector.load %arg14[%c48, %c0_13] : memref<128x64xf32, #tpu.memory_space<vmem>>, vector<16x64xf32>
    tpu.vector_store %arg14[%c48, %c0_13], %21 {strides = array<i32>} : memref<128x64xf32, #tpu.memory_space<vmem>>, vector<16x64xf32>,
    %c0_14 = arith.constant 0 : index
    %c4 = arith.constant 4 : index
    %c0_15 = arith.constant 0 : index
    %23 = vector.load %arg3[%c0_14, %c4, %c0_15] : memref<1x8x64xf32, #tpu.memory_space<vmem>>, vector<1x1x64xf32>
    %24 = vector.shape_cast %23 : vector<1x1x64xf32> to vector<1x64xf32>
    %25 = vector.shape_cast %24 : vector<1x64xf32> to vector<1x64xf32>
    %26 = vector.broadcast %25 : vector<1x64xf32> to vector<16x64xf32>
    %c64 = arith.constant 64 : index
    %c0_16 = arith.constant 0 : index
    %27 = vector.load %arg14[%c64, %c0_16] : memref<128x64xf32, #tpu.memory_space<vmem>>, vector<16x64xf32>
    tpu.vector_store %arg14[%c64, %c0_16], %26 {strides = array<i32>} : memref<128x64xf32, #tpu.memory_space<vmem>>, vector<16x64xf32>,
    %c0_17 = arith.constant 0 : index
    %c5 = arith.constant 5 : index
    %c0_18 = arith.constant 0 : index
    %28 = vector.load %arg3[%c0_17, %c5, %c0_18] : memref<1x8x64xf32, #tpu.memory_space<vmem>>, vector<1x1x64xf32>
    %29 = vector.shape_cast %28 : vector<1x1x64xf32> to vector<1x64xf32>
    %30 = vector.shape_cast %29 : vector<1x64xf32> to vector<1x64xf32>
    %31 = vector.broadcast %30 : vector<1x64xf32> to vector<16x64xf32>
    %c80 = arith.constant 80 : index
    %c0_19 = arith.constant 0 : index
    %32 = vector.load %arg14[%c80, %c0_19] : memref<128x64xf32, #tpu.memory_space<vmem>>, vector<16x64xf32>
    tpu.vector_store %arg14[%c80, %c0_19], %31 {strides = array<i32>} : memref<128x64xf32, #tpu.memory_space<vmem>>, vector<16x64xf32>,
    %c0_20 = arith.constant 0 : index
    %c6 = arith.constant 6 : index
    %c0_21 = arith.constant 0 : index
    %33 = vector.load %arg3[%c0_20, %c6, %c0_21] : memref<1x8x64xf32, #tpu.memory_space<vmem>>, vector<1x1x64xf32>
    %34 = vector.shape_cast %33 : vector<1x1x64xf32> to vector<1x64xf32>
    %35 = vector.shape_cast %34 : vector<1x64xf32> to vector<1x64xf32>
    %36 = vector.broadcast %35 : vector<1x64xf32> to vector<16x64xf32>
    %c96 = arith.constant 96 : index
    %c0_22 = arith.constant 0 : index
    %37 = vector.load %arg14[%c96, %c0_22] : memref<128x64xf32, #tpu.memory_space<vmem>>, vector<16x64xf32>
    tpu.vector_store %arg14[%c96, %c0_22], %36 {strides = array<i32>} : memref<128x64xf32, #tpu.memory_space<vmem>>, vector<16x64xf32>,
    %c0_23 = arith.constant 0 : index
    %c7 = arith.constant 7 : index
    %c0_24 = arith.constant 0 : index
    %38 = vector.load %arg3[%c0_23, %c7, %c0_24] : memref<1x8x64xf32, #tpu.memory_space<vmem>>, vector<1x1x64xf32>
    %39 = vector.shape_cast %38 : vector<1x1x64xf32> to vector<1x64xf32>
    %40 = vector.shape_cast %39 : vector<1x64xf32> to vector<1x64xf32>
    %41 = vector.broadcast %40 : vector<1x64xf32> to vector<16x64xf32>
    %c112 = arith.constant 112 : index
    %c0_25 = arith.constant 0 : index
    %42 = vector.load %arg14[%c112, %c0_25] : memref<128x64xf32, #tpu.memory_space<vmem>>, vector<16x64xf32>
    tpu.vector_store %arg14[%c112, %c0_25], %41 {strides = array<i32>} : memref<128x64xf32, #tpu.memory_space<vmem>>, vector<16x64xf32>,
    %c0_26 = arith.constant 0 : index
    %c0_27 = arith.constant 0 : index
    %43 = vector.load %arg14[%c0_26, %c0_27] : memref<128x64xf32, #tpu.memory_space<vmem>>, vector<128x64xf32>
    %c0_28 = arith.constant 0 : index
    %c0_29 = arith.constant 0 : index
    %c0_30 = arith.constant 0 : index
    %44 = vector.load %arg2[%c0_28, %c0_29, %c0_30] : memref<1x128x64xf32, #tpu.memory_space<vmem>>, vector<1x128x64xf32>
    %45 = vector.shape_cast %44 : vector<1x128x64xf32> to vector<128x64xf32>
    %cst = arith.constant 0.707106769 : f32
    %c0_i32_31 = arith.constant 0 : i32
    %c4_i32 = arith.constant 4 : i32
    %46 = arith.addi %c0_i32_31, %c4_i32 : i32
    %c1_i32 = arith.constant 1 : i32
    %47 = scf.for %arg16 = %c0_i32_31 to %46 step %c1_i32 iter_args(%arg17 = %45) -> (vector<128x64xf32>)  : i32 {
      %c6_i32 = arith.constant 6 : i32
      %65 = arith.muli %arg16, %c6_i32 : i32
      %c0_i32_47 = arith.constant 0 : i32
      %66 = arith.addi %65, %c0_i32_47 : i32
      %67 = arith.index_cast %66 : i32 to index
      %c0_48 = arith.constant 0 : index
      %c0_49 = arith.constant 0 : index
      %68 = vector.load %arg15[%67, %c0_48, %c0_49] : memref<24x64x64xf32, #tpu.memory_space<vmem>>, vector<1x64x64xf32>
      %69 = vector.shape_cast %68 : vector<1x64x64xf32> to vector<64x64xf32>
      %c0_50 = arith.constant 0 : index
      %c0_51 = arith.constant 0 : index
      %70 = vector.load %arg13[%c0_50, %c0_51] : memref<192x64xf32, #tpu.memory_space<vmem>>, vector<64x64xf32>
      tpu.vector_store %arg13[%c0_50, %c0_51], %69 {strides = array<i32>} : memref<192x64xf32, #tpu.memory_space<vmem>>, vector<64x64xf32>,
      %c64_52 = arith.constant 64 : index
      %c0_53 = arith.constant 0 : index
      %71 = vector.load %arg13[%c64_52, %c0_53] : memref<192x64xf32, #tpu.memory_space<vmem>>, vector<128x64xf32>
      tpu.vector_store %arg13[%c64_52, %c0_53], %arg17 {strides = array<i32>} : memref<192x64xf32, #tpu.memory_space<vmem>>, vector<128x64xf32>,
      %72 = vector.extract_strided_slice %arg17 {offsets = [64, 0], sizes = [64, 64], strides = [1, 1]} : vector<128x64xf32> to vector<64x64xf32>
      %73 = arith.index_cast %66 : i32 to index
      %c0_54 = arith.constant 0 : index
      %c0_55 = arith.constant 0 : index
      %74 = vector.load %arg15[%73, %c0_54, %c0_55] : memref<24x64x64xf32, #tpu.memory_space<vmem>>, vector<1x64x64xf32>
      %75 = vector.shape_cast %74 : vector<1x64x64xf32> to vector<64x64xf32>
      %76 = vector.shape_cast %72 : vector<64x64xf32> to vector<1x64x64xf32>
      tpu.vector_store %arg15[%73, %c0_54, %c0_55], %76 {strides = array<i32>} : memref<24x64x64xf32, #tpu.memory_space<vmem>>, vector<1x64x64xf32>,
      %c62 = arith.constant 62 : index
      %c0_56 = arith.constant 0 : index
      %77 = vector.load %arg13[%c62, %c0_56] : memref<192x64xf32, #tpu.memory_space<vmem>>, vector<128x64xf32>
      %c63 = arith.constant 63 : index
      %c0_57 = arith.constant 0 : index
      %78 = vector.load %arg13[%c63, %c0_57] : memref<192x64xf32, #tpu.memory_space<vmem>>, vector<128x64xf32>
      %79 = tpu.concatenate %77, %78, %arg17 in 1 : vector<128x64xf32>, vector<128x64xf32>, vector<128x64xf32> -> vector<128x192xf32>
      %80 = arith.truncf %79 : vector<128x192xf32> to vector<128x192xbf16>
      %81 = arith.index_cast %66 : i32 to index
      %c0_58 = arith.constant 0 : index
      %c0_59 = arith.constant 0 : index
      %82 = vector.load %arg4[%81, %c0_58, %c0_59] : memref<24x192x64xbf16, #tpu.memory_space<vmem>>, vector<1x192x64xbf16>
      %83 = vector.shape_cast %82 : vector<1x192x64xbf16> to vector<192x64xbf16>
      %cst_60 = arith.constant dense<0.000000e+00> : vector<128x64xf32>
      %84 = tpu.matmul %80, %83, %cst_60 {dimension_numbers = #tpu.dot_dimension_numbers<[1], [0], [0], [1], [0, 0, 1, 1], [], []>} : vector<128x192xbf16>, vector<192x64xbf16>, vector<128x64xf32> -> vector<128x64xf32>
      %85 = arith.index_cast %66 : i32 to index
      %c0_61 = arith.constant 0 : index
      %c0_62 = arith.constant 0 : index
      %86 = vector.load %arg5[%85, %c0_61, %c0_62] : memref<24x1x64xf32, #tpu.memory_space<vmem>>, vector<1x1x64xf32>
      %87 = vector.shape_cast %86 : vector<1x1x64xf32> to vector<1x64xf32>
      %88 = vector.broadcast %87 : vector<1x64xf32> to vector<128x64xf32>
      %89 = arith.addf %84, %88 : vector<128x64xf32>
      %cst_63 = arith.constant 0.000000e+00 : f32
      %90 = vector.broadcast %cst_63 : f32 to vector<128x64xf32>
      %91 = arith.maximumf %89, %90 : vector<128x64xf32>
      %92 = arith.addf %91, %43 : vector<128x64xf32>
      %93 = arith.truncf %92 : vector<128x64xf32> to vector<128x64xbf16>
      %94 = arith.index_cast %66 : i32 to index
      %c0_64 = arith.constant 0 : index
      %c0_65 = arith.constant 0 : index
      %95 = vector.load %arg6[%94, %c0_64, %c0_65] : memref<24x64x64xbf16, #tpu.memory_space<vmem>>, vector<1x64x64xbf16>
      %96 = vector.shape_cast %95 : vector<1x64x64xbf16> to vector<64x64xbf16>
      %cst_66 = arith.constant dense<0.000000e+00> : vector<128x64xf32>
      %97 = tpu.matmul %93, %96, %cst_66 {dimension_numbers = #tpu.dot_dimension_numbers<[1], [0], [0], [1], [0, 0, 1, 1], [], []>} : vector<128x64xbf16>, vector<64x64xbf16>, vector<128x64xf32> -> vector<128x64xf32>
      %98 = arith.index_cast %66 : i32 to index
      %c0_67 = arith.constant 0 : index
      %c0_68 = arith.constant 0 : index
      %99 = vector.load %arg7[%98, %c0_67, %c0_68] : memref<24x1x64xf32, #tpu.memory_space<vmem>>, vector<1x1x64xf32>
      %100 = vector.shape_cast %99 : vector<1x1x64xf32> to vector<1x64xf32>
      %101 = vector.broadcast %100 : vector<1x64xf32> to vector<128x64xf32>
      %102 = arith.addf %97, %101 : vector<128x64xf32>
      %103 = arith.addf %102, %arg17 : vector<128x64xf32>
      %104 = vector.broadcast %cst : f32 to vector<128x64xf32>
      %105 = arith.mulf %103, %104 : vector<128x64xf32>
      %c6_i32_69 = arith.constant 6 : i32
      %106 = arith.muli %arg16, %c6_i32_69 : i32
      %c1_i32_70 = arith.constant 1 : i32
      %107 = arith.addi %106, %c1_i32_70 : i32
      %108 = arith.index_cast %107 : i32 to index
      %c0_71 = arith.constant 0 : index
      %c0_72 = arith.constant 0 : index
      %109 = vector.load %arg15[%108, %c0_71, %c0_72] : memref<24x64x64xf32, #tpu.memory_space<vmem>>, vector<1x64x64xf32>
      %110 = vector.shape_cast %109 : vector<1x64x64xf32> to vector<64x64xf32>
      %c0_73 = arith.constant 0 : index
      %c0_74 = arith.constant 0 : index
      %111 = vector.load %arg13[%c0_73, %c0_74] : memref<192x64xf32, #tpu.memory_space<vmem>>, vector<64x64xf32>
      tpu.vector_store %arg13[%c0_73, %c0_74], %110 {strides = array<i32>} : memref<192x64xf32, #tpu.memory_space<vmem>>, vector<64x64xf32>,
      %c64_75 = arith.constant 64 : index
      %c0_76 = arith.constant 0 : index
      %112 = vector.load %arg13[%c64_75, %c0_76] : memref<192x64xf32, #tpu.memory_space<vmem>>, vector<128x64xf32>
      tpu.vector_store %arg13[%c64_75, %c0_76], %105 {strides = array<i32>} : memref<192x64xf32, #tpu.memory_space<vmem>>, vector<128x64xf32>,
      %113 = vector.extract_strided_slice %105 {offsets = [64, 0], sizes = [64, 64], strides = [1, 1]} : vector<128x64xf32> to vector<64x64xf32>
      %114 = arith.index_cast %107 : i32 to index
      %c0_77 = arith.constant 0 : index
      %c0_78 = arith.constant 0 : index
      %115 = vector.load %arg15[%114, %c0_77, %c0_78] : memref<24x64x64xf32, #tpu.memory_space<vmem>>, vector<1x64x64xf32>
      %116 = vector.shape_cast %115 : vector<1x64x64xf32> to vector<64x64xf32>
      %117 = vector.shape_cast %113 : vector<64x64xf32> to vector<1x64x64xf32>
      tpu.vector_store %arg15[%114, %c0_77, %c0_78], %117 {strides = array<i32>} : memref<24x64x64xf32, #tpu.memory_space<vmem>>, vector<1x64x64xf32>,
      %c60 = arith.constant 60 : index
      %c0_79 = arith.constant 0 : index
      %118 = vector.load %arg13[%c60, %c0_79] : memref<192x64xf32, #tpu.memory_space<vmem>>, vector<128x64xf32>
      %c62_80 = arith.constant 62 : index
      %c0_81 = arith.constant 0 : index
      %119 = vector.load %arg13[%c62_80, %c0_81] : memref<192x64xf32, #tpu.memory_space<vmem>>, vector<128x64xf32>
      %120 = tpu.concatenate %118, %119, %105 in 1 : vector<128x64xf32>, vector<128x64xf32>, vector<128x64xf32> -> vector<128x192xf32>
      %121 = arith.truncf %120 : vector<128x192xf32> to vector<128x192xbf16>
      %122 = arith.index_cast %107 : i32 to index
      %c0_82 = arith.constant 0 : index
      %c0_83 = arith.constant 0 : index
      %123 = vector.load %arg4[%122, %c0_82, %c0_83] : memref<24x192x64xbf16, #tpu.memory_space<vmem>>, vector<1x192x64xbf16>
      %124 = vector.shape_cast %123 : vector<1x192x64xbf16> to vector<192x64xbf16>
      %cst_84 = arith.constant dense<0.000000e+00> : vector<128x64xf32>
      %125 = tpu.matmul %121, %124, %cst_84 {dimension_numbers = #tpu.dot_dimension_numbers<[1], [0], [0], [1], [0, 0, 1, 1], [], []>} : vector<128x192xbf16>, vector<192x64xbf16>, vector<128x64xf32> -> vector<128x64xf32>
      %126 = arith.index_cast %107 : i32 to index
      %c0_85 = arith.constant 0 : index
      %c0_86 = arith.constant 0 : index
      %127 = vector.load %arg5[%126, %c0_85, %c0_86] : memref<24x1x64xf32, #tpu.memory_space<vmem>>, vector<1x1x64xf32>
      %128 = vector.shape_cast %127 : vector<1x1x64xf32> to vector<1x64xf32>
      %129 = vector.broadcast %128 : vector<1x64xf32> to vector<128x64xf32>
      %130 = arith.addf %125, %129 : vector<128x64xf32>
      %cst_87 = arith.constant 0.000000e+00 : f32
      %131 = vector.broadcast %cst_87 : f32 to vector<128x64xf32>
      %132 = arith.maximumf %130, %131 : vector<128x64xf32>
      %133 = arith.addf %132, %43 : vector<128x64xf32>
      %134 = arith.truncf %133 : vector<128x64xf32> to vector<128x64xbf16>
      %135 = arith.index_cast %107 : i32 to index
      %c0_88 = arith.constant 0 : index
      %c0_89 = arith.constant 0 : index
      %136 = vector.load %arg6[%135, %c0_88, %c0_89] : memref<24x64x64xbf16, #tpu.memory_space<vmem>>, vector<1x64x64xbf16>
      %137 = vector.shape_cast %136 : vector<1x64x64xbf16> to vector<64x64xbf16>
      %cst_90 = arith.constant dense<0.000000e+00> : vector<128x64xf32>
      %138 = tpu.matmul %134, %137, %cst_90 {dimension_numbers = #tpu.dot_dimension_numbers<[1], [0], [0], [1], [0, 0, 1, 1], [], []>} : vector<128x64xbf16>, vector<64x64xbf16>, vector<128x64xf32> -> vector<128x64xf32>
      %139 = arith.index_cast %107 : i32 to index
      %c0_91 = arith.constant 0 : index
      %c0_92 = arith.constant 0 : index
      %140 = vector.load %arg7[%139, %c0_91, %c0_92] : memref<24x1x64xf32, #tpu.memory_space<vmem>>, vector<1x1x64xf32>
      %141 = vector.shape_cast %140 : vector<1x1x64xf32> to vector<1x64xf32>
      %142 = vector.broadcast %141 : vector<1x64xf32> to vector<128x64xf32>
      %143 = arith.addf %138, %142 : vector<128x64xf32>
      %144 = arith.addf %143, %105 : vector<128x64xf32>
      %145 = vector.broadcast %cst : f32 to vector<128x64xf32>
      %146 = arith.mulf %144, %145 : vector<128x64xf32>
      %c6_i32_93 = arith.constant 6 : i32
      %147 = arith.muli %arg16, %c6_i32_93 : i32
      %c2_i32 = arith.constant 2 : i32
      %148 = arith.addi %147, %c2_i32 : i32
      %149 = arith.index_cast %148 : i32 to index
      %c0_94 = arith.constant 0 : index
      %c0_95 = arith.constant 0 : index
      %150 = vector.load %arg15[%149, %c0_94, %c0_95] : memref<24x64x64xf32, #tpu.memory_space<vmem>>, vector<1x64x64xf32>
      %151 = vector.shape_cast %150 : vector<1x64x64xf32> to vector<64x64xf32>
      %c0_96 = arith.constant 0 : index
      %c0_97 = arith.constant 0 : index
      %152 = vector.load %arg13[%c0_96, %c0_97] : memref<192x64xf32, #tpu.memory_space<vmem>>, vector<64x64xf32>
      tpu.vector_store %arg13[%c0_96, %c0_97], %151 {strides = array<i32>} : memref<192x64xf32, #tpu.memory_space<vmem>>, vector<64x64xf32>,
      %c64_98 = arith.constant 64 : index
      %c0_99 = arith.constant 0 : index
      %153 = vector.load %arg13[%c64_98, %c0_99] : memref<192x64xf32, #tpu.memory_space<vmem>>, vector<128x64xf32>
      tpu.vector_store %arg13[%c64_98, %c0_99], %146 {strides = array<i32>} : memref<192x64xf32, #tpu.memory_space<vmem>>, vector<128x64xf32>,
      %154 = vector.extract_strided_slice %146 {offsets = [64, 0], sizes = [64, 64], strides = [1, 1]} : vector<128x64xf32> to vector<64x64xf32>
      %155 = arith.index_cast %148 : i32 to index
      %c0_100 = arith.constant 0 : index
      %c0_101 = arith.constant 0 : index
      %156 = vector.load %arg15[%155, %c0_100, %c0_101] : memref<24x64x64xf32, #tpu.memory_space<vmem>>, vector<1x64x64xf32>
      %157 = vector.shape_cast %156 : vector<1x64x64xf32> to vector<64x64xf32>
      %158 = vector.shape_cast %154 : vector<64x64xf32> to vector<1x64x64xf32>
      tpu.vector_store %arg15[%155, %c0_100, %c0_101], %158 {strides = array<i32>} : memref<24x64x64xf32, #tpu.memory_space<vmem>>, vector<1x64x64xf32>,
      %c56 = arith.constant 56 : index
      %c0_102 = arith.constant 0 : index
      %159 = vector.load %arg13[%c56, %c0_102] : memref<192x64xf32, #tpu.memory_space<vmem>>, vector<128x64xf32>
      %c60_103 = arith.constant 60 : index
      %c0_104 = arith.constant 0 : index
      %160 = vector.load %arg13[%c60_103, %c0_104] : memref<192x64xf32, #tpu.memory_space<vmem>>, vector<128x64xf32>
      %161 = tpu.concatenate %159, %160, %146 in 1 : vector<128x64xf32>, vector<128x64xf32>, vector<128x64xf32> -> vector<128x192xf32>
      %162 = arith.truncf %161 : vector<128x192xf32> to vector<128x192xbf16>
      %163 = arith.index_cast %148 : i32 to index
      %c0_105 = arith.constant 0 : index
      %c0_106 = arith.constant 0 : index
      %164 = vector.load %arg4[%163, %c0_105, %c0_106] : memref<24x192x64xbf16, #tpu.memory_space<vmem>>, vector<1x192x64xbf16>
      %165 = vector.shape_cast %164 : vector<1x192x64xbf16> to vector<192x64xbf16>
      %cst_107 = arith.constant dense<0.000000e+00> : vector<128x64xf32>
      %166 = tpu.matmul %162, %165, %cst_107 {dimension_numbers = #tpu.dot_dimension_numbers<[1], [0], [0], [1], [0, 0, 1, 1], [], []>} : vector<128x192xbf16>, vector<192x64xbf16>, vector<128x64xf32> -> vector<128x64xf32>
      %167 = arith.index_cast %148 : i32 to index
      %c0_108 = arith.constant 0 : index
      %c0_109 = arith.constant 0 : index
      %168 = vector.load %arg5[%167, %c0_108, %c0_109] : memref<24x1x64xf32, #tpu.memory_space<vmem>>, vector<1x1x64xf32>
      %169 = vector.shape_cast %168 : vector<1x1x64xf32> to vector<1x64xf32>
      %170 = vector.broadcast %169 : vector<1x64xf32> to vector<128x64xf32>
      %171 = arith.addf %166, %170 : vector<128x64xf32>
      %cst_110 = arith.constant 0.000000e+00 : f32
      %172 = vector.broadcast %cst_110 : f32 to vector<128x64xf32>
      %173 = arith.maximumf %171, %172 : vector<128x64xf32>
      %174 = arith.addf %173, %43 : vector<128x64xf32>
      %175 = arith.truncf %174 : vector<128x64xf32> to vector<128x64xbf16>
      %176 = arith.index_cast %148 : i32 to index
      %c0_111 = arith.constant 0 : index
      %c0_112 = arith.constant 0 : index
      %177 = vector.load %arg6[%176, %c0_111, %c0_112] : memref<24x64x64xbf16, #tpu.memory_space<vmem>>, vector<1x64x64xbf16>
      %178 = vector.shape_cast %177 : vector<1x64x64xbf16> to vector<64x64xbf16>
      %cst_113 = arith.constant dense<0.000000e+00> : vector<128x64xf32>
      %179 = tpu.matmul %175, %178, %cst_113 {dimension_numbers = #tpu.dot_dimension_numbers<[1], [0], [0], [1], [0, 0, 1, 1], [], []>} : vector<128x64xbf16>, vector<64x64xbf16>, vector<128x64xf32> -> vector<128x64xf32>
      %180 = arith.index_cast %148 : i32 to index
      %c0_114 = arith.constant 0 : index
      %c0_115 = arith.constant 0 : index
      %181 = vector.load %arg7[%180, %c0_114, %c0_115] : memref<24x1x64xf32, #tpu.memory_space<vmem>>, vector<1x1x64xf32>
      %182 = vector.shape_cast %181 : vector<1x1x64xf32> to vector<1x64xf32>
      %183 = vector.broadcast %182 : vector<1x64xf32> to vector<128x64xf32>
      %184 = arith.addf %179, %183 : vector<128x64xf32>
      %185 = arith.addf %184, %146 : vector<128x64xf32>
      %186 = vector.broadcast %cst : f32 to vector<128x64xf32>
      %187 = arith.mulf %185, %186 : vector<128x64xf32>
      %c6_i32_116 = arith.constant 6 : i32
      %188 = arith.muli %arg16, %c6_i32_116 : i32
      %c3_i32 = arith.constant 3 : i32
      %189 = arith.addi %188, %c3_i32 : i32
      %190 = arith.index_cast %189 : i32 to index
      %c0_117 = arith.constant 0 : index
      %c0_118 = arith.constant 0 : index
      %191 = vector.load %arg15[%190, %c0_117, %c0_118] : memref<24x64x64xf32, #tpu.memory_space<vmem>>, vector<1x64x64xf32>
      %192 = vector.shape_cast %191 : vector<1x64x64xf32> to vector<64x64xf32>
      %c0_119 = arith.constant 0 : index
      %c0_120 = arith.constant 0 : index
      %193 = vector.load %arg13[%c0_119, %c0_120] : memref<192x64xf32, #tpu.memory_space<vmem>>, vector<64x64xf32>
      tpu.vector_store %arg13[%c0_119, %c0_120], %192 {strides = array<i32>} : memref<192x64xf32, #tpu.memory_space<vmem>>, vector<64x64xf32>,
      %c64_121 = arith.constant 64 : index
      %c0_122 = arith.constant 0 : index
      %194 = vector.load %arg13[%c64_121, %c0_122] : memref<192x64xf32, #tpu.memory_space<vmem>>, vector<128x64xf32>
      tpu.vector_store %arg13[%c64_121, %c0_122], %187 {strides = array<i32>} : memref<192x64xf32, #tpu.memory_space<vmem>>, vector<128x64xf32>,
      %195 = vector.extract_strided_slice %187 {offsets = [64, 0], sizes = [64, 64], strides = [1, 1]} : vector<128x64xf32> to vector<64x64xf32>
      %196 = arith.index_cast %189 : i32 to index
      %c0_123 = arith.constant 0 : index
      %c0_124 = arith.constant 0 : index
      %197 = vector.load %arg15[%196, %c0_123, %c0_124] : memref<24x64x64xf32, #tpu.memory_space<vmem>>, vector<1x64x64xf32>
      %198 = vector.shape_cast %197 : vector<1x64x64xf32> to vector<64x64xf32>
      %199 = vector.shape_cast %195 : vector<64x64xf32> to vector<1x64x64xf32>
      tpu.vector_store %arg15[%196, %c0_123, %c0_124], %199 {strides = array<i32>} : memref<24x64x64xf32, #tpu.memory_space<vmem>>, vector<1x64x64xf32>,
      %c48_125 = arith.constant 48 : index
      %c0_126 = arith.constant 0 : index
      %200 = vector.load %arg13[%c48_125, %c0_126] : memref<192x64xf32, #tpu.memory_space<vmem>>, vector<128x64xf32>
      %c56_127 = arith.constant 56 : index
      %c0_128 = arith.constant 0 : index
      %201 = vector.load %arg13[%c56_127, %c0_128] : memref<192x64xf32, #tpu.memory_space<vmem>>, vector<128x64xf32>
      %202 = tpu.concatenate %200, %201, %187 in 1 : vector<128x64xf32>, vector<128x64xf32>, vector<128x64xf32> -> vector<128x192xf32>
      %203 = arith.truncf %202 : vector<128x192xf32> to vector<128x192xbf16>
      %204 = arith.index_cast %189 : i32 to index
      %c0_129 = arith.constant 0 : index
      %c0_130 = arith.constant 0 : index
      %205 = vector.load %arg4[%204, %c0_129, %c0_130] : memref<24x192x64xbf16, #tpu.memory_space<vmem>>, vector<1x192x64xbf16>
      %206 = vector.shape_cast %205 : vector<1x192x64xbf16> to vector<192x64xbf16>
      %cst_131 = arith.constant dense<0.000000e+00> : vector<128x64xf32>
      %207 = tpu.matmul %203, %206, %cst_131 {dimension_numbers = #tpu.dot_dimension_numbers<[1], [0], [0], [1], [0, 0, 1, 1], [], []>} : vector<128x192xbf16>, vector<192x64xbf16>, vector<128x64xf32> -> vector<128x64xf32>
      %208 = arith.index_cast %189 : i32 to index
      %c0_132 = arith.constant 0 : index
      %c0_133 = arith.constant 0 : index
      %209 = vector.load %arg5[%208, %c0_132, %c0_133] : memref<24x1x64xf32, #tpu.memory_space<vmem>>, vector<1x1x64xf32>
      %210 = vector.shape_cast %209 : vector<1x1x64xf32> to vector<1x64xf32>
      %211 = vector.broadcast %210 : vector<1x64xf32> to vector<128x64xf32>
      %212 = arith.addf %207, %211 : vector<128x64xf32>
      %cst_134 = arith.constant 0.000000e+00 : f32
      %213 = vector.broadcast %cst_134 : f32 to vector<128x64xf32>
      %214 = arith.maximumf %212, %213 : vector<128x64xf32>
      %215 = arith.addf %214, %43 : vector<128x64xf32>
      %216 = arith.truncf %215 : vector<128x64xf32> to vector<128x64xbf16>
      %217 = arith.index_cast %189 : i32 to index
      %c0_135 = arith.constant 0 : index
      %c0_136 = arith.constant 0 : index
      %218 = vector.load %arg6[%217, %c0_135, %c0_136] : memref<24x64x64xbf16, #tpu.memory_space<vmem>>, vector<1x64x64xbf16>
      %219 = vector.shape_cast %218 : vector<1x64x64xbf16> to vector<64x64xbf16>
      %cst_137 = arith.constant dense<0.000000e+00> : vector<128x64xf32>
      %220 = tpu.matmul %216, %219, %cst_137 {dimension_numbers = #tpu.dot_dimension_numbers<[1], [0], [0], [1], [0, 0, 1, 1], [], []>} : vector<128x64xbf16>, vector<64x64xbf16>, vector<128x64xf32> -> vector<128x64xf32>
      %221 = arith.index_cast %189 : i32 to index
      %c0_138 = arith.constant 0 : index
      %c0_139 = arith.constant 0 : index
      %222 = vector.load %arg7[%221, %c0_138, %c0_139] : memref<24x1x64xf32, #tpu.memory_space<vmem>>, vector<1x1x64xf32>
      %223 = vector.shape_cast %222 : vector<1x1x64xf32> to vector<1x64xf32>
      %224 = vector.broadcast %223 : vector<1x64xf32> to vector<128x64xf32>
      %225 = arith.addf %220, %224 : vector<128x64xf32>
      %226 = arith.addf %225, %187 : vector<128x64xf32>
      %227 = vector.broadcast %cst : f32 to vector<128x64xf32>
      %228 = arith.mulf %226, %227 : vector<128x64xf32>
      %c6_i32_140 = arith.constant 6 : i32
      %229 = arith.muli %arg16, %c6_i32_140 : i32
      %c4_i32_141 = arith.constant 4 : i32
      %230 = arith.addi %229, %c4_i32_141 : i32
      %231 = arith.index_cast %230 : i32 to index
      %c0_142 = arith.constant 0 : index
      %c0_143 = arith.constant 0 : index
      %232 = vector.load %arg15[%231, %c0_142, %c0_143] : memref<24x64x64xf32, #tpu.memory_space<vmem>>, vector<1x64x64xf32>
      %233 = vector.shape_cast %232 : vector<1x64x64xf32> to vector<64x64xf32>
      %c0_144 = arith.constant 0 : index
      %c0_145 = arith.constant 0 : index
      %234 = vector.load %arg13[%c0_144, %c0_145] : memref<192x64xf32, #tpu.memory_space<vmem>>, vector<64x64xf32>
      tpu.vector_store %arg13[%c0_144, %c0_145], %233 {strides = array<i32>} : memref<192x64xf32, #tpu.memory_space<vmem>>, vector<64x64xf32>,
      %c64_146 = arith.constant 64 : index
      %c0_147 = arith.constant 0 : index
      %235 = vector.load %arg13[%c64_146, %c0_147] : memref<192x64xf32, #tpu.memory_space<vmem>>, vector<128x64xf32>
      tpu.vector_store %arg13[%c64_146, %c0_147], %228 {strides = array<i32>} : memref<192x64xf32, #tpu.memory_space<vmem>>, vector<128x64xf32>,
      %236 = vector.extract_strided_slice %228 {offsets = [64, 0], sizes = [64, 64], strides = [1, 1]} : vector<128x64xf32> to vector<64x64xf32>
      %237 = arith.index_cast %230 : i32 to index
      %c0_148 = arith.constant 0 : index
      %c0_149 = arith.constant 0 : index
      %238 = vector.load %arg15[%237, %c0_148, %c0_149] : memref<24x64x64xf32, #tpu.memory_space<vmem>>, vector<1x64x64xf32>
      %239 = vector.shape_cast %238 : vector<1x64x64xf32> to vector<64x64xf32>
      %240 = vector.shape_cast %236 : vector<64x64xf32> to vector<1x64x64xf32>
      tpu.vector_store %arg15[%237, %c0_148, %c0_149], %240 {strides = array<i32>} : memref<24x64x64xf32, #tpu.memory_space<vmem>>, vector<1x64x64xf32>,
      %c32_150 = arith.constant 32 : index
      %c0_151 = arith.constant 0 : index
      %241 = vector.load %arg13[%c32_150, %c0_151] : memref<192x64xf32, #tpu.memory_space<vmem>>, vector<128x64xf32>
      %c48_152 = arith.constant 48 : index
      %c0_153 = arith.constant 0 : index
      %242 = vector.load %arg13[%c48_152, %c0_153] : memref<192x64xf32, #tpu.memory_space<vmem>>, vector<128x64xf32>
      %243 = tpu.concatenate %241, %242, %228 in 1 : vector<128x64xf32>, vector<128x64xf32>, vector<128x64xf32> -> vector<128x192xf32>
      %244 = arith.truncf %243 : vector<128x192xf32> to vector<128x192xbf16>
      %245 = arith.index_cast %230 : i32 to index
      %c0_154 = arith.constant 0 : index
      %c0_155 = arith.constant 0 : index
      %246 = vector.load %arg4[%245, %c0_154, %c0_155] : memref<24x192x64xbf16, #tpu.memory_space<vmem>>, vector<1x192x64xbf16>
      %247 = vector.shape_cast %246 : vector<1x192x64xbf16> to vector<192x64xbf16>
      %cst_156 = arith.constant dense<0.000000e+00> : vector<128x64xf32>
      %248 = tpu.matmul %244, %247, %cst_156 {dimension_numbers = #tpu.dot_dimension_numbers<[1], [0], [0], [1], [0, 0, 1, 1], [], []>} : vector<128x192xbf16>, vector<192x64xbf16>, vector<128x64xf32> -> vector<128x64xf32>
      %249 = arith.index_cast %230 : i32 to index
      %c0_157 = arith.constant 0 : index
      %c0_158 = arith.constant 0 : index
      %250 = vector.load %arg5[%249, %c0_157, %c0_158] : memref<24x1x64xf32, #tpu.memory_space<vmem>>, vector<1x1x64xf32>
      %251 = vector.shape_cast %250 : vector<1x1x64xf32> to vector<1x64xf32>
      %252 = vector.broadcast %251 : vector<1x64xf32> to vector<128x64xf32>
      %253 = arith.addf %248, %252 : vector<128x64xf32>
      %cst_159 = arith.constant 0.000000e+00 : f32
      %254 = vector.broadcast %cst_159 : f32 to vector<128x64xf32>
      %255 = arith.maximumf %253, %254 : vector<128x64xf32>
      %256 = arith.addf %255, %43 : vector<128x64xf32>
      %257 = arith.truncf %256 : vector<128x64xf32> to vector<128x64xbf16>
      %258 = arith.index_cast %230 : i32 to index
      %c0_160 = arith.constant 0 : index
      %c0_161 = arith.constant 0 : index
      %259 = vector.load %arg6[%258, %c0_160, %c0_161] : memref<24x64x64xbf16, #tpu.memory_space<vmem>>, vector<1x64x64xbf16>
      %260 = vector.shape_cast %259 : vector<1x64x64xbf16> to vector<64x64xbf16>
      %cst_162 = arith.constant dense<0.000000e+00> : vector<128x64xf32>
      %261 = tpu.matmul %257, %260, %cst_162 {dimension_numbers = #tpu.dot_dimension_numbers<[1], [0], [0], [1], [0, 0, 1, 1], [], []>} : vector<128x64xbf16>, vector<64x64xbf16>, vector<128x64xf32> -> vector<128x64xf32>
      %262 = arith.index_cast %230 : i32 to index
      %c0_163 = arith.constant 0 : index
      %c0_164 = arith.constant 0 : index
      %263 = vector.load %arg7[%262, %c0_163, %c0_164] : memref<24x1x64xf32, #tpu.memory_space<vmem>>, vector<1x1x64xf32>
      %264 = vector.shape_cast %263 : vector<1x1x64xf32> to vector<1x64xf32>
      %265 = vector.broadcast %264 : vector<1x64xf32> to vector<128x64xf32>
      %266 = arith.addf %261, %265 : vector<128x64xf32>
      %267 = arith.addf %266, %228 : vector<128x64xf32>
      %268 = vector.broadcast %cst : f32 to vector<128x64xf32>
      %269 = arith.mulf %267, %268 : vector<128x64xf32>
      %c6_i32_165 = arith.constant 6 : i32
      %270 = arith.muli %arg16, %c6_i32_165 : i32
      %c5_i32 = arith.constant 5 : i32
      %271 = arith.addi %270, %c5_i32 : i32
      %272 = arith.index_cast %271 : i32 to index
      %c0_166 = arith.constant 0 : index
      %c0_167 = arith.constant 0 : index
      %273 = vector.load %arg15[%272, %c0_166, %c0_167] : memref<24x64x64xf32, #tpu.memory_space<vmem>>, vector<1x64x64xf32>
      %274 = vector.shape_cast %273 : vector<1x64x64xf32> to vector<64x64xf32>
      %c0_168 = arith.constant 0 : index
      %c0_169 = arith.constant 0 : index
      %275 = vector.load %arg13[%c0_168, %c0_169] : memref<192x64xf32, #tpu.memory_space<vmem>>, vector<64x64xf32>
      tpu.vector_store %arg13[%c0_168, %c0_169], %274 {strides = array<i32>} : memref<192x64xf32, #tpu.memory_space<vmem>>, vector<64x64xf32>,
      %c64_170 = arith.constant 64 : index
      %c0_171 = arith.constant 0 : index
      %276 = vector.load %arg13[%c64_170, %c0_171] : memref<192x64xf32, #tpu.memory_space<vmem>>, vector<128x64xf32>
      tpu.vector_store %arg13[%c64_170, %c0_171], %269 {strides = array<i32>} : memref<192x64xf32, #tpu.memory_space<vmem>>, vector<128x64xf32>,
      %277 = vector.extract_strided_slice %269 {offsets = [64, 0], sizes = [64, 64], strides = [1, 1]} : vector<128x64xf32> to vector<64x64xf32>
      %278 = arith.index_cast %271 : i32 to index
      %c0_172 = arith.constant 0 : index
      %c0_173 = arith.constant 0 : index
      %279 = vector.load %arg15[%278, %c0_172, %c0_173] : memref<24x64x64xf32, #tpu.memory_space<vmem>>, vector<1x64x64xf32>
      %280 = vector.shape_cast %279 : vector<1x64x64xf32> to vector<64x64xf32>
      %281 = vector.shape_cast %277 : vector<64x64xf32> to vector<1x64x64xf32>
      tpu.vector_store %arg15[%278, %c0_172, %c0_173], %281 {strides = array<i32>} : memref<24x64x64xf32, #tpu.memory_space<vmem>>, vector<1x64x64xf32>,
      %c0_174 = arith.constant 0 : index
      %c0_175 = arith.constant 0 : index
      %282 = vector.load %arg13[%c0_174, %c0_175] : memref<192x64xf32, #tpu.memory_space<vmem>>, vector<128x64xf32>
      %c32_176 = arith.constant 32 : index
      %c0_177 = arith.constant 0 : index
      %283 = vector.load %arg13[%c32_176, %c0_177] : memref<192x64xf32, #tpu.memory_space<vmem>>, vector<128x64xf32>
      %284 = tpu.concatenate %282, %283, %269 in 1 : vector<128x64xf32>, vector<128x64xf32>, vector<128x64xf32> -> vector<128x192xf32>
      %285 = arith.truncf %284 : vector<128x192xf32> to vector<128x192xbf16>
      %286 = arith.index_cast %271 : i32 to index
      %c0_178 = arith.constant 0 : index
      %c0_179 = arith.constant 0 : index
      %287 = vector.load %arg4[%286, %c0_178, %c0_179] : memref<24x192x64xbf16, #tpu.memory_space<vmem>>, vector<1x192x64xbf16>
      %288 = vector.shape_cast %287 : vector<1x192x64xbf16> to vector<192x64xbf16>
      %cst_180 = arith.constant dense<0.000000e+00> : vector<128x64xf32>
      %289 = tpu.matmul %285, %288, %cst_180 {dimension_numbers = #tpu.dot_dimension_numbers<[1], [0], [0], [1], [0, 0, 1, 1], [], []>} : vector<128x192xbf16>, vector<192x64xbf16>, vector<128x64xf32> -> vector<128x64xf32>
      %290 = arith.index_cast %271 : i32 to index
      %c0_181 = arith.constant 0 : index
      %c0_182 = arith.constant 0 : index
      %291 = vector.load %arg5[%290, %c0_181, %c0_182] : memref<24x1x64xf32, #tpu.memory_space<vmem>>, vector<1x1x64xf32>
      %292 = vector.shape_cast %291 : vector<1x1x64xf32> to vector<1x64xf32>
      %293 = vector.broadcast %292 : vector<1x64xf32> to vector<128x64xf32>
      %294 = arith.addf %289, %293 : vector<128x64xf32>
      %cst_183 = arith.constant 0.000000e+00 : f32
      %295 = vector.broadcast %cst_183 : f32 to vector<128x64xf32>
      %296 = arith.maximumf %294, %295 : vector<128x64xf32>
      %297 = arith.addf %296, %43 : vector<128x64xf32>
      %298 = arith.truncf %297 : vector<128x64xf32> to vector<128x64xbf16>
      %299 = arith.index_cast %271 : i32 to index
      %c0_184 = arith.constant 0 : index
      %c0_185 = arith.constant 0 : index
      %300 = vector.load %arg6[%299, %c0_184, %c0_185] : memref<24x64x64xbf16, #tpu.memory_space<vmem>>, vector<1x64x64xbf16>
      %301 = vector.shape_cast %300 : vector<1x64x64xbf16> to vector<64x64xbf16>
      %cst_186 = arith.constant dense<0.000000e+00> : vector<128x64xf32>
      %302 = tpu.matmul %298, %301, %cst_186 {dimension_numbers = #tpu.dot_dimension_numbers<[1], [0], [0], [1], [0, 0, 1, 1], [], []>} : vector<128x64xbf16>, vector<64x64xbf16>, vector<128x64xf32> -> vector<128x64xf32>
      %303 = arith.index_cast %271 : i32 to index
      %c0_187 = arith.constant 0 : index
      %c0_188 = arith.constant 0 : index
      %304 = vector.load %arg7[%303, %c0_187, %c0_188] : memref<24x1x64xf32, #tpu.memory_space<vmem>>, vector<1x1x64xf32>
      %305 = vector.shape_cast %304 : vector<1x1x64xf32> to vector<1x64xf32>
      %306 = vector.broadcast %305 : vector<1x64xf32> to vector<128x64xf32>
      %307 = arith.addf %302, %306 : vector<128x64xf32>
      %308 = arith.addf %307, %269 : vector<128x64xf32>
      %309 = vector.broadcast %cst : f32 to vector<128x64xf32>
      %310 = arith.mulf %308, %309 : vector<128x64xf32>
      scf.yield %310 : vector<128x64xf32>
    }
    %c4_i32_32 = arith.constant 4 : i32
    %48 = arith.truncf %47 : vector<128x64xf32> to vector<128x64xbf16>
    %c0_33 = arith.constant 0 : index
    %c0_34 = arith.constant 0 : index
    %49 = vector.load %arg8[%c0_33, %c0_34] : memref<64x512xbf16, #tpu.memory_space<vmem>>, vector<64x512xbf16>
    %cst_35 = arith.constant dense<0.000000e+00> : vector<128x512xf32>
    %50 = tpu.matmul %48, %49, %cst_35 {dimension_numbers = #tpu.dot_dimension_numbers<[1], [0], [0], [1], [0, 0, 1, 1], [], []>} : vector<128x64xbf16>, vector<64x512xbf16>, vector<128x512xf32> -> vector<128x512xf32>
    %c0_36 = arith.constant 0 : index
    %c0_37 = arith.constant 0 : index
    %51 = vector.load %arg9[%c0_36, %c0_37] : memref<1x512xf32, #tpu.memory_space<vmem>>, vector<1x512xf32>
    %52 = vector.broadcast %51 : vector<1x512xf32> to vector<128x512xf32>
    %53 = arith.addf %50, %52 : vector<128x512xf32>
    %cst_38 = arith.constant 0.000000e+00 : f32
    %54 = vector.broadcast %cst_38 : f32 to vector<128x512xf32>
    %55 = arith.maximumf %53, %54 : vector<128x512xf32>
    %56 = arith.truncf %55 : vector<128x512xf32> to vector<128x512xbf16>
    %c0_39 = arith.constant 0 : index
    %c0_40 = arith.constant 0 : index
    %57 = vector.load %arg10[%c0_39, %c0_40] : memref<512x384xbf16, #tpu.memory_space<vmem>>, vector<512x384xbf16>
    %cst_41 = arith.constant dense<0.000000e+00> : vector<128x384xf32>
    %58 = tpu.matmul %56, %57, %cst_41 {dimension_numbers = #tpu.dot_dimension_numbers<[1], [0], [0], [1], [0, 0, 1, 1], [], []>} : vector<128x512xbf16>, vector<512x384xbf16>, vector<128x384xf32> -> vector<128x384xf32>
    %c0_42 = arith.constant 0 : index
    %c0_43 = arith.constant 0 : index
    %59 = vector.load %arg11[%c0_42, %c0_43] : memref<1x384xf32, #tpu.memory_space<vmem>>, vector<1x384xf32>
    %60 = vector.broadcast %59 : vector<1x384xf32> to vector<128x384xf32>
    %61 = arith.addf %58, %60 : vector<128x384xf32>
    %c0_44 = arith.constant 0 : index
    %c0_45 = arith.constant 0 : index
    %c0_46 = arith.constant 0 : index
    %62 = vector.load %arg12[%c0_44, %c0_45, %c0_46] : memref<1x128x384xf32, #tpu.memory_space<vmem>>, vector<1x128x384xf32>
    %63 = vector.shape_cast %62 : vector<1x128x384xf32> to vector<128x384xf32>
    %64 = vector.shape_cast %61 : vector<128x384xf32> to vector<1x128x384xf32>
    tpu.vector_store %arg12[%c0_44, %c0_45, %c0_46], %64 {strides = array<i32>} : memref<1x128x384xf32, #tpu.memory_space<vmem>>, vector<1x128x384xf32>,
    return
  }
  func.func @transform_0(%arg0: i32, %arg1: i32) -> (i32, i32, i32) {
    %c0_i32 = arith.constant 0 : i32
    %c0_i32_0 = arith.constant 0 : i32
    return %arg0, %arg1, %c0_i32 : i32, i32, i32
  }
  func.func @transform_1(%arg0: i32, %arg1: i32) -> (i32, i32, i32) {
    %c0_i32 = arith.constant 0 : i32
    %c0_i32_0 = arith.constant 0 : i32
    return %arg0, %arg1, %c0_i32 : i32, i32, i32
  }
  func.func @transform_2(%arg0: i32, %arg1: i32) -> (i32, i32, i32) {
    %c0_i32 = arith.constant 0 : i32
    %c0_i32_0 = arith.constant 0 : i32
    %c0_i32_1 = arith.constant 0 : i32
    %c0_i32_2 = arith.constant 0 : i32
    return %c0_i32, %c0_i32_0, %c0_i32_1 : i32, i32, i32
  }
  func.func @transform_3(%arg0: i32, %arg1: i32) -> (i32, i32, i32) {
    %c0_i32 = arith.constant 0 : i32
    %c0_i32_0 = arith.constant 0 : i32
    %c0_i32_1 = arith.constant 0 : i32
    %c0_i32_2 = arith.constant 0 : i32
    return %c0_i32, %c0_i32_0, %c0_i32_1 : i32, i32, i32
  }
  func.func @transform_4(%arg0: i32, %arg1: i32) -> (i32, i32, i32) {
    %c0_i32 = arith.constant 0 : i32
    %c0_i32_0 = arith.constant 0 : i32
    %c0_i32_1 = arith.constant 0 : i32
    %c0_i32_2 = arith.constant 0 : i32
    return %c0_i32, %c0_i32_0, %c0_i32_1 : i32, i32, i32
  }
  func.func @transform_5(%arg0: i32, %arg1: i32) -> (i32, i32, i32) {
    %c0_i32 = arith.constant 0 : i32
    %c0_i32_0 = arith.constant 0 : i32
    %c0_i32_1 = arith.constant 0 : i32
    %c0_i32_2 = arith.constant 0 : i32
    return %c0_i32, %c0_i32_0, %c0_i32_1 : i32, i32, i32
  }
  func.func @transform_6(%arg0: i32, %arg1: i32) -> (i32, i32) {
    %c0_i32 = arith.constant 0 : i32
    %c0_i32_0 = arith.constant 0 : i32
    %c0_i32_1 = arith.constant 0 : i32
    return %c0_i32, %c0_i32_0 : i32, i32
  }
  func.func @transform_7(%arg0: i32, %arg1: i32) -> (i32, i32) {
    %c0_i32 = arith.constant 0 : i32
    %c0_i32_0 = arith.constant 0 : i32
    %c0_i32_1 = arith.constant 0 : i32
    return %c0_i32, %c0_i32_0 : i32, i32
  }
  func.func @transform_8(%arg0: i32, %arg1: i32) -> (i32, i32) {
    %c0_i32 = arith.constant 0 : i32
    %c0_i32_0 = arith.constant 0 : i32
    %c0_i32_1 = arith.constant 0 : i32
    return %c0_i32, %c0_i32_0 : i32, i32
  }
  func.func @transform_9(%arg0: i32, %arg1: i32) -> (i32, i32) {
    %c0_i32 = arith.constant 0 : i32
    %c0_i32_0 = arith.constant 0 : i32
    %c0_i32_1 = arith.constant 0 : i32
    return %c0_i32, %c0_i32_0 : i32, i32
  }
  func.func @transform_10(%arg0: i32, %arg1: i32) -> (i32, i32, i32) {
    %c0_i32 = arith.constant 0 : i32
    %c0_i32_0 = arith.constant 0 : i32
    return %arg0, %arg1, %c0_i32 : i32, i32, i32
  }
}

</mosaic_0001>

<llo_original>
// kernel: tpu_custom_call.1
$region0: #{tpu_custom_call.1}
  #allocation0 [shape = 'u32[]', space=smem, size = 0x4, offset = 0x4, fixed_abs, tag = 'smem constant byte address 0x4 - core index']
  #allocation1 [shape = 'u32[144,128]{1,0:T(1,128)}', space=vmem, size = 0x12000, scoped, tag = 'internal scratch']
  #allocation2 [shape = 'f32[192,64]{1,0:T(8,128)}', space=vmem, size = 0x18000, scoped, tag = 'scratch operand']
  #allocation3 [shape = 'f32[128,64]{1,0:T(8,128)}', space=vmem, size = 0x10000, scoped, tag = 'scratch operand']
  #allocation4 [shape = 'f32[24,64,64]{2,1,0:T(8,128)}', space=vmem, size = 0xc0000, scoped, tag = 'scratch operand']
  %s0 = inlined_call_operand.vmem [shape: f32[2,256,64], index: 0, kind: input, shape index: {}]
  %s1 = inlined_call_operand.vmem [shape: f32[2,16,64], index: 1, kind: input, shape index: {}]
  %s2 = inlined_call_operand.vmem [shape: bf16[24,192,64], index: 2, kind: input, shape index: {}]
  %s3 = inlined_call_operand.vmem [shape: f32[24,1,64], index: 3, kind: input, shape index: {}]
  %s4 = inlined_call_operand.vmem [shape: bf16[24,64,64], index: 4, kind: input, shape index: {}]
  %s5 = inlined_call_operand.vmem [shape: f32[24,1,64], index: 5, kind: input, shape index: {}]
  %s6 = inlined_call_operand.vmem [shape: bf16[64,512], index: 6, kind: input, shape index: {}]
  %s7 = inlined_call_operand.vmem [shape: f32[1,512], index: 7, kind: input, shape index: {}]
  %s8 = inlined_call_operand.vmem [shape: bf16[512,384], index: 8, kind: input, shape index: {}]
  %s9 = inlined_call_operand.vmem [shape: f32[1,384], index: 9, kind: input, shape index: {}]
  %s10 = inlined_call_operand.hbm [shape: f32[2,256,384], index: 10, kind: output, shape index: {}]
  %s11 = sld [smem:[#allocation0]]
  $region84: #{tpu_custom_call.1} parent=0
    _
  %s13 = ssub.s32 1, %s11
  %s14 = scalar_select 0, %s13, %s11
  $region1: #{tpu_custom_call.1} parent=0
    #allocation5 [shape = 'u8[393216]{0}', space=vmem, size = 0x60000, scoped, tag = 'output window, operand 0']
    #allocation6 [shape = 's32[2]{0}', space=sflag, size = 0x8, scoped, tag = 'scoped memory for tpu_custom_call.1']
    %15 = vsyncpa [#allocation6], 0
    %s16 = scalar_lea.sflag [#allocation6], 1
    %17 = vsyncpa %s16, 0
    loop: start=0, step=1, limit=6
    $region2: #{tpu_custom_call.1} parent=1 // loop_pre_header
      _
    $region3: #{tpu_custom_call.1} parent=1 // loop_header
      %s19 = sphi 0, %s23
      %p20 = scmp.ge.s32.totalorder %s19, 6
      %s26 = sphi 0, %s38
      %s27 = sphi 0, %s34
      %s28 = sphi 0, %s26
      %s29 = sphi 0, %s27
      %s30 = sphi 0, %s28
      %s31 = sphi 0, %s29
      %s43 = sphi 0, %s45
      %s46 = sphi 0, %s43
      %s47 = sphi 0, %s46
      %s63 = sphi 0, %s47
      %s71 = sphi 0, %s73
      %s74 = sphi 0, %s71
      %s75 = sphi 0, %s74
      %s91 = sphi 0, %s75
      %s95 = sphi 0, %s95
      %s97 = sphi 0, %s95
      %s98 = sphi 0, %s97
      %s112 = sphi 0, %s98
      %s116 = sphi 0, %s116
      %s118 = sphi 0, %s116
      %s119 = sphi 0, %s118
      %s133 = sphi 0, %s119
      %s137 = sphi 0, %s137
      %s139 = sphi 0, %s137
      %s140 = sphi 0, %s139
      %s154 = sphi 0, %s140
      %s158 = sphi 0, %s158
      %s160 = sphi 0, %s158
      %s161 = sphi 0, %s160
      %s175 = sphi 0, %s161
      %s179 = sphi 0, %s179
      %s181 = sphi 0, %s179
      %s182 = sphi 0, %s181
      %s196 = sphi 0, %s182
      %s200 = sphi 0, %s200
      %s202 = sphi 0, %s200
      %s203 = sphi 0, %s202
      %s217 = sphi 0, %s203
      %s221 = sphi 0, %s221
      %s223 = sphi 0, %s221
      %s224 = sphi 0, %s223
      %s238 = sphi 0, %s224
      %s242 = sphi 0, %s242
      %s244 = sphi 0, %s242
      %s245 = sphi 0, %s244
      %s259 = sphi 0, %s245
      %s267 = sphi 0, %s269
      %s270 = sphi 0, %s267
      %s271 = sphi 0, %s270
      %s287 = sphi 0, %s271
    $region4: #{tpu_custom_call.1} parent=1 // loop_header_branch
      %22 = sbr.rel (%p20) target = $region8
    $region5: #{tpu_custom_call.1} parent=1 // loop_body
      %s24 = ssub.s32 %s19, 1
      %s25 = ssub.s32 %s19, 2
      %s32 = sadd.s32 1, %s27
      %p33 = scmp.ge.s32.totalorder %s32, 2
      %s34 = scalar_select %p33, 0, %s32
      %s35 = sadd.s32 1, %s26
      %s36 = scalar_select %p33, %s35, %s26
      %p37 = scmp.ge.s32.totalorder %s36, 2
      %s38 = scalar_select %p37, 0, %s36
      %s39 = ssub.s32 %s26, %s38
      %s40 = ssub.s32 %s27, %s34
      %s41 = sor.u32 %s39, %s40
      %p42 = scmp.eq.s32.totalorder %s41, 0
      %s44 = sadd.s32 %s43, 1
      %s45 = scalar_select %p42, %s43, %s44
      %p48 = pneg %p42
      %p49 = scmp.eq.s32.totalorder %s19, 3
      %p50 = por %p48, %p49
      %p51 = scmp.ne.s32.totalorder %s43, %s46
      %p52 = scmp.eq.s32.totalorder %s19, 0
      %p53 = por %p51, %p52
      %p54 = scmp.ne.s32.totalorder %s43, %s46
      %p55 = scmp.eq.s32.totalorder %s24, 3
      %p56 = por %p54, %p55
      %p57 = scmp.ne.s32.totalorder %s46, %s47
      %p58 = scmp.eq.s32.totalorder %s24, 0
      %p59 = por %p57, %p58
      %p60 = scmp.ne.s32.totalorder %s46, %s47
      %p61 = scmp.eq.s32.totalorder %s25, 3
      %p62 = por %p60, %p61
      %p64 = scmp.ne.s32.totalorder %s47, %s63
      %p65 = scmp.eq.s32.totalorder %s25, 0
      %p66 = por %p64, %p65
      %s67 = ssub.s32 %s26, %s38
      %s68 = ssub.s32 %s27, %s34
      %s69 = sor.u32 %s67, %s68
      %p70 = scmp.eq.s32.totalorder %s69, 0
      %s72 = sadd.s32 %s71, 1
      %s73 = scalar_select %p70, %s71, %s72
      %p76 = pneg %p70
      %p77 = scmp.eq.s32.totalorder %s19, 3
      %p78 = por %p76, %p77
      %p79 = scmp.ne.s32.totalorder %s71, %s74
      %p80 = scmp.eq.s32.totalorder %s19, 0
      %p81 = por %p79, %p80
      %p82 = scmp.ne.s32.totalorder %s71, %s74
      %p83 = scmp.eq.s32.totalorder %s24, 3
      %p84 = por %p82, %p83
      %p85 = scmp.ne.s32.totalorder %s74, %s75
      %p86 = scmp.eq.s32.totalorder %s24, 0
      %p87 = por %p85, %p86
      %p88 = scmp.ne.s32.totalorder %s74, %s75
      %p89 = scmp.eq.s32.totalorder %s25, 3
      %p90 = por %p88, %p89
      %p92 = scmp.ne.s32.totalorder %s75, %s91
      %p93 = scmp.eq.s32.totalorder %s25, 0
      %p94 = por %p92, %p93
      %s96 = sadd.s32 %s95, 1
      %p99 = scmp.eq.s32.totalorder %s19, 3
      %p100 = scmp.ne.s32.totalorder %s95, %s97
      %p101 = scmp.eq.s32.totalorder %s19, 0
      %p102 = por %p100, %p101
      %p103 = scmp.ne.s32.totalorder %s95, %s97
      %p104 = scmp.eq.s32.totalorder %s24, 3
      %p105 = por %p103, %p104
      %p106 = scmp.ne.s32.totalorder %s97, %s98
      %p107 = scmp.eq.s32.totalorder %s24, 0
      %p108 = por %p106, %p107
      %p109 = scmp.ne.s32.totalorder %s97, %s98
      %p110 = scmp.eq.s32.totalorder %s25, 3
      %p111 = por %p109, %p110
      %p113 = scmp.ne.s32.totalorder %s98, %s112
      %p114 = scmp.eq.s32.totalorder %s25, 0
      %p115 = por %p113, %p114
      %s117 = sadd.s32 %s116, 1
      %p120 = scmp.eq.s32.totalorder %s19, 3
      %p121 = scmp.ne.s32.totalorder %s116, %s118
      %p122 = scmp.eq.s32.totalorder %s19, 0
      %p123 = por %p121, %p122
      %p124 = scmp.ne.s32.totalorder %s116, %s118
      %p125 = scmp.eq.s32.totalorder %s24, 3
      %p126 = por %p124, %p125
      %p127 = scmp.ne.s32.totalorder %s118, %s119
      %p128 = scmp.eq.s32.totalorder %s24, 0
      %p129 = por %p127, %p128
      %p130 = scmp.ne.s32.totalorder %s118, %s119
      %p131 = scmp.eq.s32.totalorder %s25, 3
      %p132 = por %p130, %p131
      %p134 = scmp.ne.s32.totalorder %s119, %s133
      %p135 = scmp.eq.s32.totalorder %s25, 0
      %p136 = por %p134, %p135
      %s138 = sadd.s32 %s137, 1
      %p141 = scmp.eq.s32.totalorder %s19, 3
      %p142 = scmp.ne.s32.totalorder %s137, %s139
      %p143 = scmp.eq.s32.totalorder %s19, 0
      %p144 = por %p142, %p143
      %p145 = scmp.ne.s32.totalorder %s137, %s139
      %p146 = scmp.eq.s32.totalorder %s24, 3
      %p147 = por %p145, %p146
      %p148 = scmp.ne.s32.totalorder %s139, %s140
      %p149 = scmp.eq.s32.totalorder %s24, 0
      %p150 = por %p148, %p149
      %p151 = scmp.ne.s32.totalorder %s139, %s140
      %p152 = scmp.eq.s32.totalorder %s25, 3
      %p153 = por %p151, %p152
      %p155 = scmp.ne.s32.totalorder %s140, %s154
      %p156 = scmp.eq.s32.totalorder %s25, 0
      %p157 = por %p155, %p156
      %s159 = sadd.s32 %s158, 1
      %p162 = scmp.eq.s32.totalorder %s19, 3
      %p163 = scmp.ne.s32.totalorder %s158, %s160
      %p164 = scmp.eq.s32.totalorder %s19, 0
      %p165 = por %p163, %p164
      %p166 = scmp.ne.s32.totalorder %s158, %s160
      %p167 = scmp.eq.s32.totalorder %s24, 3
      %p168 = por %p166, %p167
      %p169 = scmp.ne.s32.totalorder %s160, %s161
      %p170 = scmp.eq.s32.totalorder %s24, 0
      %p171 = por %p169, %p170
      %p172 = scmp.ne.s32.totalorder %s160, %s161
      %p173 = scmp.eq.s32.totalorder %s25, 3
      %p174 = por %p172, %p173
      %p176 = scmp.ne.s32.totalorder %s161, %s175
      %p177 = scmp.eq.s32.totalorder %s25, 0
      %p178 = por %p176, %p177
      %s180 = sadd.s32 %s179, 1
      %p183 = scmp.eq.s32.totalorder %s19, 3
      %p184 = scmp.ne.s32.totalorder %s179, %s181
      %p185 = scmp.eq.s32.totalorder %s19, 0
      %p186 = por %p184, %p185
      %p187 = scmp.ne.s32.totalorder %s179, %s181
      %p188 = scmp.eq.s32.totalorder %s24, 3
      %p189 = por %p187, %p188
      %p190 = scmp.ne.s32.totalorder %s181, %s182
      %p191 = scmp.eq.s32.totalorder %s24, 0
      %p192 = por %p190, %p191
      %p193 = scmp.ne.s32.totalorder %s181, %s182
      %p194 = scmp.eq.s32.totalorder %s25, 3
      %p195 = por %p193, %p194
      %p197 = scmp.ne.s32.totalorder %s182, %s196
      %p198 = scmp.eq.s32.totalorder %s25, 0
      %p199 = por %p197, %p198
      %s201 = sadd.s32 %s200, 1
      %p204 = scmp.eq.s32.totalorder %s19, 3
      %p205 = scmp.ne.s32.totalorder %s200, %s202
      %p206 = scmp.eq.s32.totalorder %s19, 0
      %p207 = por %p205, %p206
      %p208 = scmp.ne.s32.totalorder %s200, %s202
      %p209 = scmp.eq.s32.totalorder %s24, 3
      %p210 = por %p208, %p209
      %p211 = scmp.ne.s32.totalorder %s202, %s203
      %p212 = scmp.eq.s32.totalorder %s24, 0
      %p213 = por %p211, %p212
      %p214 = scmp.ne.s32.totalorder %s202, %s203
      %p215 = scmp.eq.s32.totalorder %s25, 3
      %p216 = por %p214, %p215
      %p218 = scmp.ne.s32.totalorder %s203, %s217
      %p219 = scmp.eq.s32.totalorder %s25, 0
      %p220 = por %p218, %p219
      %s222 = sadd.s32 %s221, 1
      %p225 = scmp.eq.s32.totalorder %s19, 3
      %p226 = scmp.ne.s32.totalorder %s221, %s223
      %p227 = scmp.eq.s32.totalorder %s19, 0
      %p228 = por %p226, %p227
      %p229 = scmp.ne.s32.totalorder %s221, %s223
      %p230 = scmp.eq.s32.totalorder %s24, 3
      %p231 = por %p229, %p230
      %p232 = scmp.ne.s32.totalorder %s223, %s224
      %p233 = scmp.eq.s32.totalorder %s24, 0
      %p234 = por %p232, %p233
      %p235 = scmp.ne.s32.totalorder %s223, %s224
      %p236 = scmp.eq.s32.totalorder %s25, 3
      %p237 = por %p235, %p236
      %p239 = scmp.ne.s32.totalorder %s224, %s238
      %p240 = scmp.eq.s32.totalorder %s25, 0
      %p241 = por %p239, %p240
      %s243 = sadd.s32 %s242, 1
      %p246 = scmp.eq.s32.totalorder %s19, 3
      %p247 = scmp.ne.s32.totalorder %s242, %s244
      %p248 = scmp.eq.s32.totalorder %s19, 0
      %p249 = por %p247, %p248
      %p250 = scmp.ne.s32.totalorder %s242, %s244
      %p251 = scmp.eq.s32.totalorder %s24, 3
      %p252 = por %p250, %p251
      %p253 = scmp.ne.s32.totalorder %s244, %s245
      %p254 = scmp.eq.s32.totalorder %s24, 0
      %p255 = por %p253, %p254
      %p256 = scmp.ne.s32.totalorder %s244, %s245
      %p257 = scmp.eq.s32.totalorder %s25, 3
      %p258 = por %p256, %p257
      %p260 = scmp.ne.s32.totalorder %s245, %s259
      %p261 = scmp.eq.s32.totalorder %s25, 0
      %p262 = por %p260, %p261
      %s263 = ssub.s32 %s26, %s38
      %s264 = ssub.s32 %s27, %s34
      %s265 = sor.u32 %s263, %s264
      %p266 = scmp.eq.s32.totalorder %s265, 0
      %s268 = sadd.s32 %s267, 1
      %s269 = scalar_select %p266, %s267, %s268
      %p272 = pneg %p266
      %p273 = scmp.eq.s32.totalorder %s19, 3
      %p274 = por %p272, %p273
      %p275 = scmp.ne.s32.totalorder %s267, %s270
      %p276 = scmp.eq.s32.totalorder %s19, 0
      %p277 = por %p275, %p276
      %p278 = scmp.ne.s32.totalorder %s267, %s270
      %p279 = scmp.eq.s32.totalorder %s24, 3
      %p280 = por %p278, %p279
      %p281 = scmp.ne.s32.totalorder %s270, %s271
      %p282 = scmp.eq.s32.totalorder %s24, 0
      %p283 = por %p281, %p282
      %p284 = scmp.ne.s32.totalorder %s270, %s271
      %p285 = scmp.eq.s32.totalorder %s25, 3
      %p286 = por %p284, %p285
      %p288 = scmp.ne.s32.totalorder %s271, %s287
      %p289 = scmp.eq.s32.totalorder %s25, 0
      %p290 = por %p288, %p289
      %p291 = scmp.le.s32.totalorder 1, %s19
      %p292 = scmp.lt.s32.totalorder %s19, 5
      %p293 = pnand %p291, %p292
      %p294 = pneg %p293
      // Predicated region
      $region9: #{tpu_custom_call.1} parent=5 // pred_check
        _
      $region10: #{tpu_custom_call.1} parent=5 // pred_check_branch
        %296 = sbr.rel (%p293) target = $region12
      $region11: #{tpu_custom_call.1} parent=5 // pred_region
        %s297 = ssub.s32 %s19, 1
        // Predicated region
        $region13: #{tpu_custom_call.1} parent=11 // pred_check
          %p298 = pneg %p108
        $region14: #{tpu_custom_call.1} parent=11 // pred_check_branch
          %300 = sbr.rel (%p298) target = $region16
        $region15: #{tpu_custom_call.1} parent=11 // pred_region
          _
        $region16: #{tpu_custom_call.1} parent=11 // pred_fallthru
          _
        // Predicated region
        $region17: #{tpu_custom_call.1} parent=11 // pred_check
          %p301 = pneg %p129
        $region18: #{tpu_custom_call.1} parent=11 // pred_check_branch
          %303 = sbr.rel (%p301) target = $region20
        $region19: #{tpu_custom_call.1} parent=11 // pred_region
          _
        $region20: #{tpu_custom_call.1} parent=11 // pred_fallthru
          _
        // Predicated region
        $region21: #{tpu_custom_call.1} parent=11 // pred_check
          %p304 = pneg %p150
        $region22: #{tpu_custom_call.1} parent=11 // pred_check_branch
          %306 = sbr.rel (%p304) target = $region24
        $region23: #{tpu_custom_call.1} parent=11 // pred_region
          _
        $region24: #{tpu_custom_call.1} parent=11 // pred_fallthru
          _
        // Predicated region
        $region25: #{tpu_custom_call.1} parent=11 // pred_check
          %p307 = pneg %p171
        $region26: #{tpu_custom_call.1} parent=11 // pred_check_branch
          %309 = sbr.rel (%p307) target = $region28
        $region27: #{tpu_custom_call.1} parent=11 // pred_region
          _
        $region28: #{tpu_custom_call.1} parent=11 // pred_fallthru
          _
        // Predicated region
        $region29: #{tpu_custom_call.1} parent=11 // pred_check
          %p310 = pneg %p192
        $region30: #{tpu_custom_call.1} parent=11 // pred_check_branch
          %312 = sbr.rel (%p310) target = $region32
        $region31: #{tpu_custom_call.1} parent=11 // pred_region
          _
        $region32: #{tpu_custom_call.1} parent=11 // pred_fallthru
          _
        // Predicated region
        $region33: #{tpu_custom_call.1} parent=11 // pred_check
          %p313 = pneg %p213
        $region34: #{tpu_custom_call.1} parent=11 // pred_check_branch
          %315 = sbr.rel (%p313) target = $region36
        $region35: #{tpu_custom_call.1} parent=11 // pred_region
          _
        $region36: #{tpu_custom_call.1} parent=11 // pred_fallthru
          _
        // Predicated region
        $region37: #{tpu_custom_call.1} parent=11 // pred_check
          %p316 = pneg %p234
        $region38: #{tpu_custom_call.1} parent=11 // pred_check_branch
          %318 = sbr.rel (%p316) target = $region40
        $region39: #{tpu_custom_call.1} parent=11 // pred_region
          _
        $region40: #{tpu_custom_call.1} parent=11 // pred_fallthru
          _
        // Predicated region
        $region41: #{tpu_custom_call.1} parent=11 // pred_check
          %p319 = pneg %p255
        $region42: #{tpu_custom_call.1} parent=11 // pred_check_branch
          %321 = sbr.rel (%p319) target = $region44
        $region43: #{tpu_custom_call.1} parent=11 // pred_region
          _
        $region44: #{tpu_custom_call.1} parent=11 // pred_fallthru
          _
      $region12: #{tpu_custom_call.1} parent=5 // pred_fallthru
        _
      %p322 = scmp.lt.s32.totalorder %s19, 4
      // Predicated region
      $region45: #{tpu_custom_call.1} parent=5 // pred_check
        %p323 = pneg %p322
      $region46: #{tpu_custom_call.1} parent=5 // pred_check_branch
        %325 = sbr.rel (%p323) target = $region48
      $region47: #{tpu_custom_call.1} parent=5 // pred_region
        // Predicated region
        $region49: #{tpu_custom_call.1} parent=47 // pred_check
          %p326 = pneg %p53
        $region50: #{tpu_custom_call.1} parent=47 // pred_check_branch
          %328 = sbr.rel (%p326) target = $region52
        $region51: #{tpu_custom_call.1} parent=47 // pred_region
          %s329 = smul.u32 16, %s27
          %p330 = scmp.lt.s32.totalorder %s26, 1
          %s331 = scalar_select %p330, %s26, 1
          %p332 = scmp.lt.s32.totalorder %s329, 31
          %s333 = scalar_select %p332, %s329, 31
          %s334 = smul.addr %s331, 32
          %s335 = sadd.s32 %s333, %s334
          %s336 = smul.addr %s335, 8
          %s337 = scalar_lea.vmem %s0, %s336
          %s338 = smul.u32 16, %s27
        $region52: #{tpu_custom_call.1} parent=47 // pred_fallthru
          _
        // Predicated region
        $region53: #{tpu_custom_call.1} parent=47 // pred_check
          %p339 = pneg %p81
        $region54: #{tpu_custom_call.1} parent=47 // pred_check_branch
          %341 = sbr.rel (%p339) target = $region56
        $region55: #{tpu_custom_call.1} parent=47 // pred_region
          %p342 = scmp.lt.s32.totalorder %s26, 1
          %s343 = scalar_select %p342, %s26, 1
          %p344 = scmp.lt.s32.totalorder %s27, 1
          %s345 = scalar_select %p344, %s27, 1
          %s346 = smul.addr %s343, 2
          %s347 = sadd.s32 %s345, %s346
          %s348 = smul.addr %s347, 8
          %s349 = scalar_lea.vmem %s1, %s348
        $region56: #{tpu_custom_call.1} parent=47 // pred_fallthru
          _
      $region48: #{tpu_custom_call.1} parent=5 // pred_fallthru
        _
      %p350 = scmp.le.s32.totalorder 1, %s19
      %p351 = scmp.lt.s32.totalorder %s19, 5
      %p352 = pnand %p350, %p351
      %p353 = pneg %p352
      // Predicated region
      $region57: #{tpu_custom_call.1} parent=5 // pred_check
        _
      $region58: #{tpu_custom_call.1} parent=5 // pred_check_branch
        %355 = sbr.rel (%p352) target = $region60
      $region59: #{tpu_custom_call.1} parent=5 // pred_region
        %s356 = ssub.s32 %s19, 1
        %s357 = smul.u32 16, %s29
        %p358 = scmp.lt.s32.totalorder %s28, 1
        %s359 = scalar_select %p358, %s28, 1
        %p360 = scmp.lt.s32.totalorder %s357, 31
        %s361 = scalar_select %p360, %s357, 31
        %s362 = smul.addr %s359, 32
        %s363 = sadd.s32 %s361, %s362
        %s364 = smul.addr %s363, 8
        %s365 = scalar_lea.vmem %s0, %s364
        %p366 = pneg %p59
        %p367 = pneg %p56
        %p368 = scmp.lt.s32.totalorder %s28, 1
        %s369 = scalar_select %p368, %s28, 1
        %p370 = scmp.lt.s32.totalorder %s29, 1
        %s371 = scalar_select %p370, %s29, 1
        %s372 = smul.addr %s369, 2
        %s373 = sadd.s32 %s371, %s372
        %s374 = smul.addr %s373, 8
        %s375 = scalar_lea.vmem %s1, %s374
        %p376 = pneg %p87
        %p377 = pneg %p84
        %p378 = pneg %p108
        %p379 = pneg %p105
        %p380 = pneg %p129
        %p381 = pneg %p126
        %p382 = pneg %p150
        %p383 = pneg %p147
        %p384 = pneg %p171
        %p385 = pneg %p168
        %p386 = pneg %p192
        %p387 = pneg %p189
        %p388 = pneg %p213
        %p389 = pneg %p210
        %p390 = pneg %p234
        %p391 = pneg %p231
        %p392 = pneg %p255
        %p393 = pneg %p252
        %p394 = pneg %p283
        %p395 = pneg %p280
        %s396 = sand.u32 %s270, 1
        %s397 = scalar_lea.sflag [#allocation6], %s396
        %s398 = sand.u32 %s270, 1
        %s399 = smul.addr %s398, 384
        %s400 = scalar_lea.vmem [#allocation5], %s399
        %s401 = smul.u32 16, %s29
        %p402 = scmp.lt.s32.totalorder %s28, 1
        %s403 = scalar_select %p402, %s28, 1
        %p404 = scmp.lt.s32.totalorder %s401, 31
        %s405 = scalar_select %p404, %s401, 31
        %s406 = smul.addr %s403, 32
        %s407 = sadd.s32 %s405, %s406
        %s408 = smul.addr %s407, 8
        %s409 = scalar_lea.vmem %s0, %s408
        %s410 = smul.u32 16, %s29
        %p411 = scmp.lt.s32.totalorder %s28, 1
        %s412 = scalar_select %p411, %s28, 1
        %p413 = scmp.lt.s32.totalorder %s29, 1
        %s414 = scalar_select %p413, %s29, 1
        %s415 = smul.addr %s412, 2
        %s416 = sadd.s32 %s414, %s415
        %s417 = smul.addr %s416, 8
        %s418 = scalar_lea.vmem %s1, %s417
        %s419 = smul.u32 16, %s29
        %p421 = scmp.eq.s32.totalorder %s29, 0
        // Predicated region
        $region61: #{tpu_custom_call.1} parent=59 // pred_check
          %p422 = pneg %p421
        $region62: #{tpu_custom_call.1} parent=59 // pred_check_branch
          %424 = sbr.rel (%p422) target = $region64
        $region63: #{tpu_custom_call.1} parent=59 // pred_region
          %vm425 = vcmask 523264
          %426 = vst.msk [vmem:[#allocation4] sm:$0xff] %vm425, 0.0
          %427 = vst.msk [vmem:[#allocation4 + $0x8] sm:$0xff] %vm425, 0.0
          %428 = vst.msk [vmem:[#allocation4 + $0x10] sm:$0xff] %vm425, 0.0
          %429 = vst.msk [vmem:[#allocation4 + $0x18] sm:$0xff] %vm425, 0.0
          %430 = vst.msk [vmem:[#allocation4 + $0x20] sm:$0xff] %vm425, 0.0
          %431 = vst.msk [vmem:[#allocation4 + $0x28] sm:$0xff] %vm425, 0.0
          %432 = vst.msk [vmem:[#allocation4 + $0x30] sm:$0xff] %vm425, 0.0
          %433 = vst.msk [vmem:[#allocation4 + $0x38] sm:$0xff] %vm425, 0.0
          %434 = vst.msk [vmem:[#allocation4 + $0x40] sm:$0xff] %vm425, 0.0
          %435 = vst.msk [vmem:[#allocation4 + $0x48] sm:$0xff] %vm425, 0.0
          %436 = vst.msk [vmem:[#allocation4 + $0x50] sm:$0xff] %vm425, 0.0
          %437 = vst.msk [vmem:[#allocation4 + $0x58] sm:$0xff] %vm425, 0.0
          %438 = vst.msk [vmem:[#allocation4 + $0x60] sm:$0xff] %vm425, 0.0
          %439 = vst.msk [vmem:[#allocation4 + $0x68] sm:$0xff] %vm425, 0.0
          %440 = vst.msk [vmem:[#allocation4 + $0x70] sm:$0xff] %vm425, 0.0
          %441 = vst.msk [vmem:[#allocation4 + $0x78] sm:$0xff] %vm425, 0.0
          %442 = vst.msk [vmem:[#allocation4 + $0x80] sm:$0xff] %vm425, 0.0
          %443 = vst.msk [vmem:[#allocation4 + $0x88] sm:$0xff] %vm425, 0.0
          %444 = vst.msk [vmem:[#allocation4 + $0x90] sm:$0xff] %vm425, 0.0
          %445 = vst.msk [vmem:[#allocation4 + $0x98] sm:$0xff] %vm425, 0.0
          %446 = vst.msk [vmem:[#allocation4 + $0xa0] sm:$0xff] %vm425, 0.0
          %447 = vst.msk [vmem:[#allocation4 + $0xa8] sm:$0xff] %vm425, 0.0
          %448 = vst.msk [vmem:[#allocation4 + $0xb0] sm:$0xff] %vm425, 0.0
          %449 = vst.msk [vmem:[#allocation4 + $0xb8] sm:$0xff] %vm425, 0.0
          %450 = vst.msk [vmem:[#allocation4 + $0xc0] sm:$0xff] %vm425, 0.0
          %451 = vst.msk [vmem:[#allocation4 + $0xc8] sm:$0xff] %vm425, 0.0
          %452 = vst.msk [vmem:[#allocation4 + $0xd0] sm:$0xff] %vm425, 0.0
          %453 = vst.msk [vmem:[#allocation4 + $0xd8] sm:$0xff] %vm425, 0.0
          %454 = vst.msk [vmem:[#allocation4 + $0xe0] sm:$0xff] %vm425, 0.0
          %455 = vst.msk [vmem:[#allocation4 + $0xe8] sm:$0xff] %vm425, 0.0
          %456 = vst.msk [vmem:[#allocation4 + $0xf0] sm:$0xff] %vm425, 0.0
          %457 = vst.msk [vmem:[#allocation4 + $0xf8] sm:$0xff] %vm425, 0.0
          %458 = vst.msk [vmem:[#allocation4 + $0x100] sm:$0xff] %vm425, 0.0
          %459 = vst.msk [vmem:[#allocation4 + $0x108] sm:$0xff] %vm425, 0.0
          %460 = vst.msk [vmem:[#allocation4 + $0x110] sm:$0xff] %vm425, 0.0
          %461 = vst.msk [vmem:[#allocation4 + $0x118] sm:$0xff] %vm425, 0.0
          %462 = vst.msk [vmem:[#allocation4 + $0x120] sm:$0xff] %vm425, 0.0
          %463 = vst.msk [vmem:[#allocation4 + $0x128] sm:$0xff] %vm425, 0.0
          %464 = vst.msk [vmem:[#allocation4 + $0x130] sm:$0xff] %vm425, 0.0
          %465 = vst.msk [vmem:[#allocation4 + $0x138] sm:$0xff] %vm425, 0.0
          %466 = vst.msk [vmem:[#allocation4 + $0x140] sm:$0xff] %vm425, 0.0
          %467 = vst.msk [vmem:[#allocation4 + $0x148] sm:$0xff] %vm425, 0.0
          %468 = vst.msk [vmem:[#allocation4 + $0x150] sm:$0xff] %vm425, 0.0
          %469 = vst.msk [vmem:[#allocation4 + $0x158] sm:$0xff] %vm425, 0.0
          %470 = vst.msk [vmem:[#allocation4 + $0x160] sm:$0xff] %vm425, 0.0
          %471 = vst.msk [vmem:[#allocation4 + $0x168] sm:$0xff] %vm425, 0.0
          %472 = vst.msk [vmem:[#allocation4 + $0x170] sm:$0xff] %vm425, 0.0
          %473 = vst.msk [vmem:[#allocation4 + $0x178] sm:$0xff] %vm425, 0.0
          %474 = vst.msk [vmem:[#allocation4 + $0x180] sm:$0xff] %vm425, 0.0
          %475 = vst.msk [vmem:[#allocation4 + $0x188] sm:$0xff] %vm425, 0.0
          %476 = vst.msk [vmem:[#allocation4 + $0x190] sm:$0xff] %vm425, 0.0
          %477 = vst.msk [vmem:[#allocation4 + $0x198] sm:$0xff] %vm425, 0.0
          %478 = vst.msk [vmem:[#allocation4 + $0x1a0] sm:$0xff] %vm425, 0.0
          %479 = vst.msk [vmem:[#allocation4 + $0x1a8] sm:$0xff] %vm425, 0.0
          %480 = vst.msk [vmem:[#allocation4 + $0x1b0] sm:$0xff] %vm425, 0.0
          %481 = vst.msk [vmem:[#allocation4 + $0x1b8] sm:$0xff] %vm425, 0.0
          %482 = vst.msk [vmem:[#allocation4 + $0x1c0] sm:$0xff] %vm425, 0.0
          %483 = vst.msk [vmem:[#allocation4 + $0x1c8] sm:$0xff] %vm425, 0.0
          %484 = vst.msk [vmem:[#allocation4 + $0x1d0] sm:$0xff] %vm425, 0.0
          %485 = vst.msk [vmem:[#allocation4 + $0x1d8] sm:$0xff] %vm425, 0.0
          %486 = vst.msk [vmem:[#allocation4 + $0x1e0] sm:$0xff] %vm425, 0.0
          %487 = vst.msk [vmem:[#allocation4 + $0x1e8] sm:$0xff] %vm425, 0.0
          %488 = vst.msk [vmem:[#allocation4 + $0x1f0] sm:$0xff] %vm425, 0.0
          %489 = vst.msk [vmem:[#allocation4 + $0x1f8] sm:$0xff] %vm425, 0.0
          %490 = vst.msk [vmem:[#allocation4 + $0x200] sm:$0xff] %vm425, 0.0
          %491 = vst.msk [vmem:[#allocation4 + $0x208] sm:$0xff] %vm425, 0.0
          %492 = vst.msk [vmem:[#allocation4 + $0x210] sm:$0xff] %vm425, 0.0
          %493 = vst.msk [vmem:[#allocation4 + $0x218] sm:$0xff] %vm425, 0.0
          %494 = vst.msk [vmem:[#allocation4 + $0x220] sm:$0xff] %vm425, 0.0
          %495 = vst.msk [vmem:[#allocation4 + $0x228] sm:$0xff] %vm425, 0.0
          %496 = vst.msk [vmem:[#allocation4 + $0x230] sm:$0xff] %vm425, 0.0
          %497 = vst.msk [vmem:[#allocation4 + $0x238] sm:$0xff] %vm425, 0.0
          %498 = vst.msk [vmem:[#allocation4 + $0x240] sm:$0xff] %vm425, 0.0
          %499 = vst.msk [vmem:[#allocation4 + $0x248] sm:$0xff] %vm425, 0.0
          %500 = vst.msk [vmem:[#allocation4 + $0x250] sm:$0xff] %vm425, 0.0
          %501 = vst.msk [vmem:[#allocation4 + $0x258] sm:$0xff] %vm425, 0.0
          %502 = vst.msk [vmem:[#allocation4 + $0x260] sm:$0xff] %vm425, 0.0
          %503 = vst.msk [vmem:[#allocation4 + $0x268] sm:$0xff] %vm425, 0.0
          %504 = vst.msk [vmem:[#allocation4 + $0x270] sm:$0xff] %vm425, 0.0
          %505 = vst.msk [vmem:[#allocation4 + $0x278] sm:$0xff] %vm425, 0.0
          %506 = vst.msk [vmem:[#allocation4 + $0x280] sm:$0xff] %vm425, 0.0
          %507 = vst.msk [vmem:[#allocation4 + $0x288] sm:$0xff] %vm425, 0.0
          %508 = vst.msk [vmem:[#allocation4 + $0x290] sm:$0xff] %vm425, 0.0
          %509 = vst.msk [vmem:[#allocation4 + $0x298] sm:$0xff] %vm425, 0.0
          %510 = vst.msk [vmem:[#allocation4 + $0x2a0] sm:$0xff] %vm425, 0.0
          %511 = vst.msk [vmem:[#allocation4 + $0x2a8] sm:$0xff] %vm425, 0.0
          %512 = vst.msk [vmem:[#allocation4 + $0x2b0] sm:$0xff] %vm425, 0.0
          %513 = vst.msk [vmem:[#allocation4 + $0x2b8] sm:$0xff] %vm425, 0.0
          %514 = vst.msk [vmem:[#allocation4 + $0x2c0] sm:$0xff] %vm425, 0.0
          %515 = vst.msk [vmem:[#allocation4 + $0x2c8] sm:$0xff] %vm425, 0.0
          %516 = vst.msk [vmem:[#allocation4 + $0x2d0] sm:$0xff] %vm425, 0.0
          %517 = vst.msk [vmem:[#allocation4 + $0x2d8] sm:$0xff] %vm425, 0.0
          %518 = vst.msk [vmem:[#allocation4 + $0x2e0] sm:$0xff] %vm425, 0.0
          %519 = vst.msk [vmem:[#allocation4 + $0x2e8] sm:$0xff] %vm425, 0.0
          %520 = vst.msk [vmem:[#allocation4 + $0x2f0] sm:$0xff] %vm425, 0.0
          %521 = vst.msk [vmem:[#allocation4 + $0x2f8] sm:$0xff] %vm425, 0.0
          %522 = vst.msk [vmem:[#allocation4 + $0x300] sm:$0xff] %vm425, 0.0
          %523 = vst.msk [vmem:[#allocation4 + $0x308] sm:$0xff] %vm425, 0.0
          %524 = vst.msk [vmem:[#allocation4 + $0x310] sm:$0xff] %vm425, 0.0
          %525 = vst.msk [vmem:[#allocation4 + $0x318] sm:$0xff] %vm425, 0.0
          %526 = vst.msk [vmem:[#allocation4 + $0x320] sm:$0xff] %vm425, 0.0
          %527 = vst.msk [vmem:[#allocation4 + $0x328] sm:$0xff] %vm425, 0.0
          %528 = vst.msk [vmem:[#allocation4 + $0x330] sm:$0xff] %vm425, 0.0
          %529 = vst.msk [vmem:[#allocation4 + $0x338] sm:$0xff] %vm425, 0.0
          %530 = vst.msk [vmem:[#allocation4 + $0x340] sm:$0xff] %vm425, 0.0
          %531 = vst.msk [vmem:[#allocation4 + $0x348] sm:$0xff] %vm425, 0.0
          %532 = vst.msk [vmem:[#allocation4 + $0x350] sm:$0xff] %vm425, 0.0
          %533 = vst.msk [vmem:[#allocation4 + $0x358] sm:$0xff] %vm425, 0.0
          %534 = vst.msk [vmem:[#allocation4 + $0x360] sm:$0xff] %vm425, 0.0
          %535 = vst.msk [vmem:[#allocation4 + $0x368] sm:$0xff] %vm425, 0.0
          %536 = vst.msk [vmem:[#allocation4 + $0x370] sm:$0xff] %vm425, 0.0
          %537 = vst.msk [vmem:[#allocation4 + $0x378] sm:$0xff] %vm425, 0.0
          %538 = vst.msk [vmem:[#allocation4 + $0x380] sm:$0xff] %vm425, 0.0
          %539 = vst.msk [vmem:[#allocation4 + $0x388] sm:$0xff] %vm425, 0.0
          %540 = vst.msk [vmem:[#allocation4 + $0x390] sm:$0xff] %vm425, 0.0
          %541 = vst.msk [vmem:[#allocation4 + $0x398] sm:$0xff] %vm425, 0.0
          %542 = vst.msk [vmem:[#allocation4 + $0x3a0] sm:$0xff] %vm425, 0.0
          %543 = vst.msk [vmem:[#allocation4 + $0x3a8] sm:$0xff] %vm425, 0.0
          %544 = vst.msk [vmem:[#allocation4 + $0x3b0] sm:$0xff] %vm425, 0.0
          %545 = vst.msk [vmem:[#allocation4 + $0x3b8] sm:$0xff] %vm425, 0.0
          %546 = vst.msk [vmem:[#allocation4 + $0x3c0] sm:$0xff] %vm425, 0.0
          %547 = vst.msk [vmem:[#allocation4 + $0x3c8] sm:$0xff] %vm425, 0.0
          %548 = vst.msk [vmem:[#allocation4 + $0x3d0] sm:$0xff] %vm425, 0.0
          %549 = vst.msk [vmem:[#allocation4 + $0x3d8] sm:$0xff] %vm425, 0.0
          %550 = vst.msk [vmem:[#allocation4 + $0x3e0] sm:$0xff] %vm425, 0.0
          %551 = vst.msk [vmem:[#allocation4 + $0x3e8] sm:$0xff] %vm425, 0.0
          %552 = vst.msk [vmem:[#allocation4 + $0x3f0] sm:$0xff] %vm425, 0.0
          %553 = vst.msk [vmem:[#allocation4 + $0x3f8] sm:$0xff] %vm425, 0.0
          %554 = vst.msk [vmem:[#allocation4 + $0x400] sm:$0xff] %vm425, 0.0
          %555 = vst.msk [vmem:[#allocation4 + $0x408] sm:$0xff] %vm425, 0.0
          %556 = vst.msk [vmem:[#allocation4 + $0x410] sm:$0xff] %vm425, 0.0
          %557 = vst.msk [vmem:[#allocation4 + $0x418] sm:$0xff] %vm425, 0.0
          %558 = vst.msk [vmem:[#allocation4 + $0x420] sm:$0xff] %vm425, 0.0
          %559 = vst.msk [vmem:[#allocation4 + $0x428] sm:$0xff] %vm425, 0.0
          %560 = vst.msk [vmem:[#allocation4 + $0x430] sm:$0xff] %vm425, 0.0
          %561 = vst.msk [vmem:[#allocation4 + $0x438] sm:$0xff] %vm425, 0.0
          %562 = vst.msk [vmem:[#allocation4 + $0x440] sm:$0xff] %vm425, 0.0
          %563 = vst.msk [vmem:[#allocation4 + $0x448] sm:$0xff] %vm425, 0.0
          %564 = vst.msk [vmem:[#allocation4 + $0x450] sm:$0xff] %vm425, 0.0
          %565 = vst.msk [vmem:[#allocation4 + $0x458] sm:$0xff] %vm425, 0.0
          %566 = vst.msk [vmem:[#allocation4 + $0x460] sm:$0xff] %vm425, 0.0
          %567 = vst.msk [vmem:[#allocation4 + $0x468] sm:$0xff] %vm425, 0.0
          %568 = vst.msk [vmem:[#allocation4 + $0x470] sm:$0xff] %vm425, 0.0
          %569 = vst.msk [vmem:[#allocation4 + $0x478] sm:$0xff] %vm425, 0.0
          %570 = vst.msk [vmem:[#allocation4 + $0x480] sm:$0xff] %vm425, 0.0
          %571 = vst.msk [vmem:[#allocation4 + $0x488] sm:$0xff] %vm425, 0.0
          %572 = vst.msk [vmem:[#allocation4 + $0x490] sm:$0xff] %vm425, 0.0
          %573 = vst.msk [vmem:[#allocation4 + $0x498] sm:$0xff] %vm425, 0.0
          %574 = vst.msk [vmem:[#allocation4 + $0x4a0] sm:$0xff] %vm425, 0.0
          %575 = vst.msk [vmem:[#allocation4 + $0x4a8] sm:$0xff] %vm425, 0.0
          %576 = vst.msk [vmem:[#allocation4 + $0x4b0] sm:$0xff] %vm425, 0.0
          %577 = vst.msk [vmem:[#allocation4 + $0x4b8] sm:$0xff] %vm425, 0.0
          %578 = vst.msk [vmem:[#allocation4 + $0x4c0] sm:$0xff] %vm425, 0.0
          %579 = vst.msk [vmem:[#allocation4 + $0x4c8] sm:$0xff] %vm425, 0.0
          %580 = vst.msk [vmem:[#allocation4 + $0x4d0] sm:$0xff] %vm425, 0.0
          %581 = vst.msk [vmem:[#allocation4 + $0x4d8] sm:$0xff] %vm425, 0.0
          %582 = vst.msk [vmem:[#allocation4 + $0x4e0] sm:$0xff] %vm425, 0.0
          %583 = vst.msk [vmem:[#allocation4 + $0x4e8] sm:$0xff] %vm425, 0.0
          %584 = vst.msk [vmem:[#allocation4 + $0x4f0] sm:$0xff] %vm425, 0.0
          %585 = vst.msk [vmem:[#allocation4 + $0x4f8] sm:$0xff] %vm425, 0.0
          %586 = vst.msk [vmem:[#allocation4 + $0x500] sm:$0xff] %vm425, 0.0
          %587 = vst.msk [vmem:[#allocation4 + $0x508] sm:$0xff] %vm425, 0.0
          %588 = vst.msk [vmem:[#allocation4 + $0x510] sm:$0xff] %vm425, 0.0
          %589 = vst.msk [vmem:[#allocation4 + $0x518] sm:$0xff] %vm425, 0.0
          %590 = vst.msk [vmem:[#allocation4 + $0x520] sm:$0xff] %vm425, 0.0
          %591 = vst.msk [vmem:[#allocation4 + $0x528] sm:$0xff] %vm425, 0.0
          %592 = vst.msk [vmem:[#allocation4 + $0x530] sm:$0xff] %vm425, 0.0
          %593 = vst.msk [vmem:[#allocation4 + $0x538] sm:$0xff] %vm425, 0.0
          %594 = vst.msk [vmem:[#allocation4 + $0x540] sm:$0xff] %vm425, 0.0
          %595 = vst.msk [vmem:[#allocation4 + $0x548] sm:$0xff] %vm425, 0.0
          %596 = vst.msk [vmem:[#allocation4 + $0x550] sm:$0xff] %vm425, 0.0
          %597 = vst.msk [vmem:[#allocation4 + $0x558] sm:$0xff] %vm425, 0.0
          %598 = vst.msk [vmem:[#allocation4 + $0x560] sm:$0xff] %vm425, 0.0
          %599 = vst.msk [vmem:[#allocation4 + $0x568] sm:$0xff] %vm425, 0.0
          %600 = vst.msk [vmem:[#allocation4 + $0x570] sm:$0xff] %vm425, 0.0
          %601 = vst.msk [vmem:[#allocation4 + $0x578] sm:$0xff] %vm425, 0.0
          %602 = vst.msk [vmem:[#allocation4 + $0x580] sm:$0xff] %vm425, 0.0
          %603 = vst.msk [vmem:[#allocation4 + $0x588] sm:$0xff] %vm425, 0.0
          %604 = vst.msk [vmem:[#allocation4 + $0x590] sm:$0xff] %vm425, 0.0
          %605 = vst.msk [vmem:[#allocation4 + $0x598] sm:$0xff] %vm425, 0.0
          %606 = vst.msk [vmem:[#allocation4 + $0x5a0] sm:$0xff] %vm425, 0.0
          %607 = vst.msk [vmem:[#allocation4 + $0x5a8] sm:$0xff] %vm425, 0.0
          %608 = vst.msk [vmem:[#allocation4 + $0x5b0] sm:$0xff] %vm425, 0.0
          %609 = vst.msk [vmem:[#allocation4 + $0x5b8] sm:$0xff] %vm425, 0.0
          %610 = vst.msk [vmem:[#allocation4 + $0x5c0] sm:$0xff] %vm425, 0.0
          %611 = vst.msk [vmem:[#allocation4 + $0x5c8] sm:$0xff] %vm425, 0.0
          %612 = vst.msk [vmem:[#allocation4 + $0x5d0] sm:$0xff] %vm425, 0.0
          %613 = vst.msk [vmem:[#allocation4 + $0x5d8] sm:$0xff] %vm425, 0.0
          %614 = vst.msk [vmem:[#allocation4 + $0x5e0] sm:$0xff] %vm425, 0.0
          %615 = vst.msk [vmem:[#allocation4 + $0x5e8] sm:$0xff] %vm425, 0.0
          %616 = vst.msk [vmem:[#allocation4 + $0x5f0] sm:$0xff] %vm425, 0.0
          %617 = vst.msk [vmem:[#allocation4 + $0x5f8] sm:$0xff] %vm425, 0.0
        $region64: #{tpu_custom_call.1} parent=59 // pred_fallthru
          _
        %v618 = vld [vmem:[%s418] sm:$0x1]
        %v619 = vlaneseq
        %v620 = vshrl.u32 %v619, 7
        %v621 = vsub.s32 0, %v620
        %v622 = vrot.slane %v618, %v621
        %vm623 = vcmask 523264
        %624 = vst.msk [vmem:[#allocation3] sm:$0xff] %vm623, %v622
        %625 = vst.msk [vmem:[#allocation3 + $0x8] sm:$0xff] %vm623, %v622
        %v626 = vld [vmem:[%s418 + $0x1] sm:$0x1]
        %v627 = vlaneseq
        %v628 = vshrl.u32 %v627, 7
        %v629 = vsub.s32 0, %v628
        %v630 = vrot.slane %v626, %v629
        %631 = vst.msk [vmem:[#allocation3 + $0x10] sm:$0xff] %vm623, %v630
        %632 = vst.msk [vmem:[#allocation3 + $0x18] sm:$0xff] %vm623, %v630
        %v633 = vld [vmem:[%s418 + $0x2] sm:$0x1]
        %v634 = vlaneseq
        %v635 = vshrl.u32 %v634, 7
        %v636 = vsub.s32 0, %v635
        %v637 = vrot.slane %v633, %v636
        %638 = vst.msk [vmem:[#allocation3 + $0x20] sm:$0xff] %vm623, %v637
        %639 = vst.msk [vmem:[#allocation3 + $0x28] sm:$0xff] %vm623, %v637
        %v640 = vld [vmem:[%s418 + $0x3] sm:$0x1]
        %v641 = vlaneseq
        %v642 = vshrl.u32 %v641, 7
        %v643 = vsub.s32 0, %v642
        %v644 = vrot.slane %v640, %v643
        %645 = vst.msk [vmem:[#allocation3 + $0x30] sm:$0xff] %vm623, %v644
        %646 = vst.msk [vmem:[#allocation3 + $0x38] sm:$0xff] %vm623, %v644
        %v647 = vld [vmem:[%s418 + $0x4] sm:$0x1]
        %v648 = vlaneseq
        %v649 = vshrl.u32 %v648, 7
        %v650 = vsub.s32 0, %v649
        %v651 = vrot.slane %v647, %v650
        %652 = vst.msk [vmem:[#allocation3 + $0x40] sm:$0xff] %vm623, %v651
        %653 = vst.msk [vmem:[#allocation3 + $0x48] sm:$0xff] %vm623, %v651
        %v654 = vld [vmem:[%s418 + $0x5] sm:$0x1]
        %v655 = vlaneseq
        %v656 = vshrl.u32 %v655, 7
        %v657 = vsub.s32 0, %v656
        %v658 = vrot.slane %v654, %v657
        %659 = vst.msk [vmem:[#allocation3 + $0x50] sm:$0xff] %vm623, %v658
        %660 = vst.msk [vmem:[#allocation3 + $0x58] sm:$0xff] %vm623, %v658
        %v661 = vld [vmem:[%s418 + $0x6] sm:$0x1]
        %v662 = vlaneseq
        %v663 = vshrl.u32 %v662, 7
        %v664 = vsub.s32 0, %v663
        %v665 = vrot.slane %v661, %v664
        %666 = vst.msk [vmem:[#allocation3 + $0x60] sm:$0xff] %vm623, %v665
        %667 = vst.msk [vmem:[#allocation3 + $0x68] sm:$0xff] %vm623, %v665
        %v668 = vld [vmem:[%s418 + $0x7] sm:$0x1]
        %v669 = vlaneseq
        %v670 = vshrl.u32 %v669, 7
        %v671 = vsub.s32 0, %v670
        %v672 = vrot.slane %v668, %v671
        %673 = vst.msk [vmem:[#allocation3 + $0x70] sm:$0xff] %vm623, %v672
        %674 = vst.msk [vmem:[#allocation3 + $0x78] sm:$0xff] %vm623, %v672
        %v675 = vld [vmem:[#allocation3] sm:$0xff]
        %v676 = vld [vmem:[#allocation3 + $0x8] sm:$0xff]
        %v677 = vld [vmem:[#allocation3 + $0x10] sm:$0xff]
        %v678 = vld [vmem:[#allocation3 + $0x18] sm:$0xff]
        %v679 = vld [vmem:[#allocation3 + $0x20] sm:$0xff]
        %v680 = vld [vmem:[#allocation3 + $0x28] sm:$0xff]
        %v681 = vld [vmem:[#allocation3 + $0x30] sm:$0xff]
        %v682 = vld [vmem:[#allocation3 + $0x38] sm:$0xff]
        %v683 = vld [vmem:[#allocation3 + $0x40] sm:$0xff]
        %v684 = vld [vmem:[#allocation3 + $0x48] sm:$0xff]
        %v685 = vld [vmem:[#allocation3 + $0x50] sm:$0xff]
        %v686 = vld [vmem:[#allocation3 + $0x58] sm:$0xff]
        %v687 = vld [vmem:[#allocation3 + $0x60] sm:$0xff]
        %v688 = vld [vmem:[#allocation3 + $0x68] sm:$0xff]
        %v689 = vld [vmem:[#allocation3 + $0x70] sm:$0xff]
        %v690 = vld [vmem:[#allocation3 + $0x78] sm:$0xff]
        %v691 = vld [vmem:[%s409] sm:$0xff]
        %v692 = vld [vmem:[%s409 + $0x8] sm:$0xff]
        %v693 = vld [vmem:[%s409 + $0x10] sm:$0xff]
        %v694 = vld [vmem:[%s409 + $0x18] sm:$0xff]
        %v695 = vld [vmem:[%s409 + $0x20] sm:$0xff]
        %v696 = vld [vmem:[%s409 + $0x28] sm:$0xff]
        %v697 = vld [vmem:[%s409 + $0x30] sm:$0xff]
        %v698 = vld [vmem:[%s409 + $0x38] sm:$0xff]
        %v699 = vld [vmem:[%s409 + $0x40] sm:$0xff]
        %v700 = vld [vmem:[%s409 + $0x48] sm:$0xff]
        %v701 = vld [vmem:[%s409 + $0x50] sm:$0xff]
        %v702 = vld [vmem:[%s409 + $0x58] sm:$0xff]
        %v703 = vld [vmem:[%s409 + $0x60] sm:$0xff]
        %v704 = vld [vmem:[%s409 + $0x68] sm:$0xff]
        %v705 = vld [vmem:[%s409 + $0x70] sm:$0xff]
        %v706 = vld [vmem:[%s409 + $0x78] sm:$0xff]
        loop: start=0, step=1, limit=4
        $region65: #{tpu_custom_call.1} parent=59 // loop_pre_header
          _
        $region66: #{tpu_custom_call.1} parent=59 // loop_header
          %s708 = sphi 0, %s712
          %p709 = scmp.ge.s32.totalorder %s708, 4
          %v713 = vphi %v691, %v4482
          %v714 = vphi %v692, %v4483
          %v715 = vphi %v693, %v4484
          %v716 = vphi %v694, %v4485
          %v717 = vphi %v695, %v4486
          %v718 = vphi %v696, %v4487
          %v719 = vphi %v697, %v4488
          %v720 = vphi %v698, %v4489
          %v721 = vphi %v699, %v4490
          %v722 = vphi %v700, %v4491
          %v723 = vphi %v701, %v4492
          %v724 = vphi %v702, %v4493
          %v725 = vphi %v703, %v4494
          %v726 = vphi %v704, %v4495
          %v727 = vphi %v705, %v4496
          %v728 = vphi %v706, %v4497
        $region67: #{tpu_custom_call.1} parent=59 // loop_header_branch
          %711 = sbr.rel (%p709) target = $region71
        $region68: #{tpu_custom_call.1} parent=59 // loop_body
          %s729 = smul.u32 %s708, 6
          %s730 = smul.u32 %s729, 64
          %s731 = scalar_lea.vmem [#allocation4], %s730
          %v732 = vld [vmem:[%s731] sm:$0xff]
          %v733 = vld [vmem:[%s731 + $0x8] sm:$0xff]
          %v734 = vld [vmem:[%s731 + $0x10] sm:$0xff]
          %v735 = vld [vmem:[%s731 + $0x18] sm:$0xff]
          %v736 = vld [vmem:[%s731 + $0x20] sm:$0xff]
          %v737 = vld [vmem:[%s731 + $0x28] sm:$0xff]
          %v738 = vld [vmem:[%s731 + $0x30] sm:$0xff]
          %v739 = vld [vmem:[%s731 + $0x38] sm:$0xff]
          %740 = vst.msk [vmem:[#allocation2] sm:$0xff] %vm623, %v732
          %741 = vst.msk [vmem:[#allocation2 + $0x8] sm:$0xff] %vm623, %v733
          %742 = vst.msk [vmem:[#allocation2 + $0x10] sm:$0xff] %vm623, %v734
          %743 = vst.msk [vmem:[#allocation2 + $0x18] sm:$0xff] %vm623, %v735
          %744 = vst.msk [vmem:[#allocation2 + $0x20] sm:$0xff] %vm623, %v736
          %745 = vst.msk [vmem:[#allocation2 + $0x28] sm:$0xff] %vm623, %v737
          %746 = vst.msk [vmem:[#allocation2 + $0x30] sm:$0xff] %vm623, %v738
          %747 = vst.msk [vmem:[#allocation2 + $0x38] sm:$0xff] %vm623, %v739
          %748 = vst.msk [vmem:[#allocation2 + $0x40] sm:$0xff] %vm623, %v713
          %749 = vst.msk [vmem:[#allocation2 + $0x48] sm:$0xff] %vm623, %v714
          %750 = vst.msk [vmem:[#allocation2 + $0x50] sm:$0xff] %vm623, %v715
          %751 = vst.msk [vmem:[#allocation2 + $0x58] sm:$0xff] %vm623, %v716
          %752 = vst.msk [vmem:[#allocation2 + $0x60] sm:$0xff] %vm623, %v717
          %753 = vst.msk [vmem:[#allocation2 + $0x68] sm:$0xff] %vm623, %v718
          %754 = vst.msk [vmem:[#allocation2 + $0x70] sm:$0xff] %vm623, %v719
          %755 = vst.msk [vmem:[#allocation2 + $0x78] sm:$0xff] %vm623, %v720
          %756 = vst.msk [vmem:[#allocation2 + $0x80] sm:$0xff] %vm623, %v721
          %757 = vst.msk [vmem:[#allocation2 + $0x88] sm:$0xff] %vm623, %v722
          %758 = vst.msk [vmem:[#allocation2 + $0x90] sm:$0xff] %vm623, %v723
          %759 = vst.msk [vmem:[#allocation2 + $0x98] sm:$0xff] %vm623, %v724
          %760 = vst.msk [vmem:[#allocation2 + $0xa0] sm:$0xff] %vm623, %v725
          %761 = vst.msk [vmem:[#allocation2 + $0xa8] sm:$0xff] %vm623, %v726
          %762 = vst.msk [vmem:[#allocation2 + $0xb0] sm:$0xff] %vm623, %v727
          %763 = vst.msk [vmem:[#allocation2 + $0xb8] sm:$0xff] %vm623, %v728
          %764 = vst.msk [vmem:[%s731] sm:$0xff] %vm623, %v721
          %765 = vst.msk [vmem:[%s731 + $0x8] sm:$0xff] %vm623, %v722
          %766 = vst.msk [vmem:[%s731 + $0x10] sm:$0xff] %vm623, %v723
          %767 = vst.msk [vmem:[%s731 + $0x18] sm:$0xff] %vm623, %v724
          %768 = vst.msk [vmem:[%s731 + $0x20] sm:$0xff] %vm623, %v725
          %769 = vst.msk [vmem:[%s731 + $0x28] sm:$0xff] %vm623, %v726
          %770 = vst.msk [vmem:[%s731 + $0x30] sm:$0xff] %vm623, %v727
          %771 = vst.msk [vmem:[%s731 + $0x38] sm:$0xff] %vm623, %v728
          %v772 = vld [vmem:[#allocation2 + $0x3e] sm:$0xff]
          %v773 = vld [vmem:[#allocation2 + $0x46] sm:$0xff]
          %v774 = vld [vmem:[#allocation2 + $0x4e] sm:$0xff]
          %v775 = vld [vmem:[#allocation2 + $0x56] sm:$0xff]
          %v776 = vld [vmem:[#allocation2 + $0x5e] sm:$0xff]
          %v777 = vld [vmem:[#allocation2 + $0x66] sm:$0xff]
          %v778 = vld [vmem:[#allocation2 + $0x6e] sm:$0xff]
          %v779 = vld [vmem:[#allocation2 + $0x76] sm:$0xff]
          %v780 = vld [vmem:[#allocation2 + $0x7e] sm:$0xff]
          %v781 = vld [vmem:[#allocation2 + $0x86] sm:$0xff]
          %v782 = vld [vmem:[#allocation2 + $0x8e] sm:$0xff]
          %v783 = vld [vmem:[#allocation2 + $0x96] sm:$0xff]
          %v784 = vld [vmem:[#allocation2 + $0x9e] sm:$0xff]
          %v785 = vld [vmem:[#allocation2 + $0xa6] sm:$0xff]
          %v786 = vld [vmem:[#allocation2 + $0xae] sm:$0xff]
          %v787 = vld [vmem:[#allocation2 + $0xb6] sm:$0xff]
          %v788 = vld [vmem:[#allocation2 + $0x3f] sm:$0xff]
          %v789 = vld [vmem:[#allocation2 + $0x47] sm:$0xff]
          %v790 = vld [vmem:[#allocation2 + $0x4f] sm:$0xff]
          %v791 = vld [vmem:[#allocation2 + $0x57] sm:$0xff]
          %v792 = vld [vmem:[#allocation2 + $0x5f] sm:$0xff]
          %v793 = vld [vmem:[#allocation2 + $0x67] sm:$0xff]
          %v794 = vld [vmem:[#allocation2 + $0x6f] sm:$0xff]
          %v795 = vld [vmem:[#allocation2 + $0x77] sm:$0xff]
          %v796 = vld [vmem:[#allocation2 + $0x7f] sm:$0xff]
          %v797 = vld [vmem:[#allocation2 + $0x87] sm:$0xff]
          %v798 = vld [vmem:[#allocation2 + $0x8f] sm:$0xff]
          %v799 = vld [vmem:[#allocation2 + $0x97] sm:$0xff]
          %v800 = vld [vmem:[#allocation2 + $0x9f] sm:$0xff]
          %v801 = vld [vmem:[#allocation2 + $0xa7] sm:$0xff]
          %v802 = vld [vmem:[#allocation2 + $0xaf] sm:$0xff]
          %v803 = vld [vmem:[#allocation2 + $0xb7] sm:$0xff]
          %820 = vrot.lane.b32.xlu0 %v788, 64
          %v821 = vpop.permute.xlu0 %820
          %822 = vrot.lane.b32.xlu0 %v789, 64
          %v823 = vpop.permute.xlu0 %822
          %824 = vrot.lane.b32.xlu0 %v790, 64
          %v825 = vpop.permute.xlu0 %824
          %826 = vrot.lane.b32.xlu0 %v791, 64
          %v827 = vpop.permute.xlu0 %826
          %828 = vrot.lane.b32.xlu0 %v792, 64
          %v829 = vpop.permute.xlu0 %828
          %830 = vrot.lane.b32.xlu0 %v793, 64
          %v831 = vpop.permute.xlu0 %830
          %832 = vrot.lane.b32.xlu0 %v794, 64
          %v833 = vpop.permute.xlu0 %832
          %834 = vrot.lane.b32.xlu0 %v795, 64
          %v835 = vpop.permute.xlu0 %834
          %836 = vrot.lane.b32.xlu0 %v796, 64
          %v837 = vpop.permute.xlu0 %836
          %838 = vrot.lane.b32.xlu0 %v797, 64
          %v839 = vpop.permute.xlu0 %838
          %840 = vrot.lane.b32.xlu0 %v798, 64
          %v841 = vpop.permute.xlu0 %840
          %842 = vrot.lane.b32.xlu0 %v799, 64
          %v843 = vpop.permute.xlu0 %842
          %844 = vrot.lane.b32.xlu0 %v800, 64
          %v845 = vpop.permute.xlu0 %844
          %846 = vrot.lane.b32.xlu0 %v801, 64
          %v847 = vpop.permute.xlu0 %846
          %848 = vrot.lane.b32.xlu0 %v802, 64
          %v849 = vpop.permute.xlu0 %848
          %850 = vrot.lane.b32.xlu0 %v803, 64
          %v851 = vpop.permute.xlu0 %850
          %v868 = vsel %vm623, %v772, %v821
          %v869 = vsel %vm623, %v773, %v823
          %v870 = vsel %vm623, %v774, %v825
          %v871 = vsel %vm623, %v775, %v827
          %v872 = vsel %vm623, %v776, %v829
          %v873 = vsel %vm623, %v777, %v831
          %v874 = vsel %vm623, %v778, %v833
          %v875 = vsel %vm623, %v779, %v835
          %v876 = vsel %vm623, %v780, %v837
          %v877 = vsel %vm623, %v781, %v839
          %v878 = vsel %vm623, %v782, %v841
          %v879 = vsel %vm623, %v783, %v843
          %v880 = vsel %vm623, %v784, %v845
          %v881 = vsel %vm623, %v785, %v847
          %v882 = vsel %vm623, %v786, %v849
          %v883 = vsel %vm623, %v787, %v851
          %v884 = vpack.c.bf16 %v869, %v868
          %v885 = vpack.c.bf16 %v714, %v713
          %v886 = vpack.c.bf16 %v871, %v870
          %v887 = vpack.c.bf16 %v716, %v715
          %v888 = vpack.c.bf16 %v873, %v872
          %v889 = vpack.c.bf16 %v718, %v717
          %v890 = vpack.c.bf16 %v875, %v874
          %v891 = vpack.c.bf16 %v720, %v719
          %v892 = vpack.c.bf16 %v877, %v876
          %v893 = vpack.c.bf16 %v722, %v721
          %v894 = vpack.c.bf16 %v879, %v878
          %v895 = vpack.c.bf16 %v724, %v723
          %v896 = vpack.c.bf16 %v881, %v880
          %v897 = vpack.c.bf16 %v726, %v725
          %v898 = vpack.c.bf16 %v883, %v882
          %v899 = vpack.c.bf16 %v728, %v727
          %s900 = smul.u32 %s729, 24
          %s901 = smul.addr %s900, 4
          %s902 = scalar_lea.vmem %s2, %s901
          %v903 = vld [vmem:[%s902] sm:$0xf]
          %v904 = vld [vmem:[%s902 + $0x4] sm:$0xf]
          %v905 = vld [vmem:[%s902 + $0x8] sm:$0xf]
          %v906 = vld [vmem:[%s902 + $0xc] sm:$0xf]
          %v907 = vld [vmem:[%s902 + $0x10] sm:$0xf]
          %v908 = vld [vmem:[%s902 + $0x14] sm:$0xf]
          %v909 = vld [vmem:[%s902 + $0x18] sm:$0xf]
          %v910 = vld [vmem:[%s902 + $0x1c] sm:$0xf]
          %v911 = vld [vmem:[%s902 + $0x20] sm:$0xf]
          %v912 = vld [vmem:[%s902 + $0x24] sm:$0xf]
          %v913 = vld [vmem:[%s902 + $0x28] sm:$0xf]
          %v914 = vld [vmem:[%s902 + $0x2c] sm:$0xf]
          %v915 = vld [vmem:[%s902 + $0x30] sm:$0xf]
          %v916 = vld [vmem:[%s902 + $0x34] sm:$0xf]
          %v917 = vld [vmem:[%s902 + $0x38] sm:$0xf]
          %v918 = vld [vmem:[%s902 + $0x3c] sm:$0xf]
          %v919 = vld [vmem:[%s902 + $0x40] sm:$0xf]
          %v920 = vld [vmem:[%s902 + $0x44] sm:$0xf]
          %v921 = vld [vmem:[%s902 + $0x48] sm:$0xf]
          %v922 = vld [vmem:[%s902 + $0x4c] sm:$0xf]
          %v923 = vld [vmem:[%s902 + $0x50] sm:$0xf]
          %v924 = vld [vmem:[%s902 + $0x54] sm:$0xf]
          %v925 = vld [vmem:[%s902 + $0x58] sm:$0xf]
          %v926 = vld [vmem:[%s902 + $0x5c] sm:$0xf]
          %s927 = scalar_lea.vmem %s3, %s729
          %v928 = vld [vmem:[%s927] sm:$0x1]
          %v930 = vlaneseq
          %v931 = vshrl.u32 %v930, 7
          %v932 = vsub.s32 0, %v931
          %v933 = vrot.slane %v928, %v932
          %v959 = vunpack.c.l.b16 %v903
          %v960 = vunpack.c.l.b16 %v904
          %v961 = vunpack.c.l.b16 %v905
          %v962 = vunpack.c.l.b16 %v906
          %v963 = vunpack.c.l.b16 %v907
          %v964 = vunpack.c.l.b16 %v908
          %v965 = vunpack.c.l.b16 %v909
          %v966 = vunpack.c.l.b16 %v910
          %v967 = vunpack.c.l.b16 %v911
          %v968 = vunpack.c.l.b16 %v912
          %v969 = vunpack.c.l.b16 %v913
          %v970 = vunpack.c.l.b16 %v914
          %v971 = vunpack.c.l.b16 %v915
          %v972 = vunpack.c.l.b16 %v916
          %v973 = vunpack.c.l.b16 %v917
          %v974 = vunpack.c.l.b16 %v918
          %v975 = vunpack.c.l.b16 %v919
          %v976 = vunpack.c.l.b16 %v920
          %v977 = vunpack.c.l.b16 %v921
          %v978 = vunpack.c.l.b16 %v922
          %v979 = vunpack.c.l.b16 %v923
          %v980 = vunpack.c.l.b16 %v924
          %v981 = vunpack.c.l.b16 %v925
          %v982 = vunpack.c.l.b16 %v926
          %v983 = vpack.c.b16 %v960, %v959
          %v984 = vpack.c.b16 %v962, %v961
          %v985 = vpack.c.b16 %v964, %v963
          %v986 = vpack.c.b16 %v966, %v965
          %v987 = vpack.c.b16 %v968, %v967
          %v988 = vpack.c.b16 %v970, %v969
          %v989 = vpack.c.b16 %v972, %v971
          %v990 = vpack.c.b16 %v974, %v973
          %v991 = vpack.c.b16 %v976, %v975
          %v992 = vpack.c.b16 %v978, %v977
          %v993 = vpack.c.b16 %v980, %v979
          %v994 = vpack.c.b16 %v982, %v981
          %v1008 = vsel %vm623, %v885, 0
          %v1011 = vsel %vm623, %v887, 0
          %v1014 = vsel %vm623, %v889, 0
          %v1017 = vsel %vm623, %v891, 0
          %v1020 = vsel %vm623, %v893, 0
          %v1023 = vsel %vm623, %v895, 0
          %v1026 = vsel %vm623, %v897, 0
          %v1029 = vsel %vm623, %v899, 0
          %1031 = vmatprep.subr.bf16.mxu0 0
          %1032 = vmatpush1.bf16.msra.mxu0 %v983
          %1033 = vmatprep.subr.bf16.mxu0 0
          %1034 = vmatpush1.bf16.msra.mxu0 %v984
          %1035 = vmatprep.subr.bf16.mxu0 0
          %1036 = vmatpush1.bf16.msra.mxu0 %v985
          %1037 = vmatprep.subr.bf16.mxu0 0
          %1038 = vmatpush1.bf16.msra.mxu0 %v986
          %1039 = vmatprep.subr.bf16.mxu0 0
          %1040 = vmatpush1.bf16.msra.mxu0 %v987
          %1041 = vmatprep.subr.bf16.mxu0 0
          %1042 = vmatpush1.bf16.msra.mxu0 %v988
          %1043 = vmatprep.subr.bf16.mxu0 0
          %1044 = vmatpush1.bf16.msra.mxu0 %v989
          %1045 = vmatprep.subr.bf16.mxu0 0
          %1046 = vmatpush1.bf16.msra.mxu0 %v990
          %1047 = vmatprep.subr.bf16.mxu0 0
          %1048 = vmatpush1.bf16.msra.mxu0 %v991
          %1049 = vmatprep.subr.bf16.mxu0 0
          %1050 = vmatpush1.bf16.msra.mxu0 %v992
          %1051 = vmatprep.subr.bf16.mxu0 0
          %1052 = vmatpush1.bf16.msra.mxu0 %v993
          %1053 = vmatprep.subr.bf16.mxu0 0
          %1054 = vmatpush1.bf16.msra.mxu0 %v994
          %1055 = vmatprep.subr.bf16.mxu0 0
          %1056 = vmatpush1.bf16.msra.mxu0 0
          %1057 = vmatprep.subr.bf16.mxu0 0
          %1058 = vmatpush1.bf16.msra.mxu0 0
          %1059 = vmatprep.subr.bf16.mxu0 0
          %1060 = vmatpush1.bf16.msra.mxu0 0
          %1061 = vmatprep.subr.bf16.mxu0 0
          %1062 = vmatpush1.bf16.msra.mxu0 0
          %1063 = vmatprep.mubr.bf16.mxu0 %v1008
          %1064 = vmatmul.mubr.bf16.gmra.mrb[0].mxu0 %v884
          %v1065 = vpop.f32.mrb[0].mxu0
          %v1066 = vadd.f32 %v933, %v1065
          %v1067 = vpop.f32.mrb[0].mxu0
          %v1068 = vpop.f32.mrb[0].mxu0
          %v1069 = vadd.f32 %v933, %v1068
          %v1070 = vpop.f32.mrb[0].mxu0
          %1071 = vmatprep.mubr.bf16.mxu0 %v1011
          %1072 = vmatmul.mubr.bf16.gmra.mrb[0].mxu0 %v886
          %v1073 = vpop.f32.mrb[0].mxu0
          %v1074 = vadd.f32 %v933, %v1073
          %v1075 = vpop.f32.mrb[0].mxu0
          %v1076 = vpop.f32.mrb[0].mxu0
          %v1077 = vadd.f32 %v933, %v1076
          %v1078 = vpop.f32.mrb[0].mxu0
          %1079 = vmatprep.mubr.bf16.mxu0 %v1014
          %1080 = vmatmul.mubr.bf16.gmra.mrb[0].mxu0 %v888
          %v1081 = vpop.f32.mrb[0].mxu0
          %v1082 = vadd.f32 %v933, %v1081
          %v1083 = vpop.f32.mrb[0].mxu0
          %v1084 = vpop.f32.mrb[0].mxu0
          %v1085 = vadd.f32 %v933, %v1084
          %v1086 = vpop.f32.mrb[0].mxu0
          %1087 = vmatprep.mubr.bf16.mxu0 %v1017
          %1088 = vmatmul.mubr.bf16.gmra.mrb[0].mxu0 %v890
          %v1089 = vpop.f32.mrb[0].mxu0
          %v1090 = vadd.f32 %v933, %v1089
          %v1091 = vpop.f32.mrb[0].mxu0
          %v1092 = vpop.f32.mrb[0].mxu0
          %v1093 = vadd.f32 %v933, %v1092
          %v1094 = vpop.f32.mrb[0].mxu0
          %1095 = vmatprep.mubr.bf16.mxu0 %v1020
          %1096 = vmatmul.mubr.bf16.gmra.mrb[0].mxu0 %v892
          %v1097 = vpop.f32.mrb[0].mxu0
          %v1098 = vadd.f32 %v933, %v1097
          %v1099 = vpop.f32.mrb[0].mxu0
          %v1100 = vpop.f32.mrb[0].mxu0
          %v1101 = vadd.f32 %v933, %v1100
          %v1102 = vpop.f32.mrb[0].mxu0
          %1103 = vmatprep.mubr.bf16.mxu0 %v1023
          %1104 = vmatmul.mubr.bf16.gmra.mrb[0].mxu0 %v894
          %v1105 = vpop.f32.mrb[0].mxu0
          %v1106 = vadd.f32 %v933, %v1105
          %v1107 = vpop.f32.mrb[0].mxu0
          %v1108 = vpop.f32.mrb[0].mxu0
          %v1109 = vadd.f32 %v933, %v1108
          %v1110 = vpop.f32.mrb[0].mxu0
          %1111 = vmatprep.mubr.bf16.mxu0 %v1026
          %1112 = vmatmul.mubr.bf16.gmra.mrb[0].mxu0 %v896
          %v1113 = vpop.f32.mrb[0].mxu0
          %v1114 = vadd.f32 %v933, %v1113
          %v1115 = vpop.f32.mrb[0].mxu0
          %v1116 = vpop.f32.mrb[0].mxu0
          %v1117 = vadd.f32 %v933, %v1116
          %v1118 = vpop.f32.mrb[0].mxu0
          %1119 = vmatprep.mubr.bf16.mxu0 %v1029
          %1120 = vmatmul.mubr.bf16.gmra.mrb[0].mxu0 %v898
          %v1121 = vpop.f32.mrb[0].mxu0
          %v1122 = vadd.f32 %v933, %v1121
          %v1123 = vpop.f32.mrb[0].mxu0
          %v1124 = vpop.f32.mrb[0].mxu0
          %v1125 = vadd.f32 %v933, %v1124
          %v1126 = vpop.f32.mrb[0].mxu0
          %1127 = vdwg.mxu0
          %v1128 = vmax.f32 %v1066, 0.0
          %v1129 = vmax.f32 %v1069, 0.0
          %v1130 = vmax.f32 %v1074, 0.0
          %v1131 = vmax.f32 %v1077, 0.0
          %v1132 = vmax.f32 %v1082, 0.0
          %v1133 = vmax.f32 %v1085, 0.0
          %v1134 = vmax.f32 %v1090, 0.0
          %v1135 = vmax.f32 %v1093, 0.0
          %v1136 = vmax.f32 %v1098, 0.0
          %v1137 = vmax.f32 %v1101, 0.0
          %v1138 = vmax.f32 %v1106, 0.0
          %v1139 = vmax.f32 %v1109, 0.0
          %v1140 = vmax.f32 %v1114, 0.0
          %v1141 = vmax.f32 %v1117, 0.0
          %v1142 = vmax.f32 %v1122, 0.0
          %v1143 = vmax.f32 %v1125, 0.0
          %v1144 = vadd.f32 %v1128, %v675
          %v1145 = vadd.f32 %v1129, %v676
          %v1146 = vadd.f32 %v1130, %v677
          %v1147 = vadd.f32 %v1131, %v678
          %v1148 = vadd.f32 %v1132, %v679
          %v1149 = vadd.f32 %v1133, %v680
          %v1150 = vadd.f32 %v1134, %v681
          %v1151 = vadd.f32 %v1135, %v682
          %v1152 = vadd.f32 %v1136, %v683
          %v1153 = vadd.f32 %v1137, %v684
          %v1154 = vadd.f32 %v1138, %v685
          %v1155 = vadd.f32 %v1139, %v686
          %v1156 = vadd.f32 %v1140, %v687
          %v1157 = vadd.f32 %v1141, %v688
          %v1158 = vadd.f32 %v1142, %v689
          %v1159 = vadd.f32 %v1143, %v690
          %v1160 = vpack.c.bf16 %v1145, %v1144
          %v1161 = vpack.c.bf16 %v1147, %v1146
          %v1162 = vpack.c.bf16 %v1149, %v1148
          %v1163 = vpack.c.bf16 %v1151, %v1150
          %v1164 = vpack.c.bf16 %v1153, %v1152
          %v1165 = vpack.c.bf16 %v1155, %v1154
          %v1166 = vpack.c.bf16 %v1157, %v1156
          %v1167 = vpack.c.bf16 %v1159, %v1158
          %s1168 = smul.u32 %s729, 8
          %s1169 = smul.addr %s1168, 4
          %s1170 = scalar_lea.vmem %s4, %s1169
          %v1171 = vld [vmem:[%s1170] sm:$0xf]
          %v1172 = vld [vmem:[%s1170 + $0x4] sm:$0xf]
          %v1173 = vld [vmem:[%s1170 + $0x8] sm:$0xf]
          %v1174 = vld [vmem:[%s1170 + $0xc] sm:$0xf]
          %v1175 = vld [vmem:[%s1170 + $0x10] sm:$0xf]
          %v1176 = vld [vmem:[%s1170 + $0x14] sm:$0xf]
          %v1177 = vld [vmem:[%s1170 + $0x18] sm:$0xf]
          %v1178 = vld [vmem:[%s1170 + $0x1c] sm:$0xf]
          %s1179 = scalar_lea.vmem %s5, %s729
          %v1180 = vld [vmem:[%s1179] sm:$0x1]
          %v1182 = vlaneseq
          %v1183 = vshrl.u32 %v1182, 7
          %v1184 = vsub.s32 0, %v1183
          %v1185 = vrot.slane %v1180, %v1184
          %v1195 = vunpack.c.l.b16 %v1171
          %v1196 = vunpack.c.l.b16 %v1172
          %v1197 = vunpack.c.l.b16 %v1173
          %v1198 = vunpack.c.l.b16 %v1174
          %v1199 = vunpack.c.l.b16 %v1175
          %v1200 = vunpack.c.l.b16 %v1176
          %v1201 = vunpack.c.l.b16 %v1177
          %v1202 = vunpack.c.l.b16 %v1178
          %v1203 = vpack.c.b16 %v1196, %v1195
          %v1204 = vpack.c.b16 %v1198, %v1197
          %v1205 = vpack.c.b16 %v1200, %v1199
          %v1206 = vpack.c.b16 %v1202, %v1201
          %v1212 = vsel %vm623, %v1160, 0
          %v1215 = vsel %vm623, %v1161, 0
          %v1218 = vsel %vm623, %v1162, 0
          %v1221 = vsel %vm623, %v1163, 0
          %v1224 = vsel %vm623, %v1164, 0
          %v1227 = vsel %vm623, %v1165, 0
          %v1230 = vsel %vm623, %v1166, 0
          %v1233 = vsel %vm623, %v1167, 0
          %1235 = vmatprep.subr.bf16.mxu0 0
          %1236 = vmatpush1.bf16.msra.mxu0 %v1203
          %1237 = vmatprep.subr.bf16.mxu0 0
          %1238 = vmatpush1.bf16.msra.mxu0 %v1204
          %1239 = vmatprep.subr.bf16.mxu0 0
          %1240 = vmatpush1.bf16.msra.mxu0 %v1205
          %1241 = vmatprep.subr.bf16.mxu0 0
          %1242 = vmatpush1.bf16.msra.mxu0 %v1206
          %1243 = vmatprep.subr.bf16.mxu0 0
          %1244 = vmatpush1.bf16.msra.mxu0 0
          %1245 = vmatprep.subr.bf16.mxu0 0
          %1246 = vmatpush1.bf16.msra.mxu0 0
          %1247 = vmatprep.subr.bf16.mxu0 0
          %1248 = vmatpush1.bf16.msra.mxu0 0
          %1249 = vmatprep.subr.bf16.mxu0 0
          %1250 = vmatpush1.bf16.msra.mxu0 0
          %1251 = vmatprep.subr.bf16.mxu0 0
          %1252 = vmatpush1.bf16.msra.mxu0 0
          %1253 = vmatprep.subr.bf16.mxu0 0
          %1254 = vmatpush1.bf16.msra.mxu0 0
          %1255 = vmatprep.subr.bf16.mxu0 0
          %1256 = vmatpush1.bf16.msra.mxu0 0
          %1257 = vmatprep.subr.bf16.mxu0 0
          %1258 = vmatpush1.bf16.msra.mxu0 0
          %1259 = vmatprep.subr.bf16.mxu0 0
          %1260 = vmatpush1.bf16.msra.mxu0 0
          %1261 = vmatprep.subr.bf16.mxu0 0
          %1262 = vmatpush1.bf16.msra.mxu0 0
          %1263 = vmatprep.subr.bf16.mxu0 0
          %1264 = vmatpush1.bf16.msra.mxu0 0
          %1265 = vmatprep.subr.bf16.mxu0 0
          %1266 = vmatpush1.bf16.msra.mxu0 0
          %1267 = vmatprep.mubr.bf16.mxu0 0
          %1268 = vmatmul.mubr.bf16.gmra.mrb[0].mxu0 %v1212
          %v1269 = vpop.f32.mrb[0].mxu0
          %v1270 = vadd.f32 %v1185, %v1269
          %v1271 = vpop.f32.mrb[0].mxu0
          %v1272 = vpop.f32.mrb[0].mxu0
          %v1273 = vadd.f32 %v1185, %v1272
          %v1274 = vpop.f32.mrb[0].mxu0
          %1275 = vmatprep.mubr.bf16.mxu0 0
          %1276 = vmatmul.mubr.bf16.gmra.mrb[0].mxu0 %v1215
          %v1277 = vpop.f32.mrb[0].mxu0
          %v1278 = vadd.f32 %v1185, %v1277
          %v1279 = vpop.f32.mrb[0].mxu0
          %v1280 = vpop.f32.mrb[0].mxu0
          %v1281 = vadd.f32 %v1185, %v1280
          %v1282 = vpop.f32.mrb[0].mxu0
          %1283 = vmatprep.mubr.bf16.mxu0 0
          %1284 = vmatmul.mubr.bf16.gmra.mrb[0].mxu0 %v1218
          %v1285 = vpop.f32.mrb[0].mxu0
          %v1286 = vadd.f32 %v1185, %v1285
          %v1287 = vpop.f32.mrb[0].mxu0
          %v1288 = vpop.f32.mrb[0].mxu0
          %v1289 = vadd.f32 %v1185, %v1288
          %v1290 = vpop.f32.mrb[0].mxu0
          %1291 = vmatprep.mubr.bf16.mxu0 0
          %1292 = vmatmul.mubr.bf16.gmra.mrb[0].mxu0 %v1221
          %v1293 = vpop.f32.mrb[0].mxu0
          %v1294 = vadd.f32 %v1185, %v1293
          %v1295 = vpop.f32.mrb[0].mxu0
          %v1296 = vpop.f32.mrb[0].mxu0
          %v1297 = vadd.f32 %v1185, %v1296
          %v1298 = vpop.f32.mrb[0].mxu0
          %1299 = vmatprep.mubr.bf16.mxu0 0
          %1300 = vmatmul.mubr.bf16.gmra.mrb[0].mxu0 %v1224
          %v1301 = vpop.f32.mrb[0].mxu0
          %v1302 = vadd.f32 %v1185, %v1301
          %v1303 = vpop.f32.mrb[0].mxu0
          %v1304 = vpop.f32.mrb[0].mxu0
          %v1305 = vadd.f32 %v1185, %v1304
          %v1306 = vpop.f32.mrb[0].mxu0
          %1307 = vmatprep.mubr.bf16.mxu0 0
          %1308 = vmatmul.mubr.bf16.gmra.mrb[0].mxu0 %v1227
          %v1309 = vpop.f32.mrb[0].mxu0
          %v1310 = vadd.f32 %v1185, %v1309
          %v1311 = vpop.f32.mrb[0].mxu0
          %v1312 = vpop.f32.mrb[0].mxu0
          %v1313 = vadd.f32 %v1185, %v1312
          %v1314 = vpop.f32.mrb[0].mxu0
          %1315 = vmatprep.mubr.bf16.mxu0 0
          %1316 = vmatmul.mubr.bf16.gmra.mrb[0].mxu0 %v1230
          %v1317 = vpop.f32.mrb[0].mxu0
          %v1318 = vadd.f32 %v1185, %v1317
          %v1319 = vpop.f32.mrb[0].mxu0
          %v1320 = vpop.f32.mrb[0].mxu0
          %v1321 = vadd.f32 %v1185, %v1320
          %v1322 = vpop.f32.mrb[0].mxu0
          %1323 = vmatprep.mubr.bf16.mxu0 0
          %1324 = vmatmul.mubr.bf16.gmra.mrb[0].mxu0 %v1233
          %v1325 = vpop.f32.mrb[0].mxu0
          %v1326 = vadd.f32 %v1185, %v1325
          %v1327 = vpop.f32.mrb[0].mxu0
          %v1328 = vpop.f32.mrb[0].mxu0
          %v1329 = vadd.f32 %v1185, %v1328
          %v1330 = vpop.f32.mrb[0].mxu0
          %1331 = vdwg.mxu0
          %v1332 = vadd.f32 %v1270, %v713
          %v1333 = vadd.f32 %v1273, %v714
          %v1334 = vadd.f32 %v1278, %v715
          %v1335 = vadd.f32 %v1281, %v716
          %v1336 = vadd.f32 %v1286, %v717
          %v1337 = vadd.f32 %v1289, %v718
          %v1338 = vadd.f32 %v1294, %v719
          %v1339 = vadd.f32 %v1297, %v720
          %v1340 = vadd.f32 %v1302, %v721
          %v1341 = vadd.f32 %v1305, %v722
          %v1342 = vadd.f32 %v1310, %v723
          %v1343 = vadd.f32 %v1313, %v724
          %v1344 = vadd.f32 %v1318, %v725
          %v1345 = vadd.f32 %v1321, %v726
          %v1346 = vadd.f32 %v1326, %v727
          %v1347 = vadd.f32 %v1329, %v728
          %v1348 = vmul.f32 %v1332, 0.70710677
          %v1349 = vmul.f32 %v1333, 0.70710677
          %v1350 = vmul.f32 %v1334, 0.70710677
          %v1351 = vmul.f32 %v1335, 0.70710677
          %v1352 = vmul.f32 %v1336, 0.70710677
          %v1353 = vmul.f32 %v1337, 0.70710677
          %v1354 = vmul.f32 %v1338, 0.70710677
          %v1355 = vmul.f32 %v1339, 0.70710677
          %v1356 = vmul.f32 %v1340, 0.70710677
          %v1357 = vmul.f32 %v1341, 0.70710677
          %v1358 = vmul.f32 %v1342, 0.70710677
          %v1359 = vmul.f32 %v1343, 0.70710677
          %v1360 = vmul.f32 %v1344, 0.70710677
          %v1361 = vmul.f32 %v1345, 0.70710677
          %v1362 = vmul.f32 %v1346, 0.70710677
          %v1363 = vmul.f32 %v1347, 0.70710677
          %s1364 = sadd.s32 %s729, 1
          %s1365 = smul.u32 %s1364, 64
          %s1366 = scalar_lea.vmem [#allocation4], %s1365
          %v1367 = vld [vmem:[%s1366] sm:$0xff]
          %v1368 = vld [vmem:[%s1366 + $0x8] sm:$0xff]
          %v1369 = vld [vmem:[%s1366 + $0x10] sm:$0xff]
          %v1370 = vld [vmem:[%s1366 + $0x18] sm:$0xff]
          %v1371 = vld [vmem:[%s1366 + $0x20] sm:$0xff]
          %v1372 = vld [vmem:[%s1366 + $0x28] sm:$0xff]
          %v1373 = vld [vmem:[%s1366 + $0x30] sm:$0xff]
          %v1374 = vld [vmem:[%s1366 + $0x38] sm:$0xff]
          %1375 = vst.msk [vmem:[#allocation2] sm:$0xff] %vm623, %v1367
          %1376 = vst.msk [vmem:[#allocation2 + $0x8] sm:$0xff] %vm623, %v1368
          %1377 = vst.msk [vmem:[#allocation2 + $0x10] sm:$0xff] %vm623, %v1369
          %1378 = vst.msk [vmem:[#allocation2 + $0x18] sm:$0xff] %vm623, %v1370
          %1379 = vst.msk [vmem:[#allocation2 + $0x20] sm:$0xff] %vm623, %v1371
          %1380 = vst.msk [vmem:[#allocation2 + $0x28] sm:$0xff] %vm623, %v1372
          %1381 = vst.msk [vmem:[#allocation2 + $0x30] sm:$0xff] %vm623, %v1373
          %1382 = vst.msk [vmem:[#allocation2 + $0x38] sm:$0xff] %vm623, %v1374
          %1383 = vst.msk [vmem:[#allocation2 + $0x40] sm:$0xff] %vm623, %v1348
          %1384 = vst.msk [vmem:[#allocation2 + $0x48] sm:$0xff] %vm623, %v1349
          %1385 = vst.msk [vmem:[#allocation2 + $0x50] sm:$0xff] %vm623, %v1350
          %1386 = vst.msk [vmem:[#allocation2 + $0x58] sm:$0xff] %vm623, %v1351
          %1387 = vst.msk [vmem:[#allocation2 + $0x60] sm:$0xff] %vm623, %v1352
          %1388 = vst.msk [vmem:[#allocation2 + $0x68] sm:$0xff] %vm623, %v1353
          %1389 = vst.msk [vmem:[#allocation2 + $0x70] sm:$0xff] %vm623, %v1354
          %1390 = vst.msk [vmem:[#allocation2 + $0x78] sm:$0xff] %vm623, %v1355
          %1391 = vst.msk [vmem:[#allocation2 + $0x80] sm:$0xff] %vm623, %v1356
          %1392 = vst.msk [vmem:[#allocation2 + $0x88] sm:$0xff] %vm623, %v1357
          %1393 = vst.msk [vmem:[#allocation2 + $0x90] sm:$0xff] %vm623, %v1358
          %1394 = vst.msk [vmem:[#allocation2 + $0x98] sm:$0xff] %vm623, %v1359
          %1395 = vst.msk [vmem:[#allocation2 + $0xa0] sm:$0xff] %vm623, %v1360
          %1396 = vst.msk [vmem:[#allocation2 + $0xa8] sm:$0xff] %vm623, %v1361
          %1397 = vst.msk [vmem:[#allocation2 + $0xb0] sm:$0xff] %vm623, %v1362
          %1398 = vst.msk [vmem:[#allocation2 + $0xb8] sm:$0xff] %vm623, %v1363
          %1399 = vst.msk [vmem:[%s1366] sm:$0xff] %vm623, %v1356
          %1400 = vst.msk [vmem:[%s1366 + $0x8] sm:$0xff] %vm623, %v1357
          %1401 = vst.msk [vmem:[%s1366 + $0x10] sm:$0xff] %vm623, %v1358
          %1402 = vst.msk [vmem:[%s1366 + $0x18] sm:$0xff] %vm623, %v1359
          %1403 = vst.msk [vmem:[%s1366 + $0x20] sm:$0xff] %vm623, %v1360
          %1404 = vst.msk [vmem:[%s1366 + $0x28] sm:$0xff] %vm623, %v1361
          %1405 = vst.msk [vmem:[%s1366 + $0x30] sm:$0xff] %vm623, %v1362
          %1406 = vst.msk [vmem:[%s1366 + $0x38] sm:$0xff] %vm623, %v1363
          %v1407 = vld [vmem:[#allocation2 + $0x3c] sm:$0xff]
          %v1408 = vld [vmem:[#allocation2 + $0x44] sm:$0xff]
          %v1409 = vld [vmem:[#allocation2 + $0x4c] sm:$0xff]
          %v1410 = vld [vmem:[#allocation2 + $0x54] sm:$0xff]
          %v1411 = vld [vmem:[#allocation2 + $0x5c] sm:$0xff]
          %v1412 = vld [vmem:[#allocation2 + $0x64] sm:$0xff]
          %v1413 = vld [vmem:[#allocation2 + $0x6c] sm:$0xff]
          %v1414 = vld [vmem:[#allocation2 + $0x74] sm:$0xff]
          %v1415 = vld [vmem:[#allocation2 + $0x7c] sm:$0xff]
          %v1416 = vld [vmem:[#allocation2 + $0x84] sm:$0xff]
          %v1417 = vld [vmem:[#allocation2 + $0x8c] sm:$0xff]
          %v1418 = vld [vmem:[#allocation2 + $0x94] sm:$0xff]
          %v1419 = vld [vmem:[#allocation2 + $0x9c] sm:$0xff]
          %v1420 = vld [vmem:[#allocation2 + $0xa4] sm:$0xff]
          %v1421 = vld [vmem:[#allocation2 + $0xac] sm:$0xff]
          %v1422 = vld [vmem:[#allocation2 + $0xb4] sm:$0xff]
          %v1423 = vld [vmem:[#allocation2 + $0x3e] sm:$0xff]
          %v1424 = vld [vmem:[#allocation2 + $0x46] sm:$0xff]
          %v1425 = vld [vmem:[#allocation2 + $0x4e] sm:$0xff]
          %v1426 = vld [vmem:[#allocation2 + $0x56] sm:$0xff]
          %v1427 = vld [vmem:[#allocation2 + $0x5e] sm:$0xff]
          %v1428 = vld [vmem:[#allocation2 + $0x66] sm:$0xff]
          %v1429 = vld [vmem:[#allocation2 + $0x6e] sm:$0xff]
          %v1430 = vld [vmem:[#allocation2 + $0x76] sm:$0xff]
          %v1431 = vld [vmem:[#allocation2 + $0x7e] sm:$0xff]
          %v1432 = vld [vmem:[#allocation2 + $0x86] sm:$0xff]
          %v1433 = vld [vmem:[#allocation2 + $0x8e] sm:$0xff]
          %v1434 = vld [vmem:[#allocation2 + $0x96] sm:$0xff]
          %v1435 = vld [vmem:[#allocation2 + $0x9e] sm:$0xff]
          %v1436 = vld [vmem:[#allocation2 + $0xa6] sm:$0xff]
          %v1437 = vld [vmem:[#allocation2 + $0xae] sm:$0xff]
          %v1438 = vld [vmem:[#allocation2 + $0xb6] sm:$0xff]
          %1455 = vrot.lane.b32.xlu0 %v1423, 64
          %v1456 = vpop.permute.xlu0 %1455
          %1457 = vrot.lane.b32.xlu0 %v1424, 64
          %v1458 = vpop.permute.xlu0 %1457
          %1459 = vrot.lane.b32.xlu0 %v1425, 64
          %v1460 = vpop.permute.xlu0 %1459
          %1461 = vrot.lane.b32.xlu0 %v1426, 64
          %v1462 = vpop.permute.xlu0 %1461
          %1463 = vrot.lane.b32.xlu0 %v1427, 64
          %v1464 = vpop.permute.xlu0 %1463
          %1465 = vrot.lane.b32.xlu0 %v1428, 64
          %v1466 = vpop.permute.xlu0 %1465
          %1467 = vrot.lane.b32.xlu0 %v1429, 64
          %v1468 = vpop.permute.xlu0 %1467
          %1469 = vrot.lane.b32.xlu0 %v1430, 64
          %v1470 = vpop.permute.xlu0 %1469
          %1471 = vrot.lane.b32.xlu0 %v1431, 64
          %v1472 = vpop.permute.xlu0 %1471
          %1473 = vrot.lane.b32.xlu0 %v1432, 64
          %v1474 = vpop.permute.xlu0 %1473
          %1475 = vrot.lane.b32.xlu0 %v1433, 64
          %v1476 = vpop.permute.xlu0 %1475
          %1477 = vrot.lane.b32.xlu0 %v1434, 64
          %v1478 = vpop.permute.xlu0 %1477
          %1479 = vrot.lane.b32.xlu0 %v1435, 64
          %v1480 = vpop.permute.xlu0 %1479
          %1481 = vrot.lane.b32.xlu0 %v1436, 64
          %v1482 = vpop.permute.xlu0 %1481
          %1483 = vrot.lane.b32.xlu0 %v1437, 64
          %v1484 = vpop.permute.xlu0 %1483
          %1485 = vrot.lane.b32.xlu0 %v1438, 64
          %v1486 = vpop.permute.xlu0 %1485
          %v1503 = vsel %vm623, %v1407, %v1456
          %v1504 = vsel %vm623, %v1408, %v1458
          %v1505 = vsel %vm623, %v1409, %v1460
          %v1506 = vsel %vm623, %v1410, %v1462
          %v1507 = vsel %vm623, %v1411, %v1464
          %v1508 = vsel %vm623, %v1412, %v1466
          %v1509 = vsel %vm623, %v1413, %v1468
          %v1510 = vsel %vm623, %v1414, %v1470
          %v1511 = vsel %vm623, %v1415, %v1472
          %v1512 = vsel %vm623, %v1416, %v1474
          %v1513 = vsel %vm623, %v1417, %v1476
          %v1514 = vsel %vm623, %v1418, %v1478
          %v1515 = vsel %vm623, %v1419, %v1480
          %v1516 = vsel %vm623, %v1420, %v1482
          %v1517 = vsel %vm623, %v1421, %v1484
          %v1518 = vsel %vm623, %v1422, %v1486
          %v1519 = vpack.c.bf16 %v1504, %v1503
          %v1520 = vpack.c.bf16 %v1349, %v1348
          %v1521 = vpack.c.bf16 %v1506, %v1505
          %v1522 = vpack.c.bf16 %v1351, %v1350
          %v1523 = vpack.c.bf16 %v1508, %v1507
          %v1524 = vpack.c.bf16 %v1353, %v1352
          %v1525 = vpack.c.bf16 %v1510, %v1509
          %v1526 = vpack.c.bf16 %v1355, %v1354
          %v1527 = vpack.c.bf16 %v1512, %v1511
          %v1528 = vpack.c.bf16 %v1357, %v1356
          %v1529 = vpack.c.bf16 %v1514, %v1513
          %v1530 = vpack.c.bf16 %v1359, %v1358
          %v1531 = vpack.c.bf16 %v1516, %v1515
          %v1532 = vpack.c.bf16 %v1361, %v1360
          %v1533 = vpack.c.bf16 %v1518, %v1517
          %v1534 = vpack.c.bf16 %v1363, %v1362
          %s1535 = smul.u32 %s1364, 24
          %s1536 = smul.addr %s1535, 4
          %s1537 = scalar_lea.vmem %s2, %s1536
          %v1538 = vld [vmem:[%s1537] sm:$0xf]
          %v1539 = vld [vmem:[%s1537 + $0x4] sm:$0xf]
          %v1540 = vld [vmem:[%s1537 + $0x8] sm:$0xf]
          %v1541 = vld [vmem:[%s1537 + $0xc] sm:$0xf]
          %v1542 = vld [vmem:[%s1537 + $0x10] sm:$0xf]
          %v1543 = vld [vmem:[%s1537 + $0x14] sm:$0xf]
          %v1544 = vld [vmem:[%s1537 + $0x18] sm:$0xf]
          %v1545 = vld [vmem:[%s1537 + $0x1c] sm:$0xf]
          %v1546 = vld [vmem:[%s1537 + $0x20] sm:$0xf]
          %v1547 = vld [vmem:[%s1537 + $0x24] sm:$0xf]
          %v1548 = vld [vmem:[%s1537 + $0x28] sm:$0xf]
          %v1549 = vld [vmem:[%s1537 + $0x2c] sm:$0xf]
          %v1550 = vld [vmem:[%s1537 + $0x30] sm:$0xf]
          %v1551 = vld [vmem:[%s1537 + $0x34] sm:$0xf]
          %v1552 = vld [vmem:[%s1537 + $0x38] sm:$0xf]
          %v1553 = vld [vmem:[%s1537 + $0x3c] sm:$0xf]
          %v1554 = vld [vmem:[%s1537 + $0x40] sm:$0xf]
          %v1555 = vld [vmem:[%s1537 + $0x44] sm:$0xf]
          %v1556 = vld [vmem:[%s1537 + $0x48] sm:$0xf]
          %v1557 = vld [vmem:[%s1537 + $0x4c] sm:$0xf]
          %v1558 = vld [vmem:[%s1537 + $0x50] sm:$0xf]
          %v1559 = vld [vmem:[%s1537 + $0x54] sm:$0xf]
          %v1560 = vld [vmem:[%s1537 + $0x58] sm:$0xf]
          %v1561 = vld [vmem:[%s1537 + $0x5c] sm:$0xf]
          %s1562 = scalar_lea.vmem %s3, %s1364
          %v1563 = vld [vmem:[%s1562] sm:$0x1]
          %v1565 = vlaneseq
          %v1566 = vshrl.u32 %v1565, 7
          %v1567 = vsub.s32 0, %v1566
          %v1568 = vrot.slane %v1563, %v1567
          %v1594 = vunpack.c.l.b16 %v1538
          %v1595 = vunpack.c.l.b16 %v1539
          %v1596 = vunpack.c.l.b16 %v1540
          %v1597 = vunpack.c.l.b16 %v1541
          %v1598 = vunpack.c.l.b16 %v1542
          %v1599 = vunpack.c.l.b16 %v1543
          %v1600 = vunpack.c.l.b16 %v1544
          %v1601 = vunpack.c.l.b16 %v1545
          %v1602 = vunpack.c.l.b16 %v1546
          %v1603 = vunpack.c.l.b16 %v1547
          %v1604 = vunpack.c.l.b16 %v1548
          %v1605 = vunpack.c.l.b16 %v1549
          %v1606 = vunpack.c.l.b16 %v1550
          %v1607 = vunpack.c.l.b16 %v1551
          %v1608 = vunpack.c.l.b16 %v1552
          %v1609 = vunpack.c.l.b16 %v1553
          %v1610 = vunpack.c.l.b16 %v1554
          %v1611 = vunpack.c.l.b16 %v1555
          %v1612 = vunpack.c.l.b16 %v1556
          %v1613 = vunpack.c.l.b16 %v1557
          %v1614 = vunpack.c.l.b16 %v1558
          %v1615 = vunpack.c.l.b16 %v1559
          %v1616 = vunpack.c.l.b16 %v1560
          %v1617 = vunpack.c.l.b16 %v1561
          %v1618 = vpack.c.b16 %v1595, %v1594
          %v1619 = vpack.c.b16 %v1597, %v1596
          %v1620 = vpack.c.b16 %v1599, %v1598
          %v1621 = vpack.c.b16 %v1601, %v1600
          %v1622 = vpack.c.b16 %v1603, %v1602
          %v1623 = vpack.c.b16 %v1605, %v1604
          %v1624 = vpack.c.b16 %v1607, %v1606
          %v1625 = vpack.c.b16 %v1609, %v1608
          %v1626 = vpack.c.b16 %v1611, %v1610
          %v1627 = vpack.c.b16 %v1613, %v1612
          %v1628 = vpack.c.b16 %v1615, %v1614
          %v1629 = vpack.c.b16 %v1617, %v1616
          %v1643 = vsel %vm623, %v1520, 0
          %v1646 = vsel %vm623, %v1522, 0
          %v1649 = vsel %vm623, %v1524, 0
          %v1652 = vsel %vm623, %v1526, 0
          %v1655 = vsel %vm623, %v1528, 0
          %v1658 = vsel %vm623, %v1530, 0
          %v1661 = vsel %vm623, %v1532, 0
          %v1664 = vsel %vm623, %v1534, 0
          %1666 = vmatprep.subr.bf16.mxu0 0
          %1667 = vmatpush1.bf16.msra.mxu0 %v1618
          %1668 = vmatprep.subr.bf16.mxu0 0
          %1669 = vmatpush1.bf16.msra.mxu0 %v1619
          %1670 = vmatprep.subr.bf16.mxu0 0
          %1671 = vmatpush1.bf16.msra.mxu0 %v1620
          %1672 = vmatprep.subr.bf16.mxu0 0
          %1673 = vmatpush1.bf16.msra.mxu0 %v1621
          %1674 = vmatprep.subr.bf16.mxu0 0
          %1675 = vmatpush1.bf16.msra.mxu0 %v1622
          %1676 = vmatprep.subr.bf16.mxu0 0
          %1677 = vmatpush1.bf16.msra.mxu0 %v1623
          %1678 = vmatprep.subr.bf16.mxu0 0
          %1679 = vmatpush1.bf16.msra.mxu0 %v1624
          %1680 = vmatprep.subr.bf16.mxu0 0
          %1681 = vmatpush1.bf16.msra.mxu0 %v1625
          %1682 = vmatprep.subr.bf16.mxu0 0
          %1683 = vmatpush1.bf16.msra.mxu0 %v1626
          %1684 = vmatprep.subr.bf16.mxu0 0
          %1685 = vmatpush1.bf16.msra.mxu0 %v1627
          %1686 = vmatprep.subr.bf16.mxu0 0
          %1687 = vmatpush1.bf16.msra.mxu0 %v1628
          %1688 = vmatprep.subr.bf16.mxu0 0
          %1689 = vmatpush1.bf16.msra.mxu0 %v1629
          %1690 = vmatprep.subr.bf16.mxu0 0
          %1691 = vmatpush1.bf16.msra.mxu0 0
          %1692 = vmatprep.subr.bf16.mxu0 0
          %1693 = vmatpush1.bf16.msra.mxu0 0
          %1694 = vmatprep.subr.bf16.mxu0 0
          %1695 = vmatpush1.bf16.msra.mxu0 0
          %1696 = vmatprep.subr.bf16.mxu0 0
          %1697 = vmatpush1.bf16.msra.mxu0 0
          %1698 = vmatprep.mubr.bf16.mxu0 %v1643
          %1699 = vmatmul.mubr.bf16.gmra.mrb[0].mxu0 %v1519
          %v1700 = vpop.f32.mrb[0].mxu0
          %v1701 = vadd.f32 %v1568, %v1700
          %v1702 = vpop.f32.mrb[0].mxu0
          %v1703 = vpop.f32.mrb[0].mxu0
          %v1704 = vadd.f32 %v1568, %v1703
          %v1705 = vpop.f32.mrb[0].mxu0
          %1706 = vmatprep.mubr.bf16.mxu0 %v1646
          %1707 = vmatmul.mubr.bf16.gmra.mrb[0].mxu0 %v1521
          %v1708 = vpop.f32.mrb[0].mxu0
          %v1709 = vadd.f32 %v1568, %v1708
          %v1710 = vpop.f32.mrb[0].mxu0
          %v1711 = vpop.f32.mrb[0].mxu0
          %v1712 = vadd.f32 %v1568, %v1711
          %v1713 = vpop.f32.mrb[0].mxu0
          %1714 = vmatprep.mubr.bf16.mxu0 %v1649
          %1715 = vmatmul.mubr.bf16.gmra.mrb[0].mxu0 %v1523
          %v1716 = vpop.f32.mrb[0].mxu0
          %v1717 = vadd.f32 %v1568, %v1716
          %v1718 = vpop.f32.mrb[0].mxu0
          %v1719 = vpop.f32.mrb[0].mxu0
          %v1720 = vadd.f32 %v1568, %v1719
          %v1721 = vpop.f32.mrb[0].mxu0
          %1722 = vmatprep.mubr.bf16.mxu0 %v1652
          %1723 = vmatmul.mubr.bf16.gmra.mrb[0].mxu0 %v1525
          %v1724 = vpop.f32.mrb[0].mxu0
          %v1725 = vadd.f32 %v1568, %v1724
          %v1726 = vpop.f32.mrb[0].mxu0
          %v1727 = vpop.f32.mrb[0].mxu0
          %v1728 = vadd.f32 %v1568, %v1727
          %v1729 = vpop.f32.mrb[0].mxu0
          %1730 = vmatprep.mubr.bf16.mxu0 %v1655
          %1731 = vmatmul.mubr.bf16.gmra.mrb[0].mxu0 %v1527
          %v1732 = vpop.f32.mrb[0].mxu0
          %v1733 = vadd.f32 %v1568, %v1732
          %v1734 = vpop.f32.mrb[0].mxu0
          %v1735 = vpop.f32.mrb[0].mxu0
          %v1736 = vadd.f32 %v1568, %v1735
          %v1737 = vpop.f32.mrb[0].mxu0
          %1738 = vmatprep.mubr.bf16.mxu0 %v1658
          %1739 = vmatmul.mubr.bf16.gmra.mrb[0].mxu0 %v1529
          %v1740 = vpop.f32.mrb[0].mxu0
          %v1741 = vadd.f32 %v1568, %v1740
          %v1742 = vpop.f32.mrb[0].mxu0
          %v1743 = vpop.f32.mrb[0].mxu0
          %v1744 = vadd.f32 %v1568, %v1743
          %v1745 = vpop.f32.mrb[0].mxu0
          %1746 = vmatprep.mubr.bf16.mxu0 %v1661
          %1747 = vmatmul.mubr.bf16.gmra.mrb[0].mxu0 %v1531
          %v1748 = vpop.f32.mrb[0].mxu0
          %v1749 = vadd.f32 %v1568, %v1748
          %v1750 = vpop.f32.mrb[0].mxu0
          %v1751 = vpop.f32.mrb[0].mxu0
          %v1752 = vadd.f32 %v1568, %v1751
          %v1753 = vpop.f32.mrb[0].mxu0
          %1754 = vmatprep.mubr.bf16.mxu0 %v1664
          %1755 = vmatmul.mubr.bf16.gmra.mrb[0].mxu0 %v1533
          %v1756 = vpop.f32.mrb[0].mxu0
          %v1757 = vadd.f32 %v1568, %v1756
          %v1758 = vpop.f32.mrb[0].mxu0
          %v1759 = vpop.f32.mrb[0].mxu0
          %v1760 = vadd.f32 %v1568, %v1759
          %v1761 = vpop.f32.mrb[0].mxu0
          %1762 = vdwg.mxu0
          %v1763 = vmax.f32 %v1701, 0.0
          %v1764 = vmax.f32 %v1704, 0.0
          %v1765 = vmax.f32 %v1709, 0.0
          %v1766 = vmax.f32 %v1712, 0.0
          %v1767 = vmax.f32 %v1717, 0.0
          %v1768 = vmax.f32 %v1720, 0.0
          %v1769 = vmax.f32 %v1725, 0.0
          %v1770 = vmax.f32 %v1728, 0.0
          %v1771 = vmax.f32 %v1733, 0.0
          %v1772 = vmax.f32 %v1736, 0.0
          %v1773 = vmax.f32 %v1741, 0.0
          %v1774 = vmax.f32 %v1744, 0.0
          %v1775 = vmax.f32 %v1749, 0.0
          %v1776 = vmax.f32 %v1752, 0.0
          %v1777 = vmax.f32 %v1757, 0.0
          %v1778 = vmax.f32 %v1760, 0.0
          %v1779 = vadd.f32 %v1763, %v675
          %v1780 = vadd.f32 %v1764, %v676
          %v1781 = vadd.f32 %v1765, %v677
          %v1782 = vadd.f32 %v1766, %v678
          %v1783 = vadd.f32 %v1767, %v679
          %v1784 = vadd.f32 %v1768, %v680
          %v1785 = vadd.f32 %v1769, %v681
          %v1786 = vadd.f32 %v1770, %v682
          %v1787 = vadd.f32 %v1771, %v683
          %v1788 = vadd.f32 %v1772, %v684
          %v1789 = vadd.f32 %v1773, %v685
          %v1790 = vadd.f32 %v1774, %v686
          %v1791 = vadd.f32 %v1775, %v687
          %v1792 = vadd.f32 %v1776, %v688
          %v1793 = vadd.f32 %v1777, %v689
          %v1794 = vadd.f32 %v1778, %v690
          %v1795 = vpack.c.bf16 %v1780, %v1779
          %v1796 = vpack.c.bf16 %v1782, %v1781
          %v1797 = vpack.c.bf16 %v1784, %v1783
          %v1798 = vpack.c.bf16 %v1786, %v1785
          %v1799 = vpack.c.bf16 %v1788, %v1787
          %v1800 = vpack.c.bf16 %v1790, %v1789
          %v1801 = vpack.c.bf16 %v1792, %v1791
          %v1802 = vpack.c.bf16 %v1794, %v1793
          %s1803 = smul.u32 %s1364, 8
          %s1804 = smul.addr %s1803, 4
          %s1805 = scalar_lea.vmem %s4, %s1804
          %v1806 = vld [vmem:[%s1805] sm:$0xf]
          %v1807 = vld [vmem:[%s1805 + $0x4] sm:$0xf]
          %v1808 = vld [vmem:[%s1805 + $0x8] sm:$0xf]
          %v1809 = vld [vmem:[%s1805 + $0xc] sm:$0xf]
          %v1810 = vld [vmem:[%s1805 + $0x10] sm:$0xf]
          %v1811 = vld [vmem:[%s1805 + $0x14] sm:$0xf]
          %v1812 = vld [vmem:[%s1805 + $0x18] sm:$0xf]
          %v1813 = vld [vmem:[%s1805 + $0x1c] sm:$0xf]
          %s1814 = scalar_lea.vmem %s5, %s1364
          %v1815 = vld [vmem:[%s1814] sm:$0x1]
          %v1817 = vlaneseq
          %v1818 = vshrl.u32 %v1817, 7
          %v1819 = vsub.s32 0, %v1818
          %v1820 = vrot.slane %v1815, %v1819
          %v1830 = vunpack.c.l.b16 %v1806
          %v1831 = vunpack.c.l.b16 %v1807
          %v1832 = vunpack.c.l.b16 %v1808
          %v1833 = vunpack.c.l.b16 %v1809
          %v1834 = vunpack.c.l.b16 %v1810
          %v1835 = vunpack.c.l.b16 %v1811
          %v1836 = vunpack.c.l.b16 %v1812
          %v1837 = vunpack.c.l.b16 %v1813
          %v1838 = vpack.c.b16 %v1831, %v1830
          %v1839 = vpack.c.b16 %v1833, %v1832
          %v1840 = vpack.c.b16 %v1835, %v1834
          %v1841 = vpack.c.b16 %v1837, %v1836
          %v1847 = vsel %vm623, %v1795, 0
          %v1850 = vsel %vm623, %v1796, 0
          %v1853 = vsel %vm623, %v1797, 0
          %v1856 = vsel %vm623, %v1798, 0
          %v1859 = vsel %vm623, %v1799, 0
          %v1862 = vsel %vm623, %v1800, 0
          %v1865 = vsel %vm623, %v1801, 0
          %v1868 = vsel %vm623, %v1802, 0
          %1870 = vmatprep.subr.bf16.mxu0 0
          %1871 = vmatpush1.bf16.msra.mxu0 %v1838
          %1872 = vmatprep.subr.bf16.mxu0 0
          %1873 = vmatpush1.bf16.msra.mxu0 %v1839
          %1874 = vmatprep.subr.bf16.mxu0 0
          %1875 = vmatpush1.bf16.msra.mxu0 %v1840
          %1876 = vmatprep.subr.bf16.mxu0 0
          %1877 = vmatpush1.bf16.msra.mxu0 %v1841
          %1878 = vmatprep.subr.bf16.mxu0 0
          %1879 = vmatpush1.bf16.msra.mxu0 0
          %1880 = vmatprep.subr.bf16.mxu0 0
          %1881 = vmatpush1.bf16.msra.mxu0 0
          %1882 = vmatprep.subr.bf16.mxu0 0
          %1883 = vmatpush1.bf16.msra.mxu0 0
          %1884 = vmatprep.subr.bf16.mxu0 0
          %1885 = vmatpush1.bf16.msra.mxu0 0
          %1886 = vmatprep.subr.bf16.mxu0 0
          %1887 = vmatpush1.bf16.msra.mxu0 0
          %1888 = vmatprep.subr.bf16.mxu0 0
          %1889 = vmatpush1.bf16.msra.mxu0 0
          %1890 = vmatprep.subr.bf16.mxu0 0
          %1891 = vmatpush1.bf16.msra.mxu0 0
          %1892 = vmatprep.subr.bf16.mxu0 0
          %1893 = vmatpush1.bf16.msra.mxu0 0
          %1894 = vmatprep.subr.bf16.mxu0 0
          %1895 = vmatpush1.bf16.msra.mxu0 0
          %1896 = vmatprep.subr.bf16.mxu0 0
          %1897 = vmatpush1.bf16.msra.mxu0 0
          %1898 = vmatprep.subr.bf16.mxu0 0
          %1899 = vmatpush1.bf16.msra.mxu0 0
          %1900 = vmatprep.subr.bf16.mxu0 0
          %1901 = vmatpush1.bf16.msra.mxu0 0
          %1902 = vmatprep.mubr.bf16.mxu0 0
          %1903 = vmatmul.mubr.bf16.gmra.mrb[0].mxu0 %v1847
          %v1904 = vpop.f32.mrb[0].mxu0
          %v1905 = vadd.f32 %v1820, %v1904
          %v1906 = vpop.f32.mrb[0].mxu0
          %v1907 = vpop.f32.mrb[0].mxu0
          %v1908 = vadd.f32 %v1820, %v1907
          %v1909 = vpop.f32.mrb[0].mxu0
          %1910 = vmatprep.mubr.bf16.mxu0 0
          %1911 = vmatmul.mubr.bf16.gmra.mrb[0].mxu0 %v1850
          %v1912 = vpop.f32.mrb[0].mxu0
          %v1913 = vadd.f32 %v1820, %v1912
          %v1914 = vpop.f32.mrb[0].mxu0
          %v1915 = vpop.f32.mrb[0].mxu0
          %v1916 = vadd.f32 %v1820, %v1915
          %v1917 = vpop.f32.mrb[0].mxu0
          %1918 = vmatprep.mubr.bf16.mxu0 0
          %1919 = vmatmul.mubr.bf16.gmra.mrb[0].mxu0 %v1853
          %v1920 = vpop.f32.mrb[0].mxu0
          %v1921 = vadd.f32 %v1820, %v1920
          %v1922 = vpop.f32.mrb[0].mxu0
          %v1923 = vpop.f32.mrb[0].mxu0
          %v1924 = vadd.f32 %v1820, %v1923
          %v1925 = vpop.f32.mrb[0].mxu0
          %1926 = vmatprep.mubr.bf16.mxu0 0
          %1927 = vmatmul.mubr.bf16.gmra.mrb[0].mxu0 %v1856
          %v1928 = vpop.f32.mrb[0].mxu0
          %v1929 = vadd.f32 %v1820, %v1928
          %v1930 = vpop.f32.mrb[0].mxu0
          %v1931 = vpop.f32.mrb[0].mxu0
          %v1932 = vadd.f32 %v1820, %v1931
          %v1933 = vpop.f32.mrb[0].mxu0
          %1934 = vmatprep.mubr.bf16.mxu0 0
          %1935 = vmatmul.mubr.bf16.gmra.mrb[0].mxu0 %v1859
          %v1936 = vpop.f32.mrb[0].mxu0
          %v1937 = vadd.f32 %v1820, %v1936
          %v1938 = vpop.f32.mrb[0].mxu0
          %v1939 = vpop.f32.mrb[0].mxu0
          %v1940 = vadd.f32 %v1820, %v1939
          %v1941 = vpop.f32.mrb[0].mxu0
          %1942 = vmatprep.mubr.bf16.mxu0 0
          %1943 = vmatmul.mubr.bf16.gmra.mrb[0].mxu0 %v1862
          %v1944 = vpop.f32.mrb[0].mxu0
          %v1945 = vadd.f32 %v1820, %v1944
          %v1946 = vpop.f32.mrb[0].mxu0
          %v1947 = vpop.f32.mrb[0].mxu0
          %v1948 = vadd.f32 %v1820, %v1947
          %v1949 = vpop.f32.mrb[0].mxu0
          %1950 = vmatprep.mubr.bf16.mxu0 0
          %1951 = vmatmul.mubr.bf16.gmra.mrb[0].mxu0 %v1865
          %v1952 = vpop.f32.mrb[0].mxu0
          %v1953 = vadd.f32 %v1820, %v1952
          %v1954 = vpop.f32.mrb[0].mxu0
          %v1955 = vpop.f32.mrb[0].mxu0
          %v1956 = vadd.f32 %v1820, %v1955
          %v1957 = vpop.f32.mrb[0].mxu0
          %1958 = vmatprep.mubr.bf16.mxu0 0
          %1959 = vmatmul.mubr.bf16.gmra.mrb[0].mxu0 %v1868
          %v1960 = vpop.f32.mrb[0].mxu0
          %v1961 = vadd.f32 %v1820, %v1960
          %v1962 = vpop.f32.mrb[0].mxu0
          %v1963 = vpop.f32.mrb[0].mxu0
          %v1964 = vadd.f32 %v1820, %v1963
          %v1965 = vpop.f32.mrb[0].mxu0
          %1966 = vdwg.mxu0
          %v1967 = vadd.f32 %v1905, %v1348
          %v1968 = vadd.f32 %v1908, %v1349
          %v1969 = vadd.f32 %v1913, %v1350
          %v1970 = vadd.f32 %v1916, %v1351
          %v1971 = vadd.f32 %v1921, %v1352
          %v1972 = vadd.f32 %v1924, %v1353
          %v1973 = vadd.f32 %v1929, %v1354
          %v1974 = vadd.f32 %v1932, %v1355
          %v1975 = vadd.f32 %v1937, %v1356
          %v1976 = vadd.f32 %v1940, %v1357
          %v1977 = vadd.f32 %v1945, %v1358
          %v1978 = vadd.f32 %v1948, %v1359
          %v1979 = vadd.f32 %v1953, %v1360
          %v1980 = vadd.f32 %v1956, %v1361
          %v1981 = vadd.f32 %v1961, %v1362
          %v1982 = vadd.f32 %v1964, %v1363
          %v1983 = vmul.f32 %v1967, 0.70710677
          %v1984 = vmul.f32 %v1968, 0.70710677
          %v1985 = vmul.f32 %v1969, 0.70710677
          %v1986 = vmul.f32 %v1970, 0.70710677
          %v1987 = vmul.f32 %v1971, 0.70710677
          %v1988 = vmul.f32 %v1972, 0.70710677
          %v1989 = vmul.f32 %v1973, 0.70710677
          %v1990 = vmul.f32 %v1974, 0.70710677
          %v1991 = vmul.f32 %v1975, 0.70710677
          %v1992 = vmul.f32 %v1976, 0.70710677
          %v1993 = vmul.f32 %v1977, 0.70710677
          %v1994 = vmul.f32 %v1978, 0.70710677
          %v1995 = vmul.f32 %v1979, 0.70710677
          %v1996 = vmul.f32 %v1980, 0.70710677
          %v1997 = vmul.f32 %v1981, 0.70710677
          %v1998 = vmul.f32 %v1982, 0.70710677
          %s1999 = sadd.s32 %s729, 2
          %s2000 = smul.u32 %s1999, 64
          %s2001 = scalar_lea.vmem [#allocation4], %s2000
          %v2002 = vld [vmem:[%s2001] sm:$0xff]
          %v2003 = vld [vmem:[%s2001 + $0x8] sm:$0xff]
          %v2004 = vld [vmem:[%s2001 + $0x10] sm:$0xff]
          %v2005 = vld [vmem:[%s2001 + $0x18] sm:$0xff]
          %v2006 = vld [vmem:[%s2001 + $0x20] sm:$0xff]
          %v2007 = vld [vmem:[%s2001 + $0x28] sm:$0xff]
          %v2008 = vld [vmem:[%s2001 + $0x30] sm:$0xff]
          %v2009 = vld [vmem:[%s2001 + $0x38] sm:$0xff]
          %2010 = vst.msk [vmem:[#allocation2] sm:$0xff] %vm623, %v2002
          %2011 = vst.msk [vmem:[#allocation2 + $0x8] sm:$0xff] %vm623, %v2003
          %2012 = vst.msk [vmem:[#allocation2 + $0x10] sm:$0xff] %vm623, %v2004
          %2013 = vst.msk [vmem:[#allocation2 + $0x18] sm:$0xff] %vm623, %v2005
          %2014 = vst.msk [vmem:[#allocation2 + $0x20] sm:$0xff] %vm623, %v2006
          %2015 = vst.msk [vmem:[#allocation2 + $0x28] sm:$0xff] %vm623, %v2007
          %2016 = vst.msk [vmem:[#allocation2 + $0x30] sm:$0xff] %vm623, %v2008
          %2017 = vst.msk [vmem:[#allocation2 + $0x38] sm:$0xff] %vm623, %v2009
          %2018 = vst.msk [vmem:[#allocation2 + $0x40] sm:$0xff] %vm623, %v1983
          %2019 = vst.msk [vmem:[#allocation2 + $0x48] sm:$0xff] %vm623, %v1984
          %2020 = vst.msk [vmem:[#allocation2 + $0x50] sm:$0xff] %vm623, %v1985
          %2021 = vst.msk [vmem:[#allocation2 + $0x58] sm:$0xff] %vm623, %v1986
          %2022 = vst.msk [vmem:[#allocation2 + $0x60] sm:$0xff] %vm623, %v1987
          %2023 = vst.msk [vmem:[#allocation2 + $0x68] sm:$0xff] %vm623, %v1988
          %2024 = vst.msk [vmem:[#allocation2 + $0x70] sm:$0xff] %vm623, %v1989
          %2025 = vst.msk [vmem:[#allocation2 + $0x78] sm:$0xff] %vm623, %v1990
          %2026 = vst.msk [vmem:[#allocation2 + $0x80] sm:$0xff] %vm623, %v1991
          %2027 = vst.msk [vmem:[#allocation2 + $0x88] sm:$0xff] %vm623, %v1992
          %2028 = vst.msk [vmem:[#allocation2 + $0x90] sm:$0xff] %vm623, %v1993
          %2029 = vst.msk [vmem:[#allocation2 + $0x98] sm:$0xff] %vm623, %v1994
          %2030 = vst.msk [vmem:[#allocation2 + $0xa0] sm:$0xff] %vm623, %v1995
          %2031 = vst.msk [vmem:[#allocation2 + $0xa8] sm:$0xff] %vm623, %v1996
          %2032 = vst.msk [vmem:[#allocation2 + $0xb0] sm:$0xff] %vm623, %v1997
          %2033 = vst.msk [vmem:[#allocation2 + $0xb8] sm:$0xff] %vm623, %v1998
          %2034 = vst.msk [vmem:[%s2001] sm:$0xff] %vm623, %v1991
          %2035 = vst.msk [vmem:[%s2001 + $0x8] sm:$0xff] %vm623, %v1992
          %2036 = vst.msk [vmem:[%s2001 + $0x10] sm:$0xff] %vm623, %v1993
          %2037 = vst.msk [vmem:[%s2001 + $0x18] sm:$0xff] %vm623, %v1994
          %2038 = vst.msk [vmem:[%s2001 + $0x20] sm:$0xff] %vm623, %v1995
          %2039 = vst.msk [vmem:[%s2001 + $0x28] sm:$0xff] %vm623, %v1996
          %2040 = vst.msk [vmem:[%s2001 + $0x30] sm:$0xff] %vm623, %v1997
          %2041 = vst.msk [vmem:[%s2001 + $0x38] sm:$0xff] %vm623, %v1998
          %v2042 = vld [vmem:[#allocation2 + $0x38] sm:$0xff]
          %v2043 = vld [vmem:[#allocation2 + $0x40] sm:$0xff]
          %v2044 = vld [vmem:[#allocation2 + $0x48] sm:$0xff]
          %v2045 = vld [vmem:[#allocation2 + $0x50] sm:$0xff]
          %v2046 = vld [vmem:[#allocation2 + $0x58] sm:$0xff]
          %v2047 = vld [vmem:[#allocation2 + $0x60] sm:$0xff]
          %v2048 = vld [vmem:[#allocation2 + $0x68] sm:$0xff]
          %v2049 = vld [vmem:[#allocation2 + $0x70] sm:$0xff]
          %v2050 = vld [vmem:[#allocation2 + $0x78] sm:$0xff]
          %v2051 = vld [vmem:[#allocation2 + $0x80] sm:$0xff]
          %v2052 = vld [vmem:[#allocation2 + $0x88] sm:$0xff]
          %v2053 = vld [vmem:[#allocation2 + $0x90] sm:$0xff]
          %v2054 = vld [vmem:[#allocation2 + $0x98] sm:$0xff]
          %v2055 = vld [vmem:[#allocation2 + $0xa0] sm:$0xff]
          %v2056 = vld [vmem:[#allocation2 + $0xa8] sm:$0xff]
          %v2057 = vld [vmem:[#allocation2 + $0xb0] sm:$0xff]
          %v2058 = vld [vmem:[#allocation2 + $0x3c] sm:$0xff]
          %v2059 = vld [vmem:[#allocation2 + $0x44] sm:$0xff]
          %v2060 = vld [vmem:[#allocation2 + $0x4c] sm:$0xff]
          %v2061 = vld [vmem:[#allocation2 + $0x54] sm:$0xff]
          %v2062 = vld [vmem:[#allocation2 + $0x5c] sm:$0xff]
          %v2063 = vld [vmem:[#allocation2 + $0x64] sm:$0xff]
          %v2064 = vld [vmem:[#allocation2 + $0x6c] sm:$0xff]
          %v2065 = vld [vmem:[#allocation2 + $0x74] sm:$0xff]
          %v2066 = vld [vmem:[#allocation2 + $0x7c] sm:$0xff]
          %v2067 = vld [vmem:[#allocation2 + $0x84] sm:$0xff]
          %v2068 = vld [vmem:[#allocation2 + $0x8c] sm:$0xff]
          %v2069 = vld [vmem:[#allocation2 + $0x94] sm:$0xff]
          %v2070 = vld [vmem:[#allocation2 + $0x9c] sm:$0xff]
          %v2071 = vld [vmem:[#allocation2 + $0xa4] sm:$0xff]
          %v2072 = vld [vmem:[#allocation2 + $0xac] sm:$0xff]
          %v2073 = vld [vmem:[#allocation2 + $0xb4] sm:$0xff]
          %2090 = vrot.lane.b32.xlu0 %v2058, 64
          %v2091 = vpop.permute.xlu0 %2090
          %2092 = vrot.lane.b32.xlu0 %v2059, 64
          %v2093 = vpop.permute.xlu0 %2092
          %2094 = vrot.lane.b32.xlu0 %v2060, 64
          %v2095 = vpop.permute.xlu0 %2094
          %2096 = vrot.lane.b32.xlu0 %v2061, 64
          %v2097 = vpop.permute.xlu0 %2096
          %2098 = vrot.lane.b32.xlu0 %v2062, 64
          %v2099 = vpop.permute.xlu0 %2098
          %2100 = vrot.lane.b32.xlu0 %v2063, 64
          %v2101 = vpop.permute.xlu0 %2100
          %2102 = vrot.lane.b32.xlu0 %v2064, 64
          %v2103 = vpop.permute.xlu0 %2102
          %2104 = vrot.lane.b32.xlu0 %v2065, 64
          %v2105 = vpop.permute.xlu0 %2104
          %2106 = vrot.lane.b32.xlu0 %v2066, 64
          %v2107 = vpop.permute.xlu0 %2106
          %2108 = vrot.lane.b32.xlu0 %v2067, 64
          %v2109 = vpop.permute.xlu0 %2108
          %2110 = vrot.lane.b32.xlu0 %v2068, 64
          %v2111 = vpop.permute.xlu0 %2110
          %2112 = vrot.lane.b32.xlu0 %v2069, 64
          %v2113 = vpop.permute.xlu0 %2112
          %2114 = vrot.lane.b32.xlu0 %v2070, 64
          %v2115 = vpop.permute.xlu0 %2114
          %2116 = vrot.lane.b32.xlu0 %v2071, 64
          %v2117 = vpop.permute.xlu0 %2116
          %2118 = vrot.lane.b32.xlu0 %v2072, 64
          %v2119 = vpop.permute.xlu0 %2118
          %2120 = vrot.lane.b32.xlu0 %v2073, 64
          %v2121 = vpop.permute.xlu0 %2120
          %v2138 = vsel %vm623, %v2042, %v2091
          %v2139 = vsel %vm623, %v2043, %v2093
          %v2140 = vsel %vm623, %v2044, %v2095
          %v2141 = vsel %vm623, %v2045, %v2097
          %v2142 = vsel %vm623, %v2046, %v2099
          %v2143 = vsel %vm623, %v2047, %v2101
          %v2144 = vsel %vm623, %v2048, %v2103
          %v2145 = vsel %vm623, %v2049, %v2105
          %v2146 = vsel %vm623, %v2050, %v2107
          %v2147 = vsel %vm623, %v2051, %v2109
          %v2148 = vsel %vm623, %v2052, %v2111
          %v2149 = vsel %vm623, %v2053, %v2113
          %v2150 = vsel %vm623, %v2054, %v2115
          %v2151 = vsel %vm623, %v2055, %v2117
          %v2152 = vsel %vm623, %v2056, %v2119
          %v2153 = vsel %vm623, %v2057, %v2121
          %v2154 = vpack.c.bf16 %v2139, %v2138
          %v2155 = vpack.c.bf16 %v1984, %v1983
          %v2156 = vpack.c.bf16 %v2141, %v2140
          %v2157 = vpack.c.bf16 %v1986, %v1985
          %v2158 = vpack.c.bf16 %v2143, %v2142
          %v2159 = vpack.c.bf16 %v1988, %v1987
          %v2160 = vpack.c.bf16 %v2145, %v2144
          %v2161 = vpack.c.bf16 %v1990, %v1989
          %v2162 = vpack.c.bf16 %v2147, %v2146
          %v2163 = vpack.c.bf16 %v1992, %v1991
          %v2164 = vpack.c.bf16 %v2149, %v2148
          %v2165 = vpack.c.bf16 %v1994, %v1993
          %v2166 = vpack.c.bf16 %v2151, %v2150
          %v2167 = vpack.c.bf16 %v1996, %v1995
          %v2168 = vpack.c.bf16 %v2153, %v2152
          %v2169 = vpack.c.bf16 %v1998, %v1997
          %s2170 = smul.u32 %s1999, 24
          %s2171 = smul.addr %s2170, 4
          %s2172 = scalar_lea.vmem %s2, %s2171
          %v2173 = vld [vmem:[%s2172] sm:$0xf]
          %v2174 = vld [vmem:[%s2172 + $0x4] sm:$0xf]
          %v2175 = vld [vmem:[%s2172 + $0x8] sm:$0xf]
          %v2176 = vld [vmem:[%s2172 + $0xc] sm:$0xf]
          %v2177 = vld [vmem:[%s2172 + $0x10] sm:$0xf]
          %v2178 = vld [vmem:[%s2172 + $0x14] sm:$0xf]
          %v2179 = vld [vmem:[%s2172 + $0x18] sm:$0xf]
          %v2180 = vld [vmem:[%s2172 + $0x1c] sm:$0xf]
          %v2181 = vld [vmem:[%s2172 + $0x20] sm:$0xf]
          %v2182 = vld [vmem:[%s2172 + $0x24] sm:$0xf]
          %v2183 = vld [vmem:[%s2172 + $0x28] sm:$0xf]
          %v2184 = vld [vmem:[%s2172 + $0x2c] sm:$0xf]
          %v2185 = vld [vmem:[%s2172 + $0x30] sm:$0xf]
          %v2186 = vld [vmem:[%s2172 + $0x34] sm:$0xf]
          %v2187 = vld [vmem:[%s2172 + $0x38] sm:$0xf]
          %v2188 = vld [vmem:[%s2172 + $0x3c] sm:$0xf]
          %v2189 = vld [vmem:[%s2172 + $0x40] sm:$0xf]
          %v2190 = vld [vmem:[%s2172 + $0x44] sm:$0xf]
          %v2191 = vld [vmem:[%s2172 + $0x48] sm:$0xf]
          %v2192 = vld [vmem:[%s2172 + $0x4c] sm:$0xf]
          %v2193 = vld [vmem:[%s2172 + $0x50] sm:$0xf]
          %v2194 = vld [vmem:[%s2172 + $0x54] sm:$0xf]
          %v2195 = vld [vmem:[%s2172 + $0x58] sm:$0xf]
          %v2196 = vld [vmem:[%s2172 + $0x5c] sm:$0xf]
          %s2197 = scalar_lea.vmem %s3, %s1999
          %v2198 = vld [vmem:[%s2197] sm:$0x1]
          %v2200 = vlaneseq
          %v2201 = vshrl.u32 %v2200, 7
          %v2202 = vsub.s32 0, %v2201
          %v2203 = vrot.slane %v2198, %v2202
          %v2229 = vunpack.c.l.b16 %v2173
          %v2230 = vunpack.c.l.b16 %v2174
          %v2231 = vunpack.c.l.b16 %v2175
          %v2232 = vunpack.c.l.b16 %v2176
          %v2233 = vunpack.c.l.b16 %v2177
          %v2234 = vunpack.c.l.b16 %v2178
          %v2235 = vunpack.c.l.b16 %v2179
          %v2236 = vunpack.c.l.b16 %v2180
          %v2237 = vunpack.c.l.b16 %v2181
          %v2238 = vunpack.c.l.b16 %v2182
          %v2239 = vunpack.c.l.b16 %v2183
          %v2240 = vunpack.c.l.b16 %v2184
          %v2241 = vunpack.c.l.b16 %v2185
          %v2242 = vunpack.c.l.b16 %v2186
          %v2243 = vunpack.c.l.b16 %v2187
          %v2244 = vunpack.c.l.b16 %v2188
          %v2245 = vunpack.c.l.b16 %v2189
          %v2246 = vunpack.c.l.b16 %v2190
          %v2247 = vunpack.c.l.b16 %v2191
          %v2248 = vunpack.c.l.b16 %v2192
          %v2249 = vunpack.c.l.b16 %v2193
          %v2250 = vunpack.c.l.b16 %v2194
          %v2251 = vunpack.c.l.b16 %v2195
          %v2252 = vunpack.c.l.b16 %v2196
          %v2253 = vpack.c.b16 %v2230, %v2229
          %v2254 = vpack.c.b16 %v2232, %v2231
          %v2255 = vpack.c.b16 %v2234, %v2233
          %v2256 = vpack.c.b16 %v2236, %v2235
          %v2257 = vpack.c.b16 %v2238, %v2237
          %v2258 = vpack.c.b16 %v2240, %v2239
          %v2259 = vpack.c.b16 %v2242, %v2241
          %v2260 = vpack.c.b16 %v2244, %v2243
          %v2261 = vpack.c.b16 %v2246, %v2245
          %v2262 = vpack.c.b16 %v2248, %v2247
          %v2263 = vpack.c.b16 %v2250, %v2249
          %v2264 = vpack.c.b16 %v2252, %v2251
          %v2278 = vsel %vm623, %v2155, 0
          %v2281 = vsel %vm623, %v2157, 0
          %v2284 = vsel %vm623, %v2159, 0
          %v2287 = vsel %vm623, %v2161, 0
          %v2290 = vsel %vm623, %v2163, 0
          %v2293 = vsel %vm623, %v2165, 0
          %v2296 = vsel %vm623, %v2167, 0
          %v2299 = vsel %vm623, %v2169, 0
          %2301 = vmatprep.subr.bf16.mxu0 0
          %2302 = vmatpush1.bf16.msra.mxu0 %v2253
          %2303 = vmatprep.subr.bf16.mxu0 0
          %2304 = vmatpush1.bf16.msra.mxu0 %v2254
          %2305 = vmatprep.subr.bf16.mxu0 0
          %2306 = vmatpush1.bf16.msra.mxu0 %v2255
          %2307 = vmatprep.subr.bf16.mxu0 0
          %2308 = vmatpush1.bf16.msra.mxu0 %v2256
          %2309 = vmatprep.subr.bf16.mxu0 0
          %2310 = vmatpush1.bf16.msra.mxu0 %v2257
          %2311 = vmatprep.subr.bf16.mxu0 0
          %2312 = vmatpush1.bf16.msra.mxu0 %v2258
          %2313 = vmatprep.subr.bf16.mxu0 0
          %2314 = vmatpush1.bf16.msra.mxu0 %v2259
          %2315 = vmatprep.subr.bf16.mxu0 0
          %2316 = vmatpush1.bf16.msra.mxu0 %v2260
          %2317 = vmatprep.subr.bf16.mxu0 0
          %2318 = vmatpush1.bf16.msra.mxu0 %v2261
          %2319 = vmatprep.subr.bf16.mxu0 0
          %2320 = vmatpush1.bf16.msra.mxu0 %v2262
          %2321 = vmatprep.subr.bf16.mxu0 0
          %2322 = vmatpush1.bf16.msra.mxu0 %v2263
          %2323 = vmatprep.subr.bf16.mxu0 0
          %2324 = vmatpush1.bf16.msra.mxu0 %v2264
          %2325 = vmatprep.subr.bf16.mxu0 0
          %2326 = vmatpush1.bf16.msra.mxu0 0
          %2327 = vmatprep.subr.bf16.mxu0 0
          %2328 = vmatpush1.bf16.msra.mxu0 0
          %2329 = vmatprep.subr.bf16.mxu0 0
          %2330 = vmatpush1.bf16.msra.mxu0 0
          %2331 = vmatprep.subr.bf16.mxu0 0
          %2332 = vmatpush1.bf16.msra.mxu0 0
          %2333 = vmatprep.mubr.bf16.mxu0 %v2278
          %2334 = vmatmul.mubr.bf16.gmra.mrb[0].mxu0 %v2154
          %v2335 = vpop.f32.mrb[0].mxu0
          %v2336 = vadd.f32 %v2203, %v2335
          %v2337 = vpop.f32.mrb[0].mxu0
          %v2338 = vpop.f32.mrb[0].mxu0
          %v2339 = vadd.f32 %v2203, %v2338
          %v2340 = vpop.f32.mrb[0].mxu0
          %2341 = vmatprep.mubr.bf16.mxu0 %v2281
          %2342 = vmatmul.mubr.bf16.gmra.mrb[0].mxu0 %v2156
          %v2343 = vpop.f32.mrb[0].mxu0
          %v2344 = vadd.f32 %v2203, %v2343
          %v2345 = vpop.f32.mrb[0].mxu0
          %v2346 = vpop.f32.mrb[0].mxu0
          %v2347 = vadd.f32 %v2203, %v2346
          %v2348 = vpop.f32.mrb[0].mxu0
          %2349 = vmatprep.mubr.bf16.mxu0 %v2284
          %2350 = vmatmul.mubr.bf16.gmra.mrb[0].mxu0 %v2158
          %v2351 = vpop.f32.mrb[0].mxu0
          %v2352 = vadd.f32 %v2203, %v2351
          %v2353 = vpop.f32.mrb[0].mxu0
          %v2354 = vpop.f32.mrb[0].mxu0
          %v2355 = vadd.f32 %v2203, %v2354
          %v2356 = vpop.f32.mrb[0].mxu0
          %2357 = vmatprep.mubr.bf16.mxu0 %v2287
          %2358 = vmatmul.mubr.bf16.gmra.mrb[0].mxu0 %v2160
          %v2359 = vpop.f32.mrb[0].mxu0
          %v2360 = vadd.f32 %v2203, %v2359
          %v2361 = vpop.f32.mrb[0].mxu0
          %v2362 = vpop.f32.mrb[0].mxu0
          %v2363 = vadd.f32 %v2203, %v2362
          %v2364 = vpop.f32.mrb[0].mxu0
          %2365 = vmatprep.mubr.bf16.mxu0 %v2290
          %2366 = vmatmul.mubr.bf16.gmra.mrb[0].mxu0 %v2162
          %v2367 = vpop.f32.mrb[0].mxu0
          %v2368 = vadd.f32 %v2203, %v2367
          %v2369 = vpop.f32.mrb[0].mxu0
          %v2370 = vpop.f32.mrb[0].mxu0
          %v2371 = vadd.f32 %v2203, %v2370
          %v2372 = vpop.f32.mrb[0].mxu0
          %2373 = vmatprep.mubr.bf16.mxu0 %v2293
          %2374 = vmatmul.mubr.bf16.gmra.mrb[0].mxu0 %v2164
          %v2375 = vpop.f32.mrb[0].mxu0
          %v2376 = vadd.f32 %v2203, %v2375
          %v2377 = vpop.f32.mrb[0].mxu0
          %v2378 = vpop.f32.mrb[0].mxu0
          %v2379 = vadd.f32 %v2203, %v2378
          %v2380 = vpop.f32.mrb[0].mxu0
          %2381 = vmatprep.mubr.bf16.mxu0 %v2296
          %2382 = vmatmul.mubr.bf16.gmra.mrb[0].mxu0 %v2166
          %v2383 = vpop.f32.mrb[0].mxu0
          %v2384 = vadd.f32 %v2203, %v2383
          %v2385 = vpop.f32.mrb[0].mxu0
          %v2386 = vpop.f32.mrb[0].mxu0
          %v2387 = vadd.f32 %v2203, %v2386
          %v2388 = vpop.f32.mrb[0].mxu0
          %2389 = vmatprep.mubr.bf16.mxu0 %v2299
          %2390 = vmatmul.mubr.bf16.gmra.mrb[0].mxu0 %v2168
          %v2391 = vpop.f32.mrb[0].mxu0
          %v2392 = vadd.f32 %v2203, %v2391
          %v2393 = vpop.f32.mrb[0].mxu0
          %v2394 = vpop.f32.mrb[0].mxu0
          %v2395 = vadd.f32 %v2203, %v2394
          %v2396 = vpop.f32.mrb[0].mxu0
          %2397 = vdwg.mxu0
          %v2398 = vmax.f32 %v2336, 0.0
          %v2399 = vmax.f32 %v2339, 0.0
          %v2400 = vmax.f32 %v2344, 0.0
          %v2401 = vmax.f32 %v2347, 0.0
          %v2402 = vmax.f32 %v2352, 0.0
          %v2403 = vmax.f32 %v2355, 0.0
          %v2404 = vmax.f32 %v2360, 0.0
          %v2405 = vmax.f32 %v2363, 0.0
          %v2406 = vmax.f32 %v2368, 0.0
          %v2407 = vmax.f32 %v2371, 0.0
          %v2408 = vmax.f32 %v2376, 0.0
          %v2409 = vmax.f32 %v2379, 0.0
          %v2410 = vmax.f32 %v2384, 0.0
          %v2411 = vmax.f32 %v2387, 0.0
          %v2412 = vmax.f32 %v2392, 0.0
          %v2413 = vmax.f32 %v2395, 0.0
          %v2414 = vadd.f32 %v2398, %v675
          %v2415 = vadd.f32 %v2399, %v676
          %v2416 = vadd.f32 %v2400, %v677
          %v2417 = vadd.f32 %v2401, %v678
          %v2418 = vadd.f32 %v2402, %v679
          %v2419 = vadd.f32 %v2403, %v680
          %v2420 = vadd.f32 %v2404, %v681
          %v2421 = vadd.f32 %v2405, %v682
          %v2422 = vadd.f32 %v2406, %v683
          %v2423 = vadd.f32 %v2407, %v684
          %v2424 = vadd.f32 %v2408, %v685
          %v2425 = vadd.f32 %v2409, %v686
          %v2426 = vadd.f32 %v2410, %v687
          %v2427 = vadd.f32 %v2411, %v688
          %v2428 = vadd.f32 %v2412, %v689
          %v2429 = vadd.f32 %v2413, %v690
          %v2430 = vpack.c.bf16 %v2415, %v2414
          %v2431 = vpack.c.bf16 %v2417, %v2416
          %v2432 = vpack.c.bf16 %v2419, %v2418
          %v2433 = vpack.c.bf16 %v2421, %v2420
          %v2434 = vpack.c.bf16 %v2423, %v2422
          %v2435 = vpack.c.bf16 %v2425, %v2424
          %v2436 = vpack.c.bf16 %v2427, %v2426
          %v2437 = vpack.c.bf16 %v2429, %v2428
          %s2438 = smul.u32 %s1999, 8
          %s2439 = smul.addr %s2438, 4
          %s2440 = scalar_lea.vmem %s4, %s2439
          %v2441 = vld [vmem:[%s2440] sm:$0xf]
          %v2442 = vld [vmem:[%s2440 + $0x4] sm:$0xf]
          %v2443 = vld [vmem:[%s2440 + $0x8] sm:$0xf]
          %v2444 = vld [vmem:[%s2440 + $0xc] sm:$0xf]
          %v2445 = vld [vmem:[%s2440 + $0x10] sm:$0xf]
          %v2446 = vld [vmem:[%s2440 + $0x14] sm:$0xf]
          %v2447 = vld [vmem:[%s2440 + $0x18] sm:$0xf]
          %v2448 = vld [vmem:[%s2440 + $0x1c] sm:$0xf]
          %s2449 = scalar_lea.vmem %s5, %s1999
          %v2450 = vld [vmem:[%s2449] sm:$0x1]
          %v2452 = vlaneseq
          %v2453 = vshrl.u32 %v2452, 7
          %v2454 = vsub.s32 0, %v2453
          %v2455 = vrot.slane %v2450, %v2454
          %v2465 = vunpack.c.l.b16 %v2441
          %v2466 = vunpack.c.l.b16 %v2442
          %v2467 = vunpack.c.l.b16 %v2443
          %v2468 = vunpack.c.l.b16 %v2444
          %v2469 = vunpack.c.l.b16 %v2445
          %v2470 = vunpack.c.l.b16 %v2446
          %v2471 = vunpack.c.l.b16 %v2447
          %v2472 = vunpack.c.l.b16 %v2448
          %v2473 = vpack.c.b16 %v2466, %v2465
          %v2474 = vpack.c.b16 %v2468, %v2467
          %v2475 = vpack.c.b16 %v2470, %v2469
          %v2476 = vpack.c.b16 %v2472, %v2471
          %v2482 = vsel %vm623, %v2430, 0
          %v2485 = vsel %vm623, %v2431, 0
          %v2488 = vsel %vm623, %v2432, 0
          %v2491 = vsel %vm623, %v2433, 0
          %v2494 = vsel %vm623, %v2434, 0
          %v2497 = vsel %vm623, %v2435, 0
          %v2500 = vsel %vm623, %v2436, 0
          %v2503 = vsel %vm623, %v2437, 0
          %2505 = vmatprep.subr.bf16.mxu0 0
          %2506 = vmatpush1.bf16.msra.mxu0 %v2473
          %2507 = vmatprep.subr.bf16.mxu0 0
          %2508 = vmatpush1.bf16.msra.mxu0 %v2474
          %2509 = vmatprep.subr.bf16.mxu0 0
          %2510 = vmatpush1.bf16.msra.mxu0 %v2475
          %2511 = vmatprep.subr.bf16.mxu0 0
          %2512 = vmatpush1.bf16.msra.mxu0 %v2476
          %2513 = vmatprep.subr.bf16.mxu0 0
          %2514 = vmatpush1.bf16.msra.mxu0 0
          %2515 = vmatprep.subr.bf16.mxu0 0
          %2516 = vmatpush1.bf16.msra.mxu0 0
          %2517 = vmatprep.subr.bf16.mxu0 0
          %2518 = vmatpush1.bf16.msra.mxu0 0
          %2519 = vmatprep.subr.bf16.mxu0 0
          %2520 = vmatpush1.bf16.msra.mxu0 0
          %2521 = vmatprep.subr.bf16.mxu0 0
          %2522 = vmatpush1.bf16.msra.mxu0 0
          %2523 = vmatprep.subr.bf16.mxu0 0
          %2524 = vmatpush1.bf16.msra.mxu0 0
          %2525 = vmatprep.subr.bf16.mxu0 0
          %2526 = vmatpush1.bf16.msra.mxu0 0
          %2527 = vmatprep.subr.bf16.mxu0 0
          %2528 = vmatpush1.bf16.msra.mxu0 0
          %2529 = vmatprep.subr.bf16.mxu0 0
          %2530 = vmatpush1.bf16.msra.mxu0 0
          %2531 = vmatprep.subr.bf16.mxu0 0
          %2532 = vmatpush1.bf16.msra.mxu0 0
          %2533 = vmatprep.subr.bf16.mxu0 0
          %2534 = vmatpush1.bf16.msra.mxu0 0
          %2535 = vmatprep.subr.bf16.mxu0 0
          %2536 = vmatpush1.bf16.msra.mxu0 0
          %2537 = vmatprep.mubr.bf16.mxu0 0
          %2538 = vmatmul.mubr.bf16.gmra.mrb[0].mxu0 %v2482
          %v2539 = vpop.f32.mrb[0].mxu0
          %v2540 = vadd.f32 %v2455, %v2539
          %v2541 = vpop.f32.mrb[0].mxu0
          %v2542 = vpop.f32.mrb[0].mxu0
          %v2543 = vadd.f32 %v2455, %v2542
          %v2544 = vpop.f32.mrb[0].mxu0
          %2545 = vmatprep.mubr.bf16.mxu0 0
          %2546 = vmatmul.mubr.bf16.gmra.mrb[0].mxu0 %v2485
          %v2547 = vpop.f32.mrb[0].mxu0
          %v2548 = vadd.f32 %v2455, %v2547
          %v2549 = vpop.f32.mrb[0].mxu0
          %v2550 = vpop.f32.mrb[0].mxu0
          %v2551 = vadd.f32 %v2455, %v2550
          %v2552 = vpop.f32.mrb[0].mxu0
          %2553 = vmatprep.mubr.bf16.mxu0 0
          %2554 = vmatmul.mubr.bf16.gmra.mrb[0].mxu0 %v2488
          %v2555 = vpop.f32.mrb[0].mxu0
          %v2556 = vadd.f32 %v2455, %v2555
          %v2557 = vpop.f32.mrb[0].mxu0
          %v2558 = vpop.f32.mrb[0].mxu0
          %v2559 = vadd.f32 %v2455, %v2558
          %v2560 = vpop.f32.mrb[0].mxu0
          %2561 = vmatprep.mubr.bf16.mxu0 0
          %2562 = vmatmul.mubr.bf16.gmra.mrb[0].mxu0 %v2491
          %v2563 = vpop.f32.mrb[0].mxu0
          %v2564 = vadd.f32 %v2455, %v2563
          %v2565 = vpop.f32.mrb[0].mxu0
          %v2566 = vpop.f32.mrb[0].mxu0
          %v2567 = vadd.f32 %v2455, %v2566
          %v2568 = vpop.f32.mrb[0].mxu0
          %2569 = vmatprep.mubr.bf16.mxu0 0
          %2570 = vmatmul.mubr.bf16.gmra.mrb[0].mxu0 %v2494
          %v2571 = vpop.f32.mrb[0].mxu0
          %v2572 = vadd.f32 %v2455, %v2571
          %v2573 = vpop.f32.mrb[0].mxu0
          %v2574 = vpop.f32.mrb[0].mxu0
          %v2575 = vadd.f32 %v2455, %v2574
          %v2576 = vpop.f32.mrb[0].mxu0
          %2577 = vmatprep.mubr.bf16.mxu0 0
          %2578 = vmatmul.mubr.bf16.gmra.mrb[0].mxu0 %v2497
          %v2579 = vpop.f32.mrb[0].mxu0
          %v2580 = vadd.f32 %v2455, %v2579
          %v2581 = vpop.f32.mrb[0].mxu0
          %v2582 = vpop.f32.mrb[0].mxu0
          %v2583 = vadd.f32 %v2455, %v2582
          %v2584 = vpop.f32.mrb[0].mxu0
          %2585 = vmatprep.mubr.bf16.mxu0 0
          %2586 = vmatmul.mubr.bf16.gmra.mrb[0].mxu0 %v2500
          %v2587 = vpop.f32.mrb[0].mxu0
          %v2588 = vadd.f32 %v2455, %v2587
          %v2589 = vpop.f32.mrb[0].mxu0
          %v2590 = vpop.f32.mrb[0].mxu0
          %v2591 = vadd.f32 %v2455, %v2590
          %v2592 = vpop.f32.mrb[0].mxu0
          %2593 = vmatprep.mubr.bf16.mxu0 0
          %2594 = vmatmul.mubr.bf16.gmra.mrb[0].mxu0 %v2503
          %v2595 = vpop.f32.mrb[0].mxu0
          %v2596 = vadd.f32 %v2455, %v2595
          %v2597 = vpop.f32.mrb[0].mxu0
          %v2598 = vpop.f32.mrb[0].mxu0
          %v2599 = vadd.f32 %v2455, %v2598
          %v2600 = vpop.f32.mrb[0].mxu0
          %2601 = vdwg.mxu0
          %v2602 = vadd.f32 %v2540, %v1983
          %v2603 = vadd.f32 %v2543, %v1984
          %v2604 = vadd.f32 %v2548, %v1985
          %v2605 = vadd.f32 %v2551, %v1986
          %v2606 = vadd.f32 %v2556, %v1987
          %v2607 = vadd.f32 %v2559, %v1988
          %v2608 = vadd.f32 %v2564, %v1989
          %v2609 = vadd.f32 %v2567, %v1990
          %v2610 = vadd.f32 %v2572, %v1991
          %v2611 = vadd.f32 %v2575, %v1992
          %v2612 = vadd.f32 %v2580, %v1993
          %v2613 = vadd.f32 %v2583, %v1994
          %v2614 = vadd.f32 %v2588, %v1995
          %v2615 = vadd.f32 %v2591, %v1996
          %v2616 = vadd.f32 %v2596, %v1997
          %v2617 = vadd.f32 %v2599, %v1998
          %v2618 = vmul.f32 %v2602, 0.70710677
          %v2619 = vmul.f32 %v2603, 0.70710677
          %v2620 = vmul.f32 %v2604, 0.70710677
          %v2621 = vmul.f32 %v2605, 0.70710677
          %v2622 = vmul.f32 %v2606, 0.70710677
          %v2623 = vmul.f32 %v2607, 0.70710677
          %v2624 = vmul.f32 %v2608, 0.70710677
          %v2625 = vmul.f32 %v2609, 0.70710677
          %v2626 = vmul.f32 %v2610, 0.70710677
          %v2627 = vmul.f32 %v2611, 0.70710677
          %v2628 = vmul.f32 %v2612, 0.70710677
          %v2629 = vmul.f32 %v2613, 0.70710677
          %v2630 = vmul.f32 %v2614, 0.70710677
          %v2631 = vmul.f32 %v2615, 0.70710677
          %v2632 = vmul.f32 %v2616, 0.70710677
          %v2633 = vmul.f32 %v2617, 0.70710677
          %s2634 = sadd.s32 %s729, 3
          %s2635 = smul.u32 %s2634, 64
          %s2636 = scalar_lea.vmem [#allocation4], %s2635
          %v2637 = vld [vmem:[%s2636] sm:$0xff]
          %v2638 = vld [vmem:[%s2636 + $0x8] sm:$0xff]
          %v2639 = vld [vmem:[%s2636 + $0x10] sm:$0xff]
          %v2640 = vld [vmem:[%s2636 + $0x18] sm:$0xff]
          %v2641 = vld [vmem:[%s2636 + $0x20] sm:$0xff]
          %v2642 = vld [vmem:[%s2636 + $0x28] sm:$0xff]
          %v2643 = vld [vmem:[%s2636 + $0x30] sm:$0xff]
          %v2644 = vld [vmem:[%s2636 + $0x38] sm:$0xff]
          %2645 = vst.msk [vmem:[#allocation2] sm:$0xff] %vm623, %v2637
          %2646 = vst.msk [vmem:[#allocation2 + $0x8] sm:$0xff] %vm623, %v2638
          %2647 = vst.msk [vmem:[#allocation2 + $0x10] sm:$0xff] %vm623, %v2639
          %2648 = vst.msk [vmem:[#allocation2 + $0x18] sm:$0xff] %vm623, %v2640
          %2649 = vst.msk [vmem:[#allocation2 + $0x20] sm:$0xff] %vm623, %v2641
          %2650 = vst.msk [vmem:[#allocation2 + $0x28] sm:$0xff] %vm623, %v2642
          %2651 = vst.msk [vmem:[#allocation2 + $0x30] sm:$0xff] %vm623, %v2643
          %2652 = vst.msk [vmem:[#allocation2 + $0x38] sm:$0xff] %vm623, %v2644
          %2653 = vst.msk [vmem:[#allocation2 + $0x40] sm:$0xff] %vm623, %v2618
          %2654 = vst.msk [vmem:[#allocation2 + $0x48] sm:$0xff] %vm623, %v2619
          %2655 = vst.msk [vmem:[#allocation2 + $0x50] sm:$0xff] %vm623, %v2620
          %2656 = vst.msk [vmem:[#allocation2 + $0x58] sm:$0xff] %vm623, %v2621
          %2657 = vst.msk [vmem:[#allocation2 + $0x60] sm:$0xff] %vm623, %v2622
          %2658 = vst.msk [vmem:[#allocation2 + $0x68] sm:$0xff] %vm623, %v2623
          %2659 = vst.msk [vmem:[#allocation2 + $0x70] sm:$0xff] %vm623, %v2624
          %2660 = vst.msk [vmem:[#allocation2 + $0x78] sm:$0xff] %vm623, %v2625
          %2661 = vst.msk [vmem:[#allocation2 + $0x80] sm:$0xff] %vm623, %v2626
          %2662 = vst.msk [vmem:[#allocation2 + $0x88] sm:$0xff] %vm623, %v2627
          %2663 = vst.msk [vmem:[#allocation2 + $0x90] sm:$0xff] %vm623, %v2628
          %2664 = vst.msk [vmem:[#allocation2 + $0x98] sm:$0xff] %vm623, %v2629
          %2665 = vst.msk [vmem:[#allocation2 + $0xa0] sm:$0xff] %vm623, %v2630
          %2666 = vst.msk [vmem:[#allocation2 + $0xa8] sm:$0xff] %vm623, %v2631
          %2667 = vst.msk [vmem:[#allocation2 + $0xb0] sm:$0xff] %vm623, %v2632
          %2668 = vst.msk [vmem:[#allocation2 + $0xb8] sm:$0xff] %vm623, %v2633
          %2669 = vst.msk [vmem:[%s2636] sm:$0xff] %vm623, %v2626
          %2670 = vst.msk [vmem:[%s2636 + $0x8] sm:$0xff] %vm623, %v2627
          %2671 = vst.msk [vmem:[%s2636 + $0x10] sm:$0xff] %vm623, %v2628
          %2672 = vst.msk [vmem:[%s2636 + $0x18] sm:$0xff] %vm623, %v2629
          %2673 = vst.msk [vmem:[%s2636 + $0x20] sm:$0xff] %vm623, %v2630
          %2674 = vst.msk [vmem:[%s2636 + $0x28] sm:$0xff] %vm623, %v2631
          %2675 = vst.msk [vmem:[%s2636 + $0x30] sm:$0xff] %vm623, %v2632
          %2676 = vst.msk [vmem:[%s2636 + $0x38] sm:$0xff] %vm623, %v2633
          %v2677 = vld [vmem:[#allocation2 + $0x30] sm:$0xff]
          %v2678 = vld [vmem:[#allocation2 + $0x38] sm:$0xff]
          %v2679 = vld [vmem:[#allocation2 + $0x40] sm:$0xff]
          %v2680 = vld [vmem:[#allocation2 + $0x48] sm:$0xff]
          %v2681 = vld [vmem:[#allocation2 + $0x50] sm:$0xff]
          %v2682 = vld [vmem:[#allocation2 + $0x58] sm:$0xff]
          %v2683 = vld [vmem:[#allocation2 + $0x60] sm:$0xff]
          %v2684 = vld [vmem:[#allocation2 + $0x68] sm:$0xff]
          %v2685 = vld [vmem:[#allocation2 + $0x70] sm:$0xff]
          %v2686 = vld [vmem:[#allocation2 + $0x78] sm:$0xff]
          %v2687 = vld [vmem:[#allocation2 + $0x80] sm:$0xff]
          %v2688 = vld [vmem:[#allocation2 + $0x88] sm:$0xff]
          %v2689 = vld [vmem:[#allocation2 + $0x90] sm:$0xff]
          %v2690 = vld [vmem:[#allocation2 + $0x98] sm:$0xff]
          %v2691 = vld [vmem:[#allocation2 + $0xa0] sm:$0xff]
          %v2692 = vld [vmem:[#allocation2 + $0xa8] sm:$0xff]
          %v2693 = vld [vmem:[#allocation2 + $0xb0] sm:$0xff]
          %2710 = vrot.lane.b32.xlu0 %v2678, 64
          %v2711 = vpop.permute.xlu0 %2710
          %2712 = vrot.lane.b32.xlu0 %v2679, 64
          %v2713 = vpop.permute.xlu0 %2712
          %2714 = vrot.lane.b32.xlu0 %v2680, 64
          %v2715 = vpop.permute.xlu0 %2714
          %2716 = vrot.lane.b32.xlu0 %v2681, 64
          %v2717 = vpop.permute.xlu0 %2716
          %2718 = vrot.lane.b32.xlu0 %v2682, 64
          %v2719 = vpop.permute.xlu0 %2718
          %2720 = vrot.lane.b32.xlu0 %v2683, 64
          %v2721 = vpop.permute.xlu0 %2720
          %2722 = vrot.lane.b32.xlu0 %v2684, 64
          %v2723 = vpop.permute.xlu0 %2722
          %2724 = vrot.lane.b32.xlu0 %v2685, 64
          %v2725 = vpop.permute.xlu0 %2724
          %2726 = vrot.lane.b32.xlu0 %v2686, 64
          %v2727 = vpop.permute.xlu0 %2726
          %2728 = vrot.lane.b32.xlu0 %v2687, 64
          %v2729 = vpop.permute.xlu0 %2728
          %2730 = vrot.lane.b32.xlu0 %v2688, 64
          %v2731 = vpop.permute.xlu0 %2730
          %2732 = vrot.lane.b32.xlu0 %v2689, 64
          %v2733 = vpop.permute.xlu0 %2732
          %2734 = vrot.lane.b32.xlu0 %v2690, 64
          %v2735 = vpop.permute.xlu0 %2734
          %2736 = vrot.lane.b32.xlu0 %v2691, 64
          %v2737 = vpop.permute.xlu0 %2736
          %2738 = vrot.lane.b32.xlu0 %v2692, 64
          %v2739 = vpop.permute.xlu0 %2738
          %2740 = vrot.lane.b32.xlu0 %v2693, 64
          %v2741 = vpop.permute.xlu0 %2740
          %v2758 = vsel %vm623, %v2677, %v2711
          %v2759 = vsel %vm623, %v2678, %v2713
          %v2760 = vsel %vm623, %v2679, %v2715
          %v2761 = vsel %vm623, %v2680, %v2717
          %v2762 = vsel %vm623, %v2681, %v2719
          %v2763 = vsel %vm623, %v2682, %v2721
          %v2764 = vsel %vm623, %v2683, %v2723
          %v2765 = vsel %vm623, %v2684, %v2725
          %v2766 = vsel %vm623, %v2685, %v2727
          %v2767 = vsel %vm623, %v2686, %v2729
          %v2768 = vsel %vm623, %v2687, %v2731
          %v2769 = vsel %vm623, %v2688, %v2733
          %v2770 = vsel %vm623, %v2689, %v2735
          %v2771 = vsel %vm623, %v2690, %v2737
          %v2772 = vsel %vm623, %v2691, %v2739
          %v2773 = vsel %vm623, %v2692, %v2741
          %v2774 = vpack.c.bf16 %v2759, %v2758
          %v2775 = vpack.c.bf16 %v2619, %v2618
          %v2776 = vpack.c.bf16 %v2761, %v2760
          %v2777 = vpack.c.bf16 %v2621, %v2620
          %v2778 = vpack.c.bf16 %v2763, %v2762
          %v2779 = vpack.c.bf16 %v2623, %v2622
          %v2780 = vpack.c.bf16 %v2765, %v2764
          %v2781 = vpack.c.bf16 %v2625, %v2624
          %v2782 = vpack.c.bf16 %v2767, %v2766
          %v2783 = vpack.c.bf16 %v2627, %v2626
          %v2784 = vpack.c.bf16 %v2769, %v2768
          %v2785 = vpack.c.bf16 %v2629, %v2628
          %v2786 = vpack.c.bf16 %v2771, %v2770
          %v2787 = vpack.c.bf16 %v2631, %v2630
          %v2788 = vpack.c.bf16 %v2773, %v2772
          %v2789 = vpack.c.bf16 %v2633, %v2632
          %s2790 = smul.u32 %s2634, 24
          %s2791 = smul.addr %s2790, 4
          %s2792 = scalar_lea.vmem %s2, %s2791
          %v2793 = vld [vmem:[%s2792] sm:$0xf]
          %v2794 = vld [vmem:[%s2792 + $0x4] sm:$0xf]
          %v2795 = vld [vmem:[%s2792 + $0x8] sm:$0xf]
          %v2796 = vld [vmem:[%s2792 + $0xc] sm:$0xf]
          %v2797 = vld [vmem:[%s2792 + $0x10] sm:$0xf]
          %v2798 = vld [vmem:[%s2792 + $0x14] sm:$0xf]
          %v2799 = vld [vmem:[%s2792 + $0x18] sm:$0xf]
          %v2800 = vld [vmem:[%s2792 + $0x1c] sm:$0xf]
          %v2801 = vld [vmem:[%s2792 + $0x20] sm:$0xf]
          %v2802 = vld [vmem:[%s2792 + $0x24] sm:$0xf]
          %v2803 = vld [vmem:[%s2792 + $0x28] sm:$0xf]
          %v2804 = vld [vmem:[%s2792 + $0x2c] sm:$0xf]
          %v2805 = vld [vmem:[%s2792 + $0x30] sm:$0xf]
          %v2806 = vld [vmem:[%s2792 + $0x34] sm:$0xf]
          %v2807 = vld [vmem:[%s2792 + $0x38] sm:$0xf]
          %v2808 = vld [vmem:[%s2792 + $0x3c] sm:$0xf]
          %v2809 = vld [vmem:[%s2792 + $0x40] sm:$0xf]
          %v2810 = vld [vmem:[%s2792 + $0x44] sm:$0xf]
          %v2811 = vld [vmem:[%s2792 + $0x48] sm:$0xf]
          %v2812 = vld [vmem:[%s2792 + $0x4c] sm:$0xf]
          %v2813 = vld [vmem:[%s2792 + $0x50] sm:$0xf]
          %v2814 = vld [vmem:[%s2792 + $0x54] sm:$0xf]
          %v2815 = vld [vmem:[%s2792 + $0x58] sm:$0xf]
          %v2816 = vld [vmem:[%s2792 + $0x5c] sm:$0xf]
          %s2817 = scalar_lea.vmem %s3, %s2634
          %v2818 = vld [vmem:[%s2817] sm:$0x1]
          %v2820 = vlaneseq
          %v2821 = vshrl.u32 %v2820, 7
          %v2822 = vsub.s32 0, %v2821
          %v2823 = vrot.slane %v2818, %v2822
          %v2849 = vunpack.c.l.b16 %v2793
          %v2850 = vunpack.c.l.b16 %v2794
          %v2851 = vunpack.c.l.b16 %v2795
          %v2852 = vunpack.c.l.b16 %v2796
          %v2853 = vunpack.c.l.b16 %v2797
          %v2854 = vunpack.c.l.b16 %v2798
          %v2855 = vunpack.c.l.b16 %v2799
          %v2856 = vunpack.c.l.b16 %v2800
          %v2857 = vunpack.c.l.b16 %v2801
          %v2858 = vunpack.c.l.b16 %v2802
          %v2859 = vunpack.c.l.b16 %v2803
          %v2860 = vunpack.c.l.b16 %v2804
          %v2861 = vunpack.c.l.b16 %v2805
          %v2862 = vunpack.c.l.b16 %v2806
          %v2863 = vunpack.c.l.b16 %v2807
          %v2864 = vunpack.c.l.b16 %v2808
          %v2865 = vunpack.c.l.b16 %v2809
          %v2866 = vunpack.c.l.b16 %v2810
          %v2867 = vunpack.c.l.b16 %v2811
          %v2868 = vunpack.c.l.b16 %v2812
          %v2869 = vunpack.c.l.b16 %v2813
          %v2870 = vunpack.c.l.b16 %v2814
          %v2871 = vunpack.c.l.b16 %v2815
          %v2872 = vunpack.c.l.b16 %v2816
          %v2873 = vpack.c.b16 %v2850, %v2849
          %v2874 = vpack.c.b16 %v2852, %v2851
          %v2875 = vpack.c.b16 %v2854, %v2853
          %v2876 = vpack.c.b16 %v2856, %v2855
          %v2877 = vpack.c.b16 %v2858, %v2857
          %v2878 = vpack.c.b16 %v2860, %v2859
          %v2879 = vpack.c.b16 %v2862, %v2861
          %v2880 = vpack.c.b16 %v2864, %v2863
          %v2881 = vpack.c.b16 %v2866, %v2865
          %v2882 = vpack.c.b16 %v2868, %v2867
          %v2883 = vpack.c.b16 %v2870, %v2869
          %v2884 = vpack.c.b16 %v2872, %v2871
          %v2898 = vsel %vm623, %v2775, 0
          %v2901 = vsel %vm623, %v2777, 0
          %v2904 = vsel %vm623, %v2779, 0
          %v2907 = vsel %vm623, %v2781, 0
          %v2910 = vsel %vm623, %v2783, 0
          %v2913 = vsel %vm623, %v2785, 0
          %v2916 = vsel %vm623, %v2787, 0
          %v2919 = vsel %vm623, %v2789, 0
          %2921 = vmatprep.subr.bf16.mxu0 0
          %2922 = vmatpush1.bf16.msra.mxu0 %v2873
          %2923 = vmatprep.subr.bf16.mxu0 0
          %2924 = vmatpush1.bf16.msra.mxu0 %v2874
          %2925 = vmatprep.subr.bf16.mxu0 0
          %2926 = vmatpush1.bf16.msra.mxu0 %v2875
          %2927 = vmatprep.subr.bf16.mxu0 0
          %2928 = vmatpush1.bf16.msra.mxu0 %v2876
          %2929 = vmatprep.subr.bf16.mxu0 0
          %2930 = vmatpush1.bf16.msra.mxu0 %v2877
          %2931 = vmatprep.subr.bf16.mxu0 0
          %2932 = vmatpush1.bf16.msra.mxu0 %v2878
          %2933 = vmatprep.subr.bf16.mxu0 0
          %2934 = vmatpush1.bf16.msra.mxu0 %v2879
          %2935 = vmatprep.subr.bf16.mxu0 0
          %2936 = vmatpush1.bf16.msra.mxu0 %v2880
          %2937 = vmatprep.subr.bf16.mxu0 0
          %2938 = vmatpush1.bf16.msra.mxu0 %v2881
          %2939 = vmatprep.subr.bf16.mxu0 0
          %2940 = vmatpush1.bf16.msra.mxu0 %v2882
          %2941 = vmatprep.subr.bf16.mxu0 0
          %2942 = vmatpush1.bf16.msra.mxu0 %v2883
          %2943 = vmatprep.subr.bf16.mxu0 0
          %2944 = vmatpush1.bf16.msra.mxu0 %v2884
          %2945 = vmatprep.subr.bf16.mxu0 0
          %2946 = vmatpush1.bf16.msra.mxu0 0
          %2947 = vmatprep.subr.bf16.mxu0 0
          %2948 = vmatpush1.bf16.msra.mxu0 0
          %2949 = vmatprep.subr.bf16.mxu0 0
          %2950 = vmatpush1.bf16.msra.mxu0 0
          %2951 = vmatprep.subr.bf16.mxu0 0
          %2952 = vmatpush1.bf16.msra.mxu0 0
          %2953 = vmatprep.mubr.bf16.mxu0 %v2898
          %2954 = vmatmul.mubr.bf16.gmra.mrb[0].mxu0 %v2774
          %v2955 = vpop.f32.mrb[0].mxu0
          %v2956 = vadd.f32 %v2823, %v2955
          %v2957 = vpop.f32.mrb[0].mxu0
          %v2958 = vpop.f32.mrb[0].mxu0
          %v2959 = vadd.f32 %v2823, %v2958
          %v2960 = vpop.f32.mrb[0].mxu0
          %2961 = vmatprep.mubr.bf16.mxu0 %v2901
          %2962 = vmatmul.mubr.bf16.gmra.mrb[0].mxu0 %v2776
          %v2963 = vpop.f32.mrb[0].mxu0
          %v2964 = vadd.f32 %v2823, %v2963
          %v2965 = vpop.f32.mrb[0].mxu0
          %v2966 = vpop.f32.mrb[0].mxu0
          %v2967 = vadd.f32 %v2823, %v2966
          %v2968 = vpop.f32.mrb[0].mxu0
          %2969 = vmatprep.mubr.bf16.mxu0 %v2904
          %2970 = vmatmul.mubr.bf16.gmra.mrb[0].mxu0 %v2778
          %v2971 = vpop.f32.mrb[0].mxu0
          %v2972 = vadd.f32 %v2823, %v2971
          %v2973 = vpop.f32.mrb[0].mxu0
          %v2974 = vpop.f32.mrb[0].mxu0
          %v2975 = vadd.f32 %v2823, %v2974
          %v2976 = vpop.f32.mrb[0].mxu0
          %2977 = vmatprep.mubr.bf16.mxu0 %v2907
          %2978 = vmatmul.mubr.bf16.gmra.mrb[0].mxu0 %v2780
          %v2979 = vpop.f32.mrb[0].mxu0
          %v2980 = vadd.f32 %v2823, %v2979
          %v2981 = vpop.f32.mrb[0].mxu0
          %v2982 = vpop.f32.mrb[0].mxu0
          %v2983 = vadd.f32 %v2823, %v2982
          %v2984 = vpop.f32.mrb[0].mxu0
          %2985 = vmatprep.mubr.bf16.mxu0 %v2910
          %2986 = vmatmul.mubr.bf16.gmra.mrb[0].mxu0 %v2782
          %v2987 = vpop.f32.mrb[0].mxu0
          %v2988 = vadd.f32 %v2823, %v2987
          %v2989 = vpop.f32.mrb[0].mxu0
          %v2990 = vpop.f32.mrb[0].mxu0
          %v2991 = vadd.f32 %v2823, %v2990
          %v2992 = vpop.f32.mrb[0].mxu0
          %2993 = vmatprep.mubr.bf16.mxu0 %v2913
          %2994 = vmatmul.mubr.bf16.gmra.mrb[0].mxu0 %v2784
          %v2995 = vpop.f32.mrb[0].mxu0
          %v2996 = vadd.f32 %v2823, %v2995
          %v2997 = vpop.f32.mrb[0].mxu0
          %v2998 = vpop.f32.mrb[0].mxu0
          %v2999 = vadd.f32 %v2823, %v2998
          %v3000 = vpop.f32.mrb[0].mxu0
          %3001 = vmatprep.mubr.bf16.mxu0 %v2916
          %3002 = vmatmul.mubr.bf16.gmra.mrb[0].mxu0 %v2786
          %v3003 = vpop.f32.mrb[0].mxu0
          %v3004 = vadd.f32 %v2823, %v3003
          %v3005 = vpop.f32.mrb[0].mxu0
          %v3006 = vpop.f32.mrb[0].mxu0
          %v3007 = vadd.f32 %v2823, %v3006
          %v3008 = vpop.f32.mrb[0].mxu0
          %3009 = vmatprep.mubr.bf16.mxu0 %v2919
          %3010 = vmatmul.mubr.bf16.gmra.mrb[0].mxu0 %v2788
          %v3011 = vpop.f32.mrb[0].mxu0
          %v3012 = vadd.f32 %v2823, %v3011
          %v3013 = vpop.f32.mrb[0].mxu0
          %v3014 = vpop.f32.mrb[0].mxu0
          %v3015 = vadd.f32 %v2823, %v3014
          %v3016 = vpop.f32.mrb[0].mxu0
          %3017 = vdwg.mxu0
          %v3018 = vmax.f32 %v2956, 0.0
          %v3019 = vmax.f32 %v2959, 0.0
          %v3020 = vmax.f32 %v2964, 0.0
          %v3021 = vmax.f32 %v2967, 0.0
          %v3022 = vmax.f32 %v2972, 0.0
          %v3023 = vmax.f32 %v2975, 0.0
          %v3024 = vmax.f32 %v2980, 0.0
          %v3025 = vmax.f32 %v2983, 0.0
          %v3026 = vmax.f32 %v2988, 0.0
          %v3027 = vmax.f32 %v2991, 0.0
          %v3028 = vmax.f32 %v2996, 0.0
          %v3029 = vmax.f32 %v2999, 0.0
          %v3030 = vmax.f32 %v3004, 0.0
          %v3031 = vmax.f32 %v3007, 0.0
          %v3032 = vmax.f32 %v3012, 0.0
          %v3033 = vmax.f32 %v3015, 0.0
          %v3034 = vadd.f32 %v3018, %v675
          %v3035 = vadd.f32 %v3019, %v676
          %v3036 = vadd.f32 %v3020, %v677
          %v3037 = vadd.f32 %v3021, %v678
          %v3038 = vadd.f32 %v3022, %v679
          %v3039 = vadd.f32 %v3023, %v680
          %v3040 = vadd.f32 %v3024, %v681
          %v3041 = vadd.f32 %v3025, %v682
          %v3042 = vadd.f32 %v3026, %v683
          %v3043 = vadd.f32 %v3027, %v684
          %v3044 = vadd.f32 %v3028, %v685
          %v3045 = vadd.f32 %v3029, %v686
          %v3046 = vadd.f32 %v3030, %v687
          %v3047 = vadd.f32 %v3031, %v688
          %v3048 = vadd.f32 %v3032, %v689
          %v3049 = vadd.f32 %v3033, %v690
          %v3050 = vpack.c.bf16 %v3035, %v3034
          %v3051 = vpack.c.bf16 %v3037, %v3036
          %v3052 = vpack.c.bf16 %v3039, %v3038
          %v3053 = vpack.c.bf16 %v3041, %v3040
          %v3054 = vpack.c.bf16 %v3043, %v3042
          %v3055 = vpack.c.bf16 %v3045, %v3044
          %v3056 = vpack.c.bf16 %v3047, %v3046
          %v3057 = vpack.c.bf16 %v3049, %v3048
          %s3058 = smul.u32 %s2634, 8
          %s3059 = smul.addr %s3058, 4
          %s3060 = scalar_lea.vmem %s4, %s3059
          %v3061 = vld [vmem:[%s3060] sm:$0xf]
          %v3062 = vld [vmem:[%s3060 + $0x4] sm:$0xf]
          %v3063 = vld [vmem:[%s3060 + $0x8] sm:$0xf]
          %v3064 = vld [vmem:[%s3060 + $0xc] sm:$0xf]
          %v3065 = vld [vmem:[%s3060 + $0x10] sm:$0xf]
          %v3066 = vld [vmem:[%s3060 + $0x14] sm:$0xf]
          %v3067 = vld [vmem:[%s3060 + $0x18] sm:$0xf]
          %v3068 = vld [vmem:[%s3060 + $0x1c] sm:$0xf]
          %s3069 = scalar_lea.vmem %s5, %s2634
          %v3070 = vld [vmem:[%s3069] sm:$0x1]
          %v3072 = vlaneseq
          %v3073 = vshrl.u32 %v3072, 7
          %v3074 = vsub.s32 0, %v3073
          %v3075 = vrot.slane %v3070, %v3074
          %v3085 = vunpack.c.l.b16 %v3061
          %v3086 = vunpack.c.l.b16 %v3062
          %v3087 = vunpack.c.l.b16 %v3063
          %v3088 = vunpack.c.l.b16 %v3064
          %v3089 = vunpack.c.l.b16 %v3065
          %v3090 = vunpack.c.l.b16 %v3066
          %v3091 = vunpack.c.l.b16 %v3067
          %v3092 = vunpack.c.l.b16 %v3068
          %v3093 = vpack.c.b16 %v3086, %v3085
          %v3094 = vpack.c.b16 %v3088, %v3087
          %v3095 = vpack.c.b16 %v3090, %v3089
          %v3096 = vpack.c.b16 %v3092, %v3091
          %v3102 = vsel %vm623, %v3050, 0
          %v3105 = vsel %vm623, %v3051, 0
          %v3108 = vsel %vm623, %v3052, 0
          %v3111 = vsel %vm623, %v3053, 0
          %v3114 = vsel %vm623, %v3054, 0
          %v3117 = vsel %vm623, %v3055, 0
          %v3120 = vsel %vm623, %v3056, 0
          %v3123 = vsel %vm623, %v3057, 0
          %3125 = vmatprep.subr.bf16.mxu0 0
          %3126 = vmatpush1.bf16.msra.mxu0 %v3093
          %3127 = vmatprep.subr.bf16.mxu0 0
          %3128 = vmatpush1.bf16.msra.mxu0 %v3094
          %3129 = vmatprep.subr.bf16.mxu0 0
          %3130 = vmatpush1.bf16.msra.mxu0 %v3095
          %3131 = vmatprep.subr.bf16.mxu0 0
          %3132 = vmatpush1.bf16.msra.mxu0 %v3096
          %3133 = vmatprep.subr.bf16.mxu0 0
          %3134 = vmatpush1.bf16.msra.mxu0 0
          %3135 = vmatprep.subr.bf16.mxu0 0
          %3136 = vmatpush1.bf16.msra.mxu0 0
          %3137 = vmatprep.subr.bf16.mxu0 0
          %3138 = vmatpush1.bf16.msra.mxu0 0
          %3139 = vmatprep.subr.bf16.mxu0 0
          %3140 = vmatpush1.bf16.msra.mxu0 0
          %3141 = vmatprep.subr.bf16.mxu0 0
          %3142 = vmatpush1.bf16.msra.mxu0 0
          %3143 = vmatprep.subr.bf16.mxu0 0
          %3144 = vmatpush1.bf16.msra.mxu0 0
          %3145 = vmatprep.subr.bf16.mxu0 0
          %3146 = vmatpush1.bf16.msra.mxu0 0
          %3147 = vmatprep.subr.bf16.mxu0 0
          %3148 = vmatpush1.bf16.msra.mxu0 0
          %3149 = vmatprep.subr.bf16.mxu0 0
          %3150 = vmatpush1.bf16.msra.mxu0 0
          %3151 = vmatprep.subr.bf16.mxu0 0
          %3152 = vmatpush1.bf16.msra.mxu0 0
          %3153 = vmatprep.subr.bf16.mxu0 0
          %3154 = vmatpush1.bf16.msra.mxu0 0
          %3155 = vmatprep.subr.bf16.mxu0 0
          %3156 = vmatpush1.bf16.msra.mxu0 0
          %3157 = vmatprep.mubr.bf16.mxu0 0
          %3158 = vmatmul.mubr.bf16.gmra.mrb[0].mxu0 %v3102
          %v3159 = vpop.f32.mrb[0].mxu0
          %v3160 = vadd.f32 %v3075, %v3159
          %v3161 = vpop.f32.mrb[0].mxu0
          %v3162 = vpop.f32.mrb[0].mxu0
          %v3163 = vadd.f32 %v3075, %v3162
          %v3164 = vpop.f32.mrb[0].mxu0
          %3165 = vmatprep.mubr.bf16.mxu0 0
          %3166 = vmatmul.mubr.bf16.gmra.mrb[0].mxu0 %v3105
          %v3167 = vpop.f32.mrb[0].mxu0
          %v3168 = vadd.f32 %v3075, %v3167
          %v3169 = vpop.f32.mrb[0].mxu0
          %v3170 = vpop.f32.mrb[0].mxu0
          %v3171 = vadd.f32 %v3075, %v3170
          %v3172 = vpop.f32.mrb[0].mxu0
          %3173 = vmatprep.mubr.bf16.mxu0 0
          %3174 = vmatmul.mubr.bf16.gmra.mrb[0].mxu0 %v3108
          %v3175 = vpop.f32.mrb[0].mxu0
          %v3176 = vadd.f32 %v3075, %v3175
          %v3177 = vpop.f32.mrb[0].mxu0
          %v3178 = vpop.f32.mrb[0].mxu0
          %v3179 = vadd.f32 %v3075, %v3178
          %v3180 = vpop.f32.mrb[0].mxu0
          %3181 = vmatprep.mubr.bf16.mxu0 0
          %3182 = vmatmul.mubr.bf16.gmra.mrb[0].mxu0 %v3111
          %v3183 = vpop.f32.mrb[0].mxu0
          %v3184 = vadd.f32 %v3075, %v3183
          %v3185 = vpop.f32.mrb[0].mxu0
          %v3186 = vpop.f32.mrb[0].mxu0
          %v3187 = vadd.f32 %v3075, %v3186
          %v3188 = vpop.f32.mrb[0].mxu0
          %3189 = vmatprep.mubr.bf16.mxu0 0
          %3190 = vmatmul.mubr.bf16.gmra.mrb[0].mxu0 %v3114
          %v3191 = vpop.f32.mrb[0].mxu0
          %v3192 = vadd.f32 %v3075, %v3191
          %v3193 = vpop.f32.mrb[0].mxu0
          %v3194 = vpop.f32.mrb[0].mxu0
          %v3195 = vadd.f32 %v3075, %v3194
          %v3196 = vpop.f32.mrb[0].mxu0
          %3197 = vmatprep.mubr.bf16.mxu0 0
          %3198 = vmatmul.mubr.bf16.gmra.mrb[0].mxu0 %v3117
          %v3199 = vpop.f32.mrb[0].mxu0
          %v3200 = vadd.f32 %v3075, %v3199
          %v3201 = vpop.f32.mrb[0].mxu0
          %v3202 = vpop.f32.mrb[0].mxu0
          %v3203 = vadd.f32 %v3075, %v3202
          %v3204 = vpop.f32.mrb[0].mxu0
          %3205 = vmatprep.mubr.bf16.mxu0 0
          %3206 = vmatmul.mubr.bf16.gmra.mrb[0].mxu0 %v3120
          %v3207 = vpop.f32.mrb[0].mxu0
          %v3208 = vadd.f32 %v3075, %v3207
          %v3209 = vpop.f32.mrb[0].mxu0
          %v3210 = vpop.f32.mrb[0].mxu0
          %v3211 = vadd.f32 %v3075, %v3210
          %v3212 = vpop.f32.mrb[0].mxu0
          %3213 = vmatprep.mubr.bf16.mxu0 0
          %3214 = vmatmul.mubr.bf16.gmra.mrb[0].mxu0 %v3123
          %v3215 = vpop.f32.mrb[0].mxu0
          %v3216 = vadd.f32 %v3075, %v3215
          %v3217 = vpop.f32.mrb[0].mxu0
          %v3218 = vpop.f32.mrb[0].mxu0
          %v3219 = vadd.f32 %v3075, %v3218
          %v3220 = vpop.f32.mrb[0].mxu0
          %3221 = vdwg.mxu0
          %v3222 = vadd.f32 %v3160, %v2618
          %v3223 = vadd.f32 %v3163, %v2619
          %v3224 = vadd.f32 %v3168, %v2620
          %v3225 = vadd.f32 %v3171, %v2621
          %v3226 = vadd.f32 %v3176, %v2622
          %v3227 = vadd.f32 %v3179, %v2623
          %v3228 = vadd.f32 %v3184, %v2624
          %v3229 = vadd.f32 %v3187, %v2625
          %v3230 = vadd.f32 %v3192, %v2626
          %v3231 = vadd.f32 %v3195, %v2627
          %v3232 = vadd.f32 %v3200, %v2628
          %v3233 = vadd.f32 %v3203, %v2629
          %v3234 = vadd.f32 %v3208, %v2630
          %v3235 = vadd.f32 %v3211, %v2631
          %v3236 = vadd.f32 %v3216, %v2632
          %v3237 = vadd.f32 %v3219, %v2633
          %v3238 = vmul.f32 %v3222, 0.70710677
          %v3239 = vmul.f32 %v3223, 0.70710677
          %v3240 = vmul.f32 %v3224, 0.70710677
          %v3241 = vmul.f32 %v3225, 0.70710677
          %v3242 = vmul.f32 %v3226, 0.70710677
          %v3243 = vmul.f32 %v3227, 0.70710677
          %v3244 = vmul.f32 %v3228, 0.70710677
          %v3245 = vmul.f32 %v3229, 0.70710677
          %v3246 = vmul.f32 %v3230, 0.70710677
          %v3247 = vmul.f32 %v3231, 0.70710677
          %v3248 = vmul.f32 %v3232, 0.70710677
          %v3249 = vmul.f32 %v3233, 0.70710677
          %v3250 = vmul.f32 %v3234, 0.70710677
          %v3251 = vmul.f32 %v3235, 0.70710677
          %v3252 = vmul.f32 %v3236, 0.70710677
          %v3253 = vmul.f32 %v3237, 0.70710677
          %s3254 = sadd.s32 %s729, 4
          %s3255 = smul.u32 %s3254, 64
          %s3256 = scalar_lea.vmem [#allocation4], %s3255
          %v3257 = vld [vmem:[%s3256] sm:$0xff]
          %v3258 = vld [vmem:[%s3256 + $0x8] sm:$0xff]
          %v3259 = vld [vmem:[%s3256 + $0x10] sm:$0xff]
          %v3260 = vld [vmem:[%s3256 + $0x18] sm:$0xff]
          %v3261 = vld [vmem:[%s3256 + $0x20] sm:$0xff]
          %v3262 = vld [vmem:[%s3256 + $0x28] sm:$0xff]
          %v3263 = vld [vmem:[%s3256 + $0x30] sm:$0xff]
          %v3264 = vld [vmem:[%s3256 + $0x38] sm:$0xff]
          %3265 = vst.msk [vmem:[#allocation2] sm:$0xff] %vm623, %v3257
          %3266 = vst.msk [vmem:[#allocation2 + $0x8] sm:$0xff] %vm623, %v3258
          %3267 = vst.msk [vmem:[#allocation2 + $0x10] sm:$0xff] %vm623, %v3259
          %3268 = vst.msk [vmem:[#allocation2 + $0x18] sm:$0xff] %vm623, %v3260
          %3269 = vst.msk [vmem:[#allocation2 + $0x20] sm:$0xff] %vm623, %v3261
          %3270 = vst.msk [vmem:[#allocation2 + $0x28] sm:$0xff] %vm623, %v3262
          %3271 = vst.msk [vmem:[#allocation2 + $0x30] sm:$0xff] %vm623, %v3263
          %3272 = vst.msk [vmem:[#allocation2 + $0x38] sm:$0xff] %vm623, %v3264
          %3273 = vst.msk [vmem:[#allocation2 + $0x40] sm:$0xff] %vm623, %v3238
          %3274 = vst.msk [vmem:[#allocation2 + $0x48] sm:$0xff] %vm623, %v3239
          %3275 = vst.msk [vmem:[#allocation2 + $0x50] sm:$0xff] %vm623, %v3240
          %3276 = vst.msk [vmem:[#allocation2 + $0x58] sm:$0xff] %vm623, %v3241
          %3277 = vst.msk [vmem:[#allocation2 + $0x60] sm:$0xff] %vm623, %v3242
          %3278 = vst.msk [vmem:[#allocation2 + $0x68] sm:$0xff] %vm623, %v3243
          %3279 = vst.msk [vmem:[#allocation2 + $0x70] sm:$0xff] %vm623, %v3244
          %3280 = vst.msk [vmem:[#allocation2 + $0x78] sm:$0xff] %vm623, %v3245
          %3281 = vst.msk [vmem:[#allocation2 + $0x80] sm:$0xff] %vm623, %v3246
          %3282 = vst.msk [vmem:[#allocation2 + $0x88] sm:$0xff] %vm623, %v3247
          %3283 = vst.msk [vmem:[#allocation2 + $0x90] sm:$0xff] %vm623, %v3248
          %3284 = vst.msk [vmem:[#allocation2 + $0x98] sm:$0xff] %vm623, %v3249
          %3285 = vst.msk [vmem:[#allocation2 + $0xa0] sm:$0xff] %vm623, %v3250
          %3286 = vst.msk [vmem:[#allocation2 + $0xa8] sm:$0xff] %vm623, %v3251
          %3287 = vst.msk [vmem:[#allocation2 + $0xb0] sm:$0xff] %vm623, %v3252
          %3288 = vst.msk [vmem:[#allocation2 + $0xb8] sm:$0xff] %vm623, %v3253
          %3289 = vst.msk [vmem:[%s3256] sm:$0xff] %vm623, %v3246
          %3290 = vst.msk [vmem:[%s3256 + $0x8] sm:$0xff] %vm623, %v3247
          %3291 = vst.msk [vmem:[%s3256 + $0x10] sm:$0xff] %vm623, %v3248
          %3292 = vst.msk [vmem:[%s3256 + $0x18] sm:$0xff] %vm623, %v3249
          %3293 = vst.msk [vmem:[%s3256 + $0x20] sm:$0xff] %vm623, %v3250
          %3294 = vst.msk [vmem:[%s3256 + $0x28] sm:$0xff] %vm623, %v3251
          %3295 = vst.msk [vmem:[%s3256 + $0x30] sm:$0xff] %vm623, %v3252
          %3296 = vst.msk [vmem:[%s3256 + $0x38] sm:$0xff] %vm623, %v3253
          %v3297 = vld [vmem:[#allocation2 + $0x20] sm:$0xff]
          %v3298 = vld [vmem:[#allocation2 + $0x28] sm:$0xff]
          %v3299 = vld [vmem:[#allocation2 + $0x30] sm:$0xff]
          %v3300 = vld [vmem:[#allocation2 + $0x38] sm:$0xff]
          %v3301 = vld [vmem:[#allocation2 + $0x40] sm:$0xff]
          %v3302 = vld [vmem:[#allocation2 + $0x48] sm:$0xff]
          %v3303 = vld [vmem:[#allocation2 + $0x50] sm:$0xff]
          %v3304 = vld [vmem:[#allocation2 + $0x58] sm:$0xff]
          %v3305 = vld [vmem:[#allocation2 + $0x60] sm:$0xff]
          %v3306 = vld [vmem:[#allocation2 + $0x68] sm:$0xff]
          %v3307 = vld [vmem:[#allocation2 + $0x70] sm:$0xff]
          %v3308 = vld [vmem:[#allocation2 + $0x78] sm:$0xff]
          %v3309 = vld [vmem:[#allocation2 + $0x80] sm:$0xff]
          %v3310 = vld [vmem:[#allocation2 + $0x88] sm:$0xff]
          %v3311 = vld [vmem:[#allocation2 + $0x90] sm:$0xff]
          %v3312 = vld [vmem:[#allocation2 + $0x98] sm:$0xff]
          %v3313 = vld [vmem:[#allocation2 + $0xa0] sm:$0xff]
          %v3314 = vld [vmem:[#allocation2 + $0xa8] sm:$0xff]
          %3331 = vrot.lane.b32.xlu0 %v3299, 64
          %v3332 = vpop.permute.xlu0 %3331
          %3333 = vrot.lane.b32.xlu0 %v3300, 64
          %v3334 = vpop.permute.xlu0 %3333
          %3335 = vrot.lane.b32.xlu0 %v3301, 64
          %v3336 = vpop.permute.xlu0 %3335
          %3337 = vrot.lane.b32.xlu0 %v3302, 64
          %v3338 = vpop.permute.xlu0 %3337
          %3339 = vrot.lane.b32.xlu0 %v3303, 64
          %v3340 = vpop.permute.xlu0 %3339
          %3341 = vrot.lane.b32.xlu0 %v3304, 64
          %v3342 = vpop.permute.xlu0 %3341
          %3343 = vrot.lane.b32.xlu0 %v3305, 64
          %v3344 = vpop.permute.xlu0 %3343
          %3345 = vrot.lane.b32.xlu0 %v3306, 64
          %v3346 = vpop.permute.xlu0 %3345
          %3347 = vrot.lane.b32.xlu0 %v3307, 64
          %v3348 = vpop.permute.xlu0 %3347
          %3349 = vrot.lane.b32.xlu0 %v3308, 64
          %v3350 = vpop.permute.xlu0 %3349
          %3351 = vrot.lane.b32.xlu0 %v3309, 64
          %v3352 = vpop.permute.xlu0 %3351
          %3353 = vrot.lane.b32.xlu0 %v3310, 64
          %v3354 = vpop.permute.xlu0 %3353
          %3355 = vrot.lane.b32.xlu0 %v3311, 64
          %v3356 = vpop.permute.xlu0 %3355
          %3357 = vrot.lane.b32.xlu0 %v3312, 64
          %v3358 = vpop.permute.xlu0 %3357
          %3359 = vrot.lane.b32.xlu0 %v3313, 64
          %v3360 = vpop.permute.xlu0 %3359
          %3361 = vrot.lane.b32.xlu0 %v3314, 64
          %v3362 = vpop.permute.xlu0 %3361
          %v3379 = vsel %vm623, %v3297, %v3332
          %v3380 = vsel %vm623, %v3298, %v3334
          %v3381 = vsel %vm623, %v3299, %v3336
          %v3382 = vsel %vm623, %v3300, %v3338
          %v3383 = vsel %vm623, %v3301, %v3340
          %v3384 = vsel %vm623, %v3302, %v3342
          %v3385 = vsel %vm623, %v3303, %v3344
          %v3386 = vsel %vm623, %v3304, %v3346
          %v3387 = vsel %vm623, %v3305, %v3348
          %v3388 = vsel %vm623, %v3306, %v3350
          %v3389 = vsel %vm623, %v3307, %v3352
          %v3390 = vsel %vm623, %v3308, %v3354
          %v3391 = vsel %vm623, %v3309, %v3356
          %v3392 = vsel %vm623, %v3310, %v3358
          %v3393 = vsel %vm623, %v3311, %v3360
          %v3394 = vsel %vm623, %v3312, %v3362
          %v3395 = vpack.c.bf16 %v3380, %v3379
          %v3396 = vpack.c.bf16 %v3239, %v3238
          %v3397 = vpack.c.bf16 %v3382, %v3381
          %v3398 = vpack.c.bf16 %v3241, %v3240
          %v3399 = vpack.c.bf16 %v3384, %v3383
          %v3400 = vpack.c.bf16 %v3243, %v3242
          %v3401 = vpack.c.bf16 %v3386, %v3385
          %v3402 = vpack.c.bf16 %v3245, %v3244
          %v3403 = vpack.c.bf16 %v3388, %v3387
          %v3404 = vpack.c.bf16 %v3247, %v3246
          %v3405 = vpack.c.bf16 %v3390, %v3389
          %v3406 = vpack.c.bf16 %v3249, %v3248
          %v3407 = vpack.c.bf16 %v3392, %v3391
          %v3408 = vpack.c.bf16 %v3251, %v3250
          %v3409 = vpack.c.bf16 %v3394, %v3393
          %v3410 = vpack.c.bf16 %v3253, %v3252
          %s3411 = smul.u32 %s3254, 24
          %s3412 = smul.addr %s3411, 4
          %s3413 = scalar_lea.vmem %s2, %s3412
          %v3414 = vld [vmem:[%s3413] sm:$0xf]
          %v3415 = vld [vmem:[%s3413 + $0x4] sm:$0xf]
          %v3416 = vld [vmem:[%s3413 + $0x8] sm:$0xf]
          %v3417 = vld [vmem:[%s3413 + $0xc] sm:$0xf]
          %v3418 = vld [vmem:[%s3413 + $0x10] sm:$0xf]
          %v3419 = vld [vmem:[%s3413 + $0x14] sm:$0xf]
          %v3420 = vld [vmem:[%s3413 + $0x18] sm:$0xf]
          %v3421 = vld [vmem:[%s3413 + $0x1c] sm:$0xf]
          %v3422 = vld [vmem:[%s3413 + $0x20] sm:$0xf]
          %v3423 = vld [vmem:[%s3413 + $0x24] sm:$0xf]
          %v3424 = vld [vmem:[%s3413 + $0x28] sm:$0xf]
          %v3425 = vld [vmem:[%s3413 + $0x2c] sm:$0xf]
          %v3426 = vld [vmem:[%s3413 + $0x30] sm:$0xf]
          %v3427 = vld [vmem:[%s3413 + $0x34] sm:$0xf]
          %v3428 = vld [vmem:[%s3413 + $0x38] sm:$0xf]
          %v3429 = vld [vmem:[%s3413 + $0x3c] sm:$0xf]
          %v3430 = vld [vmem:[%s3413 + $0x40] sm:$0xf]
          %v3431 = vld [vmem:[%s3413 + $0x44] sm:$0xf]
          %v3432 = vld [vmem:[%s3413 + $0x48] sm:$0xf]
          %v3433 = vld [vmem:[%s3413 + $0x4c] sm:$0xf]
          %v3434 = vld [vmem:[%s3413 + $0x50] sm:$0xf]
          %v3435 = vld [vmem:[%s3413 + $0x54] sm:$0xf]
          %v3436 = vld [vmem:[%s3413 + $0x58] sm:$0xf]
          %v3437 = vld [vmem:[%s3413 + $0x5c] sm:$0xf]
          %s3438 = scalar_lea.vmem %s3, %s3254
          %v3439 = vld [vmem:[%s3438] sm:$0x1]
          %v3441 = vlaneseq
          %v3442 = vshrl.u32 %v3441, 7
          %v3443 = vsub.s32 0, %v3442
          %v3444 = vrot.slane %v3439, %v3443
          %v3470 = vunpack.c.l.b16 %v3414
          %v3471 = vunpack.c.l.b16 %v3415
          %v3472 = vunpack.c.l.b16 %v3416
          %v3473 = vunpack.c.l.b16 %v3417
          %v3474 = vunpack.c.l.b16 %v3418
          %v3475 = vunpack.c.l.b16 %v3419
          %v3476 = vunpack.c.l.b16 %v3420
          %v3477 = vunpack.c.l.b16 %v3421
          %v3478 = vunpack.c.l.b16 %v3422
          %v3479 = vunpack.c.l.b16 %v3423
          %v3480 = vunpack.c.l.b16 %v3424
          %v3481 = vunpack.c.l.b16 %v3425
          %v3482 = vunpack.c.l.b16 %v3426
          %v3483 = vunpack.c.l.b16 %v3427
          %v3484 = vunpack.c.l.b16 %v3428
          %v3485 = vunpack.c.l.b16 %v3429
          %v3486 = vunpack.c.l.b16 %v3430
          %v3487 = vunpack.c.l.b16 %v3431
          %v3488 = vunpack.c.l.b16 %v3432
          %v3489 = vunpack.c.l.b16 %v3433
          %v3490 = vunpack.c.l.b16 %v3434
          %v3491 = vunpack.c.l.b16 %v3435
          %v3492 = vunpack.c.l.b16 %v3436
          %v3493 = vunpack.c.l.b16 %v3437
          %v3494 = vpack.c.b16 %v3471, %v3470
          %v3495 = vpack.c.b16 %v3473, %v3472
          %v3496 = vpack.c.b16 %v3475, %v3474
          %v3497 = vpack.c.b16 %v3477, %v3476
          %v3498 = vpack.c.b16 %v3479, %v3478
          %v3499 = vpack.c.b16 %v3481, %v3480
          %v3500 = vpack.c.b16 %v3483, %v3482
          %v3501 = vpack.c.b16 %v3485, %v3484
          %v3502 = vpack.c.b16 %v3487, %v3486
          %v3503 = vpack.c.b16 %v3489, %v3488
          %v3504 = vpack.c.b16 %v3491, %v3490
          %v3505 = vpack.c.b16 %v3493, %v3492
          %v3519 = vsel %vm623, %v3396, 0
          %v3522 = vsel %vm623, %v3398, 0
          %v3525 = vsel %vm623, %v3400, 0
          %v3528 = vsel %vm623, %v3402, 0
          %v3531 = vsel %vm623, %v3404, 0
          %v3534 = vsel %vm623, %v3406, 0
          %v3537 = vsel %vm623, %v3408, 0
          %v3540 = vsel %vm623, %v3410, 0
          %3542 = vmatprep.subr.bf16.mxu0 0
          %3543 = vmatpush1.bf16.msra.mxu0 %v3494
          %3544 = vmatprep.subr.bf16.mxu0 0
          %3545 = vmatpush1.bf16.msra.mxu0 %v3495
          %3546 = vmatprep.subr.bf16.mxu0 0
          %3547 = vmatpush1.bf16.msra.mxu0 %v3496
          %3548 = vmatprep.subr.bf16.mxu0 0
          %3549 = vmatpush1.bf16.msra.mxu0 %v3497
          %3550 = vmatprep.subr.bf16.mxu0 0
          %3551 = vmatpush1.bf16.msra.mxu0 %v3498
          %3552 = vmatprep.subr.bf16.mxu0 0
          %3553 = vmatpush1.bf16.msra.mxu0 %v3499
          %3554 = vmatprep.subr.bf16.mxu0 0
          %3555 = vmatpush1.bf16.msra.mxu0 %v3500
          %3556 = vmatprep.subr.bf16.mxu0 0
          %3557 = vmatpush1.bf16.msra.mxu0 %v3501
          %3558 = vmatprep.subr.bf16.mxu0 0
          %3559 = vmatpush1.bf16.msra.mxu0 %v3502
          %3560 = vmatprep.subr.bf16.mxu0 0
          %3561 = vmatpush1.bf16.msra.mxu0 %v3503
          %3562 = vmatprep.subr.bf16.mxu0 0
          %3563 = vmatpush1.bf16.msra.mxu0 %v3504
          %3564 = vmatprep.subr.bf16.mxu0 0
          %3565 = vmatpush1.bf16.msra.mxu0 %v3505
          %3566 = vmatprep.subr.bf16.mxu0 0
          %3567 = vmatpush1.bf16.msra.mxu0 0
          %3568 = vmatprep.subr.bf16.mxu0 0
          %3569 = vmatpush1.bf16.msra.mxu0 0
          %3570 = vmatprep.subr.bf16.mxu0 0
          %3571 = vmatpush1.bf16.msra.mxu0 0
          %3572 = vmatprep.subr.bf16.mxu0 0
          %3573 = vmatpush1.bf16.msra.mxu0 0
          %3574 = vmatprep.mubr.bf16.mxu0 %v3519
          %3575 = vmatmul.mubr.bf16.gmra.mrb[0].mxu0 %v3395
          %v3576 = vpop.f32.mrb[0].mxu0
          %v3577 = vadd.f32 %v3444, %v3576
          %v3578 = vpop.f32.mrb[0].mxu0
          %v3579 = vpop.f32.mrb[0].mxu0
          %v3580 = vadd.f32 %v3444, %v3579
          %v3581 = vpop.f32.mrb[0].mxu0
          %3582 = vmatprep.mubr.bf16.mxu0 %v3522
          %3583 = vmatmul.mubr.bf16.gmra.mrb[0].mxu0 %v3397
          %v3584 = vpop.f32.mrb[0].mxu0
          %v3585 = vadd.f32 %v3444, %v3584
          %v3586 = vpop.f32.mrb[0].mxu0
          %v3587 = vpop.f32.mrb[0].mxu0
          %v3588 = vadd.f32 %v3444, %v3587
          %v3589 = vpop.f32.mrb[0].mxu0
          %3590 = vmatprep.mubr.bf16.mxu0 %v3525
          %3591 = vmatmul.mubr.bf16.gmra.mrb[0].mxu0 %v3399
          %v3592 = vpop.f32.mrb[0].mxu0
          %v3593 = vadd.f32 %v3444, %v3592
          %v3594 = vpop.f32.mrb[0].mxu0
          %v3595 = vpop.f32.mrb[0].mxu0
          %v3596 = vadd.f32 %v3444, %v3595
          %v3597 = vpop.f32.mrb[0].mxu0
          %3598 = vmatprep.mubr.bf16.mxu0 %v3528
          %3599 = vmatmul.mubr.bf16.gmra.mrb[0].mxu0 %v3401
          %v3600 = vpop.f32.mrb[0].mxu0
          %v3601 = vadd.f32 %v3444, %v3600
          %v3602 = vpop.f32.mrb[0].mxu0
          %v3603 = vpop.f32.mrb[0].mxu0
          %v3604 = vadd.f32 %v3444, %v3603
          %v3605 = vpop.f32.mrb[0].mxu0
          %3606 = vmatprep.mubr.bf16.mxu0 %v3531
          %3607 = vmatmul.mubr.bf16.gmra.mrb[0].mxu0 %v3403
          %v3608 = vpop.f32.mrb[0].mxu0
          %v3609 = vadd.f32 %v3444, %v3608
          %v3610 = vpop.f32.mrb[0].mxu0
          %v3611 = vpop.f32.mrb[0].mxu0
          %v3612 = vadd.f32 %v3444, %v3611
          %v3613 = vpop.f32.mrb[0].mxu0
          %3614 = vmatprep.mubr.bf16.mxu0 %v3534
          %3615 = vmatmul.mubr.bf16.gmra.mrb[0].mxu0 %v3405
          %v3616 = vpop.f32.mrb[0].mxu0
          %v3617 = vadd.f32 %v3444, %v3616
          %v3618 = vpop.f32.mrb[0].mxu0
          %v3619 = vpop.f32.mrb[0].mxu0
          %v3620 = vadd.f32 %v3444, %v3619
          %v3621 = vpop.f32.mrb[0].mxu0
          %3622 = vmatprep.mubr.bf16.mxu0 %v3537
          %3623 = vmatmul.mubr.bf16.gmra.mrb[0].mxu0 %v3407
          %v3624 = vpop.f32.mrb[0].mxu0
          %v3625 = vadd.f32 %v3444, %v3624
          %v3626 = vpop.f32.mrb[0].mxu0
          %v3627 = vpop.f32.mrb[0].mxu0
          %v3628 = vadd.f32 %v3444, %v3627
          %v3629 = vpop.f32.mrb[0].mxu0
          %3630 = vmatprep.mubr.bf16.mxu0 %v3540
          %3631 = vmatmul.mubr.bf16.gmra.mrb[0].mxu0 %v3409
          %v3632 = vpop.f32.mrb[0].mxu0
          %v3633 = vadd.f32 %v3444, %v3632
          %v3634 = vpop.f32.mrb[0].mxu0
          %v3635 = vpop.f32.mrb[0].mxu0
          %v3636 = vadd.f32 %v3444, %v3635
          %v3637 = vpop.f32.mrb[0].mxu0
          %3638 = vdwg.mxu0
          %v3639 = vmax.f32 %v3577, 0.0
          %v3640 = vmax.f32 %v3580, 0.0
          %v3641 = vmax.f32 %v3585, 0.0
          %v3642 = vmax.f32 %v3588, 0.0
          %v3643 = vmax.f32 %v3593, 0.0
          %v3644 = vmax.f32 %v3596, 0.0
          %v3645 = vmax.f32 %v3601, 0.0
          %v3646 = vmax.f32 %v3604, 0.0
          %v3647 = vmax.f32 %v3609, 0.0
          %v3648 = vmax.f32 %v3612, 0.0
          %v3649 = vmax.f32 %v3617, 0.0
          %v3650 = vmax.f32 %v3620, 0.0
          %v3651 = vmax.f32 %v3625, 0.0
          %v3652 = vmax.f32 %v3628, 0.0
          %v3653 = vmax.f32 %v3633, 0.0
          %v3654 = vmax.f32 %v3636, 0.0
          %v3655 = vadd.f32 %v3639, %v675
          %v3656 = vadd.f32 %v3640, %v676
          %v3657 = vadd.f32 %v3641, %v677
          %v3658 = vadd.f32 %v3642, %v678
          %v3659 = vadd.f32 %v3643, %v679
          %v3660 = vadd.f32 %v3644, %v680
          %v3661 = vadd.f32 %v3645, %v681
          %v3662 = vadd.f32 %v3646, %v682
          %v3663 = vadd.f32 %v3647, %v683
          %v3664 = vadd.f32 %v3648, %v684
          %v3665 = vadd.f32 %v3649, %v685
          %v3666 = vadd.f32 %v3650, %v686
          %v3667 = vadd.f32 %v3651, %v687
          %v3668 = vadd.f32 %v3652, %v688
          %v3669 = vadd.f32 %v3653, %v689
          %v3670 = vadd.f32 %v3654, %v690
          %v3671 = vpack.c.bf16 %v3656, %v3655
          %v3672 = vpack.c.bf16 %v3658, %v3657
          %v3673 = vpack.c.bf16 %v3660, %v3659
          %v3674 = vpack.c.bf16 %v3662, %v3661
          %v3675 = vpack.c.bf16 %v3664, %v3663
          %v3676 = vpack.c.bf16 %v3666, %v3665
          %v3677 = vpack.c.bf16 %v3668, %v3667
          %v3678 = vpack.c.bf16 %v3670, %v3669
          %s3679 = smul.u32 %s3254, 8
          %s3680 = smul.addr %s3679, 4
          %s3681 = scalar_lea.vmem %s4, %s3680
          %v3682 = vld [vmem:[%s3681] sm:$0xf]
          %v3683 = vld [vmem:[%s3681 + $0x4] sm:$0xf]
          %v3684 = vld [vmem:[%s3681 + $0x8] sm:$0xf]
          %v3685 = vld [vmem:[%s3681 + $0xc] sm:$0xf]
          %v3686 = vld [vmem:[%s3681 + $0x10] sm:$0xf]
          %v3687 = vld [vmem:[%s3681 + $0x14] sm:$0xf]
          %v3688 = vld [vmem:[%s3681 + $0x18] sm:$0xf]
          %v3689 = vld [vmem:[%s3681 + $0x1c] sm:$0xf]
          %s3690 = scalar_lea.vmem %s5, %s3254
          %v3691 = vld [vmem:[%s3690] sm:$0x1]
          %v3693 = vlaneseq
          %v3694 = vshrl.u32 %v3693, 7
          %v3695 = vsub.s32 0, %v3694
          %v3696 = vrot.slane %v3691, %v3695
          %v3706 = vunpack.c.l.b16 %v3682
          %v3707 = vunpack.c.l.b16 %v3683
          %v3708 = vunpack.c.l.b16 %v3684
          %v3709 = vunpack.c.l.b16 %v3685
          %v3710 = vunpack.c.l.b16 %v3686
          %v3711 = vunpack.c.l.b16 %v3687
          %v3712 = vunpack.c.l.b16 %v3688
          %v3713 = vunpack.c.l.b16 %v3689
          %v3714 = vpack.c.b16 %v3707, %v3706
          %v3715 = vpack.c.b16 %v3709, %v3708
          %v3716 = vpack.c.b16 %v3711, %v3710
          %v3717 = vpack.c.b16 %v3713, %v3712
          %v3723 = vsel %vm623, %v3671, 0
          %v3726 = vsel %vm623, %v3672, 0
          %v3729 = vsel %vm623, %v3673, 0
          %v3732 = vsel %vm623, %v3674, 0
          %v3735 = vsel %vm623, %v3675, 0
          %v3738 = vsel %vm623, %v3676, 0
          %v3741 = vsel %vm623, %v3677, 0
          %v3744 = vsel %vm623, %v3678, 0
          %3746 = vmatprep.subr.bf16.mxu0 0
          %3747 = vmatpush1.bf16.msra.mxu0 %v3714
          %3748 = vmatprep.subr.bf16.mxu0 0
          %3749 = vmatpush1.bf16.msra.mxu0 %v3715
          %3750 = vmatprep.subr.bf16.mxu0 0
          %3751 = vmatpush1.bf16.msra.mxu0 %v3716
          %3752 = vmatprep.subr.bf16.mxu0 0
          %3753 = vmatpush1.bf16.msra.mxu0 %v3717
          %3754 = vmatprep.subr.bf16.mxu0 0
          %3755 = vmatpush1.bf16.msra.mxu0 0
          %3756 = vmatprep.subr.bf16.mxu0 0
          %3757 = vmatpush1.bf16.msra.mxu0 0
          %3758 = vmatprep.subr.bf16.mxu0 0
          %3759 = vmatpush1.bf16.msra.mxu0 0
          %3760 = vmatprep.subr.bf16.mxu0 0
          %3761 = vmatpush1.bf16.msra.mxu0 0
          %3762 = vmatprep.subr.bf16.mxu0 0
          %3763 = vmatpush1.bf16.msra.mxu0 0
          %3764 = vmatprep.subr.bf16.mxu0 0
          %3765 = vmatpush1.bf16.msra.mxu0 0
          %3766 = vmatprep.subr.bf16.mxu0 0
          %3767 = vmatpush1.bf16.msra.mxu0 0
          %3768 = vmatprep.subr.bf16.mxu0 0
          %3769 = vmatpush1.bf16.msra.mxu0 0
          %3770 = vmatprep.subr.bf16.mxu0 0
          %3771 = vmatpush1.bf16.msra.mxu0 0
          %3772 = vmatprep.subr.bf16.mxu0 0
          %3773 = vmatpush1.bf16.msra.mxu0 0
          %3774 = vmatprep.subr.bf16.mxu0 0
          %3775 = vmatpush1.bf16.msra.mxu0 0
          %3776 = vmatprep.subr.bf16.mxu0 0
          %3777 = vmatpush1.bf16.msra.mxu0 0
          %3778 = vmatprep.mubr.bf16.mxu0 0
          %3779 = vmatmul.mubr.bf16.gmra.mrb[0].mxu0 %v3723
          %v3780 = vpop.f32.mrb[0].mxu0
          %v3781 = vadd.f32 %v3696, %v3780
          %v3782 = vpop.f32.mrb[0].mxu0
          %v3783 = vpop.f32.mrb[0].mxu0
          %v3784 = vadd.f32 %v3696, %v3783
          %v3785 = vpop.f32.mrb[0].mxu0
          %3786 = vmatprep.mubr.bf16.mxu0 0
          %3787 = vmatmul.mubr.bf16.gmra.mrb[0].mxu0 %v3726
          %v3788 = vpop.f32.mrb[0].mxu0
          %v3789 = vadd.f32 %v3696, %v3788
          %v3790 = vpop.f32.mrb[0].mxu0
          %v3791 = vpop.f32.mrb[0].mxu0
          %v3792 = vadd.f32 %v3696, %v3791
          %v3793 = vpop.f32.mrb[0].mxu0
          %3794 = vmatprep.mubr.bf16.mxu0 0
          %3795 = vmatmul.mubr.bf16.gmra.mrb[0].mxu0 %v3729
          %v3796 = vpop.f32.mrb[0].mxu0
          %v3797 = vadd.f32 %v3696, %v3796
          %v3798 = vpop.f32.mrb[0].mxu0
          %v3799 = vpop.f32.mrb[0].mxu0
          %v3800 = vadd.f32 %v3696, %v3799
          %v3801 = vpop.f32.mrb[0].mxu0
          %3802 = vmatprep.mubr.bf16.mxu0 0
          %3803 = vmatmul.mubr.bf16.gmra.mrb[0].mxu0 %v3732
          %v3804 = vpop.f32.mrb[0].mxu0
          %v3805 = vadd.f32 %v3696, %v3804
          %v3806 = vpop.f32.mrb[0].mxu0
          %v3807 = vpop.f32.mrb[0].mxu0
          %v3808 = vadd.f32 %v3696, %v3807
          %v3809 = vpop.f32.mrb[0].mxu0
          %3810 = vmatprep.mubr.bf16.mxu0 0
          %3811 = vmatmul.mubr.bf16.gmra.mrb[0].mxu0 %v3735
          %v3812 = vpop.f32.mrb[0].mxu0
          %v3813 = vadd.f32 %v3696, %v3812
          %v3814 = vpop.f32.mrb[0].mxu0
          %v3815 = vpop.f32.mrb[0].mxu0
          %v3816 = vadd.f32 %v3696, %v3815
          %v3817 = vpop.f32.mrb[0].mxu0
          %3818 = vmatprep.mubr.bf16.mxu0 0
          %3819 = vmatmul.mubr.bf16.gmra.mrb[0].mxu0 %v3738
          %v3820 = vpop.f32.mrb[0].mxu0
          %v3821 = vadd.f32 %v3696, %v3820
          %v3822 = vpop.f32.mrb[0].mxu0
          %v3823 = vpop.f32.mrb[0].mxu0
          %v3824 = vadd.f32 %v3696, %v3823
          %v3825 = vpop.f32.mrb[0].mxu0
          %3826 = vmatprep.mubr.bf16.mxu0 0
          %3827 = vmatmul.mubr.bf16.gmra.mrb[0].mxu0 %v3741
          %v3828 = vpop.f32.mrb[0].mxu0
          %v3829 = vadd.f32 %v3696, %v3828
          %v3830 = vpop.f32.mrb[0].mxu0
          %v3831 = vpop.f32.mrb[0].mxu0
          %v3832 = vadd.f32 %v3696, %v3831
          %v3833 = vpop.f32.mrb[0].mxu0
          %3834 = vmatprep.mubr.bf16.mxu0 0
          %3835 = vmatmul.mubr.bf16.gmra.mrb[0].mxu0 %v3744
          %v3836 = vpop.f32.mrb[0].mxu0
          %v3837 = vadd.f32 %v3696, %v3836
          %v3838 = vpop.f32.mrb[0].mxu0
          %v3839 = vpop.f32.mrb[0].mxu0
          %v3840 = vadd.f32 %v3696, %v3839
          %v3841 = vpop.f32.mrb[0].mxu0
          %3842 = vdwg.mxu0
          %v3843 = vadd.f32 %v3781, %v3238
          %v3844 = vadd.f32 %v3784, %v3239
          %v3845 = vadd.f32 %v3789, %v3240
          %v3846 = vadd.f32 %v3792, %v3241
          %v3847 = vadd.f32 %v3797, %v3242
          %v3848 = vadd.f32 %v3800, %v3243
          %v3849 = vadd.f32 %v3805, %v3244
          %v3850 = vadd.f32 %v3808, %v3245
          %v3851 = vadd.f32 %v3813, %v3246
          %v3852 = vadd.f32 %v3816, %v3247
          %v3853 = vadd.f32 %v3821, %v3248
          %v3854 = vadd.f32 %v3824, %v3249
          %v3855 = vadd.f32 %v3829, %v3250
          %v3856 = vadd.f32 %v3832, %v3251
          %v3857 = vadd.f32 %v3837, %v3252
          %v3858 = vadd.f32 %v3840, %v3253
          %v3859 = vmul.f32 %v3843, 0.70710677
          %v3860 = vmul.f32 %v3844, 0.70710677
          %v3861 = vmul.f32 %v3845, 0.70710677
          %v3862 = vmul.f32 %v3846, 0.70710677
          %v3863 = vmul.f32 %v3847, 0.70710677
          %v3864 = vmul.f32 %v3848, 0.70710677
          %v3865 = vmul.f32 %v3849, 0.70710677
          %v3866 = vmul.f32 %v3850, 0.70710677
          %v3867 = vmul.f32 %v3851, 0.70710677
          %v3868 = vmul.f32 %v3852, 0.70710677
          %v3869 = vmul.f32 %v3853, 0.70710677
          %v3870 = vmul.f32 %v3854, 0.70710677
          %v3871 = vmul.f32 %v3855, 0.70710677
          %v3872 = vmul.f32 %v3856, 0.70710677
          %v3873 = vmul.f32 %v3857, 0.70710677
          %v3874 = vmul.f32 %v3858, 0.70710677
          %s3875 = sadd.s32 %s729, 5
          %s3876 = smul.u32 %s3875, 64
          %s3877 = scalar_lea.vmem [#allocation4], %s3876
          %v3878 = vld [vmem:[%s3877] sm:$0xff]
          %v3879 = vld [vmem:[%s3877 + $0x8] sm:$0xff]
          %v3880 = vld [vmem:[%s3877 + $0x10] sm:$0xff]
          %v3881 = vld [vmem:[%s3877 + $0x18] sm:$0xff]
          %v3882 = vld [vmem:[%s3877 + $0x20] sm:$0xff]
          %v3883 = vld [vmem:[%s3877 + $0x28] sm:$0xff]
          %v3884 = vld [vmem:[%s3877 + $0x30] sm:$0xff]
          %v3885 = vld [vmem:[%s3877 + $0x38] sm:$0xff]
          %3886 = vst.msk [vmem:[#allocation2] sm:$0xff] %vm623, %v3878
          %3887 = vst.msk [vmem:[#allocation2 + $0x8] sm:$0xff] %vm623, %v3879
          %3888 = vst.msk [vmem:[#allocation2 + $0x10] sm:$0xff] %vm623, %v3880
          %3889 = vst.msk [vmem:[#allocation2 + $0x18] sm:$0xff] %vm623, %v3881
          %3890 = vst.msk [vmem:[#allocation2 + $0x20] sm:$0xff] %vm623, %v3882
          %3891 = vst.msk [vmem:[#allocation2 + $0x28] sm:$0xff] %vm623, %v3883
          %3892 = vst.msk [vmem:[#allocation2 + $0x30] sm:$0xff] %vm623, %v3884
          %3893 = vst.msk [vmem:[#allocation2 + $0x38] sm:$0xff] %vm623, %v3885
          %3894 = vst.msk [vmem:[#allocation2 + $0x40] sm:$0xff] %vm623, %v3859
          %3895 = vst.msk [vmem:[#allocation2 + $0x48] sm:$0xff] %vm623, %v3860
          %3896 = vst.msk [vmem:[#allocation2 + $0x50] sm:$0xff] %vm623, %v3861
          %3897 = vst.msk [vmem:[#allocation2 + $0x58] sm:$0xff] %vm623, %v3862
          %3898 = vst.msk [vmem:[#allocation2 + $0x60] sm:$0xff] %vm623, %v3863
          %3899 = vst.msk [vmem:[#allocation2 + $0x68] sm:$0xff] %vm623, %v3864
          %3900 = vst.msk [vmem:[#allocation2 + $0x70] sm:$0xff] %vm623, %v3865
          %3901 = vst.msk [vmem:[#allocation2 + $0x78] sm:$0xff] %vm623, %v3866
          %3902 = vst.msk [vmem:[#allocation2 + $0x80] sm:$0xff] %vm623, %v3867
          %3903 = vst.msk [vmem:[#allocation2 + $0x88] sm:$0xff] %vm623, %v3868
          %3904 = vst.msk [vmem:[#allocation2 + $0x90] sm:$0xff] %vm623, %v3869
          %3905 = vst.msk [vmem:[#allocation2 + $0x98] sm:$0xff] %vm623, %v3870
          %3906 = vst.msk [vmem:[#allocation2 + $0xa0] sm:$0xff] %vm623, %v3871
          %3907 = vst.msk [vmem:[#allocation2 + $0xa8] sm:$0xff] %vm623, %v3872
          %3908 = vst.msk [vmem:[#allocation2 + $0xb0] sm:$0xff] %vm623, %v3873
          %3909 = vst.msk [vmem:[#allocation2 + $0xb8] sm:$0xff] %vm623, %v3874
          %3910 = vst.msk [vmem:[%s3877] sm:$0xff] %vm623, %v3867
          %3911 = vst.msk [vmem:[%s3877 + $0x8] sm:$0xff] %vm623, %v3868
          %3912 = vst.msk [vmem:[%s3877 + $0x10] sm:$0xff] %vm623, %v3869
          %3913 = vst.msk [vmem:[%s3877 + $0x18] sm:$0xff] %vm623, %v3870
          %3914 = vst.msk [vmem:[%s3877 + $0x20] sm:$0xff] %vm623, %v3871
          %3915 = vst.msk [vmem:[%s3877 + $0x28] sm:$0xff] %vm623, %v3872
          %3916 = vst.msk [vmem:[%s3877 + $0x30] sm:$0xff] %vm623, %v3873
          %3917 = vst.msk [vmem:[%s3877 + $0x38] sm:$0xff] %vm623, %v3874
          %v3918 = vld [vmem:[#allocation2] sm:$0xff]
          %v3919 = vld [vmem:[#allocation2 + $0x8] sm:$0xff]
          %v3920 = vld [vmem:[#allocation2 + $0x10] sm:$0xff]
          %v3921 = vld [vmem:[#allocation2 + $0x18] sm:$0xff]
          %v3922 = vld [vmem:[#allocation2 + $0x20] sm:$0xff]
          %v3923 = vld [vmem:[#allocation2 + $0x28] sm:$0xff]
          %v3924 = vld [vmem:[#allocation2 + $0x30] sm:$0xff]
          %v3925 = vld [vmem:[#allocation2 + $0x38] sm:$0xff]
          %v3926 = vld [vmem:[#allocation2 + $0x40] sm:$0xff]
          %v3927 = vld [vmem:[#allocation2 + $0x48] sm:$0xff]
          %v3928 = vld [vmem:[#allocation2 + $0x50] sm:$0xff]
          %v3929 = vld [vmem:[#allocation2 + $0x58] sm:$0xff]
          %v3930 = vld [vmem:[#allocation2 + $0x60] sm:$0xff]
          %v3931 = vld [vmem:[#allocation2 + $0x68] sm:$0xff]
          %v3932 = vld [vmem:[#allocation2 + $0x70] sm:$0xff]
          %v3933 = vld [vmem:[#allocation2 + $0x78] sm:$0xff]
          %v3934 = vld [vmem:[#allocation2 + $0x80] sm:$0xff]
          %v3935 = vld [vmem:[#allocation2 + $0x88] sm:$0xff]
          %v3936 = vld [vmem:[#allocation2 + $0x90] sm:$0xff]
          %v3937 = vld [vmem:[#allocation2 + $0x98] sm:$0xff]
          %3954 = vrot.lane.b32.xlu0 %v3922, 64
          %v3955 = vpop.permute.xlu0 %3954
          %3956 = vrot.lane.b32.xlu0 %v3923, 64
          %v3957 = vpop.permute.xlu0 %3956
          %3958 = vrot.lane.b32.xlu0 %v3924, 64
          %v3959 = vpop.permute.xlu0 %3958
          %3960 = vrot.lane.b32.xlu0 %v3925, 64
          %v3961 = vpop.permute.xlu0 %3960
          %3962 = vrot.lane.b32.xlu0 %v3926, 64
          %v3963 = vpop.permute.xlu0 %3962
          %3964 = vrot.lane.b32.xlu0 %v3927, 64
          %v3965 = vpop.permute.xlu0 %3964
          %3966 = vrot.lane.b32.xlu0 %v3928, 64
          %v3967 = vpop.permute.xlu0 %3966
          %3968 = vrot.lane.b32.xlu0 %v3929, 64
          %v3969 = vpop.permute.xlu0 %3968
          %3970 = vrot.lane.b32.xlu0 %v3930, 64
          %v3971 = vpop.permute.xlu0 %3970
          %3972 = vrot.lane.b32.xlu0 %v3931, 64
          %v3973 = vpop.permute.xlu0 %3972
          %3974 = vrot.lane.b32.xlu0 %v3932, 64
          %v3975 = vpop.permute.xlu0 %3974
          %3976 = vrot.lane.b32.xlu0 %v3933, 64
          %v3977 = vpop.permute.xlu0 %3976
          %3978 = vrot.lane.b32.xlu0 %v3934, 64
          %v3979 = vpop.permute.xlu0 %3978
          %3980 = vrot.lane.b32.xlu0 %v3935, 64
          %v3981 = vpop.permute.xlu0 %3980
          %3982 = vrot.lane.b32.xlu0 %v3936, 64
          %v3983 = vpop.permute.xlu0 %3982
          %3984 = vrot.lane.b32.xlu0 %v3937, 64
          %v3985 = vpop.permute.xlu0 %3984
          %v4002 = vsel %vm623, %v3918, %v3955
          %v4003 = vsel %vm623, %v3919, %v3957
          %v4004 = vsel %vm623, %v3920, %v3959
          %v4005 = vsel %vm623, %v3921, %v3961
          %v4006 = vsel %vm623, %v3922, %v3963
          %v4007 = vsel %vm623, %v3923, %v3965
          %v4008 = vsel %vm623, %v3924, %v3967
          %v4009 = vsel %vm623, %v3925, %v3969
          %v4010 = vsel %vm623, %v3926, %v3971
          %v4011 = vsel %vm623, %v3927, %v3973
          %v4012 = vsel %vm623, %v3928, %v3975
          %v4013 = vsel %vm623, %v3929, %v3977
          %v4014 = vsel %vm623, %v3930, %v3979
          %v4015 = vsel %vm623, %v3931, %v3981
          %v4016 = vsel %vm623, %v3932, %v3983
          %v4017 = vsel %vm623, %v3933, %v3985
          %v4018 = vpack.c.bf16 %v4003, %v4002
          %v4019 = vpack.c.bf16 %v3860, %v3859
          %v4020 = vpack.c.bf16 %v4005, %v4004
          %v4021 = vpack.c.bf16 %v3862, %v3861
          %v4022 = vpack.c.bf16 %v4007, %v4006
          %v4023 = vpack.c.bf16 %v3864, %v3863
          %v4024 = vpack.c.bf16 %v4009, %v4008
          %v4025 = vpack.c.bf16 %v3866, %v3865
          %v4026 = vpack.c.bf16 %v4011, %v4010
          %v4027 = vpack.c.bf16 %v3868, %v3867
          %v4028 = vpack.c.bf16 %v4013, %v4012
          %v4029 = vpack.c.bf16 %v3870, %v3869
          %v4030 = vpack.c.bf16 %v4015, %v4014
          %v4031 = vpack.c.bf16 %v3872, %v3871
          %v4032 = vpack.c.bf16 %v4017, %v4016
          %v4033 = vpack.c.bf16 %v3874, %v3873
          %s4034 = smul.u32 %s3875, 24
          %s4035 = smul.addr %s4034, 4
          %s4036 = scalar_lea.vmem %s2, %s4035
          %v4037 = vld [vmem:[%s4036] sm:$0xf]
          %v4038 = vld [vmem:[%s4036 + $0x4] sm:$0xf]
          %v4039 = vld [vmem:[%s4036 + $0x8] sm:$0xf]
          %v4040 = vld [vmem:[%s4036 + $0xc] sm:$0xf]
          %v4041 = vld [vmem:[%s4036 + $0x10] sm:$0xf]
          %v4042 = vld [vmem:[%s4036 + $0x14] sm:$0xf]
          %v4043 = vld [vmem:[%s4036 + $0x18] sm:$0xf]
          %v4044 = vld [vmem:[%s4036 + $0x1c] sm:$0xf]
          %v4045 = vld [vmem:[%s4036 + $0x20] sm:$0xf]
          %v4046 = vld [vmem:[%s4036 + $0x24] sm:$0xf]
          %v4047 = vld [vmem:[%s4036 + $0x28] sm:$0xf]
          %v4048 = vld [vmem:[%s4036 + $0x2c] sm:$0xf]
          %v4049 = vld [vmem:[%s4036 + $0x30] sm:$0xf]
          %v4050 = vld [vmem:[%s4036 + $0x34] sm:$0xf]
          %v4051 = vld [vmem:[%s4036 + $0x38] sm:$0xf]
          %v4052 = vld [vmem:[%s4036 + $0x3c] sm:$0xf]
          %v4053 = vld [vmem:[%s4036 + $0x40] sm:$0xf]
          %v4054 = vld [vmem:[%s4036 + $0x44] sm:$0xf]
          %v4055 = vld [vmem:[%s4036 + $0x48] sm:$0xf]
          %v4056 = vld [vmem:[%s4036 + $0x4c] sm:$0xf]
          %v4057 = vld [vmem:[%s4036 + $0x50] sm:$0xf]
          %v4058 = vld [vmem:[%s4036 + $0x54] sm:$0xf]
          %v4059 = vld [vmem:[%s4036 + $0x58] sm:$0xf]
          %v4060 = vld [vmem:[%s4036 + $0x5c] sm:$0xf]
          %s4061 = scalar_lea.vmem %s3, %s3875
          %v4062 = vld [vmem:[%s4061] sm:$0x1]
          %v4064 = vlaneseq
          %v4065 = vshrl.u32 %v4064, 7
          %v4066 = vsub.s32 0, %v4065
          %v4067 = vrot.slane %v4062, %v4066
          %v4093 = vunpack.c.l.b16 %v4037
          %v4094 = vunpack.c.l.b16 %v4038
          %v4095 = vunpack.c.l.b16 %v4039
          %v4096 = vunpack.c.l.b16 %v4040
          %v4097 = vunpack.c.l.b16 %v4041
          %v4098 = vunpack.c.l.b16 %v4042
          %v4099 = vunpack.c.l.b16 %v4043
          %v4100 = vunpack.c.l.b16 %v4044
          %v4101 = vunpack.c.l.b16 %v4045
          %v4102 = vunpack.c.l.b16 %v4046
          %v4103 = vunpack.c.l.b16 %v4047
          %v4104 = vunpack.c.l.b16 %v4048
          %v4105 = vunpack.c.l.b16 %v4049
          %v4106 = vunpack.c.l.b16 %v4050
          %v4107 = vunpack.c.l.b16 %v4051
          %v4108 = vunpack.c.l.b16 %v4052
          %v4109 = vunpack.c.l.b16 %v4053
          %v4110 = vunpack.c.l.b16 %v4054
          %v4111 = vunpack.c.l.b16 %v4055
          %v4112 = vunpack.c.l.b16 %v4056
          %v4113 = vunpack.c.l.b16 %v4057
          %v4114 = vunpack.c.l.b16 %v4058
          %v4115 = vunpack.c.l.b16 %v4059
          %v4116 = vunpack.c.l.b16 %v4060
          %v4117 = vpack.c.b16 %v4094, %v4093
          %v4118 = vpack.c.b16 %v4096, %v4095
          %v4119 = vpack.c.b16 %v4098, %v4097
          %v4120 = vpack.c.b16 %v4100, %v4099
          %v4121 = vpack.c.b16 %v4102, %v4101
          %v4122 = vpack.c.b16 %v4104, %v4103
          %v4123 = vpack.c.b16 %v4106, %v4105
          %v4124 = vpack.c.b16 %v4108, %v4107
          %v4125 = vpack.c.b16 %v4110, %v4109
          %v4126 = vpack.c.b16 %v4112, %v4111
          %v4127 = vpack.c.b16 %v4114, %v4113
          %v4128 = vpack.c.b16 %v4116, %v4115
          %v4142 = vsel %vm623, %v4019, 0
          %v4145 = vsel %vm623, %v4021, 0
          %v4148 = vsel %vm623, %v4023, 0
          %v4151 = vsel %vm623, %v4025, 0
          %v4154 = vsel %vm623, %v4027, 0
          %v4157 = vsel %vm623, %v4029, 0
          %v4160 = vsel %vm623, %v4031, 0
          %v4163 = vsel %vm623, %v4033, 0
          %4165 = vmatprep.subr.bf16.mxu0 0
          %4166 = vmatpush1.bf16.msra.mxu0 %v4117
          %4167 = vmatprep.subr.bf16.mxu0 0
          %4168 = vmatpush1.bf16.msra.mxu0 %v4118
          %4169 = vmatprep.subr.bf16.mxu0 0
          %4170 = vmatpush1.bf16.msra.mxu0 %v4119
          %4171 = vmatprep.subr.bf16.mxu0 0
          %4172 = vmatpush1.bf16.msra.mxu0 %v4120
          %4173 = vmatprep.subr.bf16.mxu0 0
          %4174 = vmatpush1.bf16.msra.mxu0 %v4121
          %4175 = vmatprep.subr.bf16.mxu0 0
          %4176 = vmatpush1.bf16.msra.mxu0 %v4122
          %4177 = vmatprep.subr.bf16.mxu0 0
          %4178 = vmatpush1.bf16.msra.mxu0 %v4123
          %4179 = vmatprep.subr.bf16.mxu0 0
          %4180 = vmatpush1.bf16.msra.mxu0 %v4124
          %4181 = vmatprep.subr.bf16.mxu0 0
          %4182 = vmatpush1.bf16.msra.mxu0 %v4125
          %4183 = vmatprep.subr.bf16.mxu0 0
          %4184 = vmatpush1.bf16.msra.mxu0 %v4126
          %4185 = vmatprep.subr.bf16.mxu0 0
          %4186 = vmatpush1.bf16.msra.mxu0 %v4127
          %4187 = vmatprep.subr.bf16.mxu0 0
          %4188 = vmatpush1.bf16.msra.mxu0 %v4128
          %4189 = vmatprep.subr.bf16.mxu0 0
          %4190 = vmatpush1.bf16.msra.mxu0 0
          %4191 = vmatprep.subr.bf16.mxu0 0
          %4192 = vmatpush1.bf16.msra.mxu0 0
          %4193 = vmatprep.subr.bf16.mxu0 0
          %4194 = vmatpush1.bf16.msra.mxu0 0
          %4195 = vmatprep.subr.bf16.mxu0 0
          %4196 = vmatpush1.bf16.msra.mxu0 0
          %4197 = vmatprep.mubr.bf16.mxu0 %v4142
          %4198 = vmatmul.mubr.bf16.gmra.mrb[0].mxu0 %v4018
          %v4199 = vpop.f32.mrb[0].mxu0
          %v4200 = vadd.f32 %v4067, %v4199
          %v4201 = vpop.f32.mrb[0].mxu0
          %v4202 = vpop.f32.mrb[0].mxu0
          %v4203 = vadd.f32 %v4067, %v4202
          %v4204 = vpop.f32.mrb[0].mxu0
          %4205 = vmatprep.mubr.bf16.mxu0 %v4145
          %4206 = vmatmul.mubr.bf16.gmra.mrb[0].mxu0 %v4020
          %v4207 = vpop.f32.mrb[0].mxu0
          %v4208 = vadd.f32 %v4067, %v4207
          %v4209 = vpop.f32.mrb[0].mxu0
          %v4210 = vpop.f32.mrb[0].mxu0
          %v4211 = vadd.f32 %v4067, %v4210
          %v4212 = vpop.f32.mrb[0].mxu0
          %4213 = vmatprep.mubr.bf16.mxu0 %v4148
          %4214 = vmatmul.mubr.bf16.gmra.mrb[0].mxu0 %v4022
          %v4215 = vpop.f32.mrb[0].mxu0
          %v4216 = vadd.f32 %v4067, %v4215
          %v4217 = vpop.f32.mrb[0].mxu0
          %v4218 = vpop.f32.mrb[0].mxu0
          %v4219 = vadd.f32 %v4067, %v4218
          %v4220 = vpop.f32.mrb[0].mxu0
          %4221 = vmatprep.mubr.bf16.mxu0 %v4151
          %4222 = vmatmul.mubr.bf16.gmra.mrb[0].mxu0 %v4024
          %v4223 = vpop.f32.mrb[0].mxu0
          %v4224 = vadd.f32 %v4067, %v4223
          %v4225 = vpop.f32.mrb[0].mxu0
          %v4226 = vpop.f32.mrb[0].mxu0
          %v4227 = vadd.f32 %v4067, %v4226
          %v4228 = vpop.f32.mrb[0].mxu0
          %4229 = vmatprep.mubr.bf16.mxu0 %v4154
          %4230 = vmatmul.mubr.bf16.gmra.mrb[0].mxu0 %v4026
          %v4231 = vpop.f32.mrb[0].mxu0
          %v4232 = vadd.f32 %v4067, %v4231
          %v4233 = vpop.f32.mrb[0].mxu0
          %v4234 = vpop.f32.mrb[0].mxu0
          %v4235 = vadd.f32 %v4067, %v4234
          %v4236 = vpop.f32.mrb[0].mxu0
          %4237 = vmatprep.mubr.bf16.mxu0 %v4157
          %4238 = vmatmul.mubr.bf16.gmra.mrb[0].mxu0 %v4028
          %v4239 = vpop.f32.mrb[0].mxu0
          %v4240 = vadd.f32 %v4067, %v4239
          %v4241 = vpop.f32.mrb[0].mxu0
          %v4242 = vpop.f32.mrb[0].mxu0
          %v4243 = vadd.f32 %v4067, %v4242
          %v4244 = vpop.f32.mrb[0].mxu0
          %4245 = vmatprep.mubr.bf16.mxu0 %v4160
          %4246 = vmatmul.mubr.bf16.gmra.mrb[0].mxu0 %v4030
          %v4247 = vpop.f32.mrb[0].mxu0
          %v4248 = vadd.f32 %v4067, %v4247
          %v4249 = vpop.f32.mrb[0].mxu0
          %v4250 = vpop.f32.mrb[0].mxu0
          %v4251 = vadd.f32 %v4067, %v4250
          %v4252 = vpop.f32.mrb[0].mxu0
          %4253 = vmatprep.mubr.bf16.mxu0 %v4163
          %4254 = vmatmul.mubr.bf16.gmra.mrb[0].mxu0 %v4032
          %v4255 = vpop.f32.mrb[0].mxu0
          %v4256 = vadd.f32 %v4067, %v4255
          %v4257 = vpop.f32.mrb[0].mxu0
          %v4258 = vpop.f32.mrb[0].mxu0
          %v4259 = vadd.f32 %v4067, %v4258
          %v4260 = vpop.f32.mrb[0].mxu0
          %4261 = vdwg.mxu0
          %v4262 = vmax.f32 %v4200, 0.0
          %v4263 = vmax.f32 %v4203, 0.0
          %v4264 = vmax.f32 %v4208, 0.0
          %v4265 = vmax.f32 %v4211, 0.0
          %v4266 = vmax.f32 %v4216, 0.0
          %v4267 = vmax.f32 %v4219, 0.0
          %v4268 = vmax.f32 %v4224, 0.0
          %v4269 = vmax.f32 %v4227, 0.0
          %v4270 = vmax.f32 %v4232, 0.0
          %v4271 = vmax.f32 %v4235, 0.0
          %v4272 = vmax.f32 %v4240, 0.0
          %v4273 = vmax.f32 %v4243, 0.0
          %v4274 = vmax.f32 %v4248, 0.0
          %v4275 = vmax.f32 %v4251, 0.0
          %v4276 = vmax.f32 %v4256, 0.0
          %v4277 = vmax.f32 %v4259, 0.0
          %v4278 = vadd.f32 %v4262, %v675
          %v4279 = vadd.f32 %v4263, %v676
          %v4280 = vadd.f32 %v4264, %v677
          %v4281 = vadd.f32 %v4265, %v678
          %v4282 = vadd.f32 %v4266, %v679
          %v4283 = vadd.f32 %v4267, %v680
          %v4284 = vadd.f32 %v4268, %v681
          %v4285 = vadd.f32 %v4269, %v682
          %v4286 = vadd.f32 %v4270, %v683
          %v4287 = vadd.f32 %v4271, %v684
          %v4288 = vadd.f32 %v4272, %v685
          %v4289 = vadd.f32 %v4273, %v686
          %v4290 = vadd.f32 %v4274, %v687
          %v4291 = vadd.f32 %v4275, %v688
          %v4292 = vadd.f32 %v4276, %v689
          %v4293 = vadd.f32 %v4277, %v690
          %v4294 = vpack.c.bf16 %v4279, %v4278
          %v4295 = vpack.c.bf16 %v4281, %v4280
          %v4296 = vpack.c.bf16 %v4283, %v4282
          %v4297 = vpack.c.bf16 %v4285, %v4284
          %v4298 = vpack.c.bf16 %v4287, %v4286
          %v4299 = vpack.c.bf16 %v4289, %v4288
          %v4300 = vpack.c.bf16 %v4291, %v4290
          %v4301 = vpack.c.bf16 %v4293, %v4292
          %s4302 = smul.u32 %s3875, 8
          %s4303 = smul.addr %s4302, 4
          %s4304 = scalar_lea.vmem %s4, %s4303
          %v4305 = vld [vmem:[%s4304] sm:$0xf]
          %v4306 = vld [vmem:[%s4304 + $0x4] sm:$0xf]
          %v4307 = vld [vmem:[%s4304 + $0x8] sm:$0xf]
          %v4308 = vld [vmem:[%s4304 + $0xc] sm:$0xf]
          %v4309 = vld [vmem:[%s4304 + $0x10] sm:$0xf]
          %v4310 = vld [vmem:[%s4304 + $0x14] sm:$0xf]
          %v4311 = vld [vmem:[%s4304 + $0x18] sm:$0xf]
          %v4312 = vld [vmem:[%s4304 + $0x1c] sm:$0xf]
          %s4313 = scalar_lea.vmem %s5, %s3875
          %v4314 = vld [vmem:[%s4313] sm:$0x1]
          %v4316 = vlaneseq
          %v4317 = vshrl.u32 %v4316, 7
          %v4318 = vsub.s32 0, %v4317
          %v4319 = vrot.slane %v4314, %v4318
          %v4329 = vunpack.c.l.b16 %v4305
          %v4330 = vunpack.c.l.b16 %v4306
          %v4331 = vunpack.c.l.b16 %v4307
          %v4332 = vunpack.c.l.b16 %v4308
          %v4333 = vunpack.c.l.b16 %v4309
          %v4334 = vunpack.c.l.b16 %v4310
          %v4335 = vunpack.c.l.b16 %v4311
          %v4336 = vunpack.c.l.b16 %v4312
          %v4337 = vpack.c.b16 %v4330, %v4329
          %v4338 = vpack.c.b16 %v4332, %v4331
          %v4339 = vpack.c.b16 %v4334, %v4333
          %v4340 = vpack.c.b16 %v4336, %v4335
          %v4346 = vsel %vm623, %v4294, 0
          %v4349 = vsel %vm623, %v4295, 0
          %v4352 = vsel %vm623, %v4296, 0
          %v4355 = vsel %vm623, %v4297, 0
          %v4358 = vsel %vm623, %v4298, 0
          %v4361 = vsel %vm623, %v4299, 0
          %v4364 = vsel %vm623, %v4300, 0
          %v4367 = vsel %vm623, %v4301, 0
          %4369 = vmatprep.subr.bf16.mxu0 0
          %4370 = vmatpush1.bf16.msra.mxu0 %v4337
          %4371 = vmatprep.subr.bf16.mxu0 0
          %4372 = vmatpush1.bf16.msra.mxu0 %v4338
          %4373 = vmatprep.subr.bf16.mxu0 0
          %4374 = vmatpush1.bf16.msra.mxu0 %v4339
          %4375 = vmatprep.subr.bf16.mxu0 0
          %4376 = vmatpush1.bf16.msra.mxu0 %v4340
          %4377 = vmatprep.subr.bf16.mxu0 0
          %4378 = vmatpush1.bf16.msra.mxu0 0
          %4379 = vmatprep.subr.bf16.mxu0 0
          %4380 = vmatpush1.bf16.msra.mxu0 0
          %4381 = vmatprep.subr.bf16.mxu0 0
          %4382 = vmatpush1.bf16.msra.mxu0 0
          %4383 = vmatprep.subr.bf16.mxu0 0
          %4384 = vmatpush1.bf16.msra.mxu0 0
          %4385 = vmatprep.subr.bf16.mxu0 0
          %4386 = vmatpush1.bf16.msra.mxu0 0
          %4387 = vmatprep.subr.bf16.mxu0 0
          %4388 = vmatpush1.bf16.msra.mxu0 0
          %4389 = vmatprep.subr.bf16.mxu0 0
          %4390 = vmatpush1.bf16.msra.mxu0 0
          %4391 = vmatprep.subr.bf16.mxu0 0
          %4392 = vmatpush1.bf16.msra.mxu0 0
          %4393 = vmatprep.subr.bf16.mxu0 0
          %4394 = vmatpush1.bf16.msra.mxu0 0
          %4395 = vmatprep.subr.bf16.mxu0 0
          %4396 = vmatpush1.bf16.msra.mxu0 0
          %4397 = vmatprep.subr.bf16.mxu0 0
          %4398 = vmatpush1.bf16.msra.mxu0 0
          %4399 = vmatprep.subr.bf16.mxu0 0
          %4400 = vmatpush1.bf16.msra.mxu0 0
          %4401 = vmatprep.mubr.bf16.mxu0 0
          %4402 = vmatmul.mubr.bf16.gmra.mrb[0].mxu0 %v4346
          %v4403 = vpop.f32.mrb[0].mxu0
          %v4404 = vadd.f32 %v4319, %v4403
          %v4405 = vpop.f32.mrb[0].mxu0
          %v4406 = vpop.f32.mrb[0].mxu0
          %v4407 = vadd.f32 %v4319, %v4406
          %v4408 = vpop.f32.mrb[0].mxu0
          %4409 = vmatprep.mubr.bf16.mxu0 0
          %4410 = vmatmul.mubr.bf16.gmra.mrb[0].mxu0 %v4349
          %v4411 = vpop.f32.mrb[0].mxu0
          %v4412 = vadd.f32 %v4319, %v4411
          %v4413 = vpop.f32.mrb[0].mxu0
          %v4414 = vpop.f32.mrb[0].mxu0
          %v4415 = vadd.f32 %v4319, %v4414
          %v4416 = vpop.f32.mrb[0].mxu0
          %4417 = vmatprep.mubr.bf16.mxu0 0
          %4418 = vmatmul.mubr.bf16.gmra.mrb[0].mxu0 %v4352
          %v4419 = vpop.f32.mrb[0].mxu0
          %v4420 = vadd.f32 %v4319, %v4419
          %v4421 = vpop.f32.mrb[0].mxu0
          %v4422 = vpop.f32.mrb[0].mxu0
          %v4423 = vadd.f32 %v4319, %v4422
          %v4424 = vpop.f32.mrb[0].mxu0
          %4425 = vmatprep.mubr.bf16.mxu0 0
          %4426 = vmatmul.mubr.bf16.gmra.mrb[0].mxu0 %v4355
          %v4427 = vpop.f32.mrb[0].mxu0
          %v4428 = vadd.f32 %v4319, %v4427
          %v4429 = vpop.f32.mrb[0].mxu0
          %v4430 = vpop.f32.mrb[0].mxu0
          %v4431 = vadd.f32 %v4319, %v4430
          %v4432 = vpop.f32.mrb[0].mxu0
          %4433 = vmatprep.mubr.bf16.mxu0 0
          %4434 = vmatmul.mubr.bf16.gmra.mrb[0].mxu0 %v4358
          %v4435 = vpop.f32.mrb[0].mxu0
          %v4436 = vadd.f32 %v4319, %v4435
          %v4437 = vpop.f32.mrb[0].mxu0
          %v4438 = vpop.f32.mrb[0].mxu0
          %v4439 = vadd.f32 %v4319, %v4438
          %v4440 = vpop.f32.mrb[0].mxu0
          %4441 = vmatprep.mubr.bf16.mxu0 0
          %4442 = vmatmul.mubr.bf16.gmra.mrb[0].mxu0 %v4361
          %v4443 = vpop.f32.mrb[0].mxu0
          %v4444 = vadd.f32 %v4319, %v4443
          %v4445 = vpop.f32.mrb[0].mxu0
          %v4446 = vpop.f32.mrb[0].mxu0
          %v4447 = vadd.f32 %v4319, %v4446
          %v4448 = vpop.f32.mrb[0].mxu0
          %4449 = vmatprep.mubr.bf16.mxu0 0
          %4450 = vmatmul.mubr.bf16.gmra.mrb[0].mxu0 %v4364
          %v4451 = vpop.f32.mrb[0].mxu0
          %v4452 = vadd.f32 %v4319, %v4451
          %v4453 = vpop.f32.mrb[0].mxu0
          %v4454 = vpop.f32.mrb[0].mxu0
          %v4455 = vadd.f32 %v4319, %v4454
          %v4456 = vpop.f32.mrb[0].mxu0
          %4457 = vmatprep.mubr.bf16.mxu0 0
          %4458 = vmatmul.mubr.bf16.gmra.mrb[0].mxu0 %v4367
          %v4459 = vpop.f32.mrb[0].mxu0
          %v4460 = vadd.f32 %v4319, %v4459
          %v4461 = vpop.f32.mrb[0].mxu0
          %v4462 = vpop.f32.mrb[0].mxu0
          %v4463 = vadd.f32 %v4319, %v4462
          %v4464 = vpop.f32.mrb[0].mxu0
          %4465 = vdwg.mxu0
          %v4466 = vadd.f32 %v4404, %v3859
          %v4467 = vadd.f32 %v4407, %v3860
          %v4468 = vadd.f32 %v4412, %v3861
          %v4469 = vadd.f32 %v4415, %v3862
          %v4470 = vadd.f32 %v4420, %v3863
          %v4471 = vadd.f32 %v4423, %v3864
          %v4472 = vadd.f32 %v4428, %v3865
          %v4473 = vadd.f32 %v4431, %v3866
          %v4474 = vadd.f32 %v4436, %v3867
          %v4475 = vadd.f32 %v4439, %v3868
          %v4476 = vadd.f32 %v4444, %v3869
          %v4477 = vadd.f32 %v4447, %v3870
          %v4478 = vadd.f32 %v4452, %v3871
          %v4479 = vadd.f32 %v4455, %v3872
          %v4480 = vadd.f32 %v4460, %v3873
          %v4481 = vadd.f32 %v4463, %v3874
          %v4482 = vmul.f32 %v4466, 0.70710677
          %v4483 = vmul.f32 %v4467, 0.70710677
          %v4484 = vmul.f32 %v4468, 0.70710677
          %v4485 = vmul.f32 %v4469, 0.70710677
          %v4486 = vmul.f32 %v4470, 0.70710677
          %v4487 = vmul.f32 %v4471, 0.70710677
          %v4488 = vmul.f32 %v4472, 0.70710677
          %v4489 = vmul.f32 %v4473, 0.70710677
          %v4490 = vmul.f32 %v4474, 0.70710677
          %v4491 = vmul.f32 %v4475, 0.70710677
          %v4492 = vmul.f32 %v4476, 0.70710677
          %v4493 = vmul.f32 %v4477, 0.70710677
          %v4494 = vmul.f32 %v4478, 0.70710677
          %v4495 = vmul.f32 %v4479, 0.70710677
          %v4496 = vmul.f32 %v4480, 0.70710677
          %v4497 = vmul.f32 %v4481, 0.70710677
        $region69: #{tpu_custom_call.1} parent=59 // loop_footer
          %s712 = sadd.s32 1, %s708
        $region70: #{tpu_custom_call.1} parent=59 // loop_footer_branch
          %707 = sbr.rel target = $region66
        $region71: #{tpu_custom_call.1} parent=59 // loop_exit
          _
        %v4498 = vpack.c.bf16 %v714, %v713
        %v4499 = vpack.c.bf16 %v716, %v715
        %v4500 = vpack.c.bf16 %v718, %v717
        %v4501 = vpack.c.bf16 %v720, %v719
        %v4502 = vpack.c.bf16 %v722, %v721
        %v4503 = vpack.c.bf16 %v724, %v723
        %v4504 = vpack.c.bf16 %v726, %v725
        %v4505 = vpack.c.bf16 %v728, %v727
        %v4506 = vld [vmem:[%s6] sm:$0xff]
        %v4507 = vld [vmem:[%s6 + $0x8] sm:$0xff]
        %v4508 = vld [vmem:[%s6 + $0x10] sm:$0xff]
        %v4509 = vld [vmem:[%s6 + $0x18] sm:$0xff]
        %v4510 = vld [vmem:[%s6 + $0x20] sm:$0xff]
        %v4511 = vld [vmem:[%s6 + $0x28] sm:$0xff]
        %v4512 = vld [vmem:[%s6 + $0x30] sm:$0xff]
        %v4513 = vld [vmem:[%s6 + $0x38] sm:$0xff]
        %v4514 = vld [vmem:[%s6 + $0x40] sm:$0xff]
        %v4515 = vld [vmem:[%s6 + $0x48] sm:$0xff]
        %v4516 = vld [vmem:[%s6 + $0x50] sm:$0xff]
        %v4517 = vld [vmem:[%s6 + $0x58] sm:$0xff]
        %v4518 = vld [vmem:[%s6 + $0x60] sm:$0xff]
        %v4519 = vld [vmem:[%s6 + $0x68] sm:$0xff]
        %v4520 = vld [vmem:[%s6 + $0x70] sm:$0xff]
        %v4521 = vld [vmem:[%s6 + $0x78] sm:$0xff]
        %v4522 = vld [vmem:[%s7] sm:$0xf]
        %v4524 = vlaneseq
        %v4525 = vshrl.u32 %v4524, 7
        %v4526 = vsub.s32 0, %v4525
        %v4527 = vrot.slane %v4522, %v4526
        %v4528 = vlaneseq
        %v4529 = vshrl.u32 %v4528, 7
        %v4530 = vsub.s32 1, %v4529
        %v4531 = vrot.slane %v4522, %v4530
        %v4532 = vlaneseq
        %v4533 = vshrl.u32 %v4532, 7
        %v4534 = vsub.s32 2, %v4533
        %v4535 = vrot.slane %v4522, %v4534
        %v4536 = vlaneseq
        %v4537 = vshrl.u32 %v4536, 7
        %v4538 = vsub.s32 3, %v4537
        %v4539 = vrot.slane %v4522, %v4538
        %v4560 = vunpack.c.l.b16 %v4506
        %v4561 = vunpack.c.h.b16 %v4506
        %v4562 = vunpack.c.l.b16 %v4507
        %v4563 = vunpack.c.h.b16 %v4507
        %v4564 = vunpack.c.l.b16 %v4508
        %v4565 = vunpack.c.h.b16 %v4508
        %v4566 = vunpack.c.l.b16 %v4509
        %v4567 = vunpack.c.h.b16 %v4509
        %v4568 = vunpack.c.l.b16 %v4510
        %v4569 = vunpack.c.h.b16 %v4510
        %v4570 = vunpack.c.l.b16 %v4511
        %v4571 = vunpack.c.h.b16 %v4511
        %v4572 = vunpack.c.l.b16 %v4512
        %v4573 = vunpack.c.h.b16 %v4512
        %v4574 = vunpack.c.l.b16 %v4513
        %v4575 = vunpack.c.h.b16 %v4513
        %v4576 = vunpack.c.l.b16 %v4514
        %v4577 = vunpack.c.h.b16 %v4514
        %v4578 = vunpack.c.l.b16 %v4515
        %v4579 = vunpack.c.h.b16 %v4515
        %v4580 = vunpack.c.l.b16 %v4516
        %v4581 = vunpack.c.h.b16 %v4516
        %v4582 = vunpack.c.l.b16 %v4517
        %v4583 = vunpack.c.h.b16 %v4517
        %v4584 = vunpack.c.l.b16 %v4518
        %v4585 = vunpack.c.h.b16 %v4518
        %v4586 = vunpack.c.l.b16 %v4519
        %v4587 = vunpack.c.h.b16 %v4519
        %v4588 = vunpack.c.l.b16 %v4520
        %v4589 = vunpack.c.h.b16 %v4520
        %v4590 = vunpack.c.l.b16 %v4521
        %v4591 = vunpack.c.h.b16 %v4521
        %v4592 = vpack.c.b16 %v4564, %v4560
        %v4593 = vpack.c.b16 %v4565, %v4561
        %v4594 = vpack.c.b16 %v4566, %v4562
        %v4595 = vpack.c.b16 %v4567, %v4563
        %v4596 = vpack.c.b16 %v4572, %v4568
        %v4597 = vpack.c.b16 %v4573, %v4569
        %v4598 = vpack.c.b16 %v4574, %v4570
        %v4599 = vpack.c.b16 %v4575, %v4571
        %v4600 = vpack.c.b16 %v4580, %v4576
        %v4601 = vpack.c.b16 %v4581, %v4577
        %v4602 = vpack.c.b16 %v4582, %v4578
        %v4603 = vpack.c.b16 %v4583, %v4579
        %v4604 = vpack.c.b16 %v4588, %v4584
        %v4605 = vpack.c.b16 %v4589, %v4585
        %v4606 = vpack.c.b16 %v4590, %v4586
        %v4607 = vpack.c.b16 %v4591, %v4587
        %v4625 = vsel %vm623, %v4498, 0
        %v4628 = vsel %vm623, %v4499, 0
        %v4631 = vsel %vm623, %v4500, 0
        %v4634 = vsel %vm623, %v4501, 0
        %v4637 = vsel %vm623, %v4502, 0
        %v4640 = vsel %vm623, %v4503, 0
        %v4643 = vsel %vm623, %v4504, 0
        %v4646 = vsel %vm623, %v4505, 0
        %4648 = vmatprep.subr.bf16.mxu0 %v4593
        %4649 = vmatpush1.bf16.msra.mxu0 %v4592
        %4650 = vmatprep.subr.bf16.mxu0 %v4597
        %4651 = vmatpush1.bf16.msra.mxu0 %v4596
        %4652 = vmatprep.subr.bf16.mxu0 %v4601
        %4653 = vmatpush1.bf16.msra.mxu0 %v4600
        %4654 = vmatprep.subr.bf16.mxu0 %v4605
        %4655 = vmatpush1.bf16.msra.mxu0 %v4604
        %4656 = vmatprep.subr.bf16.mxu0 0
        %4657 = vmatpush1.bf16.msra.mxu0 0
        %4658 = vmatprep.subr.bf16.mxu0 0
        %4659 = vmatpush1.bf16.msra.mxu0 0
        %4660 = vmatprep.subr.bf16.mxu0 0
        %4661 = vmatpush1.bf16.msra.mxu0 0
        %4662 = vmatprep.subr.bf16.mxu0 0
        %4663 = vmatpush1.bf16.msra.mxu0 0
        %4664 = vmatprep.subr.bf16.mxu0 0
        %4665 = vmatpush1.bf16.msra.mxu0 0
        %4666 = vmatprep.subr.bf16.mxu0 0
        %4667 = vmatpush1.bf16.msra.mxu0 0
        %4668 = vmatprep.subr.bf16.mxu0 0
        %4669 = vmatpush1.bf16.msra.mxu0 0
        %4670 = vmatprep.subr.bf16.mxu0 0
        %4671 = vmatpush1.bf16.msra.mxu0 0
        %4672 = vmatprep.subr.bf16.mxu0 0
        %4673 = vmatpush1.bf16.msra.mxu0 0
        %4674 = vmatprep.subr.bf16.mxu0 0
        %4675 = vmatpush1.bf16.msra.mxu0 0
        %4676 = vmatprep.subr.bf16.mxu0 0
        %4677 = vmatpush1.bf16.msra.mxu0 0
        %4678 = vmatprep.subr.bf16.mxu0 0
        %4679 = vmatpush1.bf16.msra.mxu0 0
        %4680 = vmatprep.mubr.bf16.mxu0 0
        %4681 = vmatmul.mubr.bf16.gmra.mrb[0].mxu0 %v4625
        %v4682 = vpop.f32.mrb[0].mxu0
        %v4683 = vadd.f32 %v4527, %v4682
        %v4684 = vpop.f32.mrb[0].mxu0
        %v4685 = vadd.f32 %v4531, %v4684
        %v4686 = vpop.f32.mrb[0].mxu0
        %v4687 = vadd.f32 %v4527, %v4686
        %v4688 = vpop.f32.mrb[0].mxu0
        %v4689 = vadd.f32 %v4531, %v4688
        %4690 = vmatprep.mubr.bf16.mxu0 0
        %4691 = vmatmul.mubr.bf16.gmra.mrb[0].mxu0 %v4628
        %v4692 = vpop.f32.mrb[0].mxu0
        %v4693 = vadd.f32 %v4527, %v4692
        %v4694 = vpop.f32.mrb[0].mxu0
        %v4695 = vadd.f32 %v4531, %v4694
        %v4696 = vpop.f32.mrb[0].mxu0
        %v4697 = vadd.f32 %v4527, %v4696
        %v4698 = vpop.f32.mrb[0].mxu0
        %v4699 = vadd.f32 %v4531, %v4698
        %4700 = vmatprep.mubr.bf16.mxu0 0
        %4701 = vmatmul.mubr.bf16.gmra.mrb[0].mxu0 %v4631
        %v4702 = vpop.f32.mrb[0].mxu0
        %v4703 = vadd.f32 %v4527, %v4702
        %v4704 = vpop.f32.mrb[0].mxu0
        %v4705 = vadd.f32 %v4531, %v4704
        %v4706 = vpop.f32.mrb[0].mxu0
        %v4707 = vadd.f32 %v4527, %v4706
        %v4708 = vpop.f32.mrb[0].mxu0
        %v4709 = vadd.f32 %v4531, %v4708
        %4710 = vmatprep.mubr.bf16.mxu0 0
        %4711 = vmatmul.mubr.bf16.gmra.mrb[0].mxu0 %v4634
        %v4712 = vpop.f32.mrb[0].mxu0
        %v4713 = vadd.f32 %v4527, %v4712
        %v4714 = vpop.f32.mrb[0].mxu0
        %v4715 = vadd.f32 %v4531, %v4714
        %v4716 = vpop.f32.mrb[0].mxu0
        %v4717 = vadd.f32 %v4527, %v4716
        %v4718 = vpop.f32.mrb[0].mxu0
        %v4719 = vadd.f32 %v4531, %v4718
        %4720 = vmatprep.mubr.bf16.mxu0 0
        %4721 = vmatmul.mubr.bf16.gmra.mrb[0].mxu0 %v4637
        %v4722 = vpop.f32.mrb[0].mxu0
        %v4723 = vadd.f32 %v4527, %v4722
        %v4724 = vpop.f32.mrb[0].mxu0
        %v4725 = vadd.f32 %v4531, %v4724
        %v4726 = vpop.f32.mrb[0].mxu0
        %v4727 = vadd.f32 %v4527, %v4726
        %v4728 = vpop.f32.mrb[0].mxu0
        %v4729 = vadd.f32 %v4531, %v4728
        %4730 = vmatprep.mubr.bf16.mxu0 0
        %4731 = vmatmul.mubr.bf16.gmra.mrb[0].mxu0 %v4640
        %v4732 = vpop.f32.mrb[0].mxu0
        %v4733 = vadd.f32 %v4527, %v4732
        %v4734 = vpop.f32.mrb[0].mxu0
        %v4735 = vadd.f32 %v4531, %v4734
        %v4736 = vpop.f32.mrb[0].mxu0
        %v4737 = vadd.f32 %v4527, %v4736
        %v4738 = vpop.f32.mrb[0].mxu0
        %v4739 = vadd.f32 %v4531, %v4738
        %4740 = vmatprep.mubr.bf16.mxu0 0
        %4741 = vmatmul.mubr.bf16.gmra.mrb[0].mxu0 %v4643
        %v4742 = vpop.f32.mrb[0].mxu0
        %v4743 = vadd.f32 %v4527, %v4742
        %v4744 = vpop.f32.mrb[0].mxu0
        %v4745 = vadd.f32 %v4531, %v4744
        %v4746 = vpop.f32.mrb[0].mxu0
        %v4747 = vadd.f32 %v4527, %v4746
        %v4748 = vpop.f32.mrb[0].mxu0
        %v4749 = vadd.f32 %v4531, %v4748
        %4750 = vmatprep.mubr.bf16.mxu0 0
        %4751 = vmatmul.mubr.bf16.gmra.mrb[0].mxu0 %v4646
        %v4752 = vpop.f32.mrb[0].mxu0
        %v4753 = vadd.f32 %v4527, %v4752
        %v4754 = vpop.f32.mrb[0].mxu0
        %v4755 = vadd.f32 %v4531, %v4754
        %v4756 = vpop.f32.mrb[0].mxu0
        %v4757 = vadd.f32 %v4527, %v4756
        %v4758 = vpop.f32.mrb[0].mxu0
        %v4759 = vadd.f32 %v4531, %v4758
        %4760 = vdwg.mxu0
        %4761 = vmatprep.subr.bf16.mxu0 %v4595
        %4762 = vmatpush1.bf16.msra.mxu0 %v4594
        %4763 = vmatprep.subr.bf16.mxu0 %v4599
        %4764 = vmatpush1.bf16.msra.mxu0 %v4598
        %4765 = vmatprep.subr.bf16.mxu0 %v4603
        %4766 = vmatpush1.bf16.msra.mxu0 %v4602
        %4767 = vmatprep.subr.bf16.mxu0 %v4607
        %4768 = vmatpush1.bf16.msra.mxu0 %v4606
        %4769 = vmatprep.subr.bf16.mxu0 0
        %4770 = vmatpush1.bf16.msra.mxu0 0
        %4771 = vmatprep.subr.bf16.mxu0 0
        %4772 = vmatpush1.bf16.msra.mxu0 0
        %4773 = vmatprep.subr.bf16.mxu0 0
        %4774 = vmatpush1.bf16.msra.mxu0 0
        %4775 = vmatprep.subr.bf16.mxu0 0
        %4776 = vmatpush1.bf16.msra.mxu0 0
        %4777 = vmatprep.subr.bf16.mxu0 0
        %4778 = vmatpush1.bf16.msra.mxu0 0
        %4779 = vmatprep.subr.bf16.mxu0 0
        %4780 = vmatpush1.bf16.msra.mxu0 0
        %4781 = vmatprep.subr.bf16.mxu0 0
        %4782 = vmatpush1.bf16.msra.mxu0 0
        %4783 = vmatprep.subr.bf16.mxu0 0
        %4784 = vmatpush1.bf16.msra.mxu0 0
        %4785 = vmatprep.subr.bf16.mxu0 0
        %4786 = vmatpush1.bf16.msra.mxu0 0
        %4787 = vmatprep.subr.bf16.mxu0 0
        %4788 = vmatpush1.bf16.msra.mxu0 0
        %4789 = vmatprep.subr.bf16.mxu0 0
        %4790 = vmatpush1.bf16.msra.mxu0 0
        %4791 = vmatprep.subr.bf16.mxu0 0
        %4792 = vmatpush1.bf16.msra.mxu0 0
        %4793 = vmatprep.mubr.bf16.mxu0 0
        %4794 = vmatmul.mubr.bf16.gmra.mrb[0].mxu0 %v4625
        %v4795 = vpop.f32.mrb[0].mxu0
        %v4796 = vadd.f32 %v4535, %v4795
        %v4797 = vpop.f32.mrb[0].mxu0
        %v4798 = vadd.f32 %v4539, %v4797
        %v4799 = vpop.f32.mrb[0].mxu0
        %v4800 = vadd.f32 %v4535, %v4799
        %v4801 = vpop.f32.mrb[0].mxu0
        %v4802 = vadd.f32 %v4539, %v4801
        %4803 = vmatprep.mubr.bf16.mxu0 0
        %4804 = vmatmul.mubr.bf16.gmra.mrb[0].mxu0 %v4628
        %v4805 = vpop.f32.mrb[0].mxu0
        %v4806 = vadd.f32 %v4535, %v4805
        %v4807 = vpop.f32.mrb[0].mxu0
        %v4808 = vadd.f32 %v4539, %v4807
        %v4809 = vpop.f32.mrb[0].mxu0
        %v4810 = vadd.f32 %v4535, %v4809
        %v4811 = vpop.f32.mrb[0].mxu0
        %v4812 = vadd.f32 %v4539, %v4811
        %4813 = vmatprep.mubr.bf16.mxu0 0
        %4814 = vmatmul.mubr.bf16.gmra.mrb[0].mxu0 %v4631
        %v4815 = vpop.f32.mrb[0].mxu0
        %v4816 = vadd.f32 %v4535, %v4815
        %v4817 = vpop.f32.mrb[0].mxu0
        %v4818 = vadd.f32 %v4539, %v4817
        %v4819 = vpop.f32.mrb[0].mxu0
        %v4820 = vadd.f32 %v4535, %v4819
        %v4821 = vpop.f32.mrb[0].mxu0
        %v4822 = vadd.f32 %v4539, %v4821
        %4823 = vmatprep.mubr.bf16.mxu0 0
        %4824 = vmatmul.mubr.bf16.gmra.mrb[0].mxu0 %v4634
        %v4825 = vpop.f32.mrb[0].mxu0
        %v4826 = vadd.f32 %v4535, %v4825
        %v4827 = vpop.f32.mrb[0].mxu0
        %v4828 = vadd.f32 %v4539, %v4827
        %v4829 = vpop.f32.mrb[0].mxu0
        %v4830 = vadd.f32 %v4535, %v4829
        %v4831 = vpop.f32.mrb[0].mxu0
        %v4832 = vadd.f32 %v4539, %v4831
        %4833 = vmatprep.mubr.bf16.mxu0 0
        %4834 = vmatmul.mubr.bf16.gmra.mrb[0].mxu0 %v4637
        %v4835 = vpop.f32.mrb[0].mxu0
        %v4836 = vadd.f32 %v4535, %v4835
        %v4837 = vpop.f32.mrb[0].mxu0
        %v4838 = vadd.f32 %v4539, %v4837
        %v4839 = vpop.f32.mrb[0].mxu0
        %v4840 = vadd.f32 %v4535, %v4839
        %v4841 = vpop.f32.mrb[0].mxu0
        %v4842 = vadd.f32 %v4539, %v4841
        %4843 = vmatprep.mubr.bf16.mxu0 0
        %4844 = vmatmul.mubr.bf16.gmra.mrb[0].mxu0 %v4640
        %v4845 = vpop.f32.mrb[0].mxu0
        %v4846 = vadd.f32 %v4535, %v4845
        %v4847 = vpop.f32.mrb[0].mxu0
        %v4848 = vadd.f32 %v4539, %v4847
        %v4849 = vpop.f32.mrb[0].mxu0
        %v4850 = vadd.f32 %v4535, %v4849
        %v4851 = vpop.f32.mrb[0].mxu0
        %v4852 = vadd.f32 %v4539, %v4851
        %4853 = vmatprep.mubr.bf16.mxu0 0
        %4854 = vmatmul.mubr.bf16.gmra.mrb[0].mxu0 %v4643
        %v4855 = vpop.f32.mrb[0].mxu0
        %v4856 = vadd.f32 %v4535, %v4855
        %v4857 = vpop.f32.mrb[0].mxu0
        %v4858 = vadd.f32 %v4539, %v4857
        %v4859 = vpop.f32.mrb[0].mxu0
        %v4860 = vadd.f32 %v4535, %v4859
        %v4861 = vpop.f32.mrb[0].mxu0
        %v4862 = vadd.f32 %v4539, %v4861
        %4863 = vmatprep.mubr.bf16.mxu0 0
        %4864 = vmatmul.mubr.bf16.gmra.mrb[0].mxu0 %v4646
        %v4865 = vpop.f32.mrb[0].mxu0
        %v4866 = vadd.f32 %v4535, %v4865
        %v4867 = vpop.f32.mrb[0].mxu0
        %v4868 = vadd.f32 %v4539, %v4867
        %v4869 = vpop.f32.mrb[0].mxu0
        %v4870 = vadd.f32 %v4535, %v4869
        %v4871 = vpop.f32.mrb[0].mxu0
        %v4872 = vadd.f32 %v4539, %v4871
        %4873 = vdwg.mxu0
        %v4874 = vmax.f32 %v4683, 0.0
        %v4875 = vmax.f32 %v4685, 0.0
        %v4876 = vmax.f32 %v4796, 0.0
        %v4877 = vmax.f32 %v4798, 0.0
        %v4878 = vmax.f32 %v4687, 0.0
        %v4879 = vmax.f32 %v4689, 0.0
        %v4880 = vmax.f32 %v4800, 0.0
        %v4881 = vmax.f32 %v4802, 0.0
        %v4882 = vmax.f32 %v4693, 0.0
        %v4883 = vmax.f32 %v4695, 0.0
        %v4884 = vmax.f32 %v4806, 0.0
        %v4885 = vmax.f32 %v4808, 0.0
        %v4886 = vmax.f32 %v4697, 0.0
        %v4887 = vmax.f32 %v4699, 0.0
        %v4888 = vmax.f32 %v4810, 0.0
        %v4889 = vmax.f32 %v4812, 0.0
        %v4890 = vmax.f32 %v4703, 0.0
        %v4891 = vmax.f32 %v4705, 0.0
        %v4892 = vmax.f32 %v4816, 0.0
        %v4893 = vmax.f32 %v4818, 0.0
        %v4894 = vmax.f32 %v4707, 0.0
        %v4895 = vmax.f32 %v4709, 0.0
        %v4896 = vmax.f32 %v4820, 0.0
        %v4897 = vmax.f32 %v4822, 0.0
        %v4898 = vmax.f32 %v4713, 0.0
        %v4899 = vmax.f32 %v4715, 0.0
        %v4900 = vmax.f32 %v4826, 0.0
        %v4901 = vmax.f32 %v4828, 0.0
        %v4902 = vmax.f32 %v4717, 0.0
        %v4903 = vmax.f32 %v4719, 0.0
        %v4904 = vmax.f32 %v4830, 0.0
        %v4905 = vmax.f32 %v4832, 0.0
        %v4906 = vmax.f32 %v4723, 0.0
        %v4907 = vmax.f32 %v4725, 0.0
        %v4908 = vmax.f32 %v4836, 0.0
        %v4909 = vmax.f32 %v4838, 0.0
        %v4910 = vmax.f32 %v4727, 0.0
        %v4911 = vmax.f32 %v4729, 0.0
        %v4912 = vmax.f32 %v4840, 0.0
        %v4913 = vmax.f32 %v4842, 0.0
        %v4914 = vmax.f32 %v4733, 0.0
        %v4915 = vmax.f32 %v4735, 0.0
        %v4916 = vmax.f32 %v4846, 0.0
        %v4917 = vmax.f32 %v4848, 0.0
        %v4918 = vmax.f32 %v4737, 0.0
        %v4919 = vmax.f32 %v4739, 0.0
        %v4920 = vmax.f32 %v4850, 0.0
        %v4921 = vmax.f32 %v4852, 0.0
        %v4922 = vmax.f32 %v4743, 0.0
        %v4923 = vmax.f32 %v4745, 0.0
        %v4924 = vmax.f32 %v4856, 0.0
        %v4925 = vmax.f32 %v4858, 0.0
        %v4926 = vmax.f32 %v4747, 0.0
        %v4927 = vmax.f32 %v4749, 0.0
        %v4928 = vmax.f32 %v4860, 0.0
        %v4929 = vmax.f32 %v4862, 0.0
        %v4930 = vmax.f32 %v4753, 0.0
        %v4931 = vmax.f32 %v4755, 0.0
        %v4932 = vmax.f32 %v4866, 0.0
        %v4933 = vmax.f32 %v4868, 0.0
        %v4934 = vmax.f32 %v4757, 0.0
        %v4935 = vmax.f32 %v4759, 0.0
        %v4936 = vmax.f32 %v4870, 0.0
        %v4937 = vmax.f32 %v4872, 0.0
        %v4938 = vpack.c.bf16 %v4878, %v4874
        %v4939 = vpack.c.bf16 %v4879, %v4875
        %v4940 = vpack.c.bf16 %v4880, %v4876
        %v4941 = vpack.c.bf16 %v4881, %v4877
        %v4942 = vpack.c.bf16 %v4886, %v4882
        %v4943 = vpack.c.bf16 %v4887, %v4883
        %v4944 = vpack.c.bf16 %v4888, %v4884
        %v4945 = vpack.c.bf16 %v4889, %v4885
        %v4946 = vpack.c.bf16 %v4894, %v4890
        %v4947 = vpack.c.bf16 %v4895, %v4891
        %v4948 = vpack.c.bf16 %v4896, %v4892
        %v4949 = vpack.c.bf16 %v4897, %v4893
        %v4950 = vpack.c.bf16 %v4902, %v4898
        %v4951 = vpack.c.bf16 %v4903, %v4899
        %v4952 = vpack.c.bf16 %v4904, %v4900
        %v4953 = vpack.c.bf16 %v4905, %v4901
        %v4954 = vpack.c.bf16 %v4910, %v4906
        %v4955 = vpack.c.bf16 %v4911, %v4907
        %v4956 = vpack.c.bf16 %v4912, %v4908
        %v4957 = vpack.c.bf16 %v4913, %v4909
        %v4958 = vpack.c.bf16 %v4918, %v4914
        %v4959 = vpack.c.bf16 %v4919, %v4915
        %v4960 = vpack.c.bf16 %v4920, %v4916
        %v4961 = vpack.c.bf16 %v4921, %v4917
        %v4962 = vpack.c.bf16 %v4926, %v4922
        %v4963 = vpack.c.bf16 %v4927, %v4923
        %v4964 = vpack.c.bf16 %v4928, %v4924
        %v4965 = vpack.c.bf16 %v4929, %v4925
        %v4966 = vpack.c.bf16 %v4934, %v4930
        %v4967 = vpack.c.bf16 %v4935, %v4931
        %v4968 = vpack.c.bf16 %v4936, %v4932
        %v4969 = vpack.c.bf16 %v4937, %v4933
        %v4970 = vld [vmem:[%s8] sm:$0xff]
        %v4971 = vld [vmem:[%s8 + $0x8] sm:$0xf]
        %v4972 = vld [vmem:[%s8 + $0xc] sm:$0xff]
        %v4973 = vld [vmem:[%s8 + $0x14] sm:$0xf]
        %v4974 = vld [vmem:[%s8 + $0x18] sm:$0xff]
        %v4975 = vld [vmem:[%s8 + $0x20] sm:$0xf]
        %v4976 = vld [vmem:[%s8 + $0x24] sm:$0xff]
        %v4977 = vld [vmem:[%s8 + $0x2c] sm:$0xf]
        %v4978 = vld [vmem:[%s8 + $0x30] sm:$0xff]
        %v4979 = vld [vmem:[%s8 + $0x38] sm:$0xf]
        %v4980 = vld [vmem:[%s8 + $0x3c] sm:$0xff]
        %v4981 = vld [vmem:[%s8 + $0x44] sm:$0xf]
        %v4982 = vld [vmem:[%s8 + $0x48] sm:$0xff]
        %v4983 = vld [vmem:[%s8 + $0x50] sm:$0xf]
        %v4984 = vld [vmem:[%s8 + $0x54] sm:$0xff]
        %v4985 = vld [vmem:[%s8 + $0x5c] sm:$0xf]
        %v4986 = vld [vmem:[%s8 + $0x60] sm:$0xff]
        %v4987 = vld [vmem:[%s8 + $0x68] sm:$0xf]
        %v4988 = vld [vmem:[%s8 + $0x6c] sm:$0xff]
        %v4989 = vld [vmem:[%s8 + $0x74] sm:$0xf]
        %v4990 = vld [vmem:[%s8 + $0x78] sm:$0xff]
        %v4991 = vld [vmem:[%s8 + $0x80] sm:$0xf]
        %v4992 = vld [vmem:[%s8 + $0x84] sm:$0xff]
        %v4993 = vld [vmem:[%s8 + $0x8c] sm:$0xf]
        %v4994 = vld [vmem:[%s8 + $0x90] sm:$0xff]
        %v4995 = vld [vmem:[%s8 + $0x98] sm:$0xf]
        %v4996 = vld [vmem:[%s8 + $0x9c] sm:$0xff]
        %v4997 = vld [vmem:[%s8 + $0xa4] sm:$0xf]
        %v4998 = vld [vmem:[%s8 + $0xa8] sm:$0xff]
        %v4999 = vld [vmem:[%s8 + $0xb0] sm:$0xf]
        %v5000 = vld [vmem:[%s8 + $0xb4] sm:$0xff]
        %v5001 = vld [vmem:[%s8 + $0xbc] sm:$0xf]
        %v5002 = vld [vmem:[%s8 + $0xc0] sm:$0xff]
        %v5003 = vld [vmem:[%s8 + $0xc8] sm:$0xf]
        %v5004 = vld [vmem:[%s8 + $0xcc] sm:$0xff]
        %v5005 = vld [vmem:[%s8 + $0xd4] sm:$0xf]
        %v5006 = vld [vmem:[%s8 + $0xd8] sm:$0xff]
        %v5007 = vld [vmem:[%s8 + $0xe0] sm:$0xf]
        %v5008 = vld [vmem:[%s8 + $0xe4] sm:$0xff]
        %v5009 = vld [vmem:[%s8 + $0xec] sm:$0xf]
        %v5010 = vld [vmem:[%s8 + $0xf0] sm:$0xff]
        %v5011 = vld [vmem:[%s8 + $0xf8] sm:$0xf]
        %v5012 = vld [vmem:[%s8 + $0xfc] sm:$0xff]
        %v5013 = vld [vmem:[%s8 + $0x104] sm:$0xf]
        %v5014 = vld [vmem:[%s8 + $0x108] sm:$0xff]
        %v5015 = vld [vmem:[%s8 + $0x110] sm:$0xf]
        %v5016 = vld [vmem:[%s8 + $0x114] sm:$0xff]
        %v5017 = vld [vmem:[%s8 + $0x11c] sm:$0xf]
        %v5018 = vld [vmem:[%s8 + $0x120] sm:$0xff]
        %v5019 = vld [vmem:[%s8 + $0x128] sm:$0xf]
        %v5020 = vld [vmem:[%s8 + $0x12c] sm:$0xff]
        %v5021 = vld [vmem:[%s8 + $0x134] sm:$0xf]
        %v5022 = vld [vmem:[%s8 + $0x138] sm:$0xff]
        %v5023 = vld [vmem:[%s8 + $0x140] sm:$0xf]
        %v5024 = vld [vmem:[%s8 + $0x144] sm:$0xff]
        %v5025 = vld [vmem:[%s8 + $0x14c] sm:$0xf]
        %v5026 = vld [vmem:[%s8 + $0x150] sm:$0xff]
        %v5027 = vld [vmem:[%s8 + $0x158] sm:$0xf]
        %v5028 = vld [vmem:[%s8 + $0x15c] sm:$0xff]
        %v5029 = vld [vmem:[%s8 + $0x164] sm:$0xf]
        %v5030 = vld [vmem:[%s8 + $0x168] sm:$0xff]
        %v5031 = vld [vmem:[%s8 + $0x170] sm:$0xf]
        %v5032 = vld [vmem:[%s8 + $0x174] sm:$0xff]
        %v5033 = vld [vmem:[%s8 + $0x17c] sm:$0xf]
        %v5034 = vld [vmem:[%s8 + $0x180] sm:$0xff]
        %v5035 = vld [vmem:[%s8 + $0x188] sm:$0xf]
        %v5036 = vld [vmem:[%s8 + $0x18c] sm:$0xff]
        %v5037 = vld [vmem:[%s8 + $0x194] sm:$0xf]
        %v5038 = vld [vmem:[%s8 + $0x198] sm:$0xff]
        %v5039 = vld [vmem:[%s8 + $0x1a0] sm:$0xf]
        %v5040 = vld [vmem:[%s8 + $0x1a4] sm:$0xff]
        %v5041 = vld [vmem:[%s8 + $0x1ac] sm:$0xf]
        %v5042 = vld [vmem:[%s8 + $0x1b0] sm:$0xff]
        %v5043 = vld [vmem:[%s8 + $0x1b8] sm:$0xf]
        %v5044 = vld [vmem:[%s8 + $0x1bc] sm:$0xff]
        %v5045 = vld [vmem:[%s8 + $0x1c4] sm:$0xf]
        %v5046 = vld [vmem:[%s8 + $0x1c8] sm:$0xff]
        %v5047 = vld [vmem:[%s8 + $0x1d0] sm:$0xf]
        %v5048 = vld [vmem:[%s8 + $0x1d4] sm:$0xff]
        %v5049 = vld [vmem:[%s8 + $0x1dc] sm:$0xf]
        %v5050 = vld [vmem:[%s8 + $0x1e0] sm:$0xff]
        %v5051 = vld [vmem:[%s8 + $0x1e8] sm:$0xf]
        %v5052 = vld [vmem:[%s8 + $0x1ec] sm:$0xff]
        %v5053 = vld [vmem:[%s8 + $0x1f4] sm:$0xf]
        %v5054 = vld [vmem:[%s8 + $0x1f8] sm:$0xff]
        %v5055 = vld [vmem:[%s8 + $0x200] sm:$0xf]
        %v5056 = vld [vmem:[%s8 + $0x204] sm:$0xff]
        %v5057 = vld [vmem:[%s8 + $0x20c] sm:$0xf]
        %v5058 = vld [vmem:[%s8 + $0x210] sm:$0xff]
        %v5059 = vld [vmem:[%s8 + $0x218] sm:$0xf]
        %v5060 = vld [vmem:[%s8 + $0x21c] sm:$0xff]
        %v5061 = vld [vmem:[%s8 + $0x224] sm:$0xf]
        %v5062 = vld [vmem:[%s8 + $0x228] sm:$0xff]
        %v5063 = vld [vmem:[%s8 + $0x230] sm:$0xf]
        %v5064 = vld [vmem:[%s8 + $0x234] sm:$0xff]
        %v5065 = vld [vmem:[%s8 + $0x23c] sm:$0xf]
        %v5066 = vld [vmem:[%s8 + $0x240] sm:$0xff]
        %v5067 = vld [vmem:[%s8 + $0x248] sm:$0xf]
        %v5068 = vld [vmem:[%s8 + $0x24c] sm:$0xff]
        %v5069 = vld [vmem:[%s8 + $0x254] sm:$0xf]
        %v5070 = vld [vmem:[%s8 + $0x258] sm:$0xff]
        %v5071 = vld [vmem:[%s8 + $0x260] sm:$0xf]
        %v5072 = vld [vmem:[%s8 + $0x264] sm:$0xff]
        %v5073 = vld [vmem:[%s8 + $0x26c] sm:$0xf]
        %v5074 = vld [vmem:[%s8 + $0x270] sm:$0xff]
        %v5075 = vld [vmem:[%s8 + $0x278] sm:$0xf]
        %v5076 = vld [vmem:[%s8 + $0x27c] sm:$0xff]
        %v5077 = vld [vmem:[%s8 + $0x284] sm:$0xf]
        %v5078 = vld [vmem:[%s8 + $0x288] sm:$0xff]
        %v5079 = vld [vmem:[%s8 + $0x290] sm:$0xf]
        %v5080 = vld [vmem:[%s8 + $0x294] sm:$0xff]
        %v5081 = vld [vmem:[%s8 + $0x29c] sm:$0xf]
        %v5082 = vld [vmem:[%s8 + $0x2a0] sm:$0xff]
        %v5083 = vld [vmem:[%s8 + $0x2a8] sm:$0xf]
        %v5084 = vld [vmem:[%s8 + $0x2ac] sm:$0xff]
        %v5085 = vld [vmem:[%s8 + $0x2b4] sm:$0xf]
        %v5086 = vld [vmem:[%s8 + $0x2b8] sm:$0xff]
        %v5087 = vld [vmem:[%s8 + $0x2c0] sm:$0xf]
        %v5088 = vld [vmem:[%s8 + $0x2c4] sm:$0xff]
        %v5089 = vld [vmem:[%s8 + $0x2cc] sm:$0xf]
        %v5090 = vld [vmem:[%s8 + $0x2d0] sm:$0xff]
        %v5091 = vld [vmem:[%s8 + $0x2d8] sm:$0xf]
        %v5092 = vld [vmem:[%s8 + $0x2dc] sm:$0xff]
        %v5093 = vld [vmem:[%s8 + $0x2e4] sm:$0xf]
        %v5094 = vld [vmem:[%s8 + $0x2e8] sm:$0xff]
        %v5095 = vld [vmem:[%s8 + $0x2f0] sm:$0xf]
        %v5096 = vld [vmem:[%s8 + $0x2f4] sm:$0xff]
        %v5097 = vld [vmem:[%s8 + $0x2fc] sm:$0xf]
        %v5098 = vld [vmem:[%s9] sm:$0x7]
        %v5100 = vlaneseq
        %v5101 = vshrl.u32 %v5100, 7
        %v5102 = vsub.s32 0, %v5101
        %v5103 = vrot.slane %v5098, %v5102
        %v5104 = vlaneseq
        %v5105 = vshrl.u32 %v5104, 7
        %v5106 = vsub.s32 1, %v5105
        %v5107 = vrot.slane %v5098, %v5106
        %v5108 = vlaneseq
        %v5109 = vshrl.u32 %v5108, 7
        %v5110 = vsub.s32 2, %v5109
        %v5111 = vrot.slane %v5098, %v5110
        %v5243 = vunpack.c.l.b16 %v4970
        %v5244 = vunpack.c.h.b16 %v4970
        %v5245 = vunpack.c.l.b16 %v4971
        %v5246 = vunpack.c.l.b16 %v4972
        %v5247 = vunpack.c.h.b16 %v4972
        %v5248 = vunpack.c.l.b16 %v4973
        %v5249 = vunpack.c.l.b16 %v4974
        %v5250 = vunpack.c.h.b16 %v4974
        %v5251 = vunpack.c.l.b16 %v4975
        %v5252 = vunpack.c.l.b16 %v4976
        %v5253 = vunpack.c.h.b16 %v4976
        %v5254 = vunpack.c.l.b16 %v4977
        %v5255 = vunpack.c.l.b16 %v4978
        %v5256 = vunpack.c.h.b16 %v4978
        %v5257 = vunpack.c.l.b16 %v4979
        %v5258 = vunpack.c.l.b16 %v4980
        %v5259 = vunpack.c.h.b16 %v4980
        %v5260 = vunpack.c.l.b16 %v4981
        %v5261 = vunpack.c.l.b16 %v4982
        %v5262 = vunpack.c.h.b16 %v4982
        %v5263 = vunpack.c.l.b16 %v4983
        %v5264 = vunpack.c.l.b16 %v4984
        %v5265 = vunpack.c.h.b16 %v4984
        %v5266 = vunpack.c.l.b16 %v4985
        %v5267 = vunpack.c.l.b16 %v4986
        %v5268 = vunpack.c.h.b16 %v4986
        %v5269 = vunpack.c.l.b16 %v4987
        %v5270 = vunpack.c.l.b16 %v4988
        %v5271 = vunpack.c.h.b16 %v4988
        %v5272 = vunpack.c.l.b16 %v4989
        %v5273 = vunpack.c.l.b16 %v4990
        %v5274 = vunpack.c.h.b16 %v4990
        %v5275 = vunpack.c.l.b16 %v4991
        %v5276 = vunpack.c.l.b16 %v4992
        %v5277 = vunpack.c.h.b16 %v4992
        %v5278 = vunpack.c.l.b16 %v4993
        %v5279 = vunpack.c.l.b16 %v4994
        %v5280 = vunpack.c.h.b16 %v4994
        %v5281 = vunpack.c.l.b16 %v4995
        %v5282 = vunpack.c.l.b16 %v4996
        %v5283 = vunpack.c.h.b16 %v4996
        %v5284 = vunpack.c.l.b16 %v4997
        %v5285 = vunpack.c.l.b16 %v4998
        %v5286 = vunpack.c.h.b16 %v4998
        %v5287 = vunpack.c.l.b16 %v4999
        %v5288 = vunpack.c.l.b16 %v5000
        %v5289 = vunpack.c.h.b16 %v5000
        %v5290 = vunpack.c.l.b16 %v5001
        %v5291 = vunpack.c.l.b16 %v5002
        %v5292 = vunpack.c.h.b16 %v5002
        %v5293 = vunpack.c.l.b16 %v5003
        %v5294 = vunpack.c.l.b16 %v5004
        %v5295 = vunpack.c.h.b16 %v5004
        %v5296 = vunpack.c.l.b16 %v5005
        %v5297 = vunpack.c.l.b16 %v5006
        %v5298 = vunpack.c.h.b16 %v5006
        %v5299 = vunpack.c.l.b16 %v5007
        %v5300 = vunpack.c.l.b16 %v5008
        %v5301 = vunpack.c.h.b16 %v5008
        %v5302 = vunpack.c.l.b16 %v5009
        %v5303 = vunpack.c.l.b16 %v5010
        %v5304 = vunpack.c.h.b16 %v5010
        %v5305 = vunpack.c.l.b16 %v5011
        %v5306 = vunpack.c.l.b16 %v5012
        %v5307 = vunpack.c.h.b16 %v5012
        %v5308 = vunpack.c.l.b16 %v5013
        %v5309 = vunpack.c.l.b16 %v5014
        %v5310 = vunpack.c.h.b16 %v5014
        %v5311 = vunpack.c.l.b16 %v5015
        %v5312 = vunpack.c.l.b16 %v5016
        %v5313 = vunpack.c.h.b16 %v5016
        %v5314 = vunpack.c.l.b16 %v5017
        %v5315 = vunpack.c.l.b16 %v5018
        %v5316 = vunpack.c.h.b16 %v5018
        %v5317 = vunpack.c.l.b16 %v5019
        %v5318 = vunpack.c.l.b16 %v5020
        %v5319 = vunpack.c.h.b16 %v5020
        %v5320 = vunpack.c.l.b16 %v5021
        %v5321 = vunpack.c.l.b16 %v5022
        %v5322 = vunpack.c.h.b16 %v5022
        %v5323 = vunpack.c.l.b16 %v5023
        %v5324 = vunpack.c.l.b16 %v5024
        %v5325 = vunpack.c.h.b16 %v5024
        %v5326 = vunpack.c.l.b16 %v5025
        %v5327 = vunpack.c.l.b16 %v5026
        %v5328 = vunpack.c.h.b16 %v5026
        %v5329 = vunpack.c.l.b16 %v5027
        %v5330 = vunpack.c.l.b16 %v5028
        %v5331 = vunpack.c.h.b16 %v5028
        %v5332 = vunpack.c.l.b16 %v5029
        %v5333 = vunpack.c.l.b16 %v5030
        %v5334 = vunpack.c.h.b16 %v5030
        %v5335 = vunpack.c.l.b16 %v5031
        %v5336 = vunpack.c.l.b16 %v5032
        %v5337 = vunpack.c.h.b16 %v5032
        %v5338 = vunpack.c.l.b16 %v5033
        %v5339 = vunpack.c.l.b16 %v5034
        %v5340 = vunpack.c.h.b16 %v5034
        %v5341 = vunpack.c.l.b16 %v5035
        %v5342 = vunpack.c.l.b16 %v5036
        %v5343 = vunpack.c.h.b16 %v5036
        %v5344 = vunpack.c.l.b16 %v5037
        %v5345 = vunpack.c.l.b16 %v5038
        %v5346 = vunpack.c.h.b16 %v5038
        %v5347 = vunpack.c.l.b16 %v5039
        %v5348 = vunpack.c.l.b16 %v5040
        %v5349 = vunpack.c.h.b16 %v5040
        %v5350 = vunpack.c.l.b16 %v5041
        %v5351 = vunpack.c.l.b16 %v5042
        %v5352 = vunpack.c.h.b16 %v5042
        %v5353 = vunpack.c.l.b16 %v5043
        %v5354 = vunpack.c.l.b16 %v5044
        %v5355 = vunpack.c.h.b16 %v5044
        %v5356 = vunpack.c.l.b16 %v5045
        %v5357 = vunpack.c.l.b16 %v5046
        %v5358 = vunpack.c.h.b16 %v5046
        %v5359 = vunpack.c.l.b16 %v5047
        %v5360 = vunpack.c.l.b16 %v5048
        %v5361 = vunpack.c.h.b16 %v5048
        %v5362 = vunpack.c.l.b16 %v5049
        %v5363 = vunpack.c.l.b16 %v5050
        %v5364 = vunpack.c.h.b16 %v5050
        %v5365 = vunpack.c.l.b16 %v5051
        %v5366 = vunpack.c.l.b16 %v5052
        %v5367 = vunpack.c.h.b16 %v5052
        %v5368 = vunpack.c.l.b16 %v5053
        %v5369 = vunpack.c.l.b16 %v5054
        %v5370 = vunpack.c.h.b16 %v5054
        %v5371 = vunpack.c.l.b16 %v5055
        %v5372 = vunpack.c.l.b16 %v5056
        %v5373 = vunpack.c.h.b16 %v5056
        %v5374 = vunpack.c.l.b16 %v5057
        %v5375 = vunpack.c.l.b16 %v5058
        %v5376 = vunpack.c.h.b16 %v5058
        %v5377 = vunpack.c.l.b16 %v5059
        %v5378 = vunpack.c.l.b16 %v5060
        %v5379 = vunpack.c.h.b16 %v5060
        %v5380 = vunpack.c.l.b16 %v5061
        %v5381 = vunpack.c.l.b16 %v5062
        %v5382 = vunpack.c.h.b16 %v5062
        %v5383 = vunpack.c.l.b16 %v5063
        %v5384 = vunpack.c.l.b16 %v5064
        %v5385 = vunpack.c.h.b16 %v5064
        %v5386 = vunpack.c.l.b16 %v5065
        %v5387 = vunpack.c.l.b16 %v5066
        %v5388 = vunpack.c.h.b16 %v5066
        %v5389 = vunpack.c.l.b16 %v5067
        %v5390 = vunpack.c.l.b16 %v5068
        %v5391 = vunpack.c.h.b16 %v5068
        %v5392 = vunpack.c.l.b16 %v5069
        %v5393 = vunpack.c.l.b16 %v5070
        %v5394 = vunpack.c.h.b16 %v5070
        %v5395 = vunpack.c.l.b16 %v5071
        %v5396 = vunpack.c.l.b16 %v5072
        %v5397 = vunpack.c.h.b16 %v5072
        %v5398 = vunpack.c.l.b16 %v5073
        %v5399 = vunpack.c.l.b16 %v5074
        %v5400 = vunpack.c.h.b16 %v5074
        %v5401 = vunpack.c.l.b16 %v5075
        %v5402 = vunpack.c.l.b16 %v5076
        %v5403 = vunpack.c.h.b16 %v5076
        %v5404 = vunpack.c.l.b16 %v5077
        %v5405 = vunpack.c.l.b16 %v5078
        %v5406 = vunpack.c.h.b16 %v5078
        %v5407 = vunpack.c.l.b16 %v5079
        %v5408 = vunpack.c.l.b16 %v5080
        %v5409 = vunpack.c.h.b16 %v5080
        %v5410 = vunpack.c.l.b16 %v5081
        %v5411 = vunpack.c.l.b16 %v5082
        %v5412 = vunpack.c.h.b16 %v5082
        %v5413 = vunpack.c.l.b16 %v5083
        %v5414 = vunpack.c.l.b16 %v5084
        %v5415 = vunpack.c.h.b16 %v5084
        %v5416 = vunpack.c.l.b16 %v5085
        %v5417 = vunpack.c.l.b16 %v5086
        %v5418 = vunpack.c.h.b16 %v5086
        %v5419 = vunpack.c.l.b16 %v5087
        %v5420 = vunpack.c.l.b16 %v5088
        %v5421 = vunpack.c.h.b16 %v5088
        %v5422 = vunpack.c.l.b16 %v5089
        %v5423 = vunpack.c.l.b16 %v5090
        %v5424 = vunpack.c.h.b16 %v5090
        %v5425 = vunpack.c.l.b16 %v5091
        %v5426 = vunpack.c.l.b16 %v5092
        %v5427 = vunpack.c.h.b16 %v5092
        %v5428 = vunpack.c.l.b16 %v5093
        %v5429 = vunpack.c.l.b16 %v5094
        %v5430 = vunpack.c.h.b16 %v5094
        %v5431 = vunpack.c.l.b16 %v5095
        %v5432 = vunpack.c.l.b16 %v5096
        %v5433 = vunpack.c.h.b16 %v5096
        %v5434 = vunpack.c.l.b16 %v5097
        %v5435 = vpack.c.b16 %v5246, %v5243
        %v5436 = vpack.c.b16 %v5247, %v5244
        %v5437 = vpack.c.b16 %v5248, %v5245
        %v5438 = vpack.c.b16 %v5252, %v5249
        %v5439 = vpack.c.b16 %v5253, %v5250
        %v5440 = vpack.c.b16 %v5254, %v5251
        %v5441 = vpack.c.b16 %v5258, %v5255
        %v5442 = vpack.c.b16 %v5259, %v5256
        %v5443 = vpack.c.b16 %v5260, %v5257
        %v5444 = vpack.c.b16 %v5264, %v5261
        %v5445 = vpack.c.b16 %v5265, %v5262
        %v5446 = vpack.c.b16 %v5266, %v5263
        %v5447 = vpack.c.b16 %v5270, %v5267
        %v5448 = vpack.c.b16 %v5271, %v5268
        %v5449 = vpack.c.b16 %v5272, %v5269
        %v5450 = vpack.c.b16 %v5276, %v5273
        %v5451 = vpack.c.b16 %v5277, %v5274
        %v5452 = vpack.c.b16 %v5278, %v5275
        %v5453 = vpack.c.b16 %v5282, %v5279
        %v5454 = vpack.c.b16 %v5283, %v5280
        %v5455 = vpack.c.b16 %v5284, %v5281
        %v5456 = vpack.c.b16 %v5288, %v5285
        %v5457 = vpack.c.b16 %v5289, %v5286
        %v5458 = vpack.c.b16 %v5290, %v5287
        %v5459 = vpack.c.b16 %v5294, %v5291
        %v5460 = vpack.c.b16 %v5295, %v5292
        %v5461 = vpack.c.b16 %v5296, %v5293
        %v5462 = vpack.c.b16 %v5300, %v5297
        %v5463 = vpack.c.b16 %v5301, %v5298
        %v5464 = vpack.c.b16 %v5302, %v5299
        %v5465 = vpack.c.b16 %v5306, %v5303
        %v5466 = vpack.c.b16 %v5307, %v5304
        %v5467 = vpack.c.b16 %v5308, %v5305
        %v5468 = vpack.c.b16 %v5312, %v5309
        %v5469 = vpack.c.b16 %v5313, %v5310
        %v5470 = vpack.c.b16 %v5314, %v5311
        %v5471 = vpack.c.b16 %v5318, %v5315
        %v5472 = vpack.c.b16 %v5319, %v5316
        %v5473 = vpack.c.b16 %v5320, %v5317
        %v5474 = vpack.c.b16 %v5324, %v5321
        %v5475 = vpack.c.b16 %v5325, %v5322
        %v5476 = vpack.c.b16 %v5326, %v5323
        %v5477 = vpack.c.b16 %v5330, %v5327
        %v5478 = vpack.c.b16 %v5331, %v5328
        %v5479 = vpack.c.b16 %v5332, %v5329
        %v5480 = vpack.c.b16 %v5336, %v5333
        %v5481 = vpack.c.b16 %v5337, %v5334
        %v5482 = vpack.c.b16 %v5338, %v5335
        %v5483 = vpack.c.b16 %v5342, %v5339
        %v5484 = vpack.c.b16 %v5343, %v5340
        %v5485 = vpack.c.b16 %v5344, %v5341
        %v5486 = vpack.c.b16 %v5348, %v5345
        %v5487 = vpack.c.b16 %v5349, %v5346
        %v5488 = vpack.c.b16 %v5350, %v5347
        %v5489 = vpack.c.b16 %v5354, %v5351
        %v5490 = vpack.c.b16 %v5355, %v5352
        %v5491 = vpack.c.b16 %v5356, %v5353
        %v5492 = vpack.c.b16 %v5360, %v5357
        %v5493 = vpack.c.b16 %v5361, %v5358
        %v5494 = vpack.c.b16 %v5362, %v5359
        %v5495 = vpack.c.b16 %v5366, %v5363
        %v5496 = vpack.c.b16 %v5367, %v5364
        %v5497 = vpack.c.b16 %v5368, %v5365
        %v5498 = vpack.c.b16 %v5372, %v5369
        %v5499 = vpack.c.b16 %v5373, %v5370
        %v5500 = vpack.c.b16 %v5374, %v5371
        %v5501 = vpack.c.b16 %v5378, %v5375
        %v5502 = vpack.c.b16 %v5379, %v5376
        %v5503 = vpack.c.b16 %v5380, %v5377
        %v5504 = vpack.c.b16 %v5384, %v5381
        %v5505 = vpack.c.b16 %v5385, %v5382
        %v5506 = vpack.c.b16 %v5386, %v5383
        %v5507 = vpack.c.b16 %v5390, %v5387
        %v5508 = vpack.c.b16 %v5391, %v5388
        %v5509 = vpack.c.b16 %v5392, %v5389
        %v5510 = vpack.c.b16 %v5396, %v5393
        %v5511 = vpack.c.b16 %v5397, %v5394
        %v5512 = vpack.c.b16 %v5398, %v5395
        %v5513 = vpack.c.b16 %v5402, %v5399
        %v5514 = vpack.c.b16 %v5403, %v5400
        %v5515 = vpack.c.b16 %v5404, %v5401
        %v5516 = vpack.c.b16 %v5408, %v5405
        %v5517 = vpack.c.b16 %v5409, %v5406
        %v5518 = vpack.c.b16 %v5410, %v5407
        %v5519 = vpack.c.b16 %v5414, %v5411
        %v5520 = vpack.c.b16 %v5415, %v5412
        %v5521 = vpack.c.b16 %v5416, %v5413
        %v5522 = vpack.c.b16 %v5420, %v5417
        %v5523 = vpack.c.b16 %v5421, %v5418
        %v5524 = vpack.c.b16 %v5422, %v5419
        %v5525 = vpack.c.b16 %v5426, %v5423
        %v5526 = vpack.c.b16 %v5427, %v5424
        %v5527 = vpack.c.b16 %v5428, %v5425
        %v5528 = vpack.c.b16 %v5432, %v5429
        %v5529 = vpack.c.b16 %v5433, %v5430
        %v5530 = vpack.c.b16 %v5434, %v5431
        %5627 = vmatprep.subr.bf16.mxu0 %v5436
        %5628 = vmatpush1.bf16.msra.mxu0 %v5435
        %5629 = vmatprep.subr.bf16.mxu0 %v5439
        %5630 = vmatpush1.bf16.msra.mxu0 %v5438
        %5631 = vmatprep.subr.bf16.mxu0 %v5442
        %5632 = vmatpush1.bf16.msra.mxu0 %v5441
        %5633 = vmatprep.subr.bf16.mxu0 %v5445
        %5634 = vmatpush1.bf16.msra.mxu0 %v5444
        %5635 = vmatprep.subr.bf16.mxu0 %v5448
        %5636 = vmatpush1.bf16.msra.mxu0 %v5447
        %5637 = vmatprep.subr.bf16.mxu0 %v5451
        %5638 = vmatpush1.bf16.msra.mxu0 %v5450
        %5639 = vmatprep.subr.bf16.mxu0 %v5454
        %5640 = vmatpush1.bf16.msra.mxu0 %v5453
        %5641 = vmatprep.subr.bf16.mxu0 %v5457
        %5642 = vmatpush1.bf16.msra.mxu0 %v5456
        %5643 = vmatprep.subr.bf16.mxu0 %v5460
        %5644 = vmatpush1.bf16.msra.mxu0 %v5459
        %5645 = vmatprep.subr.bf16.mxu0 %v5463
        %5646 = vmatpush1.bf16.msra.mxu0 %v5462
        %5647 = vmatprep.subr.bf16.mxu0 %v5466
        %5648 = vmatpush1.bf16.msra.mxu0 %v5465
        %5649 = vmatprep.subr.bf16.mxu0 %v5469
        %5650 = vmatpush1.bf16.msra.mxu0 %v5468
        %5651 = vmatprep.subr.bf16.mxu0 %v5472
        %5652 = vmatpush1.bf16.msra.mxu0 %v5471
        %5653 = vmatprep.subr.bf16.mxu0 %v5475
        %5654 = vmatpush1.bf16.msra.mxu0 %v5474
        %5655 = vmatprep.subr.bf16.mxu0 %v5478
        %5656 = vmatpush1.bf16.msra.mxu0 %v5477
        %5657 = vmatprep.subr.bf16.mxu0 %v5481
        %5658 = vmatpush1.bf16.msra.mxu0 %v5480
        %5659 = vmatprep.mubr.bf16.mxu0 %v4939
        %5660 = vmatmul.mubr.bf16.gmra.mrb[0].mxu0 %v4938
        %v5661 = vpop.f32.mrb[0].mxu0
        %v5662 = vadd.f32 %v5103, %v5661
        %v5663 = vpop.f32.mrb[0].mxu0
        %v5664 = vadd.f32 %v5107, %v5663
        %v5665 = vpop.f32.mrb[0].mxu0
        %v5666 = vadd.f32 %v5103, %v5665
        %v5667 = vpop.f32.mrb[0].mxu0
        %v5668 = vadd.f32 %v5107, %v5667
        %5669 = vmatprep.mubr.bf16.mxu0 %v4943
        %5670 = vmatmul.mubr.bf16.gmra.mrb[0].mxu0 %v4942
        %v5671 = vpop.f32.mrb[0].mxu0
        %v5672 = vadd.f32 %v5103, %v5671
        %v5673 = vpop.f32.mrb[0].mxu0
        %v5674 = vadd.f32 %v5107, %v5673
        %v5675 = vpop.f32.mrb[0].mxu0
        %v5676 = vadd.f32 %v5103, %v5675
        %v5677 = vpop.f32.mrb[0].mxu0
        %v5678 = vadd.f32 %v5107, %v5677
        %5679 = vmatprep.mubr.bf16.mxu0 %v4947
        %5680 = vmatmul.mubr.bf16.gmra.mrb[0].mxu0 %v4946
        %v5681 = vpop.f32.mrb[0].mxu0
        %v5682 = vadd.f32 %v5103, %v5681
        %v5683 = vpop.f32.mrb[0].mxu0
        %v5684 = vadd.f32 %v5107, %v5683
        %v5685 = vpop.f32.mrb[0].mxu0
        %v5686 = vadd.f32 %v5103, %v5685
        %v5687 = vpop.f32.mrb[0].mxu0
        %v5688 = vadd.f32 %v5107, %v5687
        %5689 = vmatprep.mubr.bf16.mxu0 %v4951
        %5690 = vmatmul.mubr.bf16.gmra.mrb[0].mxu0 %v4950
        %v5691 = vpop.f32.mrb[0].mxu0
        %v5692 = vadd.f32 %v5103, %v5691
        %v5693 = vpop.f32.mrb[0].mxu0
        %v5694 = vadd.f32 %v5107, %v5693
        %v5695 = vpop.f32.mrb[0].mxu0
        %v5696 = vadd.f32 %v5103, %v5695
        %v5697 = vpop.f32.mrb[0].mxu0
        %v5698 = vadd.f32 %v5107, %v5697
        %5699 = vmatprep.mubr.bf16.mxu0 %v4955
        %5700 = vmatmul.mubr.bf16.gmra.mrb[0].mxu0 %v4954
        %v5701 = vpop.f32.mrb[0].mxu0
        %v5702 = vadd.f32 %v5103, %v5701
        %v5703 = vpop.f32.mrb[0].mxu0
        %v5704 = vadd.f32 %v5107, %v5703
        %v5705 = vpop.f32.mrb[0].mxu0
        %v5706 = vadd.f32 %v5103, %v5705
        %v5707 = vpop.f32.mrb[0].mxu0
        %v5708 = vadd.f32 %v5107, %v5707
        %5709 = vmatprep.mubr.bf16.mxu0 %v4959
        %5710 = vmatmul.mubr.bf16.gmra.mrb[0].mxu0 %v4958
        %v5711 = vpop.f32.mrb[0].mxu0
        %v5712 = vadd.f32 %v5103, %v5711
        %v5713 = vpop.f32.mrb[0].mxu0
        %v5714 = vadd.f32 %v5107, %v5713
        %v5715 = vpop.f32.mrb[0].mxu0
        %v5716 = vadd.f32 %v5103, %v5715
        %v5717 = vpop.f32.mrb[0].mxu0
        %v5718 = vadd.f32 %v5107, %v5717
        %5719 = vmatprep.mubr.bf16.mxu0 %v4963
        %5720 = vmatmul.mubr.bf16.gmra.mrb[0].mxu0 %v4962
        %v5721 = vpop.f32.mrb[0].mxu0
        %v5722 = vadd.f32 %v5103, %v5721
        %v5723 = vpop.f32.mrb[0].mxu0
        %v5724 = vadd.f32 %v5107, %v5723
        %v5725 = vpop.f32.mrb[0].mxu0
        %v5726 = vadd.f32 %v5103, %v5725
        %v5727 = vpop.f32.mrb[0].mxu0
        %v5728 = vadd.f32 %v5107, %v5727
        %5729 = vmatprep.mubr.bf16.mxu0 %v4967
        %5730 = vmatmul.mubr.bf16.gmra.mrb[0].mxu0 %v4966
        %v5731 = vpop.f32.mrb[0].mxu0
        %v5732 = vadd.f32 %v5103, %v5731
        %v5733 = vpop.f32.mrb[0].mxu0
        %v5734 = vadd.f32 %v5107, %v5733
        %v5735 = vpop.f32.mrb[0].mxu0
        %v5736 = vadd.f32 %v5103, %v5735
        %v5737 = vpop.f32.mrb[0].mxu0
        %v5738 = vadd.f32 %v5107, %v5737
        %5739 = vdwg.mxu0
        %5740 = vmatprep.subr.bf16.mxu0 %v5484
        %5741 = vmatpush1.bf16.msra.mxu0 %v5483
        %5742 = vmatprep.subr.bf16.mxu0 %v5487
        %5743 = vmatpush1.bf16.msra.mxu0 %v5486
        %5744 = vmatprep.subr.bf16.mxu0 %v5490
        %5745 = vmatpush1.bf16.msra.mxu0 %v5489
        %5746 = vmatprep.subr.bf16.mxu0 %v5493
        %5747 = vmatpush1.bf16.msra.mxu0 %v5492
        %5748 = vmatprep.subr.bf16.mxu0 %v5496
        %5749 = vmatpush1.bf16.msra.mxu0 %v5495
        %5750 = vmatprep.subr.bf16.mxu0 %v5499
        %5751 = vmatpush1.bf16.msra.mxu0 %v5498
        %5752 = vmatprep.subr.bf16.mxu0 %v5502
        %5753 = vmatpush1.bf16.msra.mxu0 %v5501
        %5754 = vmatprep.subr.bf16.mxu0 %v5505
        %5755 = vmatpush1.bf16.msra.mxu0 %v5504
        %5756 = vmatprep.subr.bf16.mxu0 %v5508
        %5757 = vmatpush1.bf16.msra.mxu0 %v5507
        %5758 = vmatprep.subr.bf16.mxu0 %v5511
        %5759 = vmatpush1.bf16.msra.mxu0 %v5510
        %5760 = vmatprep.subr.bf16.mxu0 %v5514
        %5761 = vmatpush1.bf16.msra.mxu0 %v5513
        %5762 = vmatprep.subr.bf16.mxu0 %v5517
        %5763 = vmatpush1.bf16.msra.mxu0 %v5516
        %5764 = vmatprep.subr.bf16.mxu0 %v5520
        %5765 = vmatpush1.bf16.msra.mxu0 %v5519
        %5766 = vmatprep.subr.bf16.mxu0 %v5523
        %5767 = vmatpush1.bf16.msra.mxu0 %v5522
        %5768 = vmatprep.subr.bf16.mxu0 %v5526
        %5769 = vmatpush1.bf16.msra.mxu0 %v5525
        %5770 = vmatprep.subr.bf16.mxu0 %v5529
        %5771 = vmatpush1.bf16.msra.mxu0 %v5528
        %5772 = vmatprep.mubr.bf16.mxu0 %v4941
        %5773 = vmatmul.mubr.bf16.gmra.mrb[0].mxu0 %v4940
        %v5774 = vpop.f32.mrb[0].mxu0
        %v5775 = vadd.f32 %v5662, %v5774
        %v5776 = vpop.f32.mrb[0].mxu0
        %v5777 = vadd.f32 %v5664, %v5776
        %v5778 = vpop.f32.mrb[0].mxu0
        %v5779 = vadd.f32 %v5666, %v5778
        %v5780 = vpop.f32.mrb[0].mxu0
        %v5781 = vadd.f32 %v5668, %v5780
        %5782 = vmatprep.mubr.bf16.mxu0 %v4945
        %5783 = vmatmul.mubr.bf16.gmra.mrb[0].mxu0 %v4944
        %v5784 = vpop.f32.mrb[0].mxu0
        %v5785 = vadd.f32 %v5672, %v5784
        %v5786 = vpop.f32.mrb[0].mxu0
        %v5787 = vadd.f32 %v5674, %v5786
        %v5788 = vpop.f32.mrb[0].mxu0
        %v5789 = vadd.f32 %v5676, %v5788
        %v5790 = vpop.f32.mrb[0].mxu0
        %v5791 = vadd.f32 %v5678, %v5790
        %5792 = vmatprep.mubr.bf16.mxu0 %v4949
        %5793 = vmatmul.mubr.bf16.gmra.mrb[0].mxu0 %v4948
        %v5794 = vpop.f32.mrb[0].mxu0
        %v5795 = vadd.f32 %v5682, %v5794
        %v5796 = vpop.f32.mrb[0].mxu0
        %v5797 = vadd.f32 %v5684, %v5796
        %v5798 = vpop.f32.mrb[0].mxu0
        %v5799 = vadd.f32 %v5686, %v5798
        %v5800 = vpop.f32.mrb[0].mxu0
        %v5801 = vadd.f32 %v5688, %v5800
        %5802 = vmatprep.mubr.bf16.mxu0 %v4953
        %5803 = vmatmul.mubr.bf16.gmra.mrb[0].mxu0 %v4952
        %v5804 = vpop.f32.mrb[0].mxu0
        %v5805 = vadd.f32 %v5692, %v5804
        %v5806 = vpop.f32.mrb[0].mxu0
        %v5807 = vadd.f32 %v5694, %v5806
        %v5808 = vpop.f32.mrb[0].mxu0
        %v5809 = vadd.f32 %v5696, %v5808
        %v5810 = vpop.f32.mrb[0].mxu0
        %v5811 = vadd.f32 %v5698, %v5810
        %5812 = vmatprep.mubr.bf16.mxu0 %v4957
        %5813 = vmatmul.mubr.bf16.gmra.mrb[0].mxu0 %v4956
        %v5814 = vpop.f32.mrb[0].mxu0
        %v5815 = vadd.f32 %v5702, %v5814
        %v5816 = vpop.f32.mrb[0].mxu0
        %v5817 = vadd.f32 %v5704, %v5816
        %v5818 = vpop.f32.mrb[0].mxu0
        %v5819 = vadd.f32 %v5706, %v5818
        %v5820 = vpop.f32.mrb[0].mxu0
        %v5821 = vadd.f32 %v5708, %v5820
        %5822 = vmatprep.mubr.bf16.mxu0 %v4961
        %5823 = vmatmul.mubr.bf16.gmra.mrb[0].mxu0 %v4960
        %v5824 = vpop.f32.mrb[0].mxu0
        %v5825 = vadd.f32 %v5712, %v5824
        %v5826 = vpop.f32.mrb[0].mxu0
        %v5827 = vadd.f32 %v5714, %v5826
        %v5828 = vpop.f32.mrb[0].mxu0
        %v5829 = vadd.f32 %v5716, %v5828
        %v5830 = vpop.f32.mrb[0].mxu0
        %v5831 = vadd.f32 %v5718, %v5830
        %5832 = vmatprep.mubr.bf16.mxu0 %v4965
        %5833 = vmatmul.mubr.bf16.gmra.mrb[0].mxu0 %v4964
        %v5834 = vpop.f32.mrb[0].mxu0
        %v5835 = vadd.f32 %v5722, %v5834
        %v5836 = vpop.f32.mrb[0].mxu0
        %v5837 = vadd.f32 %v5724, %v5836
        %v5838 = vpop.f32.mrb[0].mxu0
        %v5839 = vadd.f32 %v5726, %v5838
        %v5840 = vpop.f32.mrb[0].mxu0
        %v5841 = vadd.f32 %v5728, %v5840
        %5842 = vmatprep.mubr.bf16.mxu0 %v4969
        %5843 = vmatmul.mubr.bf16.gmra.mrb[0].mxu0 %v4968
        %v5844 = vpop.f32.mrb[0].mxu0
        %v5845 = vadd.f32 %v5732, %v5844
        %v5846 = vpop.f32.mrb[0].mxu0
        %v5847 = vadd.f32 %v5734, %v5846
        %v5848 = vpop.f32.mrb[0].mxu0
        %v5849 = vadd.f32 %v5736, %v5848
        %v5850 = vpop.f32.mrb[0].mxu0
        %v5851 = vadd.f32 %v5738, %v5850
        %5852 = vdwg.mxu0
        %5853 = vmatprep.subr.bf16.mxu0 0
        %5854 = vmatpush1.bf16.msra.mxu0 %v5437
        %5855 = vmatprep.subr.bf16.mxu0 0
        %5856 = vmatpush1.bf16.msra.mxu0 %v5440
        %5857 = vmatprep.subr.bf16.mxu0 0
        %5858 = vmatpush1.bf16.msra.mxu0 %v5443
        %5859 = vmatprep.subr.bf16.mxu0 0
        %5860 = vmatpush1.bf16.msra.mxu0 %v5446
        %5861 = vmatprep.subr.bf16.mxu0 0
        %5862 = vmatpush1.bf16.msra.mxu0 %v5449
        %5863 = vmatprep.subr.bf16.mxu0 0
        %5864 = vmatpush1.bf16.msra.mxu0 %v5452
        %5865 = vmatprep.subr.bf16.mxu0 0
        %5866 = vmatpush1.bf16.msra.mxu0 %v5455
        %5867 = vmatprep.subr.bf16.mxu0 0
        %5868 = vmatpush1.bf16.msra.mxu0 %v5458
        %5869 = vmatprep.subr.bf16.mxu0 0
        %5870 = vmatpush1.bf16.msra.mxu0 %v5461
        %5871 = vmatprep.subr.bf16.mxu0 0
        %5872 = vmatpush1.bf16.msra.mxu0 %v5464
        %5873 = vmatprep.subr.bf16.mxu0 0
        %5874 = vmatpush1.bf16.msra.mxu0 %v5467
        %5875 = vmatprep.subr.bf16.mxu0 0
        %5876 = vmatpush1.bf16.msra.mxu0 %v5470
        %5877 = vmatprep.subr.bf16.mxu0 0
        %5878 = vmatpush1.bf16.msra.mxu0 %v5473
        %5879 = vmatprep.subr.bf16.mxu0 0
        %5880 = vmatpush1.bf16.msra.mxu0 %v5476
        %5881 = vmatprep.subr.bf16.mxu0 0
        %5882 = vmatpush1.bf16.msra.mxu0 %v5479
        %5883 = vmatprep.subr.bf16.mxu0 0
        %5884 = vmatpush1.bf16.msra.mxu0 %v5482
        %5885 = vmatprep.mubr.bf16.mxu0 %v4939
        %5886 = vmatmul.mubr.bf16.gmra.mrb[0].mxu0 %v4938
        %v5887 = vpop.f32.mrb[0].mxu0
        %v5888 = vadd.f32 %v5111, %v5887
        %v5889 = vpop.f32.mrb[0].mxu0
        %v5890 = vpop.f32.mrb[0].mxu0
        %v5891 = vadd.f32 %v5111, %v5890
        %v5892 = vpop.f32.mrb[0].mxu0
        %5893 = vmatprep.mubr.bf16.mxu0 %v4943
        %5894 = vmatmul.mubr.bf16.gmra.mrb[0].mxu0 %v4942
        %v5895 = vpop.f32.mrb[0].mxu0
        %v5896 = vadd.f32 %v5111, %v5895
        %v5897 = vpop.f32.mrb[0].mxu0
        %v5898 = vpop.f32.mrb[0].mxu0
        %v5899 = vadd.f32 %v5111, %v5898
        %v5900 = vpop.f32.mrb[0].mxu0
        %5901 = vmatprep.mubr.bf16.mxu0 %v4947
        %5902 = vmatmul.mubr.bf16.gmra.mrb[0].mxu0 %v4946
        %v5903 = vpop.f32.mrb[0].mxu0
        %v5904 = vadd.f32 %v5111, %v5903
        %v5905 = vpop.f32.mrb[0].mxu0
        %v5906 = vpop.f32.mrb[0].mxu0
        %v5907 = vadd.f32 %v5111, %v5906
        %v5908 = vpop.f32.mrb[0].mxu0
        %5909 = vmatprep.mubr.bf16.mxu0 %v4951
        %5910 = vmatmul.mubr.bf16.gmra.mrb[0].mxu0 %v4950
        %v5911 = vpop.f32.mrb[0].mxu0
        %v5912 = vadd.f32 %v5111, %v5911
        %v5913 = vpop.f32.mrb[0].mxu0
        %v5914 = vpop.f32.mrb[0].mxu0
        %v5915 = vadd.f32 %v5111, %v5914
        %v5916 = vpop.f32.mrb[0].mxu0
        %5917 = vmatprep.mubr.bf16.mxu0 %v4955
        %5918 = vmatmul.mubr.bf16.gmra.mrb[0].mxu0 %v4954
        %v5919 = vpop.f32.mrb[0].mxu0
        %v5920 = vadd.f32 %v5111, %v5919
        %v5921 = vpop.f32.mrb[0].mxu0
        %v5922 = vpop.f32.mrb[0].mxu0
        %v5923 = vadd.f32 %v5111, %v5922
        %v5924 = vpop.f32.mrb[0].mxu0
        %5925 = vmatprep.mubr.bf16.mxu0 %v4959
        %5926 = vmatmul.mubr.bf16.gmra.mrb[0].mxu0 %v4958
        %v5927 = vpop.f32.mrb[0].mxu0
        %v5928 = vadd.f32 %v5111, %v5927
        %v5929 = vpop.f32.mrb[0].mxu0
        %v5930 = vpop.f32.mrb[0].mxu0
        %v5931 = vadd.f32 %v5111, %v5930
        %v5932 = vpop.f32.mrb[0].mxu0
        %5933 = vmatprep.mubr.bf16.mxu0 %v4963
        %5934 = vmatmul.mubr.bf16.gmra.mrb[0].mxu0 %v4962
        %v5935 = vpop.f32.mrb[0].mxu0
        %v5936 = vadd.f32 %v5111, %v5935
        %v5937 = vpop.f32.mrb[0].mxu0
        %v5938 = vpop.f32.mrb[0].mxu0
        %v5939 = vadd.f32 %v5111, %v5938
        %v5940 = vpop.f32.mrb[0].mxu0
        %5941 = vmatprep.mubr.bf16.mxu0 %v4967
        %5942 = vmatmul.mubr.bf16.gmra.mrb[0].mxu0 %v4966
        %v5943 = vpop.f32.mrb[0].mxu0
        %v5944 = vadd.f32 %v5111, %v5943
        %v5945 = vpop.f32.mrb[0].mxu0
        %v5946 = vpop.f32.mrb[0].mxu0
        %v5947 = vadd.f32 %v5111, %v5946
        %v5948 = vpop.f32.mrb[0].mxu0
        %5949 = vdwg.mxu0
        %5950 = vmatprep.subr.bf16.mxu0 0
        %5951 = vmatpush1.bf16.msra.mxu0 %v5485
        %5952 = vmatprep.subr.bf16.mxu0 0
        %5953 = vmatpush1.bf16.msra.mxu0 %v5488
        %5954 = vmatprep.subr.bf16.mxu0 0
        %5955 = vmatpush1.bf16.msra.mxu0 %v5491
        %5956 = vmatprep.subr.bf16.mxu0 0
        %5957 = vmatpush1.bf16.msra.mxu0 %v5494
        %5958 = vmatprep.subr.bf16.mxu0 0
        %5959 = vmatpush1.bf16.msra.mxu0 %v5497
        %5960 = vmatprep.subr.bf16.mxu0 0
        %5961 = vmatpush1.bf16.msra.mxu0 %v5500
        %5962 = vmatprep.subr.bf16.mxu0 0
        %5963 = vmatpush1.bf16.msra.mxu0 %v5503
        %5964 = vmatprep.subr.bf16.mxu0 0
        %5965 = vmatpush1.bf16.msra.mxu0 %v5506
        %5966 = vmatprep.subr.bf16.mxu0 0
        %5967 = vmatpush1.bf16.msra.mxu0 %v5509
        %5968 = vmatprep.subr.bf16.mxu0 0
        %5969 = vmatpush1.bf16.msra.mxu0 %v5512
        %5970 = vmatprep.subr.bf16.mxu0 0
        %5971 = vmatpush1.bf16.msra.mxu0 %v5515
        %5972 = vmatprep.subr.bf16.mxu0 0
        %5973 = vmatpush1.bf16.msra.mxu0 %v5518
        %5974 = vmatprep.subr.bf16.mxu0 0
        %5975 = vmatpush1.bf16.msra.mxu0 %v5521
        %5976 = vmatprep.subr.bf16.mxu0 0
        %5977 = vmatpush1.bf16.msra.mxu0 %v5524
        %5978 = vmatprep.subr.bf16.mxu0 0
        %5979 = vmatpush1.bf16.msra.mxu0 %v5527
        %5980 = vmatprep.subr.bf16.mxu0 0
        %5981 = vmatpush1.bf16.msra.mxu0 %v5530
        %5982 = vmatprep.mubr.bf16.mxu0 %v4941
        %5983 = vmatmul.mubr.bf16.gmra.mrb[0].mxu0 %v4940
        %v5984 = vpop.f32.mrb[0].mxu0
        %v5985 = vadd.f32 %v5888, %v5984
        %v5986 = vpop.f32.mrb[0].mxu0
        %v5987 = vpop.f32.mrb[0].mxu0
        %v5988 = vadd.f32 %v5891, %v5987
        %v5989 = vpop.f32.mrb[0].mxu0
        %5990 = vmatprep.mubr.bf16.mxu0 %v4945
        %5991 = vmatmul.mubr.bf16.gmra.mrb[0].mxu0 %v4944
        %v5992 = vpop.f32.mrb[0].mxu0
        %v5993 = vadd.f32 %v5896, %v5992
        %v5994 = vpop.f32.mrb[0].mxu0
        %v5995 = vpop.f32.mrb[0].mxu0
        %v5996 = vadd.f32 %v5899, %v5995
        %v5997 = vpop.f32.mrb[0].mxu0
        %5998 = vmatprep.mubr.bf16.mxu0 %v4949
        %5999 = vmatmul.mubr.bf16.gmra.mrb[0].mxu0 %v4948
        %v6000 = vpop.f32.mrb[0].mxu0
        %v6001 = vadd.f32 %v5904, %v6000
        %v6002 = vpop.f32.mrb[0].mxu0
        %v6003 = vpop.f32.mrb[0].mxu0
        %v6004 = vadd.f32 %v5907, %v6003
        %v6005 = vpop.f32.mrb[0].mxu0
        %6006 = vmatprep.mubr.bf16.mxu0 %v4953
        %6007 = vmatmul.mubr.bf16.gmra.mrb[0].mxu0 %v4952
        %v6008 = vpop.f32.mrb[0].mxu0
        %v6009 = vadd.f32 %v5912, %v6008
        %v6010 = vpop.f32.mrb[0].mxu0
        %v6011 = vpop.f32.mrb[0].mxu0
        %v6012 = vadd.f32 %v5915, %v6011
        %v6013 = vpop.f32.mrb[0].mxu0
        %6014 = vmatprep.mubr.bf16.mxu0 %v4957
        %6015 = vmatmul.mubr.bf16.gmra.mrb[0].mxu0 %v4956
        %v6016 = vpop.f32.mrb[0].mxu0
        %v6017 = vadd.f32 %v5920, %v6016
        %v6018 = vpop.f32.mrb[0].mxu0
        %v6019 = vpop.f32.mrb[0].mxu0
        %v6020 = vadd.f32 %v5923, %v6019
        %v6021 = vpop.f32.mrb[0].mxu0
        %6022 = vmatprep.mubr.bf16.mxu0 %v4961
        %6023 = vmatmul.mubr.bf16.gmra.mrb[0].mxu0 %v4960
        %v6024 = vpop.f32.mrb[0].mxu0
        %v6025 = vadd.f32 %v5928, %v6024
        %v6026 = vpop.f32.mrb[0].mxu0
        %v6027 = vpop.f32.mrb[0].mxu0
        %v6028 = vadd.f32 %v5931, %v6027
        %v6029 = vpop.f32.mrb[0].mxu0
        %6030 = vmatprep.mubr.bf16.mxu0 %v4965
        %6031 = vmatmul.mubr.bf16.gmra.mrb[0].mxu0 %v4964
        %v6032 = vpop.f32.mrb[0].mxu0
        %v6033 = vadd.f32 %v5936, %v6032
        %v6034 = vpop.f32.mrb[0].mxu0
        %v6035 = vpop.f32.mrb[0].mxu0
        %v6036 = vadd.f32 %v5939, %v6035
        %v6037 = vpop.f32.mrb[0].mxu0
        %6038 = vmatprep.mubr.bf16.mxu0 %v4969
        %6039 = vmatmul.mubr.bf16.gmra.mrb[0].mxu0 %v4968
        %v6040 = vpop.f32.mrb[0].mxu0
        %v6041 = vadd.f32 %v5944, %v6040
        %v6042 = vpop.f32.mrb[0].mxu0
        %v6043 = vpop.f32.mrb[0].mxu0
        %v6044 = vadd.f32 %v5947, %v6043
        %v6045 = vpop.f32.mrb[0].mxu0
        %6046 = vdwg.mxu0
        %6047 = vst [vmem:[%s400] sm:$0xff] %v5775
        %6048 = vst [vmem:[%s400 + $0x8] sm:$0xff] %v5777
        %6049 = vst [vmem:[%s400 + $0x10] sm:$0xff] %v5985
        %6050 = vst [vmem:[%s400 + $0x18] sm:$0xff] %v5779
        %6051 = vst [vmem:[%s400 + $0x20] sm:$0xff] %v5781
        %6052 = vst [vmem:[%s400 + $0x28] sm:$0xff] %v5988
        %6053 = vst [vmem:[%s400 + $0x30] sm:$0xff] %v5785
        %6054 = vst [vmem:[%s400 + $0x38] sm:$0xff] %v5787
        %6055 = vst [vmem:[%s400 + $0x40] sm:$0xff] %v5993
        %6056 = vst [vmem:[%s400 + $0x48] sm:$0xff] %v5789
        %6057 = vst [vmem:[%s400 + $0x50] sm:$0xff] %v5791
        %6058 = vst [vmem:[%s400 + $0x58] sm:$0xff] %v5996
        %6059 = vst [vmem:[%s400 + $0x60] sm:$0xff] %v5795
        %6060 = vst [vmem:[%s400 + $0x68] sm:$0xff] %v5797
        %6061 = vst [vmem:[%s400 + $0x70] sm:$0xff] %v6001
        %6062 = vst [vmem:[%s400 + $0x78] sm:$0xff] %v5799
        %6063 = vst [vmem:[%s400 + $0x80] sm:$0xff] %v5801
        %6064 = vst [vmem:[%s400 + $0x88] sm:$0xff] %v6004
        %6065 = vst [vmem:[%s400 + $0x90] sm:$0xff] %v5805
        %6066 = vst [vmem:[%s400 + $0x98] sm:$0xff] %v5807
        %6067 = vst [vmem:[%s400 + $0xa0] sm:$0xff] %v6009
        %6068 = vst [vmem:[%s400 + $0xa8] sm:$0xff] %v5809
        %6069 = vst [vmem:[%s400 + $0xb0] sm:$0xff] %v5811
        %6070 = vst [vmem:[%s400 + $0xb8] sm:$0xff] %v6012
        %6071 = vst [vmem:[%s400 + $0xc0] sm:$0xff] %v5815
        %6072 = vst [vmem:[%s400 + $0xc8] sm:$0xff] %v5817
        %6073 = vst [vmem:[%s400 + $0xd0] sm:$0xff] %v6017
        %6074 = vst [vmem:[%s400 + $0xd8] sm:$0xff] %v5819
        %6075 = vst [vmem:[%s400 + $0xe0] sm:$0xff] %v5821
        %6076 = vst [vmem:[%s400 + $0xe8] sm:$0xff] %v6020
        %6077 = vst [vmem:[%s400 + $0xf0] sm:$0xff] %v5825
        %6078 = vst [vmem:[%s400 + $0xf8] sm:$0xff] %v5827
        %6079 = vst [vmem:[%s400 + $0x100] sm:$0xff] %v6025
        %6080 = vst [vmem:[%s400 + $0x108] sm:$0xff] %v5829
        %6081 = vst [vmem:[%s400 + $0x110] sm:$0xff] %v5831
        %6082 = vst [vmem:[%s400 + $0x118] sm:$0xff] %v6028
        %6083 = vst [vmem:[%s400 + $0x120] sm:$0xff] %v5835
        %6084 = vst [vmem:[%s400 + $0x128] sm:$0xff] %v5837
        %6085 = vst [vmem:[%s400 + $0x130] sm:$0xff] %v6033
        %6086 = vst [vmem:[%s400 + $0x138] sm:$0xff] %v5839
        %6087 = vst [vmem:[%s400 + $0x140] sm:$0xff] %v5841
        %6088 = vst [vmem:[%s400 + $0x148] sm:$0xff] %v6036
        %6089 = vst [vmem:[%s400 + $0x150] sm:$0xff] %v5845
        %6090 = vst [vmem:[%s400 + $0x158] sm:$0xff] %v5847
        %6091 = vst [vmem:[%s400 + $0x160] sm:$0xff] %v6041
        %6092 = vst [vmem:[%s400 + $0x168] sm:$0xff] %v5849
        %6093 = vst [vmem:[%s400 + $0x170] sm:$0xff] %v5851
        %6094 = vst [vmem:[%s400 + $0x178] sm:$0xff] %v6044
        %s6095 = sand.u32 %s270, 1
        %s6096 = scalar_lea.sflag [#allocation6], %s6095
        %s6097 = sand.u32 %s270, 1
        %s6098 = smul.addr %s6097, 384
        %s6099 = scalar_lea.vmem [#allocation5], %s6098
        // Predicated region
        $region72: #{tpu_custom_call.1} parent=59 // pred_check
          %p6100 = pneg %p280
        $region73: #{tpu_custom_call.1} parent=59 // pred_check_branch
          %6102 = sbr.rel (%p6100) target = $region75
        $region74: #{tpu_custom_call.1} parent=59 // pred_region
          %s6103 = smul.u32 16, %s29
          %s6105 = ssub.s32 6144, 6144
          %6106 = vsyncadd %s6096, %s6105
          %s6107 = smul.addr %s6103, 3
          %s6108 = smul.addr %s28, 96
          %s6109 = sadd.s32 %s6107, %s6108
          %s6110 = smul.addr %s6109, 128
          %s6111 = scalar_lea.hbm %s10, %s6110
          %s6112 = sshll.u32 %s6099, 4
          %s6113 = int_to_ptr.vmem [resolvable:$true] %s6112
          %6118 = dma.vmem_to_hbm [thread:$0]  %s6113, 6144, %s6111, %s6096, 384, 384, 24
        $region75: #{tpu_custom_call.1} parent=59 // pred_fallthru
          _
      $region60: #{tpu_custom_call.1} parent=5 // pred_fallthru
        _
      %p6119 = scmp.le.s32.totalorder 2, %s19
      // Predicated region
      $region76: #{tpu_custom_call.1} parent=5 // pred_check
        %p6120 = pneg %p6119
      $region77: #{tpu_custom_call.1} parent=5 // pred_check_branch
        %6122 = sbr.rel (%p6120) target = $region79
      $region78: #{tpu_custom_call.1} parent=5 // pred_region
        %s6123 = ssub.s32 %s19, 2
        // Predicated region
        $region80: #{tpu_custom_call.1} parent=78 // pred_check
          %p6124 = pneg %p286
        $region81: #{tpu_custom_call.1} parent=78 // pred_check_branch
          %6126 = sbr.rel (%p6124) target = $region83
        $region82: #{tpu_custom_call.1} parent=78 // pred_region
          %s6127 = sand.u32 %s271, 1
          %s6128 = scalar_lea.sflag [#allocation6], %s6127
          %s6129 = sand.u32 %s271, 1
          %s6130 = smul.addr %s6129, 384
          %s6131 = scalar_lea.vmem [#allocation5], %s6130
          %6132 = dma.done %s6128, 6144
        $region83: #{tpu_custom_call.1} parent=78 // pred_fallthru
          _
      $region79: #{tpu_custom_call.1} parent=5 // pred_fallthru
        _
    $region6: #{tpu_custom_call.1} parent=1 // loop_footer
      %s23 = sadd.s32 1, %s19
    $region7: #{tpu_custom_call.1} parent=1 // loop_footer_branch
      %18 = sbr.rel target = $region3
    $region8: #{tpu_custom_call.1} parent=1 // loop_exit
      _
    %6133 = vsyncpa [#allocation6], 1
    %s6134 = scalar_lea.sflag [#allocation6], 1
    %6135 = vsyncpa %s6134, 1

</llo_original>
